<compile_context>
chip_gen: v7x
topology: tpu7x:2x2x1
jax: 0.10.0
libtpu: 0.0.40
codegen_flags: <defaults>
</compile_context>

<pallas_src>
import functools
import math

import jax
import jax.numpy as jnp
from jax import lax
from jax.experimental import pallas as pl
from jax.experimental.pallas import tpu as pltpu


# --------------------------------------------------------------------------------------
# Pallas kernel: full encoder stack (all layers) for one chunk of batch rows.
# --------------------------------------------------------------------------------------
def _layer_norm(x, g, b, eps=1e-5):
    mean = jnp.mean(x, axis=-1, keepdims=True)
    cent = x - mean
    var = jnp.mean(cent * cent, axis=-1, keepdims=True)
    return cent * lax.rsqrt(var + eps) * g + b


def _fused_encoder_kernel(
    valid_lens_ref,                     # (B,) int32, SMEM (scalar prefetch)
    x_ref,                              # (Bblk, S, D)
    wq_ref, wk_ref, wv_ref, wo_ref,     # (L, D, D) each, pre-transposed to (in, out)
    ln1g_ref, ln1b_ref,                 # (L, 1, D)
    w1_ref,                             # (L, D, F)
    b1_ref,                             # (L, 1, F)
    w2_ref,                             # (L, F, D)
    b2_ref,                             # (L, 1, D)
    ln2g_ref, ln2b_ref,                 # (L, 1, D)
    out_ref,                            # (Bblk, S, D)
    *, num_heads, num_layers,
):
    chunk = pl.program_id(0)
    Bblk, S, D = x_ref.shape
    Dh = D // num_heads
    scale = 1.0 / math.sqrt(Dh)

    # Fold batch into the MXU M dimension: all big matmuls are (Bblk*S, D) @ ...
    x = x_ref[...].reshape(Bblk * S, D)

    # Key-position iota, shared by all layers / heads.
    key_pos = lax.broadcasted_iota(jnp.int32, (S, S), 1)

    for l in range(num_layers):                      # static: layers fused in one call
        wq, wk, wv, wo = wq_ref[l], wk_ref[l], wv_ref[l], wo_ref[l]

        # ---- multi-head attention: batched Q/K/V projections -----------------------
        q = jnp.dot(x, wq, preferred_element_type=jnp.float32)   # (Bblk*S, D)
        k = jnp.dot(x, wk, preferred_element_type=jnp.float32)
        v = jnp.dot(x, wv, preferred_element_type=jnp.float32)

        attn_rows = []
        for bi in range(Bblk):                       # static loop over batch rows
            vl = valid_lens_ref[chunk * Bblk + bi]   # scalar int32 from SMEM
            mask = key_pos < vl                      # (S, S) key mask for this row
            rows = slice(bi * S, (bi + 1) * S)

            acc = jnp.zeros((S, D), jnp.float32)     # lane-dense output-proj accumulator
            for h in range(num_heads):               # static, fully unrolled
                cols = slice(h * Dh, (h + 1) * Dh)
                qh, kh, vh = q[rows, cols], k[rows, cols], v[rows, cols]

                # scores = qh @ kh^T  (contract feature dim; no explicit transpose)
                scores = lax.dot_general(
                    qh, kh, (((1,), (1,)), ((), ())),
                    preferred_element_type=jnp.float32) * scale
                scores = jnp.where(mask, scores, jnp.float32(-1e6))

                smax = jnp.max(scores, axis=-1, keepdims=True)
                p = jnp.exp(scores - smax)
                denom = jnp.sum(p, axis=-1, keepdims=True)
                attn = p * pl.reciprocal(denom, approx=True)     # EUP, not VALU divide

                head_out = jnp.dot(attn, vh, preferred_element_type=jnp.float32)
                # Fold W_o into the head loop: (S, Dh) @ (Dh, D) -> 128-lane output,
                # no lane-axis concatenate of 32-wide head slices.
                acc = acc + jnp.dot(head_out, wo[cols, :],
                                    preferred_element_type=jnp.float32)
            attn_rows.append(acc)

        attn_out = attn_rows[0] if Bblk == 1 else jnp.concatenate(attn_rows, axis=0)

        # ---- AddNorm 1 --------------------------------------------------------------
        y = _layer_norm(x + attn_out, ln1g_ref[l], ln1b_ref[l])

        # ---- position-wise FFN (batched over Bblk*S rows) ---------------------------
        hid = jnp.maximum(
            jnp.dot(y, w1_ref[l], preferred_element_type=jnp.float32) + b1_ref[l],
            0.0)
        ffn = jnp.dot(hid, w2_ref[l], preferred_element_type=jnp.float32) + b2_ref[l]

        # ---- AddNorm 2 --------------------------------------------------------------
        x = _layer_norm(y + ffn, ln2g_ref[l], ln2b_ref[l])

    out_ref[...] = x.reshape(Bblk, S, D).astype(out_ref.dtype)


# --------------------------------------------------------------------------------------
# Wrapper
# --------------------------------------------------------------------------------------
def transformer_encoder_forward(tokens, valid_lens, params, num_heads, num_chunks=None):
    """Pallas-backed TransformerEncoder.forward. tokens: (B, S) i32 -> (B, S, D)."""
    emb = params["embedding"]                     # (V, D)
    D = emb.shape[1]
    B, S = tokens.shape
    L = params["wq"].shape[0]
    F = params["w1"].shape[2]

    # glue: embedding gather * sqrt(D) + positional encoding
    x = jnp.take(emb, tokens, axis=0) * jnp.float32(math.sqrt(D))
    x = x + params["pos_encoding"][:S][None, :, :]

    # Grid of batch chunks: 2 chunks keep both v7x TensorCores busy; each chunk
    # still folds Bblk*S rows into the MXU M dimension.
    if num_chunks is None:
        num_chunks = 2 if (B >= 2 and B % 2 == 0) else 1
    assert B % num_chunks == 0, "batch must divide evenly into chunks"
    Bblk = B // num_chunks

    def rep(shape):  # replicated (never-changing) weight block
        nd = len(shape)
        return pl.BlockSpec(shape, lambda c, vl, _nd=nd: (0,) * _nd)

    grid_spec = pltpu.PrefetchScalarGridSpec(
        num_scalar_prefetch=1,
        grid=(num_chunks,),
        in_specs=[
            pl.BlockSpec((Bblk, S, D), lambda c, vl: (c, 0, 0)),   # x (batch chunk)
            rep((L, D, D)), rep((L, D, D)),
            rep((L, D, D)), rep((L, D, D)),                        # wq wk wv wo
            rep((L, 1, D)), rep((L, 1, D)),                        # ln1 gamma/beta
            rep((L, D, F)), rep((L, 1, F)),                        # ffn dense1 w/b
            rep((L, F, D)), rep((L, 1, D)),                        # ffn dense2 w/b
            rep((L, 1, D)), rep((L, 1, D)),                        # ln2 gamma/beta
        ],
        out_specs=pl.BlockSpec((Bblk, S, D), lambda c, vl: (c, 0, 0)),
    )

    kernel = functools.partial(_fused_encoder_kernel,
                               num_heads=num_heads, num_layers=L)
    return pl.pallas_call(
        kernel,
        grid_spec=grid_spec,
        out_shape=jax.ShapeDtypeStruct((B, S, D), jnp.float32),
        compiler_params=pltpu.CompilerParams(
            dimension_semantics=("parallel",)),
    )(valid_lens, x,
      params["wq"], params["wk"], params["wv"], params["wo"],
      params["ln1_g"], params["ln1_b"],
      params["w1"], params["b1"], params["w2"], params["b2"],
      params["ln2_g"], params["ln2_b"])


# --------------------------------------------------------------------------------------
# Pure-JAX reference (mirrors the PyTorch semantics) for validation.
# --------------------------------------------------------------------------------------
def reference_forward(tokens, valid_lens, params, num_heads):
    emb = params["embedding"]
    D = emb.shape[1]
    B, S = tokens.shape
    x = jnp.take(emb, tokens, axis=0) * jnp.float32(math.sqrt(D))
    x = x + params["pos_encoding"][:S][None, :, :]

    def layer_norm(t, g, b, eps=1e-5):
        m = jnp.mean(t, axis=-1, keepdims=True)
        v = jnp.mean(jnp.square(t - m), axis=-1, keepdims=True)
        return (t - m) / jnp.sqrt(v + eps) * g + b

    Dh = D // num_heads
    L = params["wq"].shape[0]
    for l in range(L):
        q = x @ params["wq"][l]
        k = x @ params["wk"][l]
        v = x @ params["wv"][l]

        def split(t):   # transpose_qkv
            t = t.reshape(B, S, num_heads, Dh).transpose(0, 2, 1, 3)
            return t.reshape(B * num_heads, S, Dh)

        qh, kh, vh = split(q), split(k), split(v)
        scores = jnp.einsum("bqd,bkd->bqk", qh, kh) / math.sqrt(Dh)
        vl = jnp.repeat(valid_lens, num_heads)
        mask = jnp.arange(S)[None, None, :] < vl[:, None, None]
        scores = jnp.where(mask, scores, -1e6)
        attn = jax.nn.softmax(scores, axis=-1)
        o = jnp.einsum("bqk,bkd->bqd", attn, vh)
        o = o.reshape(B, num_heads, S, Dh).transpose(0, 2, 1, 3).reshape(B, S, D)
        attn_out = o @ params["wo"][l]

        y = layer_norm(x + attn_out, params["ln1_g"][l, 0], params["ln1_b"][l, 0])
        hid = jnp.maximum(y @ params["w1"][l] + params["b1"][l, 0], 0.0)
        ffn = hid @ params["w2"][l] + params["b2"][l, 0]
        x = layer_norm(y + ffn, params["ln2_g"][l, 0], params["ln2_b"][l, 0])
    return x


# --------------------------------------------------------------------------------------
# Deterministic parameter init (weights stored layer-stacked, pre-transposed (in, out)).
# --------------------------------------------------------------------------------------
def _positional_encoding(max_len, d):
    pos = jnp.arange(max_len, dtype=jnp.float32)[:, None]
    div = jnp.power(10000.0, jnp.arange(0, d, 2, dtype=jnp.float32) / d)
    angles = pos / div                                   # (max_len, d/2)
    pe = jnp.zeros((max_len, d), jnp.float32)
    pe = pe.at[:, 0::2].set(jnp.sin(angles))
    pe = pe.at[:, 1::2].set(jnp.cos(angles))
    return pe


def init_params(key, vocab_size, num_hiddens, ffn_num_hiddens, num_layers, max_len=64):
    D, F = num_hiddens, ffn_num_hiddens
    ks = iter(jax.random.split(key, 1 + 8 * num_layers))

    def lin(k, in_f, out_f):
        bound = 1.0 / math.sqrt(in_f)
        # Stored directly as (in_features, out_features): transpose done once at init.
        return jax.random.uniform(k, (in_f, out_f), jnp.float32, -bound, bound)

    emb_key = next(ks)
    wq, wk, wv, wo, w1, b1, w2, b2 = ([] for _ in range(8))
    for _ in range(num_layers):
        wq.append(lin(next(ks), D, D))
        wk.append(lin(next(ks), D, D))
        wv.append(lin(next(ks), D, D))
        wo.append(lin(next(ks), D, D))
        w1.append(lin(next(ks), D, F))
        b1.append(jax.random.uniform(next(ks), (1, F), jnp.float32, -0.1, 0.1))
        w2.append(lin(next(ks), F, D))
        b2.append(jax.random.uniform(next(ks), (1, D), jnp.float32, -0.1, 0.1))

    return {
        "embedding": jax.random.normal(emb_key, (vocab_size, D), jnp.float32) * 0.5,
        "pos_encoding": _positional_encoding(max_len, D),
        "wq": jnp.stack(wq), "wk": jnp.stack(wk),
        "wv": jnp.stack(wv), "wo": jnp.stack(wo),
        "ln1_g": jnp.ones((num_layers, 1, D), jnp.float32),
        "ln1_b": jnp.zeros((num_layers, 1, D), jnp.float32),
        "w1": jnp.stack(w1), "b1": jnp.stack(b1),
        "w2": jnp.stack(w2), "b2": jnp.stack(b2),
        "ln2_g": jnp.ones((num_layers, 1, D), jnp.float32),
        "ln2_b": jnp.zeros((num_layers, 1, D), jnp.float32),
    }


if __name__ == "__main__":
    vocab_size, num_hiddens, ffn_num_hiddens = 64, 128, 256
    num_heads, num_layers = 4, 2
    batch, seq_len = 4, 16

    root = jax.random.PRNGKey(0)
    kp, kx, kl = jax.random.split(root, 3)

    params = init_params(kp, vocab_size, num_hiddens, ffn_num_hiddens, num_layers)
    tokens = jax.random.randint(kx, (batch, seq_len), 0, vocab_size, jnp.int32)
    valid_lens = jax.random.randint(kl, (batch,), 1, seq_len + 1, jnp.int32)

    fwd = jax.jit(functools.partial(transformer_encoder_forward,
                                    num_heads=num_heads))
    out = fwd(tokens, valid_lens, params)
    jax.block_until_ready(out)

    ref = reference_forward(tokens, valid_lens, params, num_heads)
    assert out.shape == (batch, seq_len, num_hiddens)
    max_err = float(jnp.max(jnp.abs(out - ref)))
    assert max_err < 5e-3, f"max_err={max_err}"

    print("KERNEL_OK")
</pallas_src>

<mosaic_0001>
module attributes {stable_mosaic.version = 11 : i64} {
  func.func @_fused_encoder_kernel(%arg0: i32, %arg1: memref<4xi32, #tpu.memory_space<smem>>, %arg2: memref<2x16x128xf32, #tpu.memory_space<vmem>>, %arg3: memref<2x128x128xf32, #tpu.memory_space<vmem>>, %arg4: memref<2x128x128xf32, #tpu.memory_space<vmem>>, %arg5: memref<2x128x128xf32, #tpu.memory_space<vmem>>, %arg6: memref<2x128x128xf32, #tpu.memory_space<vmem>>, %arg7: memref<2x1x128xf32, #tpu.memory_space<vmem>>, %arg8: memref<2x1x128xf32, #tpu.memory_space<vmem>>, %arg9: memref<2x128x256xf32, #tpu.memory_space<vmem>>, %arg10: memref<2x1x256xf32, #tpu.memory_space<vmem>>, %arg11: memref<2x256x128xf32, #tpu.memory_space<vmem>>, %arg12: memref<2x1x128xf32, #tpu.memory_space<vmem>>, %arg13: memref<2x1x128xf32, #tpu.memory_space<vmem>>, %arg14: memref<2x1x128xf32, #tpu.memory_space<vmem>>, %arg15: memref<2x16x128xf32, #tpu.memory_space<vmem>>) attributes {dimension_semantics = [#tpu.dimension_semantics<parallel>], iteration_bounds = array<i64: 2>, scalar_prefetch = 1 : i64, scratch_operands = 0 : i64, tpu.core_type = #tpu.core_type<tc>, window_params = [{transform_indices = @transform_0, window_bounds = array<i64: 2, 16, 128>}, {pipeline_mode = #tpu.pipeline_mode<synchronous>, transform_indices = @transform_1, window_bounds = array<i64: 2, 128, 128>}, {pipeline_mode = #tpu.pipeline_mode<synchronous>, transform_indices = @transform_2, window_bounds = array<i64: 2, 128, 128>}, {pipeline_mode = #tpu.pipeline_mode<synchronous>, transform_indices = @transform_3, window_bounds = array<i64: 2, 128, 128>}, {pipeline_mode = #tpu.pipeline_mode<synchronous>, transform_indices = @transform_4, window_bounds = array<i64: 2, 128, 128>}, {pipeline_mode = #tpu.pipeline_mode<synchronous>, transform_indices = @transform_5, window_bounds = array<i64: 2, 1, 128>}, {pipeline_mode = #tpu.pipeline_mode<synchronous>, transform_indices = @transform_6, window_bounds = array<i64: 2, 1, 128>}, {pipeline_mode = #tpu.pipeline_mode<synchronous>, transform_indices = @transform_7, window_bounds = array<i64: 2, 128, 256>}, {pipeline_mode = #tpu.pipeline_mode<synchronous>, transform_indices = @transform_8, window_bounds = array<i64: 2, 1, 256>}, {pipeline_mode = #tpu.pipeline_mode<synchronous>, transform_indices = @transform_9, window_bounds = array<i64: 2, 256, 128>}, {pipeline_mode = #tpu.pipeline_mode<synchronous>, transform_indices = @transform_10, window_bounds = array<i64: 2, 1, 128>}, {pipeline_mode = #tpu.pipeline_mode<synchronous>, transform_indices = @transform_11, window_bounds = array<i64: 2, 1, 128>}, {pipeline_mode = #tpu.pipeline_mode<synchronous>, transform_indices = @transform_12, window_bounds = array<i64: 2, 1, 128>}, {transform_indices = @transform_13, window_bounds = array<i64: 2, 16, 128>}]} {
    %c0 = arith.constant 0 : index
    %c0_0 = arith.constant 0 : index
    %c0_1 = arith.constant 0 : index
    %0 = vector.load %arg2[%c0, %c0_0, %c0_1] : memref<2x16x128xf32, #tpu.memory_space<vmem>>, vector<2x16x128xf32>
    %1 = vector.shape_cast %0 : vector<2x16x128xf32> to vector<32x128xf32>
    %2 = tpu.iota {dimensions = array<i32: 1>} : vector<16x16xi32>
    %c0_2 = arith.constant 0 : index
    %c0_3 = arith.constant 0 : index
    %c0_4 = arith.constant 0 : index
    %3 = vector.load %arg3[%c0_2, %c0_3, %c0_4] : memref<2x128x128xf32, #tpu.memory_space<vmem>>, vector<1x128x128xf32>
    %4 = vector.shape_cast %3 : vector<1x128x128xf32> to vector<128x128xf32>
    %c0_5 = arith.constant 0 : index
    %c0_6 = arith.constant 0 : index
    %c0_7 = arith.constant 0 : index
    %5 = vector.load %arg4[%c0_5, %c0_6, %c0_7] : memref<2x128x128xf32, #tpu.memory_space<vmem>>, vector<1x128x128xf32>
    %6 = vector.shape_cast %5 : vector<1x128x128xf32> to vector<128x128xf32>
    %c0_8 = arith.constant 0 : index
    %c0_9 = arith.constant 0 : index
    %c0_10 = arith.constant 0 : index
    %7 = vector.load %arg5[%c0_8, %c0_9, %c0_10] : memref<2x128x128xf32, #tpu.memory_space<vmem>>, vector<1x128x128xf32>
    %8 = vector.shape_cast %7 : vector<1x128x128xf32> to vector<128x128xf32>
    %c0_11 = arith.constant 0 : index
    %c0_12 = arith.constant 0 : index
    %c0_13 = arith.constant 0 : index
    %9 = vector.load %arg6[%c0_11, %c0_12, %c0_13] : memref<2x128x128xf32, #tpu.memory_space<vmem>>, vector<1x128x128xf32>
    %10 = vector.shape_cast %9 : vector<1x128x128xf32> to vector<128x128xf32>
    %cst = arith.constant dense<0.000000e+00> : vector<32x128xf32>
    %11 = tpu.matmul %1, %4, %cst {dimension_numbers = #tpu.dot_dimension_numbers<[1], [0], [0], [1], [0, 0, 1, 1], [], []>} : vector<32x128xf32>, vector<128x128xf32>, vector<32x128xf32> -> vector<32x128xf32>
    %cst_14 = arith.constant dense<0.000000e+00> : vector<32x128xf32>
    %12 = tpu.matmul %1, %6, %cst_14 {dimension_numbers = #tpu.dot_dimension_numbers<[1], [0], [0], [1], [0, 0, 1, 1], [], []>} : vector<32x128xf32>, vector<128x128xf32>, vector<32x128xf32> -> vector<32x128xf32>
    %cst_15 = arith.constant dense<0.000000e+00> : vector<32x128xf32>
    %13 = tpu.matmul %1, %8, %cst_15 {dimension_numbers = #tpu.dot_dimension_numbers<[1], [0], [0], [1], [0, 0, 1, 1], [], []>} : vector<32x128xf32>, vector<128x128xf32>, vector<32x128xf32> -> vector<32x128xf32>
    %c2_i32 = arith.constant 2 : i32
    %14 = arith.muli %arg0, %c2_i32 : i32
    %c0_i32 = arith.constant 0 : i32
    %15 = arith.addi %14, %c0_i32 : i32
    %16 = arith.index_cast %15 : i32 to index
    %17 = memref.load %arg1[%16] : memref<4xi32, #tpu.memory_space<smem>>
    %18 = vector.broadcast %17 : i32 to vector<16x16xi32>
    %19 = arith.cmpi slt, %2, %18 : vector<16x16xi32>
    %cst_16 = arith.constant 0.000000e+00 : f32
    %20 = vector.broadcast %cst_16 : f32 to vector<16x128xf32>
    %21 = vector.extract_strided_slice %11 {offsets = [0, 0], sizes = [16, 32], strides = [1, 1]} : vector<32x128xf32> to vector<16x32xf32>
    %22 = vector.extract_strided_slice %12 {offsets = [0, 0], sizes = [16, 32], strides = [1, 1]} : vector<32x128xf32> to vector<16x32xf32>
    %23 = vector.extract_strided_slice %13 {offsets = [0, 0], sizes = [16, 32], strides = [1, 1]} : vector<32x128xf32> to vector<16x32xf32>
    %cst_17 = arith.constant dense<0.000000e+00> : vector<16x16xf32>
    %24 = tpu.matmul %21, %22, %cst_17 {dimension_numbers = #tpu.dot_dimension_numbers<[1], [1], [0], [0], [0, 0, 1, 0], [], []>} : vector<16x32xf32>, vector<16x32xf32>, vector<16x16xf32> -> vector<16x16xf32>
    %cst_18 = arith.constant 0.176776692 : f32
    %25 = vector.broadcast %cst_18 : f32 to vector<16x16xf32>
    %26 = arith.mulf %24, %25 : vector<16x16xf32>
    %cst_19 = arith.constant -1.000000e+06 : f32
    %27 = vector.broadcast %cst_19 : f32 to vector<16x16xf32>
    %28 = arith.select %19, %26, %27 : vector<16x16xi1>, vector<16x16xf32>
    %cst_20 = arith.constant dense<0xFF800000> : vector<16xf32>
    %29 = vector.multi_reduction <maximumf>, %28, %cst_20 [1] : vector<16x16xf32> to vector<16xf32>
    %30 = vector.shape_cast %29 : vector<16xf32> to vector<16x1xf32>
    %31 = vector.broadcast %30 : vector<16x1xf32> to vector<16x16xf32>
    %32 = arith.subf %28, %31 : vector<16x16xf32>
    %33 = math.exp %32 : vector<16x16xf32>
    %cst_21 = arith.constant dense<0.000000e+00> : vector<16xf32>
    %34 = vector.multi_reduction <add>, %33, %cst_21 [1] : vector<16x16xf32> to vector<16xf32>
    %35 = vector.shape_cast %34 : vector<16xf32> to vector<16x1xf32>
    %36 = tpu.reciprocal %35 {approx = true} : vector<16x1xf32> -> vector<16x1xf32>
    %37 = vector.broadcast %36 : vector<16x1xf32> to vector<16x16xf32>
    %38 = arith.mulf %33, %37 : vector<16x16xf32>
    %cst_22 = arith.constant dense<0.000000e+00> : vector<16x32xf32>
    %39 = tpu.matmul %38, %23, %cst_22 {dimension_numbers = #tpu.dot_dimension_numbers<[1], [0], [0], [1], [0, 0, 1, 1], [], []>} : vector<16x16xf32>, vector<16x32xf32>, vector<16x32xf32> -> vector<16x32xf32>
    %40 = vector.extract_strided_slice %10 {offsets = [0, 0], sizes = [32, 128], strides = [1, 1]} : vector<128x128xf32> to vector<32x128xf32>
    %cst_23 = arith.constant dense<0.000000e+00> : vector<16x128xf32>
    %41 = tpu.matmul %39, %40, %cst_23 {dimension_numbers = #tpu.dot_dimension_numbers<[1], [0], [0], [1], [0, 0, 1, 1], [], []>} : vector<16x32xf32>, vector<32x128xf32>, vector<16x128xf32> -> vector<16x128xf32>
    %42 = arith.addf %20, %41 : vector<16x128xf32>
    %43 = vector.extract_strided_slice %11 {offsets = [0, 32], sizes = [16, 32], strides = [1, 1]} : vector<32x128xf32> to vector<16x32xf32>
    %44 = vector.extract_strided_slice %12 {offsets = [0, 32], sizes = [16, 32], strides = [1, 1]} : vector<32x128xf32> to vector<16x32xf32>
    %45 = vector.extract_strided_slice %13 {offsets = [0, 32], sizes = [16, 32], strides = [1, 1]} : vector<32x128xf32> to vector<16x32xf32>
    %cst_24 = arith.constant dense<0.000000e+00> : vector<16x16xf32>
    %46 = tpu.matmul %43, %44, %cst_24 {dimension_numbers = #tpu.dot_dimension_numbers<[1], [1], [0], [0], [0, 0, 1, 0], [], []>} : vector<16x32xf32>, vector<16x32xf32>, vector<16x16xf32> -> vector<16x16xf32>
    %cst_25 = arith.constant 0.176776692 : f32
    %47 = vector.broadcast %cst_25 : f32 to vector<16x16xf32>
    %48 = arith.mulf %46, %47 : vector<16x16xf32>
    %cst_26 = arith.constant -1.000000e+06 : f32
    %49 = vector.broadcast %cst_26 : f32 to vector<16x16xf32>
    %50 = arith.select %19, %48, %49 : vector<16x16xi1>, vector<16x16xf32>
    %cst_27 = arith.constant dense<0xFF800000> : vector<16xf32>
    %51 = vector.multi_reduction <maximumf>, %50, %cst_27 [1] : vector<16x16xf32> to vector<16xf32>
    %52 = vector.shape_cast %51 : vector<16xf32> to vector<16x1xf32>
    %53 = vector.broadcast %52 : vector<16x1xf32> to vector<16x16xf32>
    %54 = arith.subf %50, %53 : vector<16x16xf32>
    %55 = math.exp %54 : vector<16x16xf32>
    %cst_28 = arith.constant dense<0.000000e+00> : vector<16xf32>
    %56 = vector.multi_reduction <add>, %55, %cst_28 [1] : vector<16x16xf32> to vector<16xf32>
    %57 = vector.shape_cast %56 : vector<16xf32> to vector<16x1xf32>
    %58 = tpu.reciprocal %57 {approx = true} : vector<16x1xf32> -> vector<16x1xf32>
    %59 = vector.broadcast %58 : vector<16x1xf32> to vector<16x16xf32>
    %60 = arith.mulf %55, %59 : vector<16x16xf32>
    %cst_29 = arith.constant dense<0.000000e+00> : vector<16x32xf32>
    %61 = tpu.matmul %60, %45, %cst_29 {dimension_numbers = #tpu.dot_dimension_numbers<[1], [0], [0], [1], [0, 0, 1, 1], [], []>} : vector<16x16xf32>, vector<16x32xf32>, vector<16x32xf32> -> vector<16x32xf32>
    %62 = vector.extract_strided_slice %10 {offsets = [32, 0], sizes = [32, 128], strides = [1, 1]} : vector<128x128xf32> to vector<32x128xf32>
    %cst_30 = arith.constant dense<0.000000e+00> : vector<16x128xf32>
    %63 = tpu.matmul %61, %62, %cst_30 {dimension_numbers = #tpu.dot_dimension_numbers<[1], [0], [0], [1], [0, 0, 1, 1], [], []>} : vector<16x32xf32>, vector<32x128xf32>, vector<16x128xf32> -> vector<16x128xf32>
    %64 = arith.addf %42, %63 : vector<16x128xf32>
    %65 = vector.extract_strided_slice %11 {offsets = [0, 64], sizes = [16, 32], strides = [1, 1]} : vector<32x128xf32> to vector<16x32xf32>
    %66 = vector.extract_strided_slice %12 {offsets = [0, 64], sizes = [16, 32], strides = [1, 1]} : vector<32x128xf32> to vector<16x32xf32>
    %67 = vector.extract_strided_slice %13 {offsets = [0, 64], sizes = [16, 32], strides = [1, 1]} : vector<32x128xf32> to vector<16x32xf32>
    %cst_31 = arith.constant dense<0.000000e+00> : vector<16x16xf32>
    %68 = tpu.matmul %65, %66, %cst_31 {dimension_numbers = #tpu.dot_dimension_numbers<[1], [1], [0], [0], [0, 0, 1, 0], [], []>} : vector<16x32xf32>, vector<16x32xf32>, vector<16x16xf32> -> vector<16x16xf32>
    %cst_32 = arith.constant 0.176776692 : f32
    %69 = vector.broadcast %cst_32 : f32 to vector<16x16xf32>
    %70 = arith.mulf %68, %69 : vector<16x16xf32>
    %cst_33 = arith.constant -1.000000e+06 : f32
    %71 = vector.broadcast %cst_33 : f32 to vector<16x16xf32>
    %72 = arith.select %19, %70, %71 : vector<16x16xi1>, vector<16x16xf32>
    %cst_34 = arith.constant dense<0xFF800000> : vector<16xf32>
    %73 = vector.multi_reduction <maximumf>, %72, %cst_34 [1] : vector<16x16xf32> to vector<16xf32>
    %74 = vector.shape_cast %73 : vector<16xf32> to vector<16x1xf32>
    %75 = vector.broadcast %74 : vector<16x1xf32> to vector<16x16xf32>
    %76 = arith.subf %72, %75 : vector<16x16xf32>
    %77 = math.exp %76 : vector<16x16xf32>
    %cst_35 = arith.constant dense<0.000000e+00> : vector<16xf32>
    %78 = vector.multi_reduction <add>, %77, %cst_35 [1] : vector<16x16xf32> to vector<16xf32>
    %79 = vector.shape_cast %78 : vector<16xf32> to vector<16x1xf32>
    %80 = tpu.reciprocal %79 {approx = true} : vector<16x1xf32> -> vector<16x1xf32>
    %81 = vector.broadcast %80 : vector<16x1xf32> to vector<16x16xf32>
    %82 = arith.mulf %77, %81 : vector<16x16xf32>
    %cst_36 = arith.constant dense<0.000000e+00> : vector<16x32xf32>
    %83 = tpu.matmul %82, %67, %cst_36 {dimension_numbers = #tpu.dot_dimension_numbers<[1], [0], [0], [1], [0, 0, 1, 1], [], []>} : vector<16x16xf32>, vector<16x32xf32>, vector<16x32xf32> -> vector<16x32xf32>
    %84 = vector.extract_strided_slice %10 {offsets = [64, 0], sizes = [32, 128], strides = [1, 1]} : vector<128x128xf32> to vector<32x128xf32>
    %cst_37 = arith.constant dense<0.000000e+00> : vector<16x128xf32>
    %85 = tpu.matmul %83, %84, %cst_37 {dimension_numbers = #tpu.dot_dimension_numbers<[1], [0], [0], [1], [0, 0, 1, 1], [], []>} : vector<16x32xf32>, vector<32x128xf32>, vector<16x128xf32> -> vector<16x128xf32>
    %86 = arith.addf %64, %85 : vector<16x128xf32>
    %87 = vector.extract_strided_slice %11 {offsets = [0, 96], sizes = [16, 32], strides = [1, 1]} : vector<32x128xf32> to vector<16x32xf32>
    %88 = vector.extract_strided_slice %12 {offsets = [0, 96], sizes = [16, 32], strides = [1, 1]} : vector<32x128xf32> to vector<16x32xf32>
    %89 = vector.extract_strided_slice %13 {offsets = [0, 96], sizes = [16, 32], strides = [1, 1]} : vector<32x128xf32> to vector<16x32xf32>
    %cst_38 = arith.constant dense<0.000000e+00> : vector<16x16xf32>
    %90 = tpu.matmul %87, %88, %cst_38 {dimension_numbers = #tpu.dot_dimension_numbers<[1], [1], [0], [0], [0, 0, 1, 0], [], []>} : vector<16x32xf32>, vector<16x32xf32>, vector<16x16xf32> -> vector<16x16xf32>
    %cst_39 = arith.constant 0.176776692 : f32
    %91 = vector.broadcast %cst_39 : f32 to vector<16x16xf32>
    %92 = arith.mulf %90, %91 : vector<16x16xf32>
    %cst_40 = arith.constant -1.000000e+06 : f32
    %93 = vector.broadcast %cst_40 : f32 to vector<16x16xf32>
    %94 = arith.select %19, %92, %93 : vector<16x16xi1>, vector<16x16xf32>
    %cst_41 = arith.constant dense<0xFF800000> : vector<16xf32>
    %95 = vector.multi_reduction <maximumf>, %94, %cst_41 [1] : vector<16x16xf32> to vector<16xf32>
    %96 = vector.shape_cast %95 : vector<16xf32> to vector<16x1xf32>
    %97 = vector.broadcast %96 : vector<16x1xf32> to vector<16x16xf32>
    %98 = arith.subf %94, %97 : vector<16x16xf32>
    %99 = math.exp %98 : vector<16x16xf32>
    %cst_42 = arith.constant dense<0.000000e+00> : vector<16xf32>
    %100 = vector.multi_reduction <add>, %99, %cst_42 [1] : vector<16x16xf32> to vector<16xf32>
    %101 = vector.shape_cast %100 : vector<16xf32> to vector<16x1xf32>
    %102 = tpu.reciprocal %101 {approx = true} : vector<16x1xf32> -> vector<16x1xf32>
    %103 = vector.broadcast %102 : vector<16x1xf32> to vector<16x16xf32>
    %104 = arith.mulf %99, %103 : vector<16x16xf32>
    %cst_43 = arith.constant dense<0.000000e+00> : vector<16x32xf32>
    %105 = tpu.matmul %104, %89, %cst_43 {dimension_numbers = #tpu.dot_dimension_numbers<[1], [0], [0], [1], [0, 0, 1, 1], [], []>} : vector<16x16xf32>, vector<16x32xf32>, vector<16x32xf32> -> vector<16x32xf32>
    %106 = vector.extract_strided_slice %10 {offsets = [96, 0], sizes = [32, 128], strides = [1, 1]} : vector<128x128xf32> to vector<32x128xf32>
    %cst_44 = arith.constant dense<0.000000e+00> : vector<16x128xf32>
    %107 = tpu.matmul %105, %106, %cst_44 {dimension_numbers = #tpu.dot_dimension_numbers<[1], [0], [0], [1], [0, 0, 1, 1], [], []>} : vector<16x32xf32>, vector<32x128xf32>, vector<16x128xf32> -> vector<16x128xf32>
    %108 = arith.addf %86, %107 : vector<16x128xf32>
    %c2_i32_45 = arith.constant 2 : i32
    %109 = arith.muli %arg0, %c2_i32_45 : i32
    %c1_i32 = arith.constant 1 : i32
    %110 = arith.addi %109, %c1_i32 : i32
    %111 = arith.index_cast %110 : i32 to index
    %112 = memref.load %arg1[%111] : memref<4xi32, #tpu.memory_space<smem>>
    %113 = vector.broadcast %112 : i32 to vector<16x16xi32>
    %114 = arith.cmpi slt, %2, %113 : vector<16x16xi32>
    %cst_46 = arith.constant 0.000000e+00 : f32
    %115 = vector.broadcast %cst_46 : f32 to vector<16x128xf32>
    %116 = vector.extract_strided_slice %11 {offsets = [16, 0], sizes = [16, 32], strides = [1, 1]} : vector<32x128xf32> to vector<16x32xf32>
    %117 = vector.extract_strided_slice %12 {offsets = [16, 0], sizes = [16, 32], strides = [1, 1]} : vector<32x128xf32> to vector<16x32xf32>
    %118 = vector.extract_strided_slice %13 {offsets = [16, 0], sizes = [16, 32], strides = [1, 1]} : vector<32x128xf32> to vector<16x32xf32>
    %cst_47 = arith.constant dense<0.000000e+00> : vector<16x16xf32>
    %119 = tpu.matmul %116, %117, %cst_47 {dimension_numbers = #tpu.dot_dimension_numbers<[1], [1], [0], [0], [0, 0, 1, 0], [], []>} : vector<16x32xf32>, vector<16x32xf32>, vector<16x16xf32> -> vector<16x16xf32>
    %cst_48 = arith.constant 0.176776692 : f32
    %120 = vector.broadcast %cst_48 : f32 to vector<16x16xf32>
    %121 = arith.mulf %119, %120 : vector<16x16xf32>
    %cst_49 = arith.constant -1.000000e+06 : f32
    %122 = vector.broadcast %cst_49 : f32 to vector<16x16xf32>
    %123 = arith.select %114, %121, %122 : vector<16x16xi1>, vector<16x16xf32>
    %cst_50 = arith.constant dense<0xFF800000> : vector<16xf32>
    %124 = vector.multi_reduction <maximumf>, %123, %cst_50 [1] : vector<16x16xf32> to vector<16xf32>
    %125 = vector.shape_cast %124 : vector<16xf32> to vector<16x1xf32>
    %126 = vector.broadcast %125 : vector<16x1xf32> to vector<16x16xf32>
    %127 = arith.subf %123, %126 : vector<16x16xf32>
    %128 = math.exp %127 : vector<16x16xf32>
    %cst_51 = arith.constant dense<0.000000e+00> : vector<16xf32>
    %129 = vector.multi_reduction <add>, %128, %cst_51 [1] : vector<16x16xf32> to vector<16xf32>
    %130 = vector.shape_cast %129 : vector<16xf32> to vector<16x1xf32>
    %131 = tpu.reciprocal %130 {approx = true} : vector<16x1xf32> -> vector<16x1xf32>
    %132 = vector.broadcast %131 : vector<16x1xf32> to vector<16x16xf32>
    %133 = arith.mulf %128, %132 : vector<16x16xf32>
    %cst_52 = arith.constant dense<0.000000e+00> : vector<16x32xf32>
    %134 = tpu.matmul %133, %118, %cst_52 {dimension_numbers = #tpu.dot_dimension_numbers<[1], [0], [0], [1], [0, 0, 1, 1], [], []>} : vector<16x16xf32>, vector<16x32xf32>, vector<16x32xf32> -> vector<16x32xf32>
    %135 = vector.extract_strided_slice %10 {offsets = [0, 0], sizes = [32, 128], strides = [1, 1]} : vector<128x128xf32> to vector<32x128xf32>
    %cst_53 = arith.constant dense<0.000000e+00> : vector<16x128xf32>
    %136 = tpu.matmul %134, %135, %cst_53 {dimension_numbers = #tpu.dot_dimension_numbers<[1], [0], [0], [1], [0, 0, 1, 1], [], []>} : vector<16x32xf32>, vector<32x128xf32>, vector<16x128xf32> -> vector<16x128xf32>
    %137 = arith.addf %115, %136 : vector<16x128xf32>
    %138 = vector.extract_strided_slice %11 {offsets = [16, 32], sizes = [16, 32], strides = [1, 1]} : vector<32x128xf32> to vector<16x32xf32>
    %139 = vector.extract_strided_slice %12 {offsets = [16, 32], sizes = [16, 32], strides = [1, 1]} : vector<32x128xf32> to vector<16x32xf32>
    %140 = vector.extract_strided_slice %13 {offsets = [16, 32], sizes = [16, 32], strides = [1, 1]} : vector<32x128xf32> to vector<16x32xf32>
    %cst_54 = arith.constant dense<0.000000e+00> : vector<16x16xf32>
    %141 = tpu.matmul %138, %139, %cst_54 {dimension_numbers = #tpu.dot_dimension_numbers<[1], [1], [0], [0], [0, 0, 1, 0], [], []>} : vector<16x32xf32>, vector<16x32xf32>, vector<16x16xf32> -> vector<16x16xf32>
    %cst_55 = arith.constant 0.176776692 : f32
    %142 = vector.broadcast %cst_55 : f32 to vector<16x16xf32>
    %143 = arith.mulf %141, %142 : vector<16x16xf32>
    %cst_56 = arith.constant -1.000000e+06 : f32
    %144 = vector.broadcast %cst_56 : f32 to vector<16x16xf32>
    %145 = arith.select %114, %143, %144 : vector<16x16xi1>, vector<16x16xf32>
    %cst_57 = arith.constant dense<0xFF800000> : vector<16xf32>
    %146 = vector.multi_reduction <maximumf>, %145, %cst_57 [1] : vector<16x16xf32> to vector<16xf32>
    %147 = vector.shape_cast %146 : vector<16xf32> to vector<16x1xf32>
    %148 = vector.broadcast %147 : vector<16x1xf32> to vector<16x16xf32>
    %149 = arith.subf %145, %148 : vector<16x16xf32>
    %150 = math.exp %149 : vector<16x16xf32>
    %cst_58 = arith.constant dense<0.000000e+00> : vector<16xf32>
    %151 = vector.multi_reduction <add>, %150, %cst_58 [1] : vector<16x16xf32> to vector<16xf32>
    %152 = vector.shape_cast %151 : vector<16xf32> to vector<16x1xf32>
    %153 = tpu.reciprocal %152 {approx = true} : vector<16x1xf32> -> vector<16x1xf32>
    %154 = vector.broadcast %153 : vector<16x1xf32> to vector<16x16xf32>
    %155 = arith.mulf %150, %154 : vector<16x16xf32>
    %cst_59 = arith.constant dense<0.000000e+00> : vector<16x32xf32>
    %156 = tpu.matmul %155, %140, %cst_59 {dimension_numbers = #tpu.dot_dimension_numbers<[1], [0], [0], [1], [0, 0, 1, 1], [], []>} : vector<16x16xf32>, vector<16x32xf32>, vector<16x32xf32> -> vector<16x32xf32>
    %157 = vector.extract_strided_slice %10 {offsets = [32, 0], sizes = [32, 128], strides = [1, 1]} : vector<128x128xf32> to vector<32x128xf32>
    %cst_60 = arith.constant dense<0.000000e+00> : vector<16x128xf32>
    %158 = tpu.matmul %156, %157, %cst_60 {dimension_numbers = #tpu.dot_dimension_numbers<[1], [0], [0], [1], [0, 0, 1, 1], [], []>} : vector<16x32xf32>, vector<32x128xf32>, vector<16x128xf32> -> vector<16x128xf32>
    %159 = arith.addf %137, %158 : vector<16x128xf32>
    %160 = vector.extract_strided_slice %11 {offsets = [16, 64], sizes = [16, 32], strides = [1, 1]} : vector<32x128xf32> to vector<16x32xf32>
    %161 = vector.extract_strided_slice %12 {offsets = [16, 64], sizes = [16, 32], strides = [1, 1]} : vector<32x128xf32> to vector<16x32xf32>
    %162 = vector.extract_strided_slice %13 {offsets = [16, 64], sizes = [16, 32], strides = [1, 1]} : vector<32x128xf32> to vector<16x32xf32>
    %cst_61 = arith.constant dense<0.000000e+00> : vector<16x16xf32>
    %163 = tpu.matmul %160, %161, %cst_61 {dimension_numbers = #tpu.dot_dimension_numbers<[1], [1], [0], [0], [0, 0, 1, 0], [], []>} : vector<16x32xf32>, vector<16x32xf32>, vector<16x16xf32> -> vector<16x16xf32>
    %cst_62 = arith.constant 0.176776692 : f32
    %164 = vector.broadcast %cst_62 : f32 to vector<16x16xf32>
    %165 = arith.mulf %163, %164 : vector<16x16xf32>
    %cst_63 = arith.constant -1.000000e+06 : f32
    %166 = vector.broadcast %cst_63 : f32 to vector<16x16xf32>
    %167 = arith.select %114, %165, %166 : vector<16x16xi1>, vector<16x16xf32>
    %cst_64 = arith.constant dense<0xFF800000> : vector<16xf32>
    %168 = vector.multi_reduction <maximumf>, %167, %cst_64 [1] : vector<16x16xf32> to vector<16xf32>
    %169 = vector.shape_cast %168 : vector<16xf32> to vector<16x1xf32>
    %170 = vector.broadcast %169 : vector<16x1xf32> to vector<16x16xf32>
    %171 = arith.subf %167, %170 : vector<16x16xf32>
    %172 = math.exp %171 : vector<16x16xf32>
    %cst_65 = arith.constant dense<0.000000e+00> : vector<16xf32>
    %173 = vector.multi_reduction <add>, %172, %cst_65 [1] : vector<16x16xf32> to vector<16xf32>
    %174 = vector.shape_cast %173 : vector<16xf32> to vector<16x1xf32>
    %175 = tpu.reciprocal %174 {approx = true} : vector<16x1xf32> -> vector<16x1xf32>
    %176 = vector.broadcast %175 : vector<16x1xf32> to vector<16x16xf32>
    %177 = arith.mulf %172, %176 : vector<16x16xf32>
    %cst_66 = arith.constant dense<0.000000e+00> : vector<16x32xf32>
    %178 = tpu.matmul %177, %162, %cst_66 {dimension_numbers = #tpu.dot_dimension_numbers<[1], [0], [0], [1], [0, 0, 1, 1], [], []>} : vector<16x16xf32>, vector<16x32xf32>, vector<16x32xf32> -> vector<16x32xf32>
    %179 = vector.extract_strided_slice %10 {offsets = [64, 0], sizes = [32, 128], strides = [1, 1]} : vector<128x128xf32> to vector<32x128xf32>
    %cst_67 = arith.constant dense<0.000000e+00> : vector<16x128xf32>
    %180 = tpu.matmul %178, %179, %cst_67 {dimension_numbers = #tpu.dot_dimension_numbers<[1], [0], [0], [1], [0, 0, 1, 1], [], []>} : vector<16x32xf32>, vector<32x128xf32>, vector<16x128xf32> -> vector<16x128xf32>
    %181 = arith.addf %159, %180 : vector<16x128xf32>
    %182 = vector.extract_strided_slice %11 {offsets = [16, 96], sizes = [16, 32], strides = [1, 1]} : vector<32x128xf32> to vector<16x32xf32>
    %183 = vector.extract_strided_slice %12 {offsets = [16, 96], sizes = [16, 32], strides = [1, 1]} : vector<32x128xf32> to vector<16x32xf32>
    %184 = vector.extract_strided_slice %13 {offsets = [16, 96], sizes = [16, 32], strides = [1, 1]} : vector<32x128xf32> to vector<16x32xf32>
    %cst_68 = arith.constant dense<0.000000e+00> : vector<16x16xf32>
    %185 = tpu.matmul %182, %183, %cst_68 {dimension_numbers = #tpu.dot_dimension_numbers<[1], [1], [0], [0], [0, 0, 1, 0], [], []>} : vector<16x32xf32>, vector<16x32xf32>, vector<16x16xf32> -> vector<16x16xf32>
    %cst_69 = arith.constant 0.176776692 : f32
    %186 = vector.broadcast %cst_69 : f32 to vector<16x16xf32>
    %187 = arith.mulf %185, %186 : vector<16x16xf32>
    %cst_70 = arith.constant -1.000000e+06 : f32
    %188 = vector.broadcast %cst_70 : f32 to vector<16x16xf32>
    %189 = arith.select %114, %187, %188 : vector<16x16xi1>, vector<16x16xf32>
    %cst_71 = arith.constant dense<0xFF800000> : vector<16xf32>
    %190 = vector.multi_reduction <maximumf>, %189, %cst_71 [1] : vector<16x16xf32> to vector<16xf32>
    %191 = vector.shape_cast %190 : vector<16xf32> to vector<16x1xf32>
    %192 = vector.broadcast %191 : vector<16x1xf32> to vector<16x16xf32>
    %193 = arith.subf %189, %192 : vector<16x16xf32>
    %194 = math.exp %193 : vector<16x16xf32>
    %cst_72 = arith.constant dense<0.000000e+00> : vector<16xf32>
    %195 = vector.multi_reduction <add>, %194, %cst_72 [1] : vector<16x16xf32> to vector<16xf32>
    %196 = vector.shape_cast %195 : vector<16xf32> to vector<16x1xf32>
    %197 = tpu.reciprocal %196 {approx = true} : vector<16x1xf32> -> vector<16x1xf32>
    %198 = vector.broadcast %197 : vector<16x1xf32> to vector<16x16xf32>
    %199 = arith.mulf %194, %198 : vector<16x16xf32>
    %cst_73 = arith.constant dense<0.000000e+00> : vector<16x32xf32>
    %200 = tpu.matmul %199, %184, %cst_73 {dimension_numbers = #tpu.dot_dimension_numbers<[1], [0], [0], [1], [0, 0, 1, 1], [], []>} : vector<16x16xf32>, vector<16x32xf32>, vector<16x32xf32> -> vector<16x32xf32>
    %201 = vector.extract_strided_slice %10 {offsets = [96, 0], sizes = [32, 128], strides = [1, 1]} : vector<128x128xf32> to vector<32x128xf32>
    %cst_74 = arith.constant dense<0.000000e+00> : vector<16x128xf32>
    %202 = tpu.matmul %200, %201, %cst_74 {dimension_numbers = #tpu.dot_dimension_numbers<[1], [0], [0], [1], [0, 0, 1, 1], [], []>} : vector<16x32xf32>, vector<32x128xf32>, vector<16x128xf32> -> vector<16x128xf32>
    %203 = arith.addf %181, %202 : vector<16x128xf32>
    %204 = tpu.concatenate %108, %203 in 0 : vector<16x128xf32>, vector<16x128xf32> -> vector<32x128xf32>
    %205 = arith.addf %1, %204 : vector<32x128xf32>
    %c0_75 = arith.constant 0 : index
    %c0_76 = arith.constant 0 : index
    %c0_77 = arith.constant 0 : index
    %206 = vector.load %arg7[%c0_75, %c0_76, %c0_77] : memref<2x1x128xf32, #tpu.memory_space<vmem>>, vector<1x1x128xf32>
    %207 = vector.shape_cast %206 : vector<1x1x128xf32> to vector<1x128xf32>
    %c0_78 = arith.constant 0 : index
    %c0_79 = arith.constant 0 : index
    %c0_80 = arith.constant 0 : index
    %208 = vector.load %arg8[%c0_78, %c0_79, %c0_80] : memref<2x1x128xf32, #tpu.memory_space<vmem>>, vector<1x1x128xf32>
    %209 = vector.shape_cast %208 : vector<1x1x128xf32> to vector<1x128xf32>
    %cst_81 = arith.constant dense<0.000000e+00> : vector<32xf32>
    %210 = vector.multi_reduction <add>, %205, %cst_81 [1] : vector<32x128xf32> to vector<32xf32>
    %211 = vector.shape_cast %210 : vector<32xf32> to vector<32x1xf32>
    %cst_82 = arith.constant 1.280000e+02 : f32
    %212 = vector.broadcast %cst_82 : f32 to vector<32x1xf32>
    %213 = arith.divf %211, %212 : vector<32x1xf32>
    %214 = vector.broadcast %213 : vector<32x1xf32> to vector<32x128xf32>
    %215 = arith.subf %205, %214 : vector<32x128xf32>
    %216 = arith.mulf %215, %215 : vector<32x128xf32>
    %cst_83 = arith.constant dense<0.000000e+00> : vector<32xf32>
    %217 = vector.multi_reduction <add>, %216, %cst_83 [1] : vector<32x128xf32> to vector<32xf32>
    %218 = vector.shape_cast %217 : vector<32xf32> to vector<32x1xf32>
    %cst_84 = arith.constant 1.280000e+02 : f32
    %219 = vector.broadcast %cst_84 : f32 to vector<32x1xf32>
    %220 = arith.divf %218, %219 : vector<32x1xf32>
    %cst_85 = arith.constant 9.99999974E-6 : f32
    %221 = vector.broadcast %cst_85 : f32 to vector<32x1xf32>
    %222 = arith.addf %220, %221 : vector<32x1xf32>
    %223 = math.rsqrt %222 : vector<32x1xf32>
    %224 = vector.broadcast %223 : vector<32x1xf32> to vector<32x128xf32>
    %225 = arith.mulf %215, %224 : vector<32x128xf32>
    %226 = vector.broadcast %207 : vector<1x128xf32> to vector<32x128xf32>
    %227 = arith.mulf %225, %226 : vector<32x128xf32>
    %228 = vector.broadcast %209 : vector<1x128xf32> to vector<32x128xf32>
    %229 = arith.addf %227, %228 : vector<32x128xf32>
    %c0_86 = arith.constant 0 : index
    %c0_87 = arith.constant 0 : index
    %c0_88 = arith.constant 0 : index
    %230 = vector.load %arg9[%c0_86, %c0_87, %c0_88] : memref<2x128x256xf32, #tpu.memory_space<vmem>>, vector<1x128x256xf32>
    %231 = vector.shape_cast %230 : vector<1x128x256xf32> to vector<128x256xf32>
    %cst_89 = arith.constant dense<0.000000e+00> : vector<32x256xf32>
    %232 = tpu.matmul %229, %231, %cst_89 {dimension_numbers = #tpu.dot_dimension_numbers<[1], [0], [0], [1], [0, 0, 1, 1], [], []>} : vector<32x128xf32>, vector<128x256xf32>, vector<32x256xf32> -> vector<32x256xf32>
    %c0_90 = arith.constant 0 : index
    %c0_91 = arith.constant 0 : index
    %c0_92 = arith.constant 0 : index
    %233 = vector.load %arg10[%c0_90, %c0_91, %c0_92] : memref<2x1x256xf32, #tpu.memory_space<vmem>>, vector<1x1x256xf32>
    %234 = vector.shape_cast %233 : vector<1x1x256xf32> to vector<1x256xf32>
    %235 = vector.broadcast %234 : vector<1x256xf32> to vector<32x256xf32>
    %236 = arith.addf %232, %235 : vector<32x256xf32>
    %cst_93 = arith.constant 0.000000e+00 : f32
    %237 = vector.broadcast %cst_93 : f32 to vector<32x256xf32>
    %238 = arith.maximumf %236, %237 : vector<32x256xf32>
    %c0_94 = arith.constant 0 : index
    %c0_95 = arith.constant 0 : index
    %c0_96 = arith.constant 0 : index
    %239 = vector.load %arg11[%c0_94, %c0_95, %c0_96] : memref<2x256x128xf32, #tpu.memory_space<vmem>>, vector<1x256x128xf32>
    %240 = vector.shape_cast %239 : vector<1x256x128xf32> to vector<256x128xf32>
    %cst_97 = arith.constant dense<0.000000e+00> : vector<32x128xf32>
    %241 = tpu.matmul %238, %240, %cst_97 {dimension_numbers = #tpu.dot_dimension_numbers<[1], [0], [0], [1], [0, 0, 1, 1], [], []>} : vector<32x256xf32>, vector<256x128xf32>, vector<32x128xf32> -> vector<32x128xf32>
    %c0_98 = arith.constant 0 : index
    %c0_99 = arith.constant 0 : index
    %c0_100 = arith.constant 0 : index
    %242 = vector.load %arg12[%c0_98, %c0_99, %c0_100] : memref<2x1x128xf32, #tpu.memory_space<vmem>>, vector<1x1x128xf32>
    %243 = vector.shape_cast %242 : vector<1x1x128xf32> to vector<1x128xf32>
    %244 = vector.broadcast %243 : vector<1x128xf32> to vector<32x128xf32>
    %245 = arith.addf %241, %244 : vector<32x128xf32>
    %246 = arith.addf %229, %245 : vector<32x128xf32>
    %c0_101 = arith.constant 0 : index
    %c0_102 = arith.constant 0 : index
    %c0_103 = arith.constant 0 : index
    %247 = vector.load %arg13[%c0_101, %c0_102, %c0_103] : memref<2x1x128xf32, #tpu.memory_space<vmem>>, vector<1x1x128xf32>
    %248 = vector.shape_cast %247 : vector<1x1x128xf32> to vector<1x128xf32>
    %c0_104 = arith.constant 0 : index
    %c0_105 = arith.constant 0 : index
    %c0_106 = arith.constant 0 : index
    %249 = vector.load %arg14[%c0_104, %c0_105, %c0_106] : memref<2x1x128xf32, #tpu.memory_space<vmem>>, vector<1x1x128xf32>
    %250 = vector.shape_cast %249 : vector<1x1x128xf32> to vector<1x128xf32>
    %cst_107 = arith.constant dense<0.000000e+00> : vector<32xf32>
    %251 = vector.multi_reduction <add>, %246, %cst_107 [1] : vector<32x128xf32> to vector<32xf32>
    %252 = vector.shape_cast %251 : vector<32xf32> to vector<32x1xf32>
    %cst_108 = arith.constant 1.280000e+02 : f32
    %253 = vector.broadcast %cst_108 : f32 to vector<32x1xf32>
    %254 = arith.divf %252, %253 : vector<32x1xf32>
    %255 = vector.broadcast %254 : vector<32x1xf32> to vector<32x128xf32>
    %256 = arith.subf %246, %255 : vector<32x128xf32>
    %257 = arith.mulf %256, %256 : vector<32x128xf32>
    %cst_109 = arith.constant dense<0.000000e+00> : vector<32xf32>
    %258 = vector.multi_reduction <add>, %257, %cst_109 [1] : vector<32x128xf32> to vector<32xf32>
    %259 = vector.shape_cast %258 : vector<32xf32> to vector<32x1xf32>
    %cst_110 = arith.constant 1.280000e+02 : f32
    %260 = vector.broadcast %cst_110 : f32 to vector<32x1xf32>
    %261 = arith.divf %259, %260 : vector<32x1xf32>
    %cst_111 = arith.constant 9.99999974E-6 : f32
    %262 = vector.broadcast %cst_111 : f32 to vector<32x1xf32>
    %263 = arith.addf %261, %262 : vector<32x1xf32>
    %264 = math.rsqrt %263 : vector<32x1xf32>
    %265 = vector.broadcast %264 : vector<32x1xf32> to vector<32x128xf32>
    %266 = arith.mulf %256, %265 : vector<32x128xf32>
    %267 = vector.broadcast %248 : vector<1x128xf32> to vector<32x128xf32>
    %268 = arith.mulf %266, %267 : vector<32x128xf32>
    %269 = vector.broadcast %250 : vector<1x128xf32> to vector<32x128xf32>
    %270 = arith.addf %268, %269 : vector<32x128xf32>
    %c1 = arith.constant 1 : index
    %c0_112 = arith.constant 0 : index
    %c0_113 = arith.constant 0 : index
    %271 = vector.load %arg3[%c1, %c0_112, %c0_113] : memref<2x128x128xf32, #tpu.memory_space<vmem>>, vector<1x128x128xf32>
    %272 = vector.shape_cast %271 : vector<1x128x128xf32> to vector<128x128xf32>
    %c1_114 = arith.constant 1 : index
    %c0_115 = arith.constant 0 : index
    %c0_116 = arith.constant 0 : index
    %273 = vector.load %arg4[%c1_114, %c0_115, %c0_116] : memref<2x128x128xf32, #tpu.memory_space<vmem>>, vector<1x128x128xf32>
    %274 = vector.shape_cast %273 : vector<1x128x128xf32> to vector<128x128xf32>
    %c1_117 = arith.constant 1 : index
    %c0_118 = arith.constant 0 : index
    %c0_119 = arith.constant 0 : index
    %275 = vector.load %arg5[%c1_117, %c0_118, %c0_119] : memref<2x128x128xf32, #tpu.memory_space<vmem>>, vector<1x128x128xf32>
    %276 = vector.shape_cast %275 : vector<1x128x128xf32> to vector<128x128xf32>
    %c1_120 = arith.constant 1 : index
    %c0_121 = arith.constant 0 : index
    %c0_122 = arith.constant 0 : index
    %277 = vector.load %arg6[%c1_120, %c0_121, %c0_122] : memref<2x128x128xf32, #tpu.memory_space<vmem>>, vector<1x128x128xf32>
    %278 = vector.shape_cast %277 : vector<1x128x128xf32> to vector<128x128xf32>
    %cst_123 = arith.constant dense<0.000000e+00> : vector<32x128xf32>
    %279 = tpu.matmul %270, %272, %cst_123 {dimension_numbers = #tpu.dot_dimension_numbers<[1], [0], [0], [1], [0, 0, 1, 1], [], []>} : vector<32x128xf32>, vector<128x128xf32>, vector<32x128xf32> -> vector<32x128xf32>
    %cst_124 = arith.constant dense<0.000000e+00> : vector<32x128xf32>
    %280 = tpu.matmul %270, %274, %cst_124 {dimension_numbers = #tpu.dot_dimension_numbers<[1], [0], [0], [1], [0, 0, 1, 1], [], []>} : vector<32x128xf32>, vector<128x128xf32>, vector<32x128xf32> -> vector<32x128xf32>
    %cst_125 = arith.constant dense<0.000000e+00> : vector<32x128xf32>
    %281 = tpu.matmul %270, %276, %cst_125 {dimension_numbers = #tpu.dot_dimension_numbers<[1], [0], [0], [1], [0, 0, 1, 1], [], []>} : vector<32x128xf32>, vector<128x128xf32>, vector<32x128xf32> -> vector<32x128xf32>
    %c2_i32_126 = arith.constant 2 : i32
    %282 = arith.muli %arg0, %c2_i32_126 : i32
    %c0_i32_127 = arith.constant 0 : i32
    %283 = arith.addi %282, %c0_i32_127 : i32
    %284 = arith.index_cast %283 : i32 to index
    %285 = memref.load %arg1[%284] : memref<4xi32, #tpu.memory_space<smem>>
    %286 = vector.broadcast %285 : i32 to vector<16x16xi32>
    %287 = arith.cmpi slt, %2, %286 : vector<16x16xi32>
    %cst_128 = arith.constant 0.000000e+00 : f32
    %288 = vector.broadcast %cst_128 : f32 to vector<16x128xf32>
    %289 = vector.extract_strided_slice %279 {offsets = [0, 0], sizes = [16, 32], strides = [1, 1]} : vector<32x128xf32> to vector<16x32xf32>
    %290 = vector.extract_strided_slice %280 {offsets = [0, 0], sizes = [16, 32], strides = [1, 1]} : vector<32x128xf32> to vector<16x32xf32>
    %291 = vector.extract_strided_slice %281 {offsets = [0, 0], sizes = [16, 32], strides = [1, 1]} : vector<32x128xf32> to vector<16x32xf32>
    %cst_129 = arith.constant dense<0.000000e+00> : vector<16x16xf32>
    %292 = tpu.matmul %289, %290, %cst_129 {dimension_numbers = #tpu.dot_dimension_numbers<[1], [1], [0], [0], [0, 0, 1, 0], [], []>} : vector<16x32xf32>, vector<16x32xf32>, vector<16x16xf32> -> vector<16x16xf32>
    %cst_130 = arith.constant 0.176776692 : f32
    %293 = vector.broadcast %cst_130 : f32 to vector<16x16xf32>
    %294 = arith.mulf %292, %293 : vector<16x16xf32>
    %cst_131 = arith.constant -1.000000e+06 : f32
    %295 = vector.broadcast %cst_131 : f32 to vector<16x16xf32>
    %296 = arith.select %287, %294, %295 : vector<16x16xi1>, vector<16x16xf32>
    %cst_132 = arith.constant dense<0xFF800000> : vector<16xf32>
    %297 = vector.multi_reduction <maximumf>, %296, %cst_132 [1] : vector<16x16xf32> to vector<16xf32>
    %298 = vector.shape_cast %297 : vector<16xf32> to vector<16x1xf32>
    %299 = vector.broadcast %298 : vector<16x1xf32> to vector<16x16xf32>
    %300 = arith.subf %296, %299 : vector<16x16xf32>
    %301 = math.exp %300 : vector<16x16xf32>
    %cst_133 = arith.constant dense<0.000000e+00> : vector<16xf32>
    %302 = vector.multi_reduction <add>, %301, %cst_133 [1] : vector<16x16xf32> to vector<16xf32>
    %303 = vector.shape_cast %302 : vector<16xf32> to vector<16x1xf32>
    %304 = tpu.reciprocal %303 {approx = true} : vector<16x1xf32> -> vector<16x1xf32>
    %305 = vector.broadcast %304 : vector<16x1xf32> to vector<16x16xf32>
    %306 = arith.mulf %301, %305 : vector<16x16xf32>
    %cst_134 = arith.constant dense<0.000000e+00> : vector<16x32xf32>
    %307 = tpu.matmul %306, %291, %cst_134 {dimension_numbers = #tpu.dot_dimension_numbers<[1], [0], [0], [1], [0, 0, 1, 1], [], []>} : vector<16x16xf32>, vector<16x32xf32>, vector<16x32xf32> -> vector<16x32xf32>
    %308 = vector.extract_strided_slice %278 {offsets = [0, 0], sizes = [32, 128], strides = [1, 1]} : vector<128x128xf32> to vector<32x128xf32>
    %cst_135 = arith.constant dense<0.000000e+00> : vector<16x128xf32>
    %309 = tpu.matmul %307, %308, %cst_135 {dimension_numbers = #tpu.dot_dimension_numbers<[1], [0], [0], [1], [0, 0, 1, 1], [], []>} : vector<16x32xf32>, vector<32x128xf32>, vector<16x128xf32> -> vector<16x128xf32>
    %310 = arith.addf %288, %309 : vector<16x128xf32>
    %311 = vector.extract_strided_slice %279 {offsets = [0, 32], sizes = [16, 32], strides = [1, 1]} : vector<32x128xf32> to vector<16x32xf32>
    %312 = vector.extract_strided_slice %280 {offsets = [0, 32], sizes = [16, 32], strides = [1, 1]} : vector<32x128xf32> to vector<16x32xf32>
    %313 = vector.extract_strided_slice %281 {offsets = [0, 32], sizes = [16, 32], strides = [1, 1]} : vector<32x128xf32> to vector<16x32xf32>
    %cst_136 = arith.constant dense<0.000000e+00> : vector<16x16xf32>
    %314 = tpu.matmul %311, %312, %cst_136 {dimension_numbers = #tpu.dot_dimension_numbers<[1], [1], [0], [0], [0, 0, 1, 0], [], []>} : vector<16x32xf32>, vector<16x32xf32>, vector<16x16xf32> -> vector<16x16xf32>
    %cst_137 = arith.constant 0.176776692 : f32
    %315 = vector.broadcast %cst_137 : f32 to vector<16x16xf32>
    %316 = arith.mulf %314, %315 : vector<16x16xf32>
    %cst_138 = arith.constant -1.000000e+06 : f32
    %317 = vector.broadcast %cst_138 : f32 to vector<16x16xf32>
    %318 = arith.select %287, %316, %317 : vector<16x16xi1>, vector<16x16xf32>
    %cst_139 = arith.constant dense<0xFF800000> : vector<16xf32>
    %319 = vector.multi_reduction <maximumf>, %318, %cst_139 [1] : vector<16x16xf32> to vector<16xf32>
    %320 = vector.shape_cast %319 : vector<16xf32> to vector<16x1xf32>
    %321 = vector.broadcast %320 : vector<16x1xf32> to vector<16x16xf32>
    %322 = arith.subf %318, %321 : vector<16x16xf32>
    %323 = math.exp %322 : vector<16x16xf32>
    %cst_140 = arith.constant dense<0.000000e+00> : vector<16xf32>
    %324 = vector.multi_reduction <add>, %323, %cst_140 [1] : vector<16x16xf32> to vector<16xf32>
    %325 = vector.shape_cast %324 : vector<16xf32> to vector<16x1xf32>
    %326 = tpu.reciprocal %325 {approx = true} : vector<16x1xf32> -> vector<16x1xf32>
    %327 = vector.broadcast %326 : vector<16x1xf32> to vector<16x16xf32>
    %328 = arith.mulf %323, %327 : vector<16x16xf32>
    %cst_141 = arith.constant dense<0.000000e+00> : vector<16x32xf32>
    %329 = tpu.matmul %328, %313, %cst_141 {dimension_numbers = #tpu.dot_dimension_numbers<[1], [0], [0], [1], [0, 0, 1, 1], [], []>} : vector<16x16xf32>, vector<16x32xf32>, vector<16x32xf32> -> vector<16x32xf32>
    %330 = vector.extract_strided_slice %278 {offsets = [32, 0], sizes = [32, 128], strides = [1, 1]} : vector<128x128xf32> to vector<32x128xf32>
    %cst_142 = arith.constant dense<0.000000e+00> : vector<16x128xf32>
    %331 = tpu.matmul %329, %330, %cst_142 {dimension_numbers = #tpu.dot_dimension_numbers<[1], [0], [0], [1], [0, 0, 1, 1], [], []>} : vector<16x32xf32>, vector<32x128xf32>, vector<16x128xf32> -> vector<16x128xf32>
    %332 = arith.addf %310, %331 : vector<16x128xf32>
    %333 = vector.extract_strided_slice %279 {offsets = [0, 64], sizes = [16, 32], strides = [1, 1]} : vector<32x128xf32> to vector<16x32xf32>
    %334 = vector.extract_strided_slice %280 {offsets = [0, 64], sizes = [16, 32], strides = [1, 1]} : vector<32x128xf32> to vector<16x32xf32>
    %335 = vector.extract_strided_slice %281 {offsets = [0, 64], sizes = [16, 32], strides = [1, 1]} : vector<32x128xf32> to vector<16x32xf32>
    %cst_143 = arith.constant dense<0.000000e+00> : vector<16x16xf32>
    %336 = tpu.matmul %333, %334, %cst_143 {dimension_numbers = #tpu.dot_dimension_numbers<[1], [1], [0], [0], [0, 0, 1, 0], [], []>} : vector<16x32xf32>, vector<16x32xf32>, vector<16x16xf32> -> vector<16x16xf32>
    %cst_144 = arith.constant 0.176776692 : f32
    %337 = vector.broadcast %cst_144 : f32 to vector<16x16xf32>
    %338 = arith.mulf %336, %337 : vector<16x16xf32>
    %cst_145 = arith.constant -1.000000e+06 : f32
    %339 = vector.broadcast %cst_145 : f32 to vector<16x16xf32>
    %340 = arith.select %287, %338, %339 : vector<16x16xi1>, vector<16x16xf32>
    %cst_146 = arith.constant dense<0xFF800000> : vector<16xf32>
    %341 = vector.multi_reduction <maximumf>, %340, %cst_146 [1] : vector<16x16xf32> to vector<16xf32>
    %342 = vector.shape_cast %341 : vector<16xf32> to vector<16x1xf32>
    %343 = vector.broadcast %342 : vector<16x1xf32> to vector<16x16xf32>
    %344 = arith.subf %340, %343 : vector<16x16xf32>
    %345 = math.exp %344 : vector<16x16xf32>
    %cst_147 = arith.constant dense<0.000000e+00> : vector<16xf32>
    %346 = vector.multi_reduction <add>, %345, %cst_147 [1] : vector<16x16xf32> to vector<16xf32>
    %347 = vector.shape_cast %346 : vector<16xf32> to vector<16x1xf32>
    %348 = tpu.reciprocal %347 {approx = true} : vector<16x1xf32> -> vector<16x1xf32>
    %349 = vector.broadcast %348 : vector<16x1xf32> to vector<16x16xf32>
    %350 = arith.mulf %345, %349 : vector<16x16xf32>
    %cst_148 = arith.constant dense<0.000000e+00> : vector<16x32xf32>
    %351 = tpu.matmul %350, %335, %cst_148 {dimension_numbers = #tpu.dot_dimension_numbers<[1], [0], [0], [1], [0, 0, 1, 1], [], []>} : vector<16x16xf32>, vector<16x32xf32>, vector<16x32xf32> -> vector<16x32xf32>
    %352 = vector.extract_strided_slice %278 {offsets = [64, 0], sizes = [32, 128], strides = [1, 1]} : vector<128x128xf32> to vector<32x128xf32>
    %cst_149 = arith.constant dense<0.000000e+00> : vector<16x128xf32>
    %353 = tpu.matmul %351, %352, %cst_149 {dimension_numbers = #tpu.dot_dimension_numbers<[1], [0], [0], [1], [0, 0, 1, 1], [], []>} : vector<16x32xf32>, vector<32x128xf32>, vector<16x128xf32> -> vector<16x128xf32>
    %354 = arith.addf %332, %353 : vector<16x128xf32>
    %355 = vector.extract_strided_slice %279 {offsets = [0, 96], sizes = [16, 32], strides = [1, 1]} : vector<32x128xf32> to vector<16x32xf32>
    %356 = vector.extract_strided_slice %280 {offsets = [0, 96], sizes = [16, 32], strides = [1, 1]} : vector<32x128xf32> to vector<16x32xf32>
    %357 = vector.extract_strided_slice %281 {offsets = [0, 96], sizes = [16, 32], strides = [1, 1]} : vector<32x128xf32> to vector<16x32xf32>
    %cst_150 = arith.constant dense<0.000000e+00> : vector<16x16xf32>
    %358 = tpu.matmul %355, %356, %cst_150 {dimension_numbers = #tpu.dot_dimension_numbers<[1], [1], [0], [0], [0, 0, 1, 0], [], []>} : vector<16x32xf32>, vector<16x32xf32>, vector<16x16xf32> -> vector<16x16xf32>
    %cst_151 = arith.constant 0.176776692 : f32
    %359 = vector.broadcast %cst_151 : f32 to vector<16x16xf32>
    %360 = arith.mulf %358, %359 : vector<16x16xf32>
    %cst_152 = arith.constant -1.000000e+06 : f32
    %361 = vector.broadcast %cst_152 : f32 to vector<16x16xf32>
    %362 = arith.select %287, %360, %361 : vector<16x16xi1>, vector<16x16xf32>
    %cst_153 = arith.constant dense<0xFF800000> : vector<16xf32>
    %363 = vector.multi_reduction <maximumf>, %362, %cst_153 [1] : vector<16x16xf32> to vector<16xf32>
    %364 = vector.shape_cast %363 : vector<16xf32> to vector<16x1xf32>
    %365 = vector.broadcast %364 : vector<16x1xf32> to vector<16x16xf32>
    %366 = arith.subf %362, %365 : vector<16x16xf32>
    %367 = math.exp %366 : vector<16x16xf32>
    %cst_154 = arith.constant dense<0.000000e+00> : vector<16xf32>
    %368 = vector.multi_reduction <add>, %367, %cst_154 [1] : vector<16x16xf32> to vector<16xf32>
    %369 = vector.shape_cast %368 : vector<16xf32> to vector<16x1xf32>
    %370 = tpu.reciprocal %369 {approx = true} : vector<16x1xf32> -> vector<16x1xf32>
    %371 = vector.broadcast %370 : vector<16x1xf32> to vector<16x16xf32>
    %372 = arith.mulf %367, %371 : vector<16x16xf32>
    %cst_155 = arith.constant dense<0.000000e+00> : vector<16x32xf32>
    %373 = tpu.matmul %372, %357, %cst_155 {dimension_numbers = #tpu.dot_dimension_numbers<[1], [0], [0], [1], [0, 0, 1, 1], [], []>} : vector<16x16xf32>, vector<16x32xf32>, vector<16x32xf32> -> vector<16x32xf32>
    %374 = vector.extract_strided_slice %278 {offsets = [96, 0], sizes = [32, 128], strides = [1, 1]} : vector<128x128xf32> to vector<32x128xf32>
    %cst_156 = arith.constant dense<0.000000e+00> : vector<16x128xf32>
    %375 = tpu.matmul %373, %374, %cst_156 {dimension_numbers = #tpu.dot_dimension_numbers<[1], [0], [0], [1], [0, 0, 1, 1], [], []>} : vector<16x32xf32>, vector<32x128xf32>, vector<16x128xf32> -> vector<16x128xf32>
    %376 = arith.addf %354, %375 : vector<16x128xf32>
    %c2_i32_157 = arith.constant 2 : i32
    %377 = arith.muli %arg0, %c2_i32_157 : i32
    %c1_i32_158 = arith.constant 1 : i32
    %378 = arith.addi %377, %c1_i32_158 : i32
    %379 = arith.index_cast %378 : i32 to index
    %380 = memref.load %arg1[%379] : memref<4xi32, #tpu.memory_space<smem>>
    %381 = vector.broadcast %380 : i32 to vector<16x16xi32>
    %382 = arith.cmpi slt, %2, %381 : vector<16x16xi32>
    %cst_159 = arith.constant 0.000000e+00 : f32
    %383 = vector.broadcast %cst_159 : f32 to vector<16x128xf32>
    %384 = vector.extract_strided_slice %279 {offsets = [16, 0], sizes = [16, 32], strides = [1, 1]} : vector<32x128xf32> to vector<16x32xf32>
    %385 = vector.extract_strided_slice %280 {offsets = [16, 0], sizes = [16, 32], strides = [1, 1]} : vector<32x128xf32> to vector<16x32xf32>
    %386 = vector.extract_strided_slice %281 {offsets = [16, 0], sizes = [16, 32], strides = [1, 1]} : vector<32x128xf32> to vector<16x32xf32>
    %cst_160 = arith.constant dense<0.000000e+00> : vector<16x16xf32>
    %387 = tpu.matmul %384, %385, %cst_160 {dimension_numbers = #tpu.dot_dimension_numbers<[1], [1], [0], [0], [0, 0, 1, 0], [], []>} : vector<16x32xf32>, vector<16x32xf32>, vector<16x16xf32> -> vector<16x16xf32>
    %cst_161 = arith.constant 0.176776692 : f32
    %388 = vector.broadcast %cst_161 : f32 to vector<16x16xf32>
    %389 = arith.mulf %387, %388 : vector<16x16xf32>
    %cst_162 = arith.constant -1.000000e+06 : f32
    %390 = vector.broadcast %cst_162 : f32 to vector<16x16xf32>
    %391 = arith.select %382, %389, %390 : vector<16x16xi1>, vector<16x16xf32>
    %cst_163 = arith.constant dense<0xFF800000> : vector<16xf32>
    %392 = vector.multi_reduction <maximumf>, %391, %cst_163 [1] : vector<16x16xf32> to vector<16xf32>
    %393 = vector.shape_cast %392 : vector<16xf32> to vector<16x1xf32>
    %394 = vector.broadcast %393 : vector<16x1xf32> to vector<16x16xf32>
    %395 = arith.subf %391, %394 : vector<16x16xf32>
    %396 = math.exp %395 : vector<16x16xf32>
    %cst_164 = arith.constant dense<0.000000e+00> : vector<16xf32>
    %397 = vector.multi_reduction <add>, %396, %cst_164 [1] : vector<16x16xf32> to vector<16xf32>
    %398 = vector.shape_cast %397 : vector<16xf32> to vector<16x1xf32>
    %399 = tpu.reciprocal %398 {approx = true} : vector<16x1xf32> -> vector<16x1xf32>
    %400 = vector.broadcast %399 : vector<16x1xf32> to vector<16x16xf32>
    %401 = arith.mulf %396, %400 : vector<16x16xf32>
    %cst_165 = arith.constant dense<0.000000e+00> : vector<16x32xf32>
    %402 = tpu.matmul %401, %386, %cst_165 {dimension_numbers = #tpu.dot_dimension_numbers<[1], [0], [0], [1], [0, 0, 1, 1], [], []>} : vector<16x16xf32>, vector<16x32xf32>, vector<16x32xf32> -> vector<16x32xf32>
    %403 = vector.extract_strided_slice %278 {offsets = [0, 0], sizes = [32, 128], strides = [1, 1]} : vector<128x128xf32> to vector<32x128xf32>
    %cst_166 = arith.constant dense<0.000000e+00> : vector<16x128xf32>
    %404 = tpu.matmul %402, %403, %cst_166 {dimension_numbers = #tpu.dot_dimension_numbers<[1], [0], [0], [1], [0, 0, 1, 1], [], []>} : vector<16x32xf32>, vector<32x128xf32>, vector<16x128xf32> -> vector<16x128xf32>
    %405 = arith.addf %383, %404 : vector<16x128xf32>
    %406 = vector.extract_strided_slice %279 {offsets = [16, 32], sizes = [16, 32], strides = [1, 1]} : vector<32x128xf32> to vector<16x32xf32>
    %407 = vector.extract_strided_slice %280 {offsets = [16, 32], sizes = [16, 32], strides = [1, 1]} : vector<32x128xf32> to vector<16x32xf32>
    %408 = vector.extract_strided_slice %281 {offsets = [16, 32], sizes = [16, 32], strides = [1, 1]} : vector<32x128xf32> to vector<16x32xf32>
    %cst_167 = arith.constant dense<0.000000e+00> : vector<16x16xf32>
    %409 = tpu.matmul %406, %407, %cst_167 {dimension_numbers = #tpu.dot_dimension_numbers<[1], [1], [0], [0], [0, 0, 1, 0], [], []>} : vector<16x32xf32>, vector<16x32xf32>, vector<16x16xf32> -> vector<16x16xf32>
    %cst_168 = arith.constant 0.176776692 : f32
    %410 = vector.broadcast %cst_168 : f32 to vector<16x16xf32>
    %411 = arith.mulf %409, %410 : vector<16x16xf32>
    %cst_169 = arith.constant -1.000000e+06 : f32
    %412 = vector.broadcast %cst_169 : f32 to vector<16x16xf32>
    %413 = arith.select %382, %411, %412 : vector<16x16xi1>, vector<16x16xf32>
    %cst_170 = arith.constant dense<0xFF800000> : vector<16xf32>
    %414 = vector.multi_reduction <maximumf>, %413, %cst_170 [1] : vector<16x16xf32> to vector<16xf32>
    %415 = vector.shape_cast %414 : vector<16xf32> to vector<16x1xf32>
    %416 = vector.broadcast %415 : vector<16x1xf32> to vector<16x16xf32>
    %417 = arith.subf %413, %416 : vector<16x16xf32>
    %418 = math.exp %417 : vector<16x16xf32>
    %cst_171 = arith.constant dense<0.000000e+00> : vector<16xf32>
    %419 = vector.multi_reduction <add>, %418, %cst_171 [1] : vector<16x16xf32> to vector<16xf32>
    %420 = vector.shape_cast %419 : vector<16xf32> to vector<16x1xf32>
    %421 = tpu.reciprocal %420 {approx = true} : vector<16x1xf32> -> vector<16x1xf32>
    %422 = vector.broadcast %421 : vector<16x1xf32> to vector<16x16xf32>
    %423 = arith.mulf %418, %422 : vector<16x16xf32>
    %cst_172 = arith.constant dense<0.000000e+00> : vector<16x32xf32>
    %424 = tpu.matmul %423, %408, %cst_172 {dimension_numbers = #tpu.dot_dimension_numbers<[1], [0], [0], [1], [0, 0, 1, 1], [], []>} : vector<16x16xf32>, vector<16x32xf32>, vector<16x32xf32> -> vector<16x32xf32>
    %425 = vector.extract_strided_slice %278 {offsets = [32, 0], sizes = [32, 128], strides = [1, 1]} : vector<128x128xf32> to vector<32x128xf32>
    %cst_173 = arith.constant dense<0.000000e+00> : vector<16x128xf32>
    %426 = tpu.matmul %424, %425, %cst_173 {dimension_numbers = #tpu.dot_dimension_numbers<[1], [0], [0], [1], [0, 0, 1, 1], [], []>} : vector<16x32xf32>, vector<32x128xf32>, vector<16x128xf32> -> vector<16x128xf32>
    %427 = arith.addf %405, %426 : vector<16x128xf32>
    %428 = vector.extract_strided_slice %279 {offsets = [16, 64], sizes = [16, 32], strides = [1, 1]} : vector<32x128xf32> to vector<16x32xf32>
    %429 = vector.extract_strided_slice %280 {offsets = [16, 64], sizes = [16, 32], strides = [1, 1]} : vector<32x128xf32> to vector<16x32xf32>
    %430 = vector.extract_strided_slice %281 {offsets = [16, 64], sizes = [16, 32], strides = [1, 1]} : vector<32x128xf32> to vector<16x32xf32>
    %cst_174 = arith.constant dense<0.000000e+00> : vector<16x16xf32>
    %431 = tpu.matmul %428, %429, %cst_174 {dimension_numbers = #tpu.dot_dimension_numbers<[1], [1], [0], [0], [0, 0, 1, 0], [], []>} : vector<16x32xf32>, vector<16x32xf32>, vector<16x16xf32> -> vector<16x16xf32>
    %cst_175 = arith.constant 0.176776692 : f32
    %432 = vector.broadcast %cst_175 : f32 to vector<16x16xf32>
    %433 = arith.mulf %431, %432 : vector<16x16xf32>
    %cst_176 = arith.constant -1.000000e+06 : f32
    %434 = vector.broadcast %cst_176 : f32 to vector<16x16xf32>
    %435 = arith.select %382, %433, %434 : vector<16x16xi1>, vector<16x16xf32>
    %cst_177 = arith.constant dense<0xFF800000> : vector<16xf32>
    %436 = vector.multi_reduction <maximumf>, %435, %cst_177 [1] : vector<16x16xf32> to vector<16xf32>
    %437 = vector.shape_cast %436 : vector<16xf32> to vector<16x1xf32>
    %438 = vector.broadcast %437 : vector<16x1xf32> to vector<16x16xf32>
    %439 = arith.subf %435, %438 : vector<16x16xf32>
    %440 = math.exp %439 : vector<16x16xf32>
    %cst_178 = arith.constant dense<0.000000e+00> : vector<16xf32>
    %441 = vector.multi_reduction <add>, %440, %cst_178 [1] : vector<16x16xf32> to vector<16xf32>
    %442 = vector.shape_cast %441 : vector<16xf32> to vector<16x1xf32>
    %443 = tpu.reciprocal %442 {approx = true} : vector<16x1xf32> -> vector<16x1xf32>
    %444 = vector.broadcast %443 : vector<16x1xf32> to vector<16x16xf32>
    %445 = arith.mulf %440, %444 : vector<16x16xf32>
    %cst_179 = arith.constant dense<0.000000e+00> : vector<16x32xf32>
    %446 = tpu.matmul %445, %430, %cst_179 {dimension_numbers = #tpu.dot_dimension_numbers<[1], [0], [0], [1], [0, 0, 1, 1], [], []>} : vector<16x16xf32>, vector<16x32xf32>, vector<16x32xf32> -> vector<16x32xf32>
    %447 = vector.extract_strided_slice %278 {offsets = [64, 0], sizes = [32, 128], strides = [1, 1]} : vector<128x128xf32> to vector<32x128xf32>
    %cst_180 = arith.constant dense<0.000000e+00> : vector<16x128xf32>
    %448 = tpu.matmul %446, %447, %cst_180 {dimension_numbers = #tpu.dot_dimension_numbers<[1], [0], [0], [1], [0, 0, 1, 1], [], []>} : vector<16x32xf32>, vector<32x128xf32>, vector<16x128xf32> -> vector<16x128xf32>
    %449 = arith.addf %427, %448 : vector<16x128xf32>
    %450 = vector.extract_strided_slice %279 {offsets = [16, 96], sizes = [16, 32], strides = [1, 1]} : vector<32x128xf32> to vector<16x32xf32>
    %451 = vector.extract_strided_slice %280 {offsets = [16, 96], sizes = [16, 32], strides = [1, 1]} : vector<32x128xf32> to vector<16x32xf32>
    %452 = vector.extract_strided_slice %281 {offsets = [16, 96], sizes = [16, 32], strides = [1, 1]} : vector<32x128xf32> to vector<16x32xf32>
    %cst_181 = arith.constant dense<0.000000e+00> : vector<16x16xf32>
    %453 = tpu.matmul %450, %451, %cst_181 {dimension_numbers = #tpu.dot_dimension_numbers<[1], [1], [0], [0], [0, 0, 1, 0], [], []>} : vector<16x32xf32>, vector<16x32xf32>, vector<16x16xf32> -> vector<16x16xf32>
    %cst_182 = arith.constant 0.176776692 : f32
    %454 = vector.broadcast %cst_182 : f32 to vector<16x16xf32>
    %455 = arith.mulf %453, %454 : vector<16x16xf32>
    %cst_183 = arith.constant -1.000000e+06 : f32
    %456 = vector.broadcast %cst_183 : f32 to vector<16x16xf32>
    %457 = arith.select %382, %455, %456 : vector<16x16xi1>, vector<16x16xf32>
    %cst_184 = arith.constant dense<0xFF800000> : vector<16xf32>
    %458 = vector.multi_reduction <maximumf>, %457, %cst_184 [1] : vector<16x16xf32> to vector<16xf32>
    %459 = vector.shape_cast %458 : vector<16xf32> to vector<16x1xf32>
    %460 = vector.broadcast %459 : vector<16x1xf32> to vector<16x16xf32>
    %461 = arith.subf %457, %460 : vector<16x16xf32>
    %462 = math.exp %461 : vector<16x16xf32>
    %cst_185 = arith.constant dense<0.000000e+00> : vector<16xf32>
    %463 = vector.multi_reduction <add>, %462, %cst_185 [1] : vector<16x16xf32> to vector<16xf32>
    %464 = vector.shape_cast %463 : vector<16xf32> to vector<16x1xf32>
    %465 = tpu.reciprocal %464 {approx = true} : vector<16x1xf32> -> vector<16x1xf32>
    %466 = vector.broadcast %465 : vector<16x1xf32> to vector<16x16xf32>
    %467 = arith.mulf %462, %466 : vector<16x16xf32>
    %cst_186 = arith.constant dense<0.000000e+00> : vector<16x32xf32>
    %468 = tpu.matmul %467, %452, %cst_186 {dimension_numbers = #tpu.dot_dimension_numbers<[1], [0], [0], [1], [0, 0, 1, 1], [], []>} : vector<16x16xf32>, vector<16x32xf32>, vector<16x32xf32> -> vector<16x32xf32>
    %469 = vector.extract_strided_slice %278 {offsets = [96, 0], sizes = [32, 128], strides = [1, 1]} : vector<128x128xf32> to vector<32x128xf32>
    %cst_187 = arith.constant dense<0.000000e+00> : vector<16x128xf32>
    %470 = tpu.matmul %468, %469, %cst_187 {dimension_numbers = #tpu.dot_dimension_numbers<[1], [0], [0], [1], [0, 0, 1, 1], [], []>} : vector<16x32xf32>, vector<32x128xf32>, vector<16x128xf32> -> vector<16x128xf32>
    %471 = arith.addf %449, %470 : vector<16x128xf32>
    %472 = tpu.concatenate %376, %471 in 0 : vector<16x128xf32>, vector<16x128xf32> -> vector<32x128xf32>
    %473 = arith.addf %270, %472 : vector<32x128xf32>
    %c1_188 = arith.constant 1 : index
    %c0_189 = arith.constant 0 : index
    %c0_190 = arith.constant 0 : index
    %474 = vector.load %arg7[%c1_188, %c0_189, %c0_190] : memref<2x1x128xf32, #tpu.memory_space<vmem>>, vector<1x1x128xf32>
    %475 = vector.shape_cast %474 : vector<1x1x128xf32> to vector<1x128xf32>
    %c1_191 = arith.constant 1 : index
    %c0_192 = arith.constant 0 : index
    %c0_193 = arith.constant 0 : index
    %476 = vector.load %arg8[%c1_191, %c0_192, %c0_193] : memref<2x1x128xf32, #tpu.memory_space<vmem>>, vector<1x1x128xf32>
    %477 = vector.shape_cast %476 : vector<1x1x128xf32> to vector<1x128xf32>
    %cst_194 = arith.constant dense<0.000000e+00> : vector<32xf32>
    %478 = vector.multi_reduction <add>, %473, %cst_194 [1] : vector<32x128xf32> to vector<32xf32>
    %479 = vector.shape_cast %478 : vector<32xf32> to vector<32x1xf32>
    %cst_195 = arith.constant 1.280000e+02 : f32
    %480 = vector.broadcast %cst_195 : f32 to vector<32x1xf32>
    %481 = arith.divf %479, %480 : vector<32x1xf32>
    %482 = vector.broadcast %481 : vector<32x1xf32> to vector<32x128xf32>
    %483 = arith.subf %473, %482 : vector<32x128xf32>
    %484 = arith.mulf %483, %483 : vector<32x128xf32>
    %cst_196 = arith.constant dense<0.000000e+00> : vector<32xf32>
    %485 = vector.multi_reduction <add>, %484, %cst_196 [1] : vector<32x128xf32> to vector<32xf32>
    %486 = vector.shape_cast %485 : vector<32xf32> to vector<32x1xf32>
    %cst_197 = arith.constant 1.280000e+02 : f32
    %487 = vector.broadcast %cst_197 : f32 to vector<32x1xf32>
    %488 = arith.divf %486, %487 : vector<32x1xf32>
    %cst_198 = arith.constant 9.99999974E-6 : f32
    %489 = vector.broadcast %cst_198 : f32 to vector<32x1xf32>
    %490 = arith.addf %488, %489 : vector<32x1xf32>
    %491 = math.rsqrt %490 : vector<32x1xf32>
    %492 = vector.broadcast %491 : vector<32x1xf32> to vector<32x128xf32>
    %493 = arith.mulf %483, %492 : vector<32x128xf32>
    %494 = vector.broadcast %475 : vector<1x128xf32> to vector<32x128xf32>
    %495 = arith.mulf %493, %494 : vector<32x128xf32>
    %496 = vector.broadcast %477 : vector<1x128xf32> to vector<32x128xf32>
    %497 = arith.addf %495, %496 : vector<32x128xf32>
    %c1_199 = arith.constant 1 : index
    %c0_200 = arith.constant 0 : index
    %c0_201 = arith.constant 0 : index
    %498 = vector.load %arg9[%c1_199, %c0_200, %c0_201] : memref<2x128x256xf32, #tpu.memory_space<vmem>>, vector<1x128x256xf32>
    %499 = vector.shape_cast %498 : vector<1x128x256xf32> to vector<128x256xf32>
    %cst_202 = arith.constant dense<0.000000e+00> : vector<32x256xf32>
    %500 = tpu.matmul %497, %499, %cst_202 {dimension_numbers = #tpu.dot_dimension_numbers<[1], [0], [0], [1], [0, 0, 1, 1], [], []>} : vector<32x128xf32>, vector<128x256xf32>, vector<32x256xf32> -> vector<32x256xf32>
    %c1_203 = arith.constant 1 : index
    %c0_204 = arith.constant 0 : index
    %c0_205 = arith.constant 0 : index
    %501 = vector.load %arg10[%c1_203, %c0_204, %c0_205] : memref<2x1x256xf32, #tpu.memory_space<vmem>>, vector<1x1x256xf32>
    %502 = vector.shape_cast %501 : vector<1x1x256xf32> to vector<1x256xf32>
    %503 = vector.broadcast %502 : vector<1x256xf32> to vector<32x256xf32>
    %504 = arith.addf %500, %503 : vector<32x256xf32>
    %cst_206 = arith.constant 0.000000e+00 : f32
    %505 = vector.broadcast %cst_206 : f32 to vector<32x256xf32>
    %506 = arith.maximumf %504, %505 : vector<32x256xf32>
    %c1_207 = arith.constant 1 : index
    %c0_208 = arith.constant 0 : index
    %c0_209 = arith.constant 0 : index
    %507 = vector.load %arg11[%c1_207, %c0_208, %c0_209] : memref<2x256x128xf32, #tpu.memory_space<vmem>>, vector<1x256x128xf32>
    %508 = vector.shape_cast %507 : vector<1x256x128xf32> to vector<256x128xf32>
    %cst_210 = arith.constant dense<0.000000e+00> : vector<32x128xf32>
    %509 = tpu.matmul %506, %508, %cst_210 {dimension_numbers = #tpu.dot_dimension_numbers<[1], [0], [0], [1], [0, 0, 1, 1], [], []>} : vector<32x256xf32>, vector<256x128xf32>, vector<32x128xf32> -> vector<32x128xf32>
    %c1_211 = arith.constant 1 : index
    %c0_212 = arith.constant 0 : index
    %c0_213 = arith.constant 0 : index
    %510 = vector.load %arg12[%c1_211, %c0_212, %c0_213] : memref<2x1x128xf32, #tpu.memory_space<vmem>>, vector<1x1x128xf32>
    %511 = vector.shape_cast %510 : vector<1x1x128xf32> to vector<1x128xf32>
    %512 = vector.broadcast %511 : vector<1x128xf32> to vector<32x128xf32>
    %513 = arith.addf %509, %512 : vector<32x128xf32>
    %514 = arith.addf %497, %513 : vector<32x128xf32>
    %c1_214 = arith.constant 1 : index
    %c0_215 = arith.constant 0 : index
    %c0_216 = arith.constant 0 : index
    %515 = vector.load %arg13[%c1_214, %c0_215, %c0_216] : memref<2x1x128xf32, #tpu.memory_space<vmem>>, vector<1x1x128xf32>
    %516 = vector.shape_cast %515 : vector<1x1x128xf32> to vector<1x128xf32>
    %c1_217 = arith.constant 1 : index
    %c0_218 = arith.constant 0 : index
    %c0_219 = arith.constant 0 : index
    %517 = vector.load %arg14[%c1_217, %c0_218, %c0_219] : memref<2x1x128xf32, #tpu.memory_space<vmem>>, vector<1x1x128xf32>
    %518 = vector.shape_cast %517 : vector<1x1x128xf32> to vector<1x128xf32>
    %cst_220 = arith.constant dense<0.000000e+00> : vector<32xf32>
    %519 = vector.multi_reduction <add>, %514, %cst_220 [1] : vector<32x128xf32> to vector<32xf32>
    %520 = vector.shape_cast %519 : vector<32xf32> to vector<32x1xf32>
    %cst_221 = arith.constant 1.280000e+02 : f32
    %521 = vector.broadcast %cst_221 : f32 to vector<32x1xf32>
    %522 = arith.divf %520, %521 : vector<32x1xf32>
    %523 = vector.broadcast %522 : vector<32x1xf32> to vector<32x128xf32>
    %524 = arith.subf %514, %523 : vector<32x128xf32>
    %525 = arith.mulf %524, %524 : vector<32x128xf32>
    %cst_222 = arith.constant dense<0.000000e+00> : vector<32xf32>
    %526 = vector.multi_reduction <add>, %525, %cst_222 [1] : vector<32x128xf32> to vector<32xf32>
    %527 = vector.shape_cast %526 : vector<32xf32> to vector<32x1xf32>
    %cst_223 = arith.constant 1.280000e+02 : f32
    %528 = vector.broadcast %cst_223 : f32 to vector<32x1xf32>
    %529 = arith.divf %527, %528 : vector<32x1xf32>
    %cst_224 = arith.constant 9.99999974E-6 : f32
    %530 = vector.broadcast %cst_224 : f32 to vector<32x1xf32>
    %531 = arith.addf %529, %530 : vector<32x1xf32>
    %532 = math.rsqrt %531 : vector<32x1xf32>
    %533 = vector.broadcast %532 : vector<32x1xf32> to vector<32x128xf32>
    %534 = arith.mulf %524, %533 : vector<32x128xf32>
    %535 = vector.broadcast %516 : vector<1x128xf32> to vector<32x128xf32>
    %536 = arith.mulf %534, %535 : vector<32x128xf32>
    %537 = vector.broadcast %518 : vector<1x128xf32> to vector<32x128xf32>
    %538 = arith.addf %536, %537 : vector<32x128xf32>
    %539 = vector.shape_cast %538 : vector<32x128xf32> to vector<2x16x128xf32>
    %c0_225 = arith.constant 0 : index
    %c0_226 = arith.constant 0 : index
    %c0_227 = arith.constant 0 : index
    %540 = vector.load %arg15[%c0_225, %c0_226, %c0_227] : memref<2x16x128xf32, #tpu.memory_space<vmem>>, vector<2x16x128xf32>
    tpu.vector_store %arg15[%c0_225, %c0_226, %c0_227], %539 {strides = array<i32>} : memref<2x16x128xf32, #tpu.memory_space<vmem>>, vector<2x16x128xf32>,
    return
  }
  func.func @transform_0(%arg0: i32, %arg1: memref<4xi32, #tpu.memory_space<smem>>) -> (i32, i32, i32) {
    %c0_i32 = arith.constant 0 : i32
    %c0_i32_0 = arith.constant 0 : i32
    %c0_i32_1 = arith.constant 0 : i32
    return %arg0, %c0_i32, %c0_i32_0 : i32, i32, i32
  }
  func.func @transform_1(%arg0: i32, %arg1: memref<4xi32, #tpu.memory_space<smem>>) -> (i32, i32, i32) {
    %c0_i32 = arith.constant 0 : i32
    %c0_i32_0 = arith.constant 0 : i32
    %c0_i32_1 = arith.constant 0 : i32
    %c0_i32_2 = arith.constant 0 : i32
    return %c0_i32, %c0_i32_0, %c0_i32_1 : i32, i32, i32
  }
  func.func @transform_2(%arg0: i32, %arg1: memref<4xi32, #tpu.memory_space<smem>>) -> (i32, i32, i32) {
    %c0_i32 = arith.constant 0 : i32
    %c0_i32_0 = arith.constant 0 : i32
    %c0_i32_1 = arith.constant 0 : i32
    %c0_i32_2 = arith.constant 0 : i32
    return %c0_i32, %c0_i32_0, %c0_i32_1 : i32, i32, i32
  }
  func.func @transform_3(%arg0: i32, %arg1: memref<4xi32, #tpu.memory_space<smem>>) -> (i32, i32, i32) {
    %c0_i32 = arith.constant 0 : i32
    %c0_i32_0 = arith.constant 0 : i32
    %c0_i32_1 = arith.constant 0 : i32
    %c0_i32_2 = arith.constant 0 : i32
    return %c0_i32, %c0_i32_0, %c0_i32_1 : i32, i32, i32
  }
  func.func @transform_4(%arg0: i32, %arg1: memref<4xi32, #tpu.memory_space<smem>>) -> (i32, i32, i32) {
    %c0_i32 = arith.constant 0 : i32
    %c0_i32_0 = arith.constant 0 : i32
    %c0_i32_1 = arith.constant 0 : i32
    %c0_i32_2 = arith.constant 0 : i32
    return %c0_i32, %c0_i32_0, %c0_i32_1 : i32, i32, i32
  }
  func.func @transform_5(%arg0: i32, %arg1: memref<4xi32, #tpu.memory_space<smem>>) -> (i32, i32, i32) {
    %c0_i32 = arith.constant 0 : i32
    %c0_i32_0 = arith.constant 0 : i32
    %c0_i32_1 = arith.constant 0 : i32
    %c0_i32_2 = arith.constant 0 : i32
    return %c0_i32, %c0_i32_0, %c0_i32_1 : i32, i32, i32
  }
  func.func @transform_6(%arg0: i32, %arg1: memref<4xi32, #tpu.memory_space<smem>>) -> (i32, i32, i32) {
    %c0_i32 = arith.constant 0 : i32
    %c0_i32_0 = arith.constant 0 : i32
    %c0_i32_1 = arith.constant 0 : i32
    %c0_i32_2 = arith.constant 0 : i32
    return %c0_i32, %c0_i32_0, %c0_i32_1 : i32, i32, i32
  }
  func.func @transform_7(%arg0: i32, %arg1: memref<4xi32, #tpu.memory_space<smem>>) -> (i32, i32, i32) {
    %c0_i32 = arith.constant 0 : i32
    %c0_i32_0 = arith.constant 0 : i32
    %c0_i32_1 = arith.constant 0 : i32
    %c0_i32_2 = arith.constant 0 : i32
    return %c0_i32, %c0_i32_0, %c0_i32_1 : i32, i32, i32
  }
  func.func @transform_8(%arg0: i32, %arg1: memref<4xi32, #tpu.memory_space<smem>>) -> (i32, i32, i32) {
    %c0_i32 = arith.constant 0 : i32
    %c0_i32_0 = arith.constant 0 : i32
    %c0_i32_1 = arith.constant 0 : i32
    %c0_i32_2 = arith.constant 0 : i32
    return %c0_i32, %c0_i32_0, %c0_i32_1 : i32, i32, i32
  }
  func.func @transform_9(%arg0: i32, %arg1: memref<4xi32, #tpu.memory_space<smem>>) -> (i32, i32, i32) {
    %c0_i32 = arith.constant 0 : i32
    %c0_i32_0 = arith.constant 0 : i32
    %c0_i32_1 = arith.constant 0 : i32
    %c0_i32_2 = arith.constant 0 : i32
    return %c0_i32, %c0_i32_0, %c0_i32_1 : i32, i32, i32
  }
  func.func @transform_10(%arg0: i32, %arg1: memref<4xi32, #tpu.memory_space<smem>>) -> (i32, i32, i32) {
    %c0_i32 = arith.constant 0 : i32
    %c0_i32_0 = arith.constant 0 : i32
    %c0_i32_1 = arith.constant 0 : i32
    %c0_i32_2 = arith.constant 0 : i32
    return %c0_i32, %c0_i32_0, %c0_i32_1 : i32, i32, i32
  }
  func.func @transform_11(%arg0: i32, %arg1: memref<4xi32, #tpu.memory_space<smem>>) -> (i32, i32, i32) {
    %c0_i32 = arith.constant 0 : i32
    %c0_i32_0 = arith.constant 0 : i32
    %c0_i32_1 = arith.constant 0 : i32
    %c0_i32_2 = arith.constant 0 : i32
    return %c0_i32, %c0_i32_0, %c0_i32_1 : i32, i32, i32
  }
  func.func @transform_12(%arg0: i32, %arg1: memref<4xi32, #tpu.memory_space<smem>>) -> (i32, i32, i32) {
    %c0_i32 = arith.constant 0 : i32
    %c0_i32_0 = arith.constant 0 : i32
    %c0_i32_1 = arith.constant 0 : i32
    %c0_i32_2 = arith.constant 0 : i32
    return %c0_i32, %c0_i32_0, %c0_i32_1 : i32, i32, i32
  }
  func.func @transform_13(%arg0: i32, %arg1: memref<4xi32, #tpu.memory_space<smem>>) -> (i32, i32, i32) {
    %c0_i32 = arith.constant 0 : i32
    %c0_i32_0 = arith.constant 0 : i32
    %c0_i32_1 = arith.constant 0 : i32
    return %arg0, %c0_i32, %c0_i32_0 : i32, i32, i32
  }
}

</mosaic_0001>

<llo_original>
// kernel: transformer_encoder_forward.1
$region0: #{transformer_encoder_forward.1}
  #allocation0 [shape = 'u32[]', space=smem, size = 0x4, offset = 0x4, fixed_abs, tag = 'smem constant byte address 0x4 - core index']
  #allocation1 [shape = 'u32[144,128]{1,0:T(1,128)}', space=vmem, size = 0x12000, scoped, tag = 'internal scratch']
  #allocation2 [shape = 's32[1]{0}', space=sflag, size = 0x4, scoped, tag = 'scoped memory for transformer_encoder_forward.1']
  #allocation3 [shape = 'u8[512]{0}', space=smem, size = 0x200, scoped, tag = 'prefetched SMEM operand 0']
  %s0 = inlined_call_operand.vmem [shape: s32[4], index: 0, kind: input, shape index: {}]
  %s1 = inlined_call_operand.vmem [shape: f32[4,16,128], index: 1, kind: input, shape index: {}]
  %s2 = inlined_call_operand.vmem [shape: f32[2,128,128], index: 2, kind: input, shape index: {}]
  %s3 = inlined_call_operand.hbm [shape: f32[2,128,128], index: 3, kind: input, shape index: {}]
  %s4 = inlined_call_operand.hbm [shape: f32[2,128,128], index: 4, kind: input, shape index: {}]
  %s5 = inlined_call_operand.hbm [shape: f32[2,128,128], index: 5, kind: input, shape index: {}]
  %s6 = inlined_call_operand.vmem [shape: f32[2,1,128], index: 6, kind: input, shape index: {}]
  %s7 = inlined_call_operand.vmem [shape: f32[2,1,128], index: 7, kind: input, shape index: {}]
  %s8 = inlined_call_operand.vmem [shape: f32[2,128,256], index: 8, kind: input, shape index: {}]
  %s9 = inlined_call_operand.vmem [shape: f32[2,1,256], index: 9, kind: input, shape index: {}]
  %s10 = inlined_call_operand.hbm [shape: f32[2,256,128], index: 10, kind: input, shape index: {}]
  %s11 = inlined_call_operand.vmem [shape: f32[2,1,128], index: 11, kind: input, shape index: {}]
  %s12 = inlined_call_operand.vmem [shape: f32[2,1,128], index: 12, kind: input, shape index: {}]
  %s13 = inlined_call_operand.vmem [shape: f32[2,1,128], index: 13, kind: input, shape index: {}]
  %s14 = inlined_call_operand.hbm [shape: f32[4,16,128], index: 14, kind: output, shape index: {}]
  %s15 = sld [smem:[#allocation0]]
  $region101: #{transformer_encoder_forward.1} parent=0
    _
  %s17 = ssub.s32 1, %s15
  %s18 = scalar_select 0, %s17, %s15
  %s19 = sshll.u32 %s0, 4
  %s20 = int_to_ptr.vmem [resolvable:$true] %s19
  %22 = dma.vmem_to_smem %s20, 16, [#allocation3], [#allocation2]
  %23 = dma.done [#allocation2], 16
  %24 = sfence
  $region1: #{transformer_encoder_forward.1} parent=0
    #allocation4 [shape = 'u8[131072]{0}', space=vmem, size = 0x20000, scoped, tag = 'input window, operand 3, single buffered']
    #allocation5 [shape = 's32[2]{0}', space=sflag, size = 0x8, scoped, tag = 'scoped memory for transformer_encoder_forward.1']
    #allocation6 [shape = 's32[2]{0}', space=sflag, size = 0x8, scoped, tag = 'scoped memory for transformer_encoder_forward.1']
    #allocation7 [shape = 'u8[131072]{0}', space=vmem, size = 0x20000, scoped, tag = 'input window, operand 4, single buffered']
    #allocation8 [shape = 's32[1]{0}', space=sflag, size = 0x4, scoped, tag = 'scoped memory for transformer_encoder_forward.1']
    #allocation9 [shape = 'u8[131072]{0}', space=vmem, size = 0x20000, scoped, tag = 'input window, operand 5, single buffered']
    #allocation10 [shape = 'u8[262144]{0}', space=vmem, size = 0x40000, scoped, tag = 'input window, operand 10, single buffered']
    #allocation11 [shape = 's32[1]{0}', space=sflag, size = 0x4, scoped, tag = 'scoped memory for transformer_encoder_forward.1']
    #allocation12 [shape = 'u8[32768]{0}', space=vmem, size = 0x8000, scoped, tag = 'output window, operand 0']
    %25 = vsyncpa [#allocation5], 0
    %26 = vsyncpa [#allocation8], 0
    %27 = vsyncpa [#allocation11], 0
    %28 = vsyncpa [#allocation6], 0
    %s29 = scalar_lea.sflag [#allocation6], 1
    %30 = vsyncpa %s29, 0
    loop: start=0, step=1, limit=4
    $region2: #{transformer_encoder_forward.1} parent=1 // loop_pre_header
      _
    $region3: #{transformer_encoder_forward.1} parent=1 // loop_header
      %s32 = sphi 0, %s36
      %p33 = scmp.ge.s32.totalorder %s32, 4
      %s42 = sphi 0, %s44
      %s45 = sphi 0, %s42
      %s46 = sphi 0, %s45
      %s62 = sphi 0, %s46
      %s66 = sphi 0, %s66
      %s68 = sphi 0, %s66
      %s69 = sphi 0, %s68
      %s83 = sphi 0, %s69
      %s87 = sphi 0, %s87
      %s89 = sphi 0, %s87
      %s90 = sphi 0, %s89
      %s104 = sphi 0, %s90
      %s108 = sphi 0, %s108
      %s110 = sphi 0, %s108
      %s111 = sphi 0, %s110
      %s125 = sphi 0, %s111
      %s129 = sphi 0, %s129
      %s131 = sphi 0, %s129
      %s132 = sphi 0, %s131
      %s146 = sphi 0, %s132
      %s150 = sphi 0, %s150
      %s152 = sphi 0, %s150
      %s153 = sphi 0, %s152
      %s167 = sphi 0, %s153
      %s171 = sphi 0, %s171
      %s173 = sphi 0, %s171
      %s174 = sphi 0, %s173
      %s188 = sphi 0, %s174
      %s192 = sphi 0, %s192
      %s194 = sphi 0, %s192
      %s195 = sphi 0, %s194
      %s209 = sphi 0, %s195
      %s213 = sphi 0, %s213
      %s215 = sphi 0, %s213
      %s216 = sphi 0, %s215
      %s230 = sphi 0, %s216
      %s234 = sphi 0, %s234
      %s236 = sphi 0, %s234
      %s237 = sphi 0, %s236
      %s251 = sphi 0, %s237
      %s255 = sphi 0, %s255
      %s257 = sphi 0, %s255
      %s258 = sphi 0, %s257
      %s272 = sphi 0, %s258
      %s276 = sphi 0, %s276
      %s278 = sphi 0, %s276
      %s279 = sphi 0, %s278
      %s293 = sphi 0, %s279
      %s297 = sphi 0, %s297
      %s299 = sphi 0, %s297
      %s300 = sphi 0, %s299
      %s314 = sphi 0, %s300
      %s320 = sphi 0, %s322
      %s323 = sphi 0, %s320
      %s324 = sphi 0, %s323
      %s340 = sphi 0, %s324
    $region4: #{transformer_encoder_forward.1} parent=1 // loop_header_branch
      %35 = sbr.rel (%p33) target = $region8
    $region5: #{transformer_encoder_forward.1} parent=1 // loop_body
      %s37 = ssub.s32 %s32, 1
      %s38 = ssub.s32 %s32, 2
      %s39 = sadd.s32 %s32, 1
      %s40 = ssub.s32 %s32, %s39
      %p41 = scmp.eq.s32.totalorder %s40, 0
      %s43 = sadd.s32 %s42, 1
      %s44 = scalar_select %p41, %s42, %s43
      %p47 = pneg %p41
      %p48 = scmp.eq.s32.totalorder %s32, 1
      %p49 = por %p47, %p48
      %p50 = scmp.ne.s32.totalorder %s42, %s45
      %p51 = scmp.eq.s32.totalorder %s32, 0
      %p52 = por %p50, %p51
      %p53 = scmp.ne.s32.totalorder %s42, %s45
      %p54 = scmp.eq.s32.totalorder %s37, 1
      %p55 = por %p53, %p54
      %p56 = scmp.ne.s32.totalorder %s45, %s46
      %p57 = scmp.eq.s32.totalorder %s37, 0
      %p58 = por %p56, %p57
      %p59 = scmp.ne.s32.totalorder %s45, %s46
      %p60 = scmp.eq.s32.totalorder %s38, 1
      %p61 = por %p59, %p60
      %p63 = scmp.ne.s32.totalorder %s46, %s62
      %p64 = scmp.eq.s32.totalorder %s38, 0
      %p65 = por %p63, %p64
      %s67 = sadd.s32 %s66, 1
      %p70 = scmp.eq.s32.totalorder %s32, 1
      %p71 = scmp.ne.s32.totalorder %s66, %s68
      %p72 = scmp.eq.s32.totalorder %s32, 0
      %p73 = por %p71, %p72
      %p74 = scmp.ne.s32.totalorder %s66, %s68
      %p75 = scmp.eq.s32.totalorder %s37, 1
      %p76 = por %p74, %p75
      %p77 = scmp.ne.s32.totalorder %s68, %s69
      %p78 = scmp.eq.s32.totalorder %s37, 0
      %p79 = por %p77, %p78
      %p80 = scmp.ne.s32.totalorder %s68, %s69
      %p81 = scmp.eq.s32.totalorder %s38, 1
      %p82 = por %p80, %p81
      %p84 = scmp.ne.s32.totalorder %s69, %s83
      %p85 = scmp.eq.s32.totalorder %s38, 0
      %p86 = por %p84, %p85
      %s88 = sadd.s32 %s87, 1
      %p91 = scmp.eq.s32.totalorder %s32, 1
      %p92 = scmp.ne.s32.totalorder %s87, %s89
      %p93 = scmp.eq.s32.totalorder %s32, 0
      %p94 = por %p92, %p93
      %p95 = scmp.ne.s32.totalorder %s87, %s89
      %p96 = scmp.eq.s32.totalorder %s37, 1
      %p97 = por %p95, %p96
      %p98 = scmp.ne.s32.totalorder %s89, %s90
      %p99 = scmp.eq.s32.totalorder %s37, 0
      %p100 = por %p98, %p99
      %p101 = scmp.ne.s32.totalorder %s89, %s90
      %p102 = scmp.eq.s32.totalorder %s38, 1
      %p103 = por %p101, %p102
      %p105 = scmp.ne.s32.totalorder %s90, %s104
      %p106 = scmp.eq.s32.totalorder %s38, 0
      %p107 = por %p105, %p106
      %s109 = sadd.s32 %s108, 1
      %p112 = scmp.eq.s32.totalorder %s32, 1
      %p113 = scmp.ne.s32.totalorder %s108, %s110
      %p114 = scmp.eq.s32.totalorder %s32, 0
      %p115 = por %p113, %p114
      %p116 = scmp.ne.s32.totalorder %s108, %s110
      %p117 = scmp.eq.s32.totalorder %s37, 1
      %p118 = por %p116, %p117
      %p119 = scmp.ne.s32.totalorder %s110, %s111
      %p120 = scmp.eq.s32.totalorder %s37, 0
      %p121 = por %p119, %p120
      %p122 = scmp.ne.s32.totalorder %s110, %s111
      %p123 = scmp.eq.s32.totalorder %s38, 1
      %p124 = por %p122, %p123
      %p126 = scmp.ne.s32.totalorder %s111, %s125
      %p127 = scmp.eq.s32.totalorder %s38, 0
      %p128 = por %p126, %p127
      %s130 = sadd.s32 %s129, 1
      %p133 = scmp.eq.s32.totalorder %s32, 1
      %p134 = scmp.ne.s32.totalorder %s129, %s131
      %p135 = scmp.eq.s32.totalorder %s32, 0
      %p136 = por %p134, %p135
      %p137 = scmp.ne.s32.totalorder %s129, %s131
      %p138 = scmp.eq.s32.totalorder %s37, 1
      %p139 = por %p137, %p138
      %p140 = scmp.ne.s32.totalorder %s131, %s132
      %p141 = scmp.eq.s32.totalorder %s37, 0
      %p142 = por %p140, %p141
      %p143 = scmp.ne.s32.totalorder %s131, %s132
      %p144 = scmp.eq.s32.totalorder %s38, 1
      %p145 = por %p143, %p144
      %p147 = scmp.ne.s32.totalorder %s132, %s146
      %p148 = scmp.eq.s32.totalorder %s38, 0
      %p149 = por %p147, %p148
      %s151 = sadd.s32 %s150, 1
      %p154 = scmp.eq.s32.totalorder %s32, 1
      %p155 = scmp.ne.s32.totalorder %s150, %s152
      %p156 = scmp.eq.s32.totalorder %s32, 0
      %p157 = por %p155, %p156
      %p158 = scmp.ne.s32.totalorder %s150, %s152
      %p159 = scmp.eq.s32.totalorder %s37, 1
      %p160 = por %p158, %p159
      %p161 = scmp.ne.s32.totalorder %s152, %s153
      %p162 = scmp.eq.s32.totalorder %s37, 0
      %p163 = por %p161, %p162
      %p164 = scmp.ne.s32.totalorder %s152, %s153
      %p165 = scmp.eq.s32.totalorder %s38, 1
      %p166 = por %p164, %p165
      %p168 = scmp.ne.s32.totalorder %s153, %s167
      %p169 = scmp.eq.s32.totalorder %s38, 0
      %p170 = por %p168, %p169
      %s172 = sadd.s32 %s171, 1
      %p175 = scmp.eq.s32.totalorder %s32, 1
      %p176 = scmp.ne.s32.totalorder %s171, %s173
      %p177 = scmp.eq.s32.totalorder %s32, 0
      %p178 = por %p176, %p177
      %p179 = scmp.ne.s32.totalorder %s171, %s173
      %p180 = scmp.eq.s32.totalorder %s37, 1
      %p181 = por %p179, %p180
      %p182 = scmp.ne.s32.totalorder %s173, %s174
      %p183 = scmp.eq.s32.totalorder %s37, 0
      %p184 = por %p182, %p183
      %p185 = scmp.ne.s32.totalorder %s173, %s174
      %p186 = scmp.eq.s32.totalorder %s38, 1
      %p187 = por %p185, %p186
      %p189 = scmp.ne.s32.totalorder %s174, %s188
      %p190 = scmp.eq.s32.totalorder %s38, 0
      %p191 = por %p189, %p190
      %s193 = sadd.s32 %s192, 1
      %p196 = scmp.eq.s32.totalorder %s32, 1
      %p197 = scmp.ne.s32.totalorder %s192, %s194
      %p198 = scmp.eq.s32.totalorder %s32, 0
      %p199 = por %p197, %p198
      %p200 = scmp.ne.s32.totalorder %s192, %s194
      %p201 = scmp.eq.s32.totalorder %s37, 1
      %p202 = por %p200, %p201
      %p203 = scmp.ne.s32.totalorder %s194, %s195
      %p204 = scmp.eq.s32.totalorder %s37, 0
      %p205 = por %p203, %p204
      %p206 = scmp.ne.s32.totalorder %s194, %s195
      %p207 = scmp.eq.s32.totalorder %s38, 1
      %p208 = por %p206, %p207
      %p210 = scmp.ne.s32.totalorder %s195, %s209
      %p211 = scmp.eq.s32.totalorder %s38, 0
      %p212 = por %p210, %p211
      %s214 = sadd.s32 %s213, 1
      %p217 = scmp.eq.s32.totalorder %s32, 1
      %p218 = scmp.ne.s32.totalorder %s213, %s215
      %p219 = scmp.eq.s32.totalorder %s32, 0
      %p220 = por %p218, %p219
      %p221 = scmp.ne.s32.totalorder %s213, %s215
      %p222 = scmp.eq.s32.totalorder %s37, 1
      %p223 = por %p221, %p222
      %p224 = scmp.ne.s32.totalorder %s215, %s216
      %p225 = scmp.eq.s32.totalorder %s37, 0
      %p226 = por %p224, %p225
      %p227 = scmp.ne.s32.totalorder %s215, %s216
      %p228 = scmp.eq.s32.totalorder %s38, 1
      %p229 = por %p227, %p228
      %p231 = scmp.ne.s32.totalorder %s216, %s230
      %p232 = scmp.eq.s32.totalorder %s38, 0
      %p233 = por %p231, %p232
      %s235 = sadd.s32 %s234, 1
      %p238 = scmp.eq.s32.totalorder %s32, 1
      %p239 = scmp.ne.s32.totalorder %s234, %s236
      %p240 = scmp.eq.s32.totalorder %s32, 0
      %p241 = por %p239, %p240
      %p242 = scmp.ne.s32.totalorder %s234, %s236
      %p243 = scmp.eq.s32.totalorder %s37, 1
      %p244 = por %p242, %p243
      %p245 = scmp.ne.s32.totalorder %s236, %s237
      %p246 = scmp.eq.s32.totalorder %s37, 0
      %p247 = por %p245, %p246
      %p248 = scmp.ne.s32.totalorder %s236, %s237
      %p249 = scmp.eq.s32.totalorder %s38, 1
      %p250 = por %p248, %p249
      %p252 = scmp.ne.s32.totalorder %s237, %s251
      %p253 = scmp.eq.s32.totalorder %s38, 0
      %p254 = por %p252, %p253
      %s256 = sadd.s32 %s255, 1
      %p259 = scmp.eq.s32.totalorder %s32, 1
      %p260 = scmp.ne.s32.totalorder %s255, %s257
      %p261 = scmp.eq.s32.totalorder %s32, 0
      %p262 = por %p260, %p261
      %p263 = scmp.ne.s32.totalorder %s255, %s257
      %p264 = scmp.eq.s32.totalorder %s37, 1
      %p265 = por %p263, %p264
      %p266 = scmp.ne.s32.totalorder %s257, %s258
      %p267 = scmp.eq.s32.totalorder %s37, 0
      %p268 = por %p266, %p267
      %p269 = scmp.ne.s32.totalorder %s257, %s258
      %p270 = scmp.eq.s32.totalorder %s38, 1
      %p271 = por %p269, %p270
      %p273 = scmp.ne.s32.totalorder %s258, %s272
      %p274 = scmp.eq.s32.totalorder %s38, 0
      %p275 = por %p273, %p274
      %s277 = sadd.s32 %s276, 1
      %p280 = scmp.eq.s32.totalorder %s32, 1
      %p281 = scmp.ne.s32.totalorder %s276, %s278
      %p282 = scmp.eq.s32.totalorder %s32, 0
      %p283 = por %p281, %p282
      %p284 = scmp.ne.s32.totalorder %s276, %s278
      %p285 = scmp.eq.s32.totalorder %s37, 1
      %p286 = por %p284, %p285
      %p287 = scmp.ne.s32.totalorder %s278, %s279
      %p288 = scmp.eq.s32.totalorder %s37, 0
      %p289 = por %p287, %p288
      %p290 = scmp.ne.s32.totalorder %s278, %s279
      %p291 = scmp.eq.s32.totalorder %s38, 1
      %p292 = por %p290, %p291
      %p294 = scmp.ne.s32.totalorder %s279, %s293
      %p295 = scmp.eq.s32.totalorder %s38, 0
      %p296 = por %p294, %p295
      %s298 = sadd.s32 %s297, 1
      %p301 = scmp.eq.s32.totalorder %s32, 1
      %p302 = scmp.ne.s32.totalorder %s297, %s299
      %p303 = scmp.eq.s32.totalorder %s32, 0
      %p304 = por %p302, %p303
      %p305 = scmp.ne.s32.totalorder %s297, %s299
      %p306 = scmp.eq.s32.totalorder %s37, 1
      %p307 = por %p305, %p306
      %p308 = scmp.ne.s32.totalorder %s299, %s300
      %p309 = scmp.eq.s32.totalorder %s37, 0
      %p310 = por %p308, %p309
      %p311 = scmp.ne.s32.totalorder %s299, %s300
      %p312 = scmp.eq.s32.totalorder %s38, 1
      %p313 = por %p311, %p312
      %p315 = scmp.ne.s32.totalorder %s300, %s314
      %p316 = scmp.eq.s32.totalorder %s38, 0
      %p317 = por %p315, %p316
      %s318 = ssub.s32 %s32, %s39
      %p319 = scmp.eq.s32.totalorder %s318, 0
      %s321 = sadd.s32 %s320, 1
      %s322 = scalar_select %p319, %s320, %s321
      %p325 = pneg %p319
      %p326 = scmp.eq.s32.totalorder %s32, 1
      %p327 = por %p325, %p326
      %p328 = scmp.ne.s32.totalorder %s320, %s323
      %p329 = scmp.eq.s32.totalorder %s32, 0
      %p330 = por %p328, %p329
      %p331 = scmp.ne.s32.totalorder %s320, %s323
      %p332 = scmp.eq.s32.totalorder %s37, 1
      %p333 = por %p331, %p332
      %p334 = scmp.ne.s32.totalorder %s323, %s324
      %p335 = scmp.eq.s32.totalorder %s37, 0
      %p336 = por %p334, %p335
      %p337 = scmp.ne.s32.totalorder %s323, %s324
      %p338 = scmp.eq.s32.totalorder %s38, 1
      %p339 = por %p337, %p338
      %p341 = scmp.ne.s32.totalorder %s324, %s340
      %p342 = scmp.eq.s32.totalorder %s38, 0
      %p343 = por %p341, %p342
      %p344 = scmp.le.s32.totalorder 1, %s32
      %p345 = scmp.lt.s32.totalorder %s32, 3
      %p346 = pnand %p344, %p345
      %p347 = pneg %p346
      // Predicated region
      $region9: #{transformer_encoder_forward.1} parent=5 // pred_check
        _
      $region10: #{transformer_encoder_forward.1} parent=5 // pred_check_branch
        %349 = sbr.rel (%p346) target = $region12
      $region11: #{transformer_encoder_forward.1} parent=5 // pred_region
        %s350 = ssub.s32 %s32, 1
        // Predicated region
        $region13: #{transformer_encoder_forward.1} parent=11 // pred_check
          %p351 = pneg %p79
        $region14: #{transformer_encoder_forward.1} parent=11 // pred_check_branch
          %353 = sbr.rel (%p351) target = $region16
        $region15: #{transformer_encoder_forward.1} parent=11 // pred_region
          _
        $region16: #{transformer_encoder_forward.1} parent=11 // pred_fallthru
          _
        // Predicated region
        $region17: #{transformer_encoder_forward.1} parent=11 // pred_check
          %p354 = pneg %p100
        $region18: #{transformer_encoder_forward.1} parent=11 // pred_check_branch
          %356 = sbr.rel (%p354) target = $region20
        $region19: #{transformer_encoder_forward.1} parent=11 // pred_region
          %s358 = ssub.s32 4096, 4096
          %359 = vsyncadd [#allocation5], %s358
          %s360 = sshll.u32 [#allocation4], 4
          %s361 = int_to_ptr.vmem [resolvable:$true] %s360
          %366 = dma.hbm_to_vmem [thread:$0]  %s3, 4096, %s361, [#allocation5], 128, 128, 8
        $region20: #{transformer_encoder_forward.1} parent=11 // pred_fallthru
          _
        // Predicated region
        $region21: #{transformer_encoder_forward.1} parent=11 // pred_check
          %p367 = pneg %p121
        $region22: #{transformer_encoder_forward.1} parent=11 // pred_check_branch
          %369 = sbr.rel (%p367) target = $region24
        $region23: #{transformer_encoder_forward.1} parent=11 // pred_region
          %s371 = ssub.s32 4096, 4096
          %372 = vsyncadd [#allocation8], %s371
          %s373 = sshll.u32 [#allocation7], 4
          %s374 = int_to_ptr.vmem [resolvable:$true] %s373
          %379 = dma.hbm_to_vmem [thread:$0]  %s4, 4096, %s374, [#allocation8], 128, 128, 8
        $region24: #{transformer_encoder_forward.1} parent=11 // pred_fallthru
          _
        // Predicated region
        $region25: #{transformer_encoder_forward.1} parent=11 // pred_check
          %p380 = pneg %p142
        $region26: #{transformer_encoder_forward.1} parent=11 // pred_check_branch
          %382 = sbr.rel (%p380) target = $region28
        $region27: #{transformer_encoder_forward.1} parent=11 // pred_region
          %s384 = ssub.s32 4096, 4096
          %385 = vsyncadd [#allocation8], %s384
          %s386 = sshll.u32 [#allocation9], 4
          %s387 = int_to_ptr.vmem [resolvable:$true] %s386
          %392 = dma.hbm_to_vmem [thread:$0]  %s5, 4096, %s387, [#allocation8], 128, 128, 8
        $region28: #{transformer_encoder_forward.1} parent=11 // pred_fallthru
          _
        // Predicated region
        $region29: #{transformer_encoder_forward.1} parent=11 // pred_check
          %p393 = pneg %p163
        $region30: #{transformer_encoder_forward.1} parent=11 // pred_check_branch
          %395 = sbr.rel (%p393) target = $region32
        $region31: #{transformer_encoder_forward.1} parent=11 // pred_region
          _
        $region32: #{transformer_encoder_forward.1} parent=11 // pred_fallthru
          _
        // Predicated region
        $region33: #{transformer_encoder_forward.1} parent=11 // pred_check
          %p396 = pneg %p184
        $region34: #{transformer_encoder_forward.1} parent=11 // pred_check_branch
          %398 = sbr.rel (%p396) target = $region36
        $region35: #{transformer_encoder_forward.1} parent=11 // pred_region
          _
        $region36: #{transformer_encoder_forward.1} parent=11 // pred_fallthru
          _
        // Predicated region
        $region37: #{transformer_encoder_forward.1} parent=11 // pred_check
          %p399 = pneg %p205
        $region38: #{transformer_encoder_forward.1} parent=11 // pred_check_branch
          %401 = sbr.rel (%p399) target = $region40
        $region39: #{transformer_encoder_forward.1} parent=11 // pred_region
          _
        $region40: #{transformer_encoder_forward.1} parent=11 // pred_fallthru
          _
        // Predicated region
        $region41: #{transformer_encoder_forward.1} parent=11 // pred_check
          %p402 = pneg %p226
        $region42: #{transformer_encoder_forward.1} parent=11 // pred_check_branch
          %404 = sbr.rel (%p402) target = $region44
        $region43: #{transformer_encoder_forward.1} parent=11 // pred_region
          _
        $region44: #{transformer_encoder_forward.1} parent=11 // pred_fallthru
          _
        // Predicated region
        $region45: #{transformer_encoder_forward.1} parent=11 // pred_check
          %p405 = pneg %p247
        $region46: #{transformer_encoder_forward.1} parent=11 // pred_check_branch
          %407 = sbr.rel (%p405) target = $region48
        $region47: #{transformer_encoder_forward.1} parent=11 // pred_region
          %s409 = ssub.s32 8192, 8192
          %410 = vsyncadd [#allocation11], %s409
          %s411 = sshll.u32 [#allocation10], 4
          %s412 = int_to_ptr.vmem [resolvable:$true] %s411
          %417 = dma.hbm_to_vmem [thread:$0]  %s10, 8192, %s412, [#allocation11], 128, 128, 8
        $region48: #{transformer_encoder_forward.1} parent=11 // pred_fallthru
          _
        // Predicated region
        $region49: #{transformer_encoder_forward.1} parent=11 // pred_check
          %p418 = pneg %p268
        $region50: #{transformer_encoder_forward.1} parent=11 // pred_check_branch
          %420 = sbr.rel (%p418) target = $region52
        $region51: #{transformer_encoder_forward.1} parent=11 // pred_region
          _
        $region52: #{transformer_encoder_forward.1} parent=11 // pred_fallthru
          _
        // Predicated region
        $region53: #{transformer_encoder_forward.1} parent=11 // pred_check
          %p421 = pneg %p289
        $region54: #{transformer_encoder_forward.1} parent=11 // pred_check_branch
          %423 = sbr.rel (%p421) target = $region56
        $region55: #{transformer_encoder_forward.1} parent=11 // pred_region
          _
        $region56: #{transformer_encoder_forward.1} parent=11 // pred_fallthru
          _
        // Predicated region
        $region57: #{transformer_encoder_forward.1} parent=11 // pred_check
          %p424 = pneg %p310
        $region58: #{transformer_encoder_forward.1} parent=11 // pred_check_branch
          %426 = sbr.rel (%p424) target = $region60
        $region59: #{transformer_encoder_forward.1} parent=11 // pred_region
          _
        $region60: #{transformer_encoder_forward.1} parent=11 // pred_fallthru
          _
      $region12: #{transformer_encoder_forward.1} parent=5 // pred_fallthru
        _
      %p427 = scmp.lt.s32.totalorder %s32, 2
      // Predicated region
      $region61: #{transformer_encoder_forward.1} parent=5 // pred_check
        %p428 = pneg %p427
      $region62: #{transformer_encoder_forward.1} parent=5 // pred_check_branch
        %430 = sbr.rel (%p428) target = $region64
      $region63: #{transformer_encoder_forward.1} parent=5 // pred_region
        // Predicated region
        $region65: #{transformer_encoder_forward.1} parent=63 // pred_check
          %p431 = pneg %p52
        $region66: #{transformer_encoder_forward.1} parent=63 // pred_check_branch
          %433 = sbr.rel (%p431) target = $region68
        $region67: #{transformer_encoder_forward.1} parent=63 // pred_region
          %s434 = smul.u32 2, %s32
          %p435 = scmp.lt.s32.totalorder %s434, 3
          %s436 = scalar_select %p435, %s434, 3
          %s437 = smul.addr %s436, 2
          %s438 = smul.addr %s437, 8
          %s439 = scalar_lea.vmem %s1, %s438
          %s440 = smul.u32 2, %s32
        $region68: #{transformer_encoder_forward.1} parent=63 // pred_fallthru
          _
      $region64: #{transformer_encoder_forward.1} parent=5 // pred_fallthru
        _
      %p441 = scmp.le.s32.totalorder 1, %s32
      %p442 = scmp.lt.s32.totalorder %s32, 3
      %p443 = pnand %p441, %p442
      %p444 = pneg %p443
      // Predicated region
      $region69: #{transformer_encoder_forward.1} parent=5 // pred_check
        _
      $region70: #{transformer_encoder_forward.1} parent=5 // pred_check_branch
        %446 = sbr.rel (%p443) target = $region72
      $region71: #{transformer_encoder_forward.1} parent=5 // pred_region
        %s447 = ssub.s32 %s32, 1
        // Predicated region
        $region73: #{transformer_encoder_forward.1} parent=71 // pred_check
          %p448 = pneg %p100
        $region74: #{transformer_encoder_forward.1} parent=71 // pred_check_branch
          %450 = sbr.rel (%p448) target = $region76
        $region75: #{transformer_encoder_forward.1} parent=71 // pred_region
          %451 = dma.done [#allocation5], 4096
        $region76: #{transformer_encoder_forward.1} parent=71 // pred_fallthru
          _
        // Predicated region
        $region77: #{transformer_encoder_forward.1} parent=71 // pred_check
          %p452 = pneg %p121
        $region78: #{transformer_encoder_forward.1} parent=71 // pred_check_branch
          %454 = sbr.rel (%p452) target = $region80
        $region79: #{transformer_encoder_forward.1} parent=71 // pred_region
          %455 = dma.done [#allocation8], 4096
        $region80: #{transformer_encoder_forward.1} parent=71 // pred_fallthru
          _
        // Predicated region
        $region81: #{transformer_encoder_forward.1} parent=71 // pred_check
          %p456 = pneg %p142
        $region82: #{transformer_encoder_forward.1} parent=71 // pred_check_branch
          %458 = sbr.rel (%p456) target = $region84
        $region83: #{transformer_encoder_forward.1} parent=71 // pred_region
          %459 = dma.done [#allocation8], 4096
        $region84: #{transformer_encoder_forward.1} parent=71 // pred_fallthru
          _
        // Predicated region
        $region85: #{transformer_encoder_forward.1} parent=71 // pred_check
          %p460 = pneg %p247
        $region86: #{transformer_encoder_forward.1} parent=71 // pred_check_branch
          %462 = sbr.rel (%p460) target = $region88
        $region87: #{transformer_encoder_forward.1} parent=71 // pred_region
          %463 = dma.done [#allocation11], 8192
        $region88: #{transformer_encoder_forward.1} parent=71 // pred_fallthru
          _
        %s464 = smul.u32 2, %s37
        %p465 = scmp.lt.s32.totalorder %s464, 3
        %s466 = scalar_select %p465, %s464, 3
        %s467 = smul.addr %s466, 2
        %s468 = smul.addr %s467, 8
        %s469 = scalar_lea.vmem %s1, %s468
        %p470 = pneg %p58
        %p471 = pneg %p55
        %p472 = pneg %p79
        %p473 = pneg %p76
        %p474 = pneg %p100
        %p475 = pneg %p97
        %p476 = pneg %p121
        %p477 = pneg %p118
        %p478 = pneg %p142
        %p479 = pneg %p139
        %p480 = pneg %p163
        %p481 = pneg %p160
        %p482 = pneg %p184
        %p483 = pneg %p181
        %p484 = pneg %p205
        %p485 = pneg %p202
        %p486 = pneg %p226
        %p487 = pneg %p223
        %p488 = pneg %p247
        %p489 = pneg %p244
        %p490 = pneg %p268
        %p491 = pneg %p265
        %p492 = pneg %p289
        %p493 = pneg %p286
        %p494 = pneg %p310
        %p495 = pneg %p307
        %p496 = pneg %p336
        %p497 = pneg %p333
        %s498 = sand.u32 %s323, 1
        %s499 = scalar_lea.sflag [#allocation6], %s498
        %s500 = sand.u32 %s323, 1
        %s501 = smul.addr %s500, 32
        %s502 = scalar_lea.vmem [#allocation12], %s501
        %s503 = smul.u32 2, %s37
        %p504 = scmp.lt.s32.totalorder %s503, 3
        %s505 = scalar_select %p504, %s503, 3
        %s506 = smul.addr %s505, 2
        %s507 = smul.addr %s506, 8
        %s508 = scalar_lea.vmem %s1, %s507
        %s509 = smul.u32 2, %s37
        %s510 = smul.u32 2, %s37
        %v511 = vld [vmem:[%s508] sm:$0xff]
        %v512 = vld [vmem:[%s508 + $0x8] sm:$0xff]
        %v513 = vld [vmem:[%s508 + $0x10] sm:$0xff]
        %v514 = vld [vmem:[%s508 + $0x18] sm:$0xff]
        %v515 = vlaneseq
        %v516 = vand.u32 %v515, 127
        %v517 = vld [vmem:[%s2] sm:$0xff]
        %v518 = vld [vmem:[%s2 + $0x8] sm:$0xff]
        %v519 = vld [vmem:[%s2 + $0x10] sm:$0xff]
        %v520 = vld [vmem:[%s2 + $0x18] sm:$0xff]
        %v521 = vld [vmem:[%s2 + $0x20] sm:$0xff]
        %v522 = vld [vmem:[%s2 + $0x28] sm:$0xff]
        %v523 = vld [vmem:[%s2 + $0x30] sm:$0xff]
        %v524 = vld [vmem:[%s2 + $0x38] sm:$0xff]
        %v525 = vld [vmem:[%s2 + $0x40] sm:$0xff]
        %v526 = vld [vmem:[%s2 + $0x48] sm:$0xff]
        %v527 = vld [vmem:[%s2 + $0x50] sm:$0xff]
        %v528 = vld [vmem:[%s2 + $0x58] sm:$0xff]
        %v529 = vld [vmem:[%s2 + $0x60] sm:$0xff]
        %v530 = vld [vmem:[%s2 + $0x68] sm:$0xff]
        %v531 = vld [vmem:[%s2 + $0x70] sm:$0xff]
        %v532 = vld [vmem:[%s2 + $0x78] sm:$0xff]
        %v533 = vld [vmem:[#allocation4] sm:$0xff]
        %v534 = vld [vmem:[#allocation4 + $0x8] sm:$0xff]
        %v535 = vld [vmem:[#allocation4 + $0x10] sm:$0xff]
        %v536 = vld [vmem:[#allocation4 + $0x18] sm:$0xff]
        %v537 = vld [vmem:[#allocation4 + $0x20] sm:$0xff]
        %v538 = vld [vmem:[#allocation4 + $0x28] sm:$0xff]
        %v539 = vld [vmem:[#allocation4 + $0x30] sm:$0xff]
        %v540 = vld [vmem:[#allocation4 + $0x38] sm:$0xff]
        %v541 = vld [vmem:[#allocation4 + $0x40] sm:$0xff]
        %v542 = vld [vmem:[#allocation4 + $0x48] sm:$0xff]
        %v543 = vld [vmem:[#allocation4 + $0x50] sm:$0xff]
        %v544 = vld [vmem:[#allocation4 + $0x58] sm:$0xff]
        %v545 = vld [vmem:[#allocation4 + $0x60] sm:$0xff]
        %v546 = vld [vmem:[#allocation4 + $0x68] sm:$0xff]
        %v547 = vld [vmem:[#allocation4 + $0x70] sm:$0xff]
        %v548 = vld [vmem:[#allocation4 + $0x78] sm:$0xff]
        %v549 = vld [vmem:[#allocation7] sm:$0xff]
        %v550 = vld [vmem:[#allocation7 + $0x8] sm:$0xff]
        %v551 = vld [vmem:[#allocation7 + $0x10] sm:$0xff]
        %v552 = vld [vmem:[#allocation7 + $0x18] sm:$0xff]
        %v553 = vld [vmem:[#allocation7 + $0x20] sm:$0xff]
        %v554 = vld [vmem:[#allocation7 + $0x28] sm:$0xff]
        %v555 = vld [vmem:[#allocation7 + $0x30] sm:$0xff]
        %v556 = vld [vmem:[#allocation7 + $0x38] sm:$0xff]
        %v557 = vld [vmem:[#allocation7 + $0x40] sm:$0xff]
        %v558 = vld [vmem:[#allocation7 + $0x48] sm:$0xff]
        %v559 = vld [vmem:[#allocation7 + $0x50] sm:$0xff]
        %v560 = vld [vmem:[#allocation7 + $0x58] sm:$0xff]
        %v561 = vld [vmem:[#allocation7 + $0x60] sm:$0xff]
        %v562 = vld [vmem:[#allocation7 + $0x68] sm:$0xff]
        %v563 = vld [vmem:[#allocation7 + $0x70] sm:$0xff]
        %v564 = vld [vmem:[#allocation7 + $0x78] sm:$0xff]
        %v565 = vld [vmem:[#allocation9] sm:$0xff]
        %v566 = vld [vmem:[#allocation9 + $0x8] sm:$0xff]
        %v567 = vld [vmem:[#allocation9 + $0x10] sm:$0xff]
        %v568 = vld [vmem:[#allocation9 + $0x18] sm:$0xff]
        %v569 = vld [vmem:[#allocation9 + $0x20] sm:$0xff]
        %v570 = vld [vmem:[#allocation9 + $0x28] sm:$0xff]
        %v571 = vld [vmem:[#allocation9 + $0x30] sm:$0xff]
        %v572 = vld [vmem:[#allocation9 + $0x38] sm:$0xff]
        %v573 = vld [vmem:[#allocation9 + $0x40] sm:$0xff]
        %v574 = vld [vmem:[#allocation9 + $0x48] sm:$0xff]
        %v575 = vld [vmem:[#allocation9 + $0x50] sm:$0xff]
        %v576 = vld [vmem:[#allocation9 + $0x58] sm:$0xff]
        %v577 = vld [vmem:[#allocation9 + $0x60] sm:$0xff]
        %v578 = vld [vmem:[#allocation9 + $0x68] sm:$0xff]
        %v579 = vld [vmem:[#allocation9 + $0x70] sm:$0xff]
        %v580 = vld [vmem:[#allocation9 + $0x78] sm:$0xff]
        %581 = vmatprep.subr.mxu0 0.0
        %582 = vmatpush1.msra.mxu0 %v517
        %583 = vmatprep.subr.mxu0 0.0
        %584 = vmatpush1.msra.mxu0 %v518
        %585 = vmatprep.subr.mxu0 0.0
        %586 = vmatpush1.msra.mxu0 %v519
        %587 = vmatprep.subr.mxu0 0.0
        %588 = vmatpush1.msra.mxu0 %v520
        %589 = vmatprep.subr.mxu0 0.0
        %590 = vmatpush1.msra.mxu0 %v521
        %591 = vmatprep.subr.mxu0 0.0
        %592 = vmatpush1.msra.mxu0 %v522
        %593 = vmatprep.subr.mxu0 0.0
        %594 = vmatpush1.msra.mxu0 %v523
        %595 = vmatprep.subr.mxu0 0.0
        %596 = vmatpush1.msra.mxu0 %v524
        %597 = vmatprep.subr.mxu0 0.0
        %598 = vmatpush1.msra.mxu0 %v525
        %599 = vmatprep.subr.mxu0 0.0
        %600 = vmatpush1.msra.mxu0 %v526
        %601 = vmatprep.subr.mxu0 0.0
        %602 = vmatpush1.msra.mxu0 %v527
        %603 = vmatprep.subr.mxu0 0.0
        %604 = vmatpush1.msra.mxu0 %v528
        %605 = vmatprep.subr.mxu0 0.0
        %606 = vmatpush1.msra.mxu0 %v529
        %607 = vmatprep.subr.mxu0 0.0
        %608 = vmatpush1.msra.mxu0 %v530
        %609 = vmatprep.subr.mxu0 0.0
        %610 = vmatpush1.msra.mxu0 %v531
        %611 = vmatprep.subr.mxu0 0.0
        %612 = vmatpush1.msra.mxu0 %v532
        %613 = vmatprep.subr.mxu0 0.0
        %614 = vmatpush1.msra.mxu0 0.0
        %615 = vmatprep.subr.mxu0 0.0
        %616 = vmatpush1.msra.mxu0 0.0
        %617 = vmatprep.subr.mxu0 0.0
        %618 = vmatpush1.msra.mxu0 0.0
        %619 = vmatprep.subr.mxu0 0.0
        %620 = vmatpush1.msra.mxu0 0.0
        %621 = vmatprep.subr.mxu0 0.0
        %622 = vmatpush1.msra.mxu0 0.0
        %623 = vmatprep.subr.mxu0 0.0
        %624 = vmatpush1.msra.mxu0 0.0
        %625 = vmatprep.subr.mxu0 0.0
        %626 = vmatpush1.msra.mxu0 0.0
        %627 = vmatprep.subr.mxu0 0.0
        %628 = vmatpush1.msra.mxu0 0.0
        %629 = vmatprep.subr.mxu0 0.0
        %630 = vmatpush1.msra.mxu0 0.0
        %631 = vmatprep.subr.mxu0 0.0
        %632 = vmatpush1.msra.mxu0 0.0
        %633 = vmatprep.subr.mxu0 0.0
        %634 = vmatpush1.msra.mxu0 0.0
        %635 = vmatprep.subr.mxu0 0.0
        %636 = vmatpush1.msra.mxu0 0.0
        %637 = vmatprep.subr.mxu0 0.0
        %638 = vmatpush1.msra.mxu0 0.0
        %639 = vmatprep.subr.mxu0 0.0
        %640 = vmatpush1.msra.mxu0 0.0
        %641 = vmatprep.subr.mxu0 0.0
        %642 = vmatpush1.msra.mxu0 0.0
        %643 = vmatprep.subr.mxu0 0.0
        %644 = vmatpush1.msra.mxu0 0.0
        %645 = vmatprep.mubr.f32.mxu0 0.0
        %646 = vmatmul.mubr.f32.gmra.mrb[0].mxu0 %v511
        %v647 = vpop.f32.mrb[0].mxu0
        %v648 = vadd.f32 0.0, %v647
        %v649 = vpop.f32.mrb[0].mxu0
        %650 = vmatprep.mubr.f32.mxu0 0.0
        %651 = vmatmul.mubr.f32.gmra.mrb[0].mxu0 %v512
        %v652 = vpop.f32.mrb[0].mxu0
        %v653 = vadd.f32 0.0, %v652
        %v654 = vpop.f32.mrb[0].mxu0
        %655 = vmatprep.mubr.f32.mxu0 0.0
        %656 = vmatmul.mubr.f32.gmra.mrb[0].mxu0 %v513
        %v657 = vpop.f32.mrb[0].mxu0
        %v658 = vadd.f32 0.0, %v657
        %v659 = vpop.f32.mrb[0].mxu0
        %660 = vmatprep.mubr.f32.mxu0 0.0
        %661 = vmatmul.mubr.f32.gmra.mrb[0].mxu0 %v514
        %v662 = vpop.f32.mrb[0].mxu0
        %v663 = vadd.f32 0.0, %v662
        %v664 = vpop.f32.mrb[0].mxu0
        %665 = vdwg.mxu0
        %666 = vmatprep.subr.mxu0 0.0
        %667 = vmatpush1.msra.mxu0 %v533
        %668 = vmatprep.subr.mxu0 0.0
        %669 = vmatpush1.msra.mxu0 %v534
        %670 = vmatprep.subr.mxu0 0.0
        %671 = vmatpush1.msra.mxu0 %v535
        %672 = vmatprep.subr.mxu0 0.0
        %673 = vmatpush1.msra.mxu0 %v536
        %674 = vmatprep.subr.mxu0 0.0
        %675 = vmatpush1.msra.mxu0 %v537
        %676 = vmatprep.subr.mxu0 0.0
        %677 = vmatpush1.msra.mxu0 %v538
        %678 = vmatprep.subr.mxu0 0.0
        %679 = vmatpush1.msra.mxu0 %v539
        %680 = vmatprep.subr.mxu0 0.0
        %681 = vmatpush1.msra.mxu0 %v540
        %682 = vmatprep.subr.mxu0 0.0
        %683 = vmatpush1.msra.mxu0 %v541
        %684 = vmatprep.subr.mxu0 0.0
        %685 = vmatpush1.msra.mxu0 %v542
        %686 = vmatprep.subr.mxu0 0.0
        %687 = vmatpush1.msra.mxu0 %v543
        %688 = vmatprep.subr.mxu0 0.0
        %689 = vmatpush1.msra.mxu0 %v544
        %690 = vmatprep.subr.mxu0 0.0
        %691 = vmatpush1.msra.mxu0 %v545
        %692 = vmatprep.subr.mxu0 0.0
        %693 = vmatpush1.msra.mxu0 %v546
        %694 = vmatprep.subr.mxu0 0.0
        %695 = vmatpush1.msra.mxu0 %v547
        %696 = vmatprep.subr.mxu0 0.0
        %697 = vmatpush1.msra.mxu0 %v548
        %698 = vmatprep.subr.mxu0 0.0
        %699 = vmatpush1.msra.mxu0 0.0
        %700 = vmatprep.subr.mxu0 0.0
        %701 = vmatpush1.msra.mxu0 0.0
        %702 = vmatprep.subr.mxu0 0.0
        %703 = vmatpush1.msra.mxu0 0.0
        %704 = vmatprep.subr.mxu0 0.0
        %705 = vmatpush1.msra.mxu0 0.0
        %706 = vmatprep.subr.mxu0 0.0
        %707 = vmatpush1.msra.mxu0 0.0
        %708 = vmatprep.subr.mxu0 0.0
        %709 = vmatpush1.msra.mxu0 0.0
        %710 = vmatprep.subr.mxu0 0.0
        %711 = vmatpush1.msra.mxu0 0.0
        %712 = vmatprep.subr.mxu0 0.0
        %713 = vmatpush1.msra.mxu0 0.0
        %714 = vmatprep.subr.mxu0 0.0
        %715 = vmatpush1.msra.mxu0 0.0
        %716 = vmatprep.subr.mxu0 0.0
        %717 = vmatpush1.msra.mxu0 0.0
        %718 = vmatprep.subr.mxu0 0.0
        %719 = vmatpush1.msra.mxu0 0.0
        %720 = vmatprep.subr.mxu0 0.0
        %721 = vmatpush1.msra.mxu0 0.0
        %722 = vmatprep.subr.mxu0 0.0
        %723 = vmatpush1.msra.mxu0 0.0
        %724 = vmatprep.subr.mxu0 0.0
        %725 = vmatpush1.msra.mxu0 0.0
        %726 = vmatprep.subr.mxu0 0.0
        %727 = vmatpush1.msra.mxu0 0.0
        %728 = vmatprep.subr.mxu0 0.0
        %729 = vmatpush1.msra.mxu0 0.0
        %730 = vmatprep.mubr.f32.mxu0 0.0
        %731 = vmatmul.mubr.f32.gmra.mrb[0].mxu0 %v511
        %v732 = vpop.f32.mrb[0].mxu0
        %v733 = vadd.f32 0.0, %v732
        %v734 = vpop.f32.mrb[0].mxu0
        %735 = vmatprep.mubr.f32.mxu0 0.0
        %736 = vmatmul.mubr.f32.gmra.mrb[0].mxu0 %v512
        %v737 = vpop.f32.mrb[0].mxu0
        %v738 = vadd.f32 0.0, %v737
        %v739 = vpop.f32.mrb[0].mxu0
        %740 = vmatprep.mubr.f32.mxu0 0.0
        %741 = vmatmul.mubr.f32.gmra.mrb[0].mxu0 %v513
        %v742 = vpop.f32.mrb[0].mxu0
        %v743 = vadd.f32 0.0, %v742
        %v744 = vpop.f32.mrb[0].mxu0
        %745 = vmatprep.mubr.f32.mxu0 0.0
        %746 = vmatmul.mubr.f32.gmra.mrb[0].mxu0 %v514
        %v747 = vpop.f32.mrb[0].mxu0
        %v748 = vadd.f32 0.0, %v747
        %v749 = vpop.f32.mrb[0].mxu0
        %750 = vdwg.mxu0
        %751 = vmatprep.subr.mxu0 0.0
        %752 = vmatpush1.msra.mxu0 %v549
        %753 = vmatprep.subr.mxu0 0.0
        %754 = vmatpush1.msra.mxu0 %v550
        %755 = vmatprep.subr.mxu0 0.0
        %756 = vmatpush1.msra.mxu0 %v551
        %757 = vmatprep.subr.mxu0 0.0
        %758 = vmatpush1.msra.mxu0 %v552
        %759 = vmatprep.subr.mxu0 0.0
        %760 = vmatpush1.msra.mxu0 %v553
        %761 = vmatprep.subr.mxu0 0.0
        %762 = vmatpush1.msra.mxu0 %v554
        %763 = vmatprep.subr.mxu0 0.0
        %764 = vmatpush1.msra.mxu0 %v555
        %765 = vmatprep.subr.mxu0 0.0
        %766 = vmatpush1.msra.mxu0 %v556
        %767 = vmatprep.subr.mxu0 0.0
        %768 = vmatpush1.msra.mxu0 %v557
        %769 = vmatprep.subr.mxu0 0.0
        %770 = vmatpush1.msra.mxu0 %v558
        %771 = vmatprep.subr.mxu0 0.0
        %772 = vmatpush1.msra.mxu0 %v559
        %773 = vmatprep.subr.mxu0 0.0
        %774 = vmatpush1.msra.mxu0 %v560
        %775 = vmatprep.subr.mxu0 0.0
        %776 = vmatpush1.msra.mxu0 %v561
        %777 = vmatprep.subr.mxu0 0.0
        %778 = vmatpush1.msra.mxu0 %v562
        %779 = vmatprep.subr.mxu0 0.0
        %780 = vmatpush1.msra.mxu0 %v563
        %781 = vmatprep.subr.mxu0 0.0
        %782 = vmatpush1.msra.mxu0 %v564
        %783 = vmatprep.subr.mxu0 0.0
        %784 = vmatpush1.msra.mxu0 0.0
        %785 = vmatprep.subr.mxu0 0.0
        %786 = vmatpush1.msra.mxu0 0.0
        %787 = vmatprep.subr.mxu0 0.0
        %788 = vmatpush1.msra.mxu0 0.0
        %789 = vmatprep.subr.mxu0 0.0
        %790 = vmatpush1.msra.mxu0 0.0
        %791 = vmatprep.subr.mxu0 0.0
        %792 = vmatpush1.msra.mxu0 0.0
        %793 = vmatprep.subr.mxu0 0.0
        %794 = vmatpush1.msra.mxu0 0.0
        %795 = vmatprep.subr.mxu0 0.0
        %796 = vmatpush1.msra.mxu0 0.0
        %797 = vmatprep.subr.mxu0 0.0
        %798 = vmatpush1.msra.mxu0 0.0
        %799 = vmatprep.subr.mxu0 0.0
        %800 = vmatpush1.msra.mxu0 0.0
        %801 = vmatprep.subr.mxu0 0.0
        %802 = vmatpush1.msra.mxu0 0.0
        %803 = vmatprep.subr.mxu0 0.0
        %804 = vmatpush1.msra.mxu0 0.0
        %805 = vmatprep.subr.mxu0 0.0
        %806 = vmatpush1.msra.mxu0 0.0
        %807 = vmatprep.subr.mxu0 0.0
        %808 = vmatpush1.msra.mxu0 0.0
        %809 = vmatprep.subr.mxu0 0.0
        %810 = vmatpush1.msra.mxu0 0.0
        %811 = vmatprep.subr.mxu0 0.0
        %812 = vmatpush1.msra.mxu0 0.0
        %813 = vmatprep.subr.mxu0 0.0
        %814 = vmatpush1.msra.mxu0 0.0
        %815 = vmatprep.mubr.f32.mxu0 0.0
        %816 = vmatmul.mubr.f32.gmra.mrb[0].mxu0 %v511
        %v817 = vpop.f32.mrb[0].mxu0
        %v818 = vadd.f32 0.0, %v817
        %v819 = vpop.f32.mrb[0].mxu0
        %820 = vmatprep.mubr.f32.mxu0 0.0
        %821 = vmatmul.mubr.f32.gmra.mrb[0].mxu0 %v512
        %v822 = vpop.f32.mrb[0].mxu0
        %v823 = vadd.f32 0.0, %v822
        %v824 = vpop.f32.mrb[0].mxu0
        %825 = vmatprep.mubr.f32.mxu0 0.0
        %826 = vmatmul.mubr.f32.gmra.mrb[0].mxu0 %v513
        %v827 = vpop.f32.mrb[0].mxu0
        %v828 = vadd.f32 0.0, %v827
        %v829 = vpop.f32.mrb[0].mxu0
        %830 = vmatprep.mubr.f32.mxu0 0.0
        %831 = vmatmul.mubr.f32.gmra.mrb[0].mxu0 %v514
        %v832 = vpop.f32.mrb[0].mxu0
        %v833 = vadd.f32 0.0, %v832
        %v834 = vpop.f32.mrb[0].mxu0
        %835 = vdwg.mxu0
        %s836 = smul.u32 %s37, 2
        %s837 = sld [smem:[#allocation3 + %s836]]
        %v838 = vstv %s837
        %vm839 = vcmp.lt.s32.totalorder %v516, %v838
        %vm840 = vcmask 261120
        %v842 = vsel %vm840, %v648, 0
        %v845 = vsel %vm840, %v653, 0
        %v848 = vsel %vm840, %v733, 0
        %v851 = vsel %vm840, %v738, 0
        %853 = vmatprep.subr.mxu0 0.0
        %854 = vmatpush1.xpose.msra.mxu0 %v848
        %855 = vmatprep.subr.mxu0 0.0
        %856 = vmatpush1.xpose.msra.mxu0 %v851
        %857 = vmatprep.subr.mxu0 0.0
        %858 = vmatpush1.xpose.msra.mxu0 0.0
        %859 = vmatprep.subr.mxu0 0.0
        %860 = vmatpush1.xpose.msra.mxu0 0.0
        %861 = vmatprep.subr.mxu0 0.0
        %862 = vmatpush1.xpose.msra.mxu0 0.0
        %863 = vmatprep.subr.mxu0 0.0
        %864 = vmatpush1.xpose.msra.mxu0 0.0
        %865 = vmatprep.subr.mxu0 0.0
        %866 = vmatpush1.xpose.msra.mxu0 0.0
        %867 = vmatprep.subr.mxu0 0.0
        %868 = vmatpush1.xpose.msra.mxu0 0.0
        %869 = vmatprep.subr.mxu0 0.0
        %870 = vmatpush1.xpose.msra.mxu0 0.0
        %871 = vmatprep.subr.mxu0 0.0
        %872 = vmatpush1.xpose.msra.mxu0 0.0
        %873 = vmatprep.subr.mxu0 0.0
        %874 = vmatpush1.xpose.msra.mxu0 0.0
        %875 = vmatprep.subr.mxu0 0.0
        %876 = vmatpush1.xpose.msra.mxu0 0.0
        %877 = vmatprep.subr.mxu0 0.0
        %878 = vmatpush1.xpose.msra.mxu0 0.0
        %879 = vmatprep.subr.mxu0 0.0
        %880 = vmatpush1.xpose.msra.mxu0 0.0
        %881 = vmatprep.subr.mxu0 0.0
        %882 = vmatpush1.xpose.msra.mxu0 0.0
        %883 = vmatprep.subr.mxu0 0.0
        %884 = vmatpush1.xpose.msra.mxu0 0.0
        %885 = vmatprep.subr.mxu0 0.0
        %886 = vmatpush1.xpose.msra.mxu0 0.0
        %887 = vmatprep.subr.mxu0 0.0
        %888 = vmatpush1.xpose.msra.mxu0 0.0
        %889 = vmatprep.subr.mxu0 0.0
        %890 = vmatpush1.xpose.msra.mxu0 0.0
        %891 = vmatprep.subr.mxu0 0.0
        %892 = vmatpush1.xpose.msra.mxu0 0.0
        %893 = vmatprep.subr.mxu0 0.0
        %894 = vmatpush1.xpose.msra.mxu0 0.0
        %895 = vmatprep.subr.mxu0 0.0
        %896 = vmatpush1.xpose.msra.mxu0 0.0
        %897 = vmatprep.subr.mxu0 0.0
        %898 = vmatpush1.xpose.msra.mxu0 0.0
        %899 = vmatprep.subr.mxu0 0.0
        %900 = vmatpush1.xpose.msra.mxu0 0.0
        %901 = vmatprep.subr.mxu0 0.0
        %902 = vmatpush1.xpose.msra.mxu0 0.0
        %903 = vmatprep.subr.mxu0 0.0
        %904 = vmatpush1.xpose.msra.mxu0 0.0
        %905 = vmatprep.subr.mxu0 0.0
        %906 = vmatpush1.xpose.msra.mxu0 0.0
        %907 = vmatprep.subr.mxu0 0.0
        %908 = vmatpush1.xpose.msra.mxu0 0.0
        %909 = vmatprep.subr.mxu0 0.0
        %910 = vmatpush1.xpose.msra.mxu0 0.0
        %911 = vmatprep.subr.mxu0 0.0
        %912 = vmatpush1.xpose.msra.mxu0 0.0
        %913 = vmatprep.subr.mxu0 0.0
        %914 = vmatpush1.xpose.msra.mxu0 0.0
        %915 = vmatprep.subr.mxu0 0.0
        %916 = vmatpush1.xpose.msra.mxu0 0.0
        %917 = vmatprep.mubr.f32.mxu0 0.0
        %918 = vmatmul.mubr.f32.gmra.mrb[0].mxu0 %v842
        %v919 = vpop.f32.mrb[0].mxu0
        %v920 = vadd.f32 0.0, %v919
        %v921 = vpop.f32.mrb[0].mxu0
        %922 = vmatprep.mubr.f32.mxu0 0.0
        %923 = vmatmul.mubr.f32.gmra.mrb[0].mxu0 %v845
        %v924 = vpop.f32.mrb[0].mxu0
        %v925 = vadd.f32 0.0, %v924
        %v926 = vpop.f32.mrb[0].mxu0
        %927 = vdwg.mxu0
        %v928 = vmul.f32 %v920, 0.17677669
        %v929 = vmul.f32 %v925, 0.17677669
        %v930 = vsel %vm839, %v928, -1000000.0
        %v931 = vsel %vm839, %v929, -1000000.0
        %vm932 = vcmask 130048
        %v933 = vsel %vm932, %v930, -inf
        %934 = vmax.xlane.f32.xlu0 %v933
        %v935 = vpop.xlane.xlu0 %934
        %v936 = vsel %vm932, %v931, -inf
        %937 = vmax.xlane.f32.xlu0 %v936
        %v938 = vpop.xlane.xlu0 %937
        %v939 = vsub.f32 %v930, %v935
        %v940 = vsub.f32 %v931, %v938
        %v941 = vmul.f32 %v939, 1.442695
        %v942 = vpow.pop %v941
        %v943 = vmul.f32 %v940, 1.442695
        %v944 = vpow.pop %v943
        %v945 = vsel %vm932, %v942, 0.0
        %946 = vadd.xlane.f32.xlu0 %v945
        %v947 = vpop.xlane.xlu0 %946
        %v948 = vsel %vm932, %v944, 0.0
        %949 = vadd.xlane.f32.xlu0 %v948
        %v950 = vpop.xlane.xlu0 %949
        %v951 = vrcp.pop %v947
        %v952 = vrcp.pop %v950
        %v953 = vmul.f32 %v942, %v951
        %v954 = vmul.f32 %v944, %v952
        %v956 = vsel %vm932, %v953, 0
        %v959 = vsel %vm932, %v954, 0
        %961 = vmatprep.subr.mxu0 0.0
        %962 = vmatpush1.msra.mxu0 %v818
        %963 = vmatprep.subr.mxu0 0.0
        %964 = vmatpush1.msra.mxu0 %v823
        %965 = vmatprep.subr.mxu0 0.0
        %966 = vmatpush1.msra.mxu0 0.0
        %967 = vmatprep.subr.mxu0 0.0
        %968 = vmatpush1.msra.mxu0 0.0
        %969 = vmatprep.subr.mxu0 0.0
        %970 = vmatpush1.msra.mxu0 0.0
        %971 = vmatprep.subr.mxu0 0.0
        %972 = vmatpush1.msra.mxu0 0.0
        %973 = vmatprep.subr.mxu0 0.0
        %974 = vmatpush1.msra.mxu0 0.0
        %975 = vmatprep.subr.mxu0 0.0
        %976 = vmatpush1.msra.mxu0 0.0
        %977 = vmatprep.subr.mxu0 0.0
        %978 = vmatpush1.msra.mxu0 0.0
        %979 = vmatprep.subr.mxu0 0.0
        %980 = vmatpush1.msra.mxu0 0.0
        %981 = vmatprep.subr.mxu0 0.0
        %982 = vmatpush1.msra.mxu0 0.0
        %983 = vmatprep.subr.mxu0 0.0
        %984 = vmatpush1.msra.mxu0 0.0
        %985 = vmatprep.subr.mxu0 0.0
        %986 = vmatpush1.msra.mxu0 0.0
        %987 = vmatprep.subr.mxu0 0.0
        %988 = vmatpush1.msra.mxu0 0.0
        %989 = vmatprep.subr.mxu0 0.0
        %990 = vmatpush1.msra.mxu0 0.0
        %991 = vmatprep.subr.mxu0 0.0
        %992 = vmatpush1.msra.mxu0 0.0
        %993 = vmatprep.subr.mxu0 0.0
        %994 = vmatpush1.msra.mxu0 0.0
        %995 = vmatprep.subr.mxu0 0.0
        %996 = vmatpush1.msra.mxu0 0.0
        %997 = vmatprep.subr.mxu0 0.0
        %998 = vmatpush1.msra.mxu0 0.0
        %999 = vmatprep.subr.mxu0 0.0
        %1000 = vmatpush1.msra.mxu0 0.0
        %1001 = vmatprep.subr.mxu0 0.0
        %1002 = vmatpush1.msra.mxu0 0.0
        %1003 = vmatprep.subr.mxu0 0.0
        %1004 = vmatpush1.msra.mxu0 0.0
        %1005 = vmatprep.subr.mxu0 0.0
        %1006 = vmatpush1.msra.mxu0 0.0
        %1007 = vmatprep.subr.mxu0 0.0
        %1008 = vmatpush1.msra.mxu0 0.0
        %1009 = vmatprep.subr.mxu0 0.0
        %1010 = vmatpush1.msra.mxu0 0.0
        %1011 = vmatprep.subr.mxu0 0.0
        %1012 = vmatpush1.msra.mxu0 0.0
        %1013 = vmatprep.subr.mxu0 0.0
        %1014 = vmatpush1.msra.mxu0 0.0
        %1015 = vmatprep.subr.mxu0 0.0
        %1016 = vmatpush1.msra.mxu0 0.0
        %1017 = vmatprep.subr.mxu0 0.0
        %1018 = vmatpush1.msra.mxu0 0.0
        %1019 = vmatprep.subr.mxu0 0.0
        %1020 = vmatpush1.msra.mxu0 0.0
        %1021 = vmatprep.subr.mxu0 0.0
        %1022 = vmatpush1.msra.mxu0 0.0
        %1023 = vmatprep.subr.mxu0 0.0
        %1024 = vmatpush1.msra.mxu0 0.0
        %1025 = vmatprep.mubr.f32.mxu0 0.0
        %1026 = vmatmul.mubr.f32.gmra.mrb[0].mxu0 %v956
        %v1027 = vpop.f32.mrb[0].mxu0
        %v1028 = vadd.f32 0.0, %v1027
        %v1029 = vpop.f32.mrb[0].mxu0
        %1030 = vmatprep.mubr.f32.mxu0 0.0
        %1031 = vmatmul.mubr.f32.gmra.mrb[0].mxu0 %v959
        %v1032 = vpop.f32.mrb[0].mxu0
        %v1033 = vadd.f32 0.0, %v1032
        %v1034 = vpop.f32.mrb[0].mxu0
        %1035 = vdwg.mxu0
        %1036 = vrot.lane.b32.xlu0 %v648, 96
        %v1037 = vpop.permute.xlu0 %1036
        %1038 = vrot.lane.b32.xlu0 %v653, 96
        %v1039 = vpop.permute.xlu0 %1038
        %1040 = vrot.lane.b32.xlu0 %v733, 96
        %v1041 = vpop.permute.xlu0 %1040
        %1042 = vrot.lane.b32.xlu0 %v738, 96
        %v1043 = vpop.permute.xlu0 %1042
        %v1044 = vsel %vm840, %v1037, 0
        %v1046 = vsel %vm840, %v1039, 0
        %v1048 = vsel %vm840, %v1041, 0
        %v1050 = vsel %vm840, %v1043, 0
        %1052 = vmatprep.subr.mxu0 0.0
        %1053 = vmatpush1.xpose.msra.mxu0 %v1048
        %1054 = vmatprep.subr.mxu0 0.0
        %1055 = vmatpush1.xpose.msra.mxu0 %v1050
        %1056 = vmatprep.subr.mxu0 0.0
        %1057 = vmatpush1.xpose.msra.mxu0 0.0
        %1058 = vmatprep.subr.mxu0 0.0
        %1059 = vmatpush1.xpose.msra.mxu0 0.0
        %1060 = vmatprep.subr.mxu0 0.0
        %1061 = vmatpush1.xpose.msra.mxu0 0.0
        %1062 = vmatprep.subr.mxu0 0.0
        %1063 = vmatpush1.xpose.msra.mxu0 0.0
        %1064 = vmatprep.subr.mxu0 0.0
        %1065 = vmatpush1.xpose.msra.mxu0 0.0
        %1066 = vmatprep.subr.mxu0 0.0
        %1067 = vmatpush1.xpose.msra.mxu0 0.0
        %1068 = vmatprep.subr.mxu0 0.0
        %1069 = vmatpush1.xpose.msra.mxu0 0.0
        %1070 = vmatprep.subr.mxu0 0.0
        %1071 = vmatpush1.xpose.msra.mxu0 0.0
        %1072 = vmatprep.subr.mxu0 0.0
        %1073 = vmatpush1.xpose.msra.mxu0 0.0
        %1074 = vmatprep.subr.mxu0 0.0
        %1075 = vmatpush1.xpose.msra.mxu0 0.0
        %1076 = vmatprep.subr.mxu0 0.0
        %1077 = vmatpush1.xpose.msra.mxu0 0.0
        %1078 = vmatprep.subr.mxu0 0.0
        %1079 = vmatpush1.xpose.msra.mxu0 0.0
        %1080 = vmatprep.subr.mxu0 0.0
        %1081 = vmatpush1.xpose.msra.mxu0 0.0
        %1082 = vmatprep.subr.mxu0 0.0
        %1083 = vmatpush1.xpose.msra.mxu0 0.0
        %1084 = vmatprep.subr.mxu0 0.0
        %1085 = vmatpush1.xpose.msra.mxu0 0.0
        %1086 = vmatprep.subr.mxu0 0.0
        %1087 = vmatpush1.xpose.msra.mxu0 0.0
        %1088 = vmatprep.subr.mxu0 0.0
        %1089 = vmatpush1.xpose.msra.mxu0 0.0
        %1090 = vmatprep.subr.mxu0 0.0
        %1091 = vmatpush1.xpose.msra.mxu0 0.0
        %1092 = vmatprep.subr.mxu0 0.0
        %1093 = vmatpush1.xpose.msra.mxu0 0.0
        %1094 = vmatprep.subr.mxu0 0.0
        %1095 = vmatpush1.xpose.msra.mxu0 0.0
        %1096 = vmatprep.subr.mxu0 0.0
        %1097 = vmatpush1.xpose.msra.mxu0 0.0
        %1098 = vmatprep.subr.mxu0 0.0
        %1099 = vmatpush1.xpose.msra.mxu0 0.0
        %1100 = vmatprep.subr.mxu0 0.0
        %1101 = vmatpush1.xpose.msra.mxu0 0.0
        %1102 = vmatprep.subr.mxu0 0.0
        %1103 = vmatpush1.xpose.msra.mxu0 0.0
        %1104 = vmatprep.subr.mxu0 0.0
        %1105 = vmatpush1.xpose.msra.mxu0 0.0
        %1106 = vmatprep.subr.mxu0 0.0
        %1107 = vmatpush1.xpose.msra.mxu0 0.0
        %1108 = vmatprep.subr.mxu0 0.0
        %1109 = vmatpush1.xpose.msra.mxu0 0.0
        %1110 = vmatprep.subr.mxu0 0.0
        %1111 = vmatpush1.xpose.msra.mxu0 0.0
        %1112 = vmatprep.subr.mxu0 0.0
        %1113 = vmatpush1.xpose.msra.mxu0 0.0
        %1114 = vmatprep.subr.mxu0 0.0
        %1115 = vmatpush1.xpose.msra.mxu0 0.0
        %1116 = vmatprep.mubr.f32.mxu0 0.0
        %1117 = vmatmul.mubr.f32.gmra.mrb[0].mxu0 %v1044
        %v1118 = vpop.f32.mrb[0].mxu0
        %v1119 = vadd.f32 0.0, %v1118
        %v1120 = vpop.f32.mrb[0].mxu0
        %1121 = vmatprep.mubr.f32.mxu0 0.0
        %1122 = vmatmul.mubr.f32.gmra.mrb[0].mxu0 %v1046
        %v1123 = vpop.f32.mrb[0].mxu0
        %v1124 = vadd.f32 0.0, %v1123
        %v1125 = vpop.f32.mrb[0].mxu0
        %1126 = vdwg.mxu0
        %v1127 = vmul.f32 %v1119, 0.17677669
        %v1128 = vmul.f32 %v1124, 0.17677669
        %v1129 = vsel %vm839, %v1127, -1000000.0
        %v1130 = vsel %vm839, %v1128, -1000000.0
        %v1131 = vsel %vm932, %v1129, -inf
        %1132 = vmax.xlane.f32.xlu0 %v1131
        %v1133 = vpop.xlane.xlu0 %1132
        %v1134 = vsel %vm932, %v1130, -inf
        %1135 = vmax.xlane.f32.xlu0 %v1134
        %v1136 = vpop.xlane.xlu0 %1135
        %v1137 = vsub.f32 %v1129, %v1133
        %v1138 = vsub.f32 %v1130, %v1136
        %v1139 = vmul.f32 %v1137, 1.442695
        %v1140 = vpow.pop %v1139
        %v1141 = vmul.f32 %v1138, 1.442695
        %v1142 = vpow.pop %v1141
        %v1143 = vsel %vm932, %v1140, 0.0
        %1144 = vadd.xlane.f32.xlu0 %v1143
        %v1145 = vpop.xlane.xlu0 %1144
        %v1146 = vsel %vm932, %v1142, 0.0
        %1147 = vadd.xlane.f32.xlu0 %v1146
        %v1148 = vpop.xlane.xlu0 %1147
        %v1149 = vrcp.pop %v1145
        %v1150 = vrcp.pop %v1148
        %v1151 = vmul.f32 %v1140, %v1149
        %v1152 = vmul.f32 %v1142, %v1150
        %1155 = vrot.lane.b32.xlu0 %v818, 96
        %v1156 = vpop.permute.xlu0 %1155
        %1157 = vrot.lane.b32.xlu0 %v823, 96
        %v1158 = vpop.permute.xlu0 %1157
        %v1162 = vsel %vm932, %v1151, 0
        %v1165 = vsel %vm932, %v1152, 0
        %1167 = vmatprep.subr.mxu0 0.0
        %1168 = vmatpush1.msra.mxu0 %v1156
        %1169 = vmatprep.subr.mxu0 0.0
        %1170 = vmatpush1.msra.mxu0 %v1158
        %1171 = vmatprep.subr.mxu0 0.0
        %1172 = vmatpush1.msra.mxu0 0.0
        %1173 = vmatprep.subr.mxu0 0.0
        %1174 = vmatpush1.msra.mxu0 0.0
        %1175 = vmatprep.subr.mxu0 0.0
        %1176 = vmatpush1.msra.mxu0 0.0
        %1177 = vmatprep.subr.mxu0 0.0
        %1178 = vmatpush1.msra.mxu0 0.0
        %1179 = vmatprep.subr.mxu0 0.0
        %1180 = vmatpush1.msra.mxu0 0.0
        %1181 = vmatprep.subr.mxu0 0.0
        %1182 = vmatpush1.msra.mxu0 0.0
        %1183 = vmatprep.subr.mxu0 0.0
        %1184 = vmatpush1.msra.mxu0 0.0
        %1185 = vmatprep.subr.mxu0 0.0
        %1186 = vmatpush1.msra.mxu0 0.0
        %1187 = vmatprep.subr.mxu0 0.0
        %1188 = vmatpush1.msra.mxu0 0.0
        %1189 = vmatprep.subr.mxu0 0.0
        %1190 = vmatpush1.msra.mxu0 0.0
        %1191 = vmatprep.subr.mxu0 0.0
        %1192 = vmatpush1.msra.mxu0 0.0
        %1193 = vmatprep.subr.mxu0 0.0
        %1194 = vmatpush1.msra.mxu0 0.0
        %1195 = vmatprep.subr.mxu0 0.0
        %1196 = vmatpush1.msra.mxu0 0.0
        %1197 = vmatprep.subr.mxu0 0.0
        %1198 = vmatpush1.msra.mxu0 0.0
        %1199 = vmatprep.subr.mxu0 0.0
        %1200 = vmatpush1.msra.mxu0 0.0
        %1201 = vmatprep.subr.mxu0 0.0
        %1202 = vmatpush1.msra.mxu0 0.0
        %1203 = vmatprep.subr.mxu0 0.0
        %1204 = vmatpush1.msra.mxu0 0.0
        %1205 = vmatprep.subr.mxu0 0.0
        %1206 = vmatpush1.msra.mxu0 0.0
        %1207 = vmatprep.subr.mxu0 0.0
        %1208 = vmatpush1.msra.mxu0 0.0
        %1209 = vmatprep.subr.mxu0 0.0
        %1210 = vmatpush1.msra.mxu0 0.0
        %1211 = vmatprep.subr.mxu0 0.0
        %1212 = vmatpush1.msra.mxu0 0.0
        %1213 = vmatprep.subr.mxu0 0.0
        %1214 = vmatpush1.msra.mxu0 0.0
        %1215 = vmatprep.subr.mxu0 0.0
        %1216 = vmatpush1.msra.mxu0 0.0
        %1217 = vmatprep.subr.mxu0 0.0
        %1218 = vmatpush1.msra.mxu0 0.0
        %1219 = vmatprep.subr.mxu0 0.0
        %1220 = vmatpush1.msra.mxu0 0.0
        %1221 = vmatprep.subr.mxu0 0.0
        %1222 = vmatpush1.msra.mxu0 0.0
        %1223 = vmatprep.subr.mxu0 0.0
        %1224 = vmatpush1.msra.mxu0 0.0
        %1225 = vmatprep.subr.mxu0 0.0
        %1226 = vmatpush1.msra.mxu0 0.0
        %1227 = vmatprep.subr.mxu0 0.0
        %1228 = vmatpush1.msra.mxu0 0.0
        %1229 = vmatprep.subr.mxu0 0.0
        %1230 = vmatpush1.msra.mxu0 0.0
        %1231 = vmatprep.mubr.f32.mxu0 0.0
        %1232 = vmatmul.mubr.f32.gmra.mrb[0].mxu0 %v1162
        %v1233 = vpop.f32.mrb[0].mxu0
        %v1234 = vadd.f32 0.0, %v1233
        %v1235 = vpop.f32.mrb[0].mxu0
        %1236 = vmatprep.mubr.f32.mxu0 0.0
        %1237 = vmatmul.mubr.f32.gmra.mrb[0].mxu0 %v1165
        %v1238 = vpop.f32.mrb[0].mxu0
        %v1239 = vadd.f32 0.0, %v1238
        %v1240 = vpop.f32.mrb[0].mxu0
        %1241 = vdwg.mxu0
        %v1243 = vsel %vm840, %v1234, 0
        %v1246 = vsel %vm840, %v1239, 0
        %1248 = vmatprep.subr.mxu0 0.0
        %1249 = vmatpush1.msra.mxu0 %v569
        %1250 = vmatprep.subr.mxu0 0.0
        %1251 = vmatpush1.msra.mxu0 %v570
        %1252 = vmatprep.subr.mxu0 0.0
        %1253 = vmatpush1.msra.mxu0 %v571
        %1254 = vmatprep.subr.mxu0 0.0
        %1255 = vmatpush1.msra.mxu0 %v572
        %1256 = vmatprep.subr.mxu0 0.0
        %1257 = vmatpush1.msra.mxu0 0.0
        %1258 = vmatprep.subr.mxu0 0.0
        %1259 = vmatpush1.msra.mxu0 0.0
        %1260 = vmatprep.subr.mxu0 0.0
        %1261 = vmatpush1.msra.mxu0 0.0
        %1262 = vmatprep.subr.mxu0 0.0
        %1263 = vmatpush1.msra.mxu0 0.0
        %1264 = vmatprep.subr.mxu0 0.0
        %1265 = vmatpush1.msra.mxu0 0.0
        %1266 = vmatprep.subr.mxu0 0.0
        %1267 = vmatpush1.msra.mxu0 0.0
        %1268 = vmatprep.subr.mxu0 0.0
        %1269 = vmatpush1.msra.mxu0 0.0
        %1270 = vmatprep.subr.mxu0 0.0
        %1271 = vmatpush1.msra.mxu0 0.0
        %1272 = vmatprep.subr.mxu0 0.0
        %1273 = vmatpush1.msra.mxu0 0.0
        %1274 = vmatprep.subr.mxu0 0.0
        %1275 = vmatpush1.msra.mxu0 0.0
        %1276 = vmatprep.subr.mxu0 0.0
        %1277 = vmatpush1.msra.mxu0 0.0
        %1278 = vmatprep.subr.mxu0 0.0
        %1279 = vmatpush1.msra.mxu0 0.0
        %1280 = vmatprep.subr.mxu0 0.0
        %1281 = vmatpush1.msra.mxu0 0.0
        %1282 = vmatprep.subr.mxu0 0.0
        %1283 = vmatpush1.msra.mxu0 0.0
        %1284 = vmatprep.subr.mxu0 0.0
        %1285 = vmatpush1.msra.mxu0 0.0
        %1286 = vmatprep.subr.mxu0 0.0
        %1287 = vmatpush1.msra.mxu0 0.0
        %1288 = vmatprep.subr.mxu0 0.0
        %1289 = vmatpush1.msra.mxu0 0.0
        %1290 = vmatprep.subr.mxu0 0.0
        %1291 = vmatpush1.msra.mxu0 0.0
        %1292 = vmatprep.subr.mxu0 0.0
        %1293 = vmatpush1.msra.mxu0 0.0
        %1294 = vmatprep.subr.mxu0 0.0
        %1295 = vmatpush1.msra.mxu0 0.0
        %1296 = vmatprep.subr.mxu0 0.0
        %1297 = vmatpush1.msra.mxu0 0.0
        %1298 = vmatprep.subr.mxu0 0.0
        %1299 = vmatpush1.msra.mxu0 0.0
        %1300 = vmatprep.subr.mxu0 0.0
        %1301 = vmatpush1.msra.mxu0 0.0
        %1302 = vmatprep.subr.mxu0 0.0
        %1303 = vmatpush1.msra.mxu0 0.0
        %1304 = vmatprep.subr.mxu0 0.0
        %1305 = vmatpush1.msra.mxu0 0.0
        %1306 = vmatprep.subr.mxu0 0.0
        %1307 = vmatpush1.msra.mxu0 0.0
        %1308 = vmatprep.subr.mxu0 0.0
        %1309 = vmatpush1.msra.mxu0 0.0
        %1310 = vmatprep.subr.mxu0 0.0
        %1311 = vmatpush1.msra.mxu0 0.0
        %1312 = vmatprep.mubr.f32.mxu0 0.0
        %1313 = vmatmul.mubr.f32.gmra.mrb[0].mxu0 %v1243
        %v1314 = vpop.f32.mrb[0].mxu0
        %v1315 = vadd.f32 0.0, %v1314
        %v1316 = vpop.f32.mrb[0].mxu0
        %1317 = vmatprep.mubr.f32.mxu0 0.0
        %1318 = vmatmul.mubr.f32.gmra.mrb[0].mxu0 %v1246
        %v1319 = vpop.f32.mrb[0].mxu0
        %v1320 = vadd.f32 0.0, %v1319
        %v1321 = vpop.f32.mrb[0].mxu0
        %1322 = vdwg.mxu0
        %v1324 = vsel %vm840, %v1028, 0
        %v1327 = vsel %vm840, %v1033, 0
        %1329 = vmatprep.subr.mxu0 0.0
        %1330 = vmatpush1.msra.mxu0 %v565
        %1331 = vmatprep.subr.mxu0 0.0
        %1332 = vmatpush1.msra.mxu0 %v566
        %1333 = vmatprep.subr.mxu0 0.0
        %1334 = vmatpush1.msra.mxu0 %v567
        %1335 = vmatprep.subr.mxu0 0.0
        %1336 = vmatpush1.msra.mxu0 %v568
        %1337 = vmatprep.subr.mxu0 0.0
        %1338 = vmatpush1.msra.mxu0 0.0
        %1339 = vmatprep.subr.mxu0 0.0
        %1340 = vmatpush1.msra.mxu0 0.0
        %1341 = vmatprep.subr.mxu0 0.0
        %1342 = vmatpush1.msra.mxu0 0.0
        %1343 = vmatprep.subr.mxu0 0.0
        %1344 = vmatpush1.msra.mxu0 0.0
        %1345 = vmatprep.subr.mxu0 0.0
        %1346 = vmatpush1.msra.mxu0 0.0
        %1347 = vmatprep.subr.mxu0 0.0
        %1348 = vmatpush1.msra.mxu0 0.0
        %1349 = vmatprep.subr.mxu0 0.0
        %1350 = vmatpush1.msra.mxu0 0.0
        %1351 = vmatprep.subr.mxu0 0.0
        %1352 = vmatpush1.msra.mxu0 0.0
        %1353 = vmatprep.subr.mxu0 0.0
        %1354 = vmatpush1.msra.mxu0 0.0
        %1355 = vmatprep.subr.mxu0 0.0
        %1356 = vmatpush1.msra.mxu0 0.0
        %1357 = vmatprep.subr.mxu0 0.0
        %1358 = vmatpush1.msra.mxu0 0.0
        %1359 = vmatprep.subr.mxu0 0.0
        %1360 = vmatpush1.msra.mxu0 0.0
        %1361 = vmatprep.subr.mxu0 0.0
        %1362 = vmatpush1.msra.mxu0 0.0
        %1363 = vmatprep.subr.mxu0 0.0
        %1364 = vmatpush1.msra.mxu0 0.0
        %1365 = vmatprep.subr.mxu0 0.0
        %1366 = vmatpush1.msra.mxu0 0.0
        %1367 = vmatprep.subr.mxu0 0.0
        %1368 = vmatpush1.msra.mxu0 0.0
        %1369 = vmatprep.subr.mxu0 0.0
        %1370 = vmatpush1.msra.mxu0 0.0
        %1371 = vmatprep.subr.mxu0 0.0
        %1372 = vmatpush1.msra.mxu0 0.0
        %1373 = vmatprep.subr.mxu0 0.0
        %1374 = vmatpush1.msra.mxu0 0.0
        %1375 = vmatprep.subr.mxu0 0.0
        %1376 = vmatpush1.msra.mxu0 0.0
        %1377 = vmatprep.subr.mxu0 0.0
        %1378 = vmatpush1.msra.mxu0 0.0
        %1379 = vmatprep.subr.mxu0 0.0
        %1380 = vmatpush1.msra.mxu0 0.0
        %1381 = vmatprep.subr.mxu0 0.0
        %1382 = vmatpush1.msra.mxu0 0.0
        %1383 = vmatprep.subr.mxu0 0.0
        %1384 = vmatpush1.msra.mxu0 0.0
        %1385 = vmatprep.subr.mxu0 0.0
        %1386 = vmatpush1.msra.mxu0 0.0
        %1387 = vmatprep.subr.mxu0 0.0
        %1388 = vmatpush1.msra.mxu0 0.0
        %1389 = vmatprep.subr.mxu0 0.0
        %1390 = vmatpush1.msra.mxu0 0.0
        %1391 = vmatprep.subr.mxu0 0.0
        %1392 = vmatpush1.msra.mxu0 0.0
        %1393 = vmatprep.mubr.f32.mxu0 0.0
        %1394 = vmatmul.mubr.f32.gmra.mrb[0].mxu0 %v1324
        %v1395 = vpop.f32.mrb[0].mxu0
        %v1396 = vadd.f32 %v1315, %v1395
        %v1397 = vpop.f32.mrb[0].mxu0
        %1398 = vmatprep.mubr.f32.mxu0 0.0
        %1399 = vmatmul.mubr.f32.gmra.mrb[0].mxu0 %v1327
        %v1400 = vpop.f32.mrb[0].mxu0
        %v1401 = vadd.f32 %v1320, %v1400
        %v1402 = vpop.f32.mrb[0].mxu0
        %1403 = vdwg.mxu0
        %1404 = vrot.lane.b32.xlu0 %v648, 64
        %v1405 = vpop.permute.xlu0 %1404
        %1406 = vrot.lane.b32.xlu0 %v653, 64
        %v1407 = vpop.permute.xlu0 %1406
        %1408 = vrot.lane.b32.xlu0 %v733, 64
        %v1409 = vpop.permute.xlu0 %1408
        %1410 = vrot.lane.b32.xlu0 %v738, 64
        %v1411 = vpop.permute.xlu0 %1410
        %v1412 = vsel %vm840, %v1405, 0
        %v1414 = vsel %vm840, %v1407, 0
        %v1416 = vsel %vm840, %v1409, 0
        %v1418 = vsel %vm840, %v1411, 0
        %1420 = vmatprep.subr.mxu0 0.0
        %1421 = vmatpush1.xpose.msra.mxu0 %v1416
        %1422 = vmatprep.subr.mxu0 0.0
        %1423 = vmatpush1.xpose.msra.mxu0 %v1418
        %1424 = vmatprep.subr.mxu0 0.0
        %1425 = vmatpush1.xpose.msra.mxu0 0.0
        %1426 = vmatprep.subr.mxu0 0.0
        %1427 = vmatpush1.xpose.msra.mxu0 0.0
        %1428 = vmatprep.subr.mxu0 0.0
        %1429 = vmatpush1.xpose.msra.mxu0 0.0
        %1430 = vmatprep.subr.mxu0 0.0
        %1431 = vmatpush1.xpose.msra.mxu0 0.0
        %1432 = vmatprep.subr.mxu0 0.0
        %1433 = vmatpush1.xpose.msra.mxu0 0.0
        %1434 = vmatprep.subr.mxu0 0.0
        %1435 = vmatpush1.xpose.msra.mxu0 0.0
        %1436 = vmatprep.subr.mxu0 0.0
        %1437 = vmatpush1.xpose.msra.mxu0 0.0
        %1438 = vmatprep.subr.mxu0 0.0
        %1439 = vmatpush1.xpose.msra.mxu0 0.0
        %1440 = vmatprep.subr.mxu0 0.0
        %1441 = vmatpush1.xpose.msra.mxu0 0.0
        %1442 = vmatprep.subr.mxu0 0.0
        %1443 = vmatpush1.xpose.msra.mxu0 0.0
        %1444 = vmatprep.subr.mxu0 0.0
        %1445 = vmatpush1.xpose.msra.mxu0 0.0
        %1446 = vmatprep.subr.mxu0 0.0
        %1447 = vmatpush1.xpose.msra.mxu0 0.0
        %1448 = vmatprep.subr.mxu0 0.0
        %1449 = vmatpush1.xpose.msra.mxu0 0.0
        %1450 = vmatprep.subr.mxu0 0.0
        %1451 = vmatpush1.xpose.msra.mxu0 0.0
        %1452 = vmatprep.subr.mxu0 0.0
        %1453 = vmatpush1.xpose.msra.mxu0 0.0
        %1454 = vmatprep.subr.mxu0 0.0
        %1455 = vmatpush1.xpose.msra.mxu0 0.0
        %1456 = vmatprep.subr.mxu0 0.0
        %1457 = vmatpush1.xpose.msra.mxu0 0.0
        %1458 = vmatprep.subr.mxu0 0.0
        %1459 = vmatpush1.xpose.msra.mxu0 0.0
        %1460 = vmatprep.subr.mxu0 0.0
        %1461 = vmatpush1.xpose.msra.mxu0 0.0
        %1462 = vmatprep.subr.mxu0 0.0
        %1463 = vmatpush1.xpose.msra.mxu0 0.0
        %1464 = vmatprep.subr.mxu0 0.0
        %1465 = vmatpush1.xpose.msra.mxu0 0.0
        %1466 = vmatprep.subr.mxu0 0.0
        %1467 = vmatpush1.xpose.msra.mxu0 0.0
        %1468 = vmatprep.subr.mxu0 0.0
        %1469 = vmatpush1.xpose.msra.mxu0 0.0
        %1470 = vmatprep.subr.mxu0 0.0
        %1471 = vmatpush1.xpose.msra.mxu0 0.0
        %1472 = vmatprep.subr.mxu0 0.0
        %1473 = vmatpush1.xpose.msra.mxu0 0.0
        %1474 = vmatprep.subr.mxu0 0.0
        %1475 = vmatpush1.xpose.msra.mxu0 0.0
        %1476 = vmatprep.subr.mxu0 0.0
        %1477 = vmatpush1.xpose.msra.mxu0 0.0
        %1478 = vmatprep.subr.mxu0 0.0
        %1479 = vmatpush1.xpose.msra.mxu0 0.0
        %1480 = vmatprep.subr.mxu0 0.0
        %1481 = vmatpush1.xpose.msra.mxu0 0.0
        %1482 = vmatprep.subr.mxu0 0.0
        %1483 = vmatpush1.xpose.msra.mxu0 0.0
        %1484 = vmatprep.mubr.f32.mxu0 0.0
        %1485 = vmatmul.mubr.f32.gmra.mrb[0].mxu0 %v1412
        %v1486 = vpop.f32.mrb[0].mxu0
        %v1487 = vadd.f32 0.0, %v1486
        %v1488 = vpop.f32.mrb[0].mxu0
        %1489 = vmatprep.mubr.f32.mxu0 0.0
        %1490 = vmatmul.mubr.f32.gmra.mrb[0].mxu0 %v1414
        %v1491 = vpop.f32.mrb[0].mxu0
        %v1492 = vadd.f32 0.0, %v1491
        %v1493 = vpop.f32.mrb[0].mxu0
        %1494 = vdwg.mxu0
        %v1495 = vmul.f32 %v1487, 0.17677669
        %v1496 = vmul.f32 %v1492, 0.17677669
        %v1497 = vsel %vm839, %v1495, -1000000.0
        %v1498 = vsel %vm839, %v1496, -1000000.0
        %v1499 = vsel %vm932, %v1497, -inf
        %1500 = vmax.xlane.f32.xlu0 %v1499
        %v1501 = vpop.xlane.xlu0 %1500
        %v1502 = vsel %vm932, %v1498, -inf
        %1503 = vmax.xlane.f32.xlu0 %v1502
        %v1504 = vpop.xlane.xlu0 %1503
        %v1505 = vsub.f32 %v1497, %v1501
        %v1506 = vsub.f32 %v1498, %v1504
        %v1507 = vmul.f32 %v1505, 1.442695
        %v1508 = vpow.pop %v1507
        %v1509 = vmul.f32 %v1506, 1.442695
        %v1510 = vpow.pop %v1509
        %v1511 = vsel %vm932, %v1508, 0.0
        %1512 = vadd.xlane.f32.xlu0 %v1511
        %v1513 = vpop.xlane.xlu0 %1512
        %v1514 = vsel %vm932, %v1510, 0.0
        %1515 = vadd.xlane.f32.xlu0 %v1514
        %v1516 = vpop.xlane.xlu0 %1515
        %v1517 = vrcp.pop %v1513
        %v1518 = vrcp.pop %v1516
        %v1519 = vmul.f32 %v1508, %v1517
        %v1520 = vmul.f32 %v1510, %v1518
        %1521 = vrot.lane.b32.xlu0 %v818, 64
        %v1522 = vpop.permute.xlu0 %1521
        %1523 = vrot.lane.b32.xlu0 %v823, 64
        %v1524 = vpop.permute.xlu0 %1523
        %v1528 = vsel %vm932, %v1519, 0
        %v1531 = vsel %vm932, %v1520, 0
        %1533 = vmatprep.subr.mxu0 0.0
        %1534 = vmatpush1.msra.mxu0 %v1522
        %1535 = vmatprep.subr.mxu0 0.0
        %1536 = vmatpush1.msra.mxu0 %v1524
        %1537 = vmatprep.subr.mxu0 0.0
        %1538 = vmatpush1.msra.mxu0 0.0
        %1539 = vmatprep.subr.mxu0 0.0
        %1540 = vmatpush1.msra.mxu0 0.0
        %1541 = vmatprep.subr.mxu0 0.0
        %1542 = vmatpush1.msra.mxu0 0.0
        %1543 = vmatprep.subr.mxu0 0.0
        %1544 = vmatpush1.msra.mxu0 0.0
        %1545 = vmatprep.subr.mxu0 0.0
        %1546 = vmatpush1.msra.mxu0 0.0
        %1547 = vmatprep.subr.mxu0 0.0
        %1548 = vmatpush1.msra.mxu0 0.0
        %1549 = vmatprep.subr.mxu0 0.0
        %1550 = vmatpush1.msra.mxu0 0.0
        %1551 = vmatprep.subr.mxu0 0.0
        %1552 = vmatpush1.msra.mxu0 0.0
        %1553 = vmatprep.subr.mxu0 0.0
        %1554 = vmatpush1.msra.mxu0 0.0
        %1555 = vmatprep.subr.mxu0 0.0
        %1556 = vmatpush1.msra.mxu0 0.0
        %1557 = vmatprep.subr.mxu0 0.0
        %1558 = vmatpush1.msra.mxu0 0.0
        %1559 = vmatprep.subr.mxu0 0.0
        %1560 = vmatpush1.msra.mxu0 0.0
        %1561 = vmatprep.subr.mxu0 0.0
        %1562 = vmatpush1.msra.mxu0 0.0
        %1563 = vmatprep.subr.mxu0 0.0
        %1564 = vmatpush1.msra.mxu0 0.0
        %1565 = vmatprep.subr.mxu0 0.0
        %1566 = vmatpush1.msra.mxu0 0.0
        %1567 = vmatprep.subr.mxu0 0.0
        %1568 = vmatpush1.msra.mxu0 0.0
        %1569 = vmatprep.subr.mxu0 0.0
        %1570 = vmatpush1.msra.mxu0 0.0
        %1571 = vmatprep.subr.mxu0 0.0
        %1572 = vmatpush1.msra.mxu0 0.0
        %1573 = vmatprep.subr.mxu0 0.0
        %1574 = vmatpush1.msra.mxu0 0.0
        %1575 = vmatprep.subr.mxu0 0.0
        %1576 = vmatpush1.msra.mxu0 0.0
        %1577 = vmatprep.subr.mxu0 0.0
        %1578 = vmatpush1.msra.mxu0 0.0
        %1579 = vmatprep.subr.mxu0 0.0
        %1580 = vmatpush1.msra.mxu0 0.0
        %1581 = vmatprep.subr.mxu0 0.0
        %1582 = vmatpush1.msra.mxu0 0.0
        %1583 = vmatprep.subr.mxu0 0.0
        %1584 = vmatpush1.msra.mxu0 0.0
        %1585 = vmatprep.subr.mxu0 0.0
        %1586 = vmatpush1.msra.mxu0 0.0
        %1587 = vmatprep.subr.mxu0 0.0
        %1588 = vmatpush1.msra.mxu0 0.0
        %1589 = vmatprep.subr.mxu0 0.0
        %1590 = vmatpush1.msra.mxu0 0.0
        %1591 = vmatprep.subr.mxu0 0.0
        %1592 = vmatpush1.msra.mxu0 0.0
        %1593 = vmatprep.subr.mxu0 0.0
        %1594 = vmatpush1.msra.mxu0 0.0
        %1595 = vmatprep.subr.mxu0 0.0
        %1596 = vmatpush1.msra.mxu0 0.0
        %1597 = vmatprep.mubr.f32.mxu0 0.0
        %1598 = vmatmul.mubr.f32.gmra.mrb[0].mxu0 %v1528
        %v1599 = vpop.f32.mrb[0].mxu0
        %v1600 = vadd.f32 0.0, %v1599
        %v1601 = vpop.f32.mrb[0].mxu0
        %1602 = vmatprep.mubr.f32.mxu0 0.0
        %1603 = vmatmul.mubr.f32.gmra.mrb[0].mxu0 %v1531
        %v1604 = vpop.f32.mrb[0].mxu0
        %v1605 = vadd.f32 0.0, %v1604
        %v1606 = vpop.f32.mrb[0].mxu0
        %1607 = vdwg.mxu0
        %v1609 = vsel %vm840, %v1600, 0
        %v1612 = vsel %vm840, %v1605, 0
        %1614 = vmatprep.subr.mxu0 0.0
        %1615 = vmatpush1.msra.mxu0 %v573
        %1616 = vmatprep.subr.mxu0 0.0
        %1617 = vmatpush1.msra.mxu0 %v574
        %1618 = vmatprep.subr.mxu0 0.0
        %1619 = vmatpush1.msra.mxu0 %v575
        %1620 = vmatprep.subr.mxu0 0.0
        %1621 = vmatpush1.msra.mxu0 %v576
        %1622 = vmatprep.subr.mxu0 0.0
        %1623 = vmatpush1.msra.mxu0 0.0
        %1624 = vmatprep.subr.mxu0 0.0
        %1625 = vmatpush1.msra.mxu0 0.0
        %1626 = vmatprep.subr.mxu0 0.0
        %1627 = vmatpush1.msra.mxu0 0.0
        %1628 = vmatprep.subr.mxu0 0.0
        %1629 = vmatpush1.msra.mxu0 0.0
        %1630 = vmatprep.subr.mxu0 0.0
        %1631 = vmatpush1.msra.mxu0 0.0
        %1632 = vmatprep.subr.mxu0 0.0
        %1633 = vmatpush1.msra.mxu0 0.0
        %1634 = vmatprep.subr.mxu0 0.0
        %1635 = vmatpush1.msra.mxu0 0.0
        %1636 = vmatprep.subr.mxu0 0.0
        %1637 = vmatpush1.msra.mxu0 0.0
        %1638 = vmatprep.subr.mxu0 0.0
        %1639 = vmatpush1.msra.mxu0 0.0
        %1640 = vmatprep.subr.mxu0 0.0
        %1641 = vmatpush1.msra.mxu0 0.0
        %1642 = vmatprep.subr.mxu0 0.0
        %1643 = vmatpush1.msra.mxu0 0.0
        %1644 = vmatprep.subr.mxu0 0.0
        %1645 = vmatpush1.msra.mxu0 0.0
        %1646 = vmatprep.subr.mxu0 0.0
        %1647 = vmatpush1.msra.mxu0 0.0
        %1648 = vmatprep.subr.mxu0 0.0
        %1649 = vmatpush1.msra.mxu0 0.0
        %1650 = vmatprep.subr.mxu0 0.0
        %1651 = vmatpush1.msra.mxu0 0.0
        %1652 = vmatprep.subr.mxu0 0.0
        %1653 = vmatpush1.msra.mxu0 0.0
        %1654 = vmatprep.subr.mxu0 0.0
        %1655 = vmatpush1.msra.mxu0 0.0
        %1656 = vmatprep.subr.mxu0 0.0
        %1657 = vmatpush1.msra.mxu0 0.0
        %1658 = vmatprep.subr.mxu0 0.0
        %1659 = vmatpush1.msra.mxu0 0.0
        %1660 = vmatprep.subr.mxu0 0.0
        %1661 = vmatpush1.msra.mxu0 0.0
        %1662 = vmatprep.subr.mxu0 0.0
        %1663 = vmatpush1.msra.mxu0 0.0
        %1664 = vmatprep.subr.mxu0 0.0
        %1665 = vmatpush1.msra.mxu0 0.0
        %1666 = vmatprep.subr.mxu0 0.0
        %1667 = vmatpush1.msra.mxu0 0.0
        %1668 = vmatprep.subr.mxu0 0.0
        %1669 = vmatpush1.msra.mxu0 0.0
        %1670 = vmatprep.subr.mxu0 0.0
        %1671 = vmatpush1.msra.mxu0 0.0
        %1672 = vmatprep.subr.mxu0 0.0
        %1673 = vmatpush1.msra.mxu0 0.0
        %1674 = vmatprep.subr.mxu0 0.0
        %1675 = vmatpush1.msra.mxu0 0.0
        %1676 = vmatprep.subr.mxu0 0.0
        %1677 = vmatpush1.msra.mxu0 0.0
        %1678 = vmatprep.mubr.f32.mxu0 0.0
        %1679 = vmatmul.mubr.f32.gmra.mrb[0].mxu0 %v1609
        %v1680 = vpop.f32.mrb[0].mxu0
        %v1681 = vadd.f32 0.0, %v1680
        %v1682 = vpop.f32.mrb[0].mxu0
        %1683 = vmatprep.mubr.f32.mxu0 0.0
        %1684 = vmatmul.mubr.f32.gmra.mrb[0].mxu0 %v1612
        %v1685 = vpop.f32.mrb[0].mxu0
        %v1686 = vadd.f32 0.0, %v1685
        %v1687 = vpop.f32.mrb[0].mxu0
        %1688 = vdwg.mxu0
        %v1689 = vadd.f32 %v1396, %v1681
        %v1690 = vadd.f32 %v1401, %v1686
        %1691 = vrot.lane.b32.xlu0 %v648, 32
        %v1692 = vpop.permute.xlu0 %1691
        %1693 = vrot.lane.b32.xlu0 %v653, 32
        %v1694 = vpop.permute.xlu0 %1693
        %1695 = vrot.lane.b32.xlu0 %v733, 32
        %v1696 = vpop.permute.xlu0 %1695
        %1697 = vrot.lane.b32.xlu0 %v738, 32
        %v1698 = vpop.permute.xlu0 %1697
        %v1699 = vsel %vm840, %v1692, 0
        %v1701 = vsel %vm840, %v1694, 0
        %v1703 = vsel %vm840, %v1696, 0
        %v1705 = vsel %vm840, %v1698, 0
        %1707 = vmatprep.subr.mxu0 0.0
        %1708 = vmatpush1.xpose.msra.mxu0 %v1703
        %1709 = vmatprep.subr.mxu0 0.0
        %1710 = vmatpush1.xpose.msra.mxu0 %v1705
        %1711 = vmatprep.subr.mxu0 0.0
        %1712 = vmatpush1.xpose.msra.mxu0 0.0
        %1713 = vmatprep.subr.mxu0 0.0
        %1714 = vmatpush1.xpose.msra.mxu0 0.0
        %1715 = vmatprep.subr.mxu0 0.0
        %1716 = vmatpush1.xpose.msra.mxu0 0.0
        %1717 = vmatprep.subr.mxu0 0.0
        %1718 = vmatpush1.xpose.msra.mxu0 0.0
        %1719 = vmatprep.subr.mxu0 0.0
        %1720 = vmatpush1.xpose.msra.mxu0 0.0
        %1721 = vmatprep.subr.mxu0 0.0
        %1722 = vmatpush1.xpose.msra.mxu0 0.0
        %1723 = vmatprep.subr.mxu0 0.0
        %1724 = vmatpush1.xpose.msra.mxu0 0.0
        %1725 = vmatprep.subr.mxu0 0.0
        %1726 = vmatpush1.xpose.msra.mxu0 0.0
        %1727 = vmatprep.subr.mxu0 0.0
        %1728 = vmatpush1.xpose.msra.mxu0 0.0
        %1729 = vmatprep.subr.mxu0 0.0
        %1730 = vmatpush1.xpose.msra.mxu0 0.0
        %1731 = vmatprep.subr.mxu0 0.0
        %1732 = vmatpush1.xpose.msra.mxu0 0.0
        %1733 = vmatprep.subr.mxu0 0.0
        %1734 = vmatpush1.xpose.msra.mxu0 0.0
        %1735 = vmatprep.subr.mxu0 0.0
        %1736 = vmatpush1.xpose.msra.mxu0 0.0
        %1737 = vmatprep.subr.mxu0 0.0
        %1738 = vmatpush1.xpose.msra.mxu0 0.0
        %1739 = vmatprep.subr.mxu0 0.0
        %1740 = vmatpush1.xpose.msra.mxu0 0.0
        %1741 = vmatprep.subr.mxu0 0.0
        %1742 = vmatpush1.xpose.msra.mxu0 0.0
        %1743 = vmatprep.subr.mxu0 0.0
        %1744 = vmatpush1.xpose.msra.mxu0 0.0
        %1745 = vmatprep.subr.mxu0 0.0
        %1746 = vmatpush1.xpose.msra.mxu0 0.0
        %1747 = vmatprep.subr.mxu0 0.0
        %1748 = vmatpush1.xpose.msra.mxu0 0.0
        %1749 = vmatprep.subr.mxu0 0.0
        %1750 = vmatpush1.xpose.msra.mxu0 0.0
        %1751 = vmatprep.subr.mxu0 0.0
        %1752 = vmatpush1.xpose.msra.mxu0 0.0
        %1753 = vmatprep.subr.mxu0 0.0
        %1754 = vmatpush1.xpose.msra.mxu0 0.0
        %1755 = vmatprep.subr.mxu0 0.0
        %1756 = vmatpush1.xpose.msra.mxu0 0.0
        %1757 = vmatprep.subr.mxu0 0.0
        %1758 = vmatpush1.xpose.msra.mxu0 0.0
        %1759 = vmatprep.subr.mxu0 0.0
        %1760 = vmatpush1.xpose.msra.mxu0 0.0
        %1761 = vmatprep.subr.mxu0 0.0
        %1762 = vmatpush1.xpose.msra.mxu0 0.0
        %1763 = vmatprep.subr.mxu0 0.0
        %1764 = vmatpush1.xpose.msra.mxu0 0.0
        %1765 = vmatprep.subr.mxu0 0.0
        %1766 = vmatpush1.xpose.msra.mxu0 0.0
        %1767 = vmatprep.subr.mxu0 0.0
        %1768 = vmatpush1.xpose.msra.mxu0 0.0
        %1769 = vmatprep.subr.mxu0 0.0
        %1770 = vmatpush1.xpose.msra.mxu0 0.0
        %1771 = vmatprep.mubr.f32.mxu0 0.0
        %1772 = vmatmul.mubr.f32.gmra.mrb[0].mxu0 %v1699
        %v1773 = vpop.f32.mrb[0].mxu0
        %v1774 = vadd.f32 0.0, %v1773
        %v1775 = vpop.f32.mrb[0].mxu0
        %1776 = vmatprep.mubr.f32.mxu0 0.0
        %1777 = vmatmul.mubr.f32.gmra.mrb[0].mxu0 %v1701
        %v1778 = vpop.f32.mrb[0].mxu0
        %v1779 = vadd.f32 0.0, %v1778
        %v1780 = vpop.f32.mrb[0].mxu0
        %1781 = vdwg.mxu0
        %v1782 = vmul.f32 %v1774, 0.17677669
        %v1783 = vmul.f32 %v1779, 0.17677669
        %v1784 = vsel %vm839, %v1782, -1000000.0
        %v1785 = vsel %vm839, %v1783, -1000000.0
        %v1786 = vsel %vm932, %v1784, -inf
        %1787 = vmax.xlane.f32.xlu0 %v1786
        %v1788 = vpop.xlane.xlu0 %1787
        %v1789 = vsel %vm932, %v1785, -inf
        %1790 = vmax.xlane.f32.xlu0 %v1789
        %v1791 = vpop.xlane.xlu0 %1790
        %v1792 = vsub.f32 %v1784, %v1788
        %v1793 = vsub.f32 %v1785, %v1791
        %v1794 = vmul.f32 %v1792, 1.442695
        %v1795 = vpow.pop %v1794
        %v1796 = vmul.f32 %v1793, 1.442695
        %v1797 = vpow.pop %v1796
        %v1798 = vsel %vm932, %v1795, 0.0
        %1799 = vadd.xlane.f32.xlu0 %v1798
        %v1800 = vpop.xlane.xlu0 %1799
        %v1801 = vsel %vm932, %v1797, 0.0
        %1802 = vadd.xlane.f32.xlu0 %v1801
        %v1803 = vpop.xlane.xlu0 %1802
        %v1804 = vrcp.pop %v1800
        %v1805 = vrcp.pop %v1803
        %v1806 = vmul.f32 %v1795, %v1804
        %v1807 = vmul.f32 %v1797, %v1805
        %1808 = vrot.lane.b32.xlu0 %v818, 32
        %v1809 = vpop.permute.xlu0 %1808
        %1810 = vrot.lane.b32.xlu0 %v823, 32
        %v1811 = vpop.permute.xlu0 %1810
        %v1815 = vsel %vm932, %v1806, 0
        %v1818 = vsel %vm932, %v1807, 0
        %1820 = vmatprep.subr.mxu0 0.0
        %1821 = vmatpush1.msra.mxu0 %v1809
        %1822 = vmatprep.subr.mxu0 0.0
        %1823 = vmatpush1.msra.mxu0 %v1811
        %1824 = vmatprep.subr.mxu0 0.0
        %1825 = vmatpush1.msra.mxu0 0.0
        %1826 = vmatprep.subr.mxu0 0.0
        %1827 = vmatpush1.msra.mxu0 0.0
        %1828 = vmatprep.subr.mxu0 0.0
        %1829 = vmatpush1.msra.mxu0 0.0
        %1830 = vmatprep.subr.mxu0 0.0
        %1831 = vmatpush1.msra.mxu0 0.0
        %1832 = vmatprep.subr.mxu0 0.0
        %1833 = vmatpush1.msra.mxu0 0.0
        %1834 = vmatprep.subr.mxu0 0.0
        %1835 = vmatpush1.msra.mxu0 0.0
        %1836 = vmatprep.subr.mxu0 0.0
        %1837 = vmatpush1.msra.mxu0 0.0
        %1838 = vmatprep.subr.mxu0 0.0
        %1839 = vmatpush1.msra.mxu0 0.0
        %1840 = vmatprep.subr.mxu0 0.0
        %1841 = vmatpush1.msra.mxu0 0.0
        %1842 = vmatprep.subr.mxu0 0.0
        %1843 = vmatpush1.msra.mxu0 0.0
        %1844 = vmatprep.subr.mxu0 0.0
        %1845 = vmatpush1.msra.mxu0 0.0
        %1846 = vmatprep.subr.mxu0 0.0
        %1847 = vmatpush1.msra.mxu0 0.0
        %1848 = vmatprep.subr.mxu0 0.0
        %1849 = vmatpush1.msra.mxu0 0.0
        %1850 = vmatprep.subr.mxu0 0.0
        %1851 = vmatpush1.msra.mxu0 0.0
        %1852 = vmatprep.subr.mxu0 0.0
        %1853 = vmatpush1.msra.mxu0 0.0
        %1854 = vmatprep.subr.mxu0 0.0
        %1855 = vmatpush1.msra.mxu0 0.0
        %1856 = vmatprep.subr.mxu0 0.0
        %1857 = vmatpush1.msra.mxu0 0.0
        %1858 = vmatprep.subr.mxu0 0.0
        %1859 = vmatpush1.msra.mxu0 0.0
        %1860 = vmatprep.subr.mxu0 0.0
        %1861 = vmatpush1.msra.mxu0 0.0
        %1862 = vmatprep.subr.mxu0 0.0
        %1863 = vmatpush1.msra.mxu0 0.0
        %1864 = vmatprep.subr.mxu0 0.0
        %1865 = vmatpush1.msra.mxu0 0.0
        %1866 = vmatprep.subr.mxu0 0.0
        %1867 = vmatpush1.msra.mxu0 0.0
        %1868 = vmatprep.subr.mxu0 0.0
        %1869 = vmatpush1.msra.mxu0 0.0
        %1870 = vmatprep.subr.mxu0 0.0
        %1871 = vmatpush1.msra.mxu0 0.0
        %1872 = vmatprep.subr.mxu0 0.0
        %1873 = vmatpush1.msra.mxu0 0.0
        %1874 = vmatprep.subr.mxu0 0.0
        %1875 = vmatpush1.msra.mxu0 0.0
        %1876 = vmatprep.subr.mxu0 0.0
        %1877 = vmatpush1.msra.mxu0 0.0
        %1878 = vmatprep.subr.mxu0 0.0
        %1879 = vmatpush1.msra.mxu0 0.0
        %1880 = vmatprep.subr.mxu0 0.0
        %1881 = vmatpush1.msra.mxu0 0.0
        %1882 = vmatprep.subr.mxu0 0.0
        %1883 = vmatpush1.msra.mxu0 0.0
        %1884 = vmatprep.mubr.f32.mxu0 0.0
        %1885 = vmatmul.mubr.f32.gmra.mrb[0].mxu0 %v1815
        %v1886 = vpop.f32.mrb[0].mxu0
        %v1887 = vadd.f32 0.0, %v1886
        %v1888 = vpop.f32.mrb[0].mxu0
        %1889 = vmatprep.mubr.f32.mxu0 0.0
        %1890 = vmatmul.mubr.f32.gmra.mrb[0].mxu0 %v1818
        %v1891 = vpop.f32.mrb[0].mxu0
        %v1892 = vadd.f32 0.0, %v1891
        %v1893 = vpop.f32.mrb[0].mxu0
        %1894 = vdwg.mxu0
        %v1896 = vsel %vm840, %v1887, 0
        %v1899 = vsel %vm840, %v1892, 0
        %1901 = vmatprep.subr.mxu0 0.0
        %1902 = vmatpush1.msra.mxu0 %v577
        %1903 = vmatprep.subr.mxu0 0.0
        %1904 = vmatpush1.msra.mxu0 %v578
        %1905 = vmatprep.subr.mxu0 0.0
        %1906 = vmatpush1.msra.mxu0 %v579
        %1907 = vmatprep.subr.mxu0 0.0
        %1908 = vmatpush1.msra.mxu0 %v580
        %1909 = vmatprep.subr.mxu0 0.0
        %1910 = vmatpush1.msra.mxu0 0.0
        %1911 = vmatprep.subr.mxu0 0.0
        %1912 = vmatpush1.msra.mxu0 0.0
        %1913 = vmatprep.subr.mxu0 0.0
        %1914 = vmatpush1.msra.mxu0 0.0
        %1915 = vmatprep.subr.mxu0 0.0
        %1916 = vmatpush1.msra.mxu0 0.0
        %1917 = vmatprep.subr.mxu0 0.0
        %1918 = vmatpush1.msra.mxu0 0.0
        %1919 = vmatprep.subr.mxu0 0.0
        %1920 = vmatpush1.msra.mxu0 0.0
        %1921 = vmatprep.subr.mxu0 0.0
        %1922 = vmatpush1.msra.mxu0 0.0
        %1923 = vmatprep.subr.mxu0 0.0
        %1924 = vmatpush1.msra.mxu0 0.0
        %1925 = vmatprep.subr.mxu0 0.0
        %1926 = vmatpush1.msra.mxu0 0.0
        %1927 = vmatprep.subr.mxu0 0.0
        %1928 = vmatpush1.msra.mxu0 0.0
        %1929 = vmatprep.subr.mxu0 0.0
        %1930 = vmatpush1.msra.mxu0 0.0
        %1931 = vmatprep.subr.mxu0 0.0
        %1932 = vmatpush1.msra.mxu0 0.0
        %1933 = vmatprep.subr.mxu0 0.0
        %1934 = vmatpush1.msra.mxu0 0.0
        %1935 = vmatprep.subr.mxu0 0.0
        %1936 = vmatpush1.msra.mxu0 0.0
        %1937 = vmatprep.subr.mxu0 0.0
        %1938 = vmatpush1.msra.mxu0 0.0
        %1939 = vmatprep.subr.mxu0 0.0
        %1940 = vmatpush1.msra.mxu0 0.0
        %1941 = vmatprep.subr.mxu0 0.0
        %1942 = vmatpush1.msra.mxu0 0.0
        %1943 = vmatprep.subr.mxu0 0.0
        %1944 = vmatpush1.msra.mxu0 0.0
        %1945 = vmatprep.subr.mxu0 0.0
        %1946 = vmatpush1.msra.mxu0 0.0
        %1947 = vmatprep.subr.mxu0 0.0
        %1948 = vmatpush1.msra.mxu0 0.0
        %1949 = vmatprep.subr.mxu0 0.0
        %1950 = vmatpush1.msra.mxu0 0.0
        %1951 = vmatprep.subr.mxu0 0.0
        %1952 = vmatpush1.msra.mxu0 0.0
        %1953 = vmatprep.subr.mxu0 0.0
        %1954 = vmatpush1.msra.mxu0 0.0
        %1955 = vmatprep.subr.mxu0 0.0
        %1956 = vmatpush1.msra.mxu0 0.0
        %1957 = vmatprep.subr.mxu0 0.0
        %1958 = vmatpush1.msra.mxu0 0.0
        %1959 = vmatprep.subr.mxu0 0.0
        %1960 = vmatpush1.msra.mxu0 0.0
        %1961 = vmatprep.subr.mxu0 0.0
        %1962 = vmatpush1.msra.mxu0 0.0
        %1963 = vmatprep.subr.mxu0 0.0
        %1964 = vmatpush1.msra.mxu0 0.0
        %1965 = vmatprep.mubr.f32.mxu0 0.0
        %1966 = vmatmul.mubr.f32.gmra.mrb[0].mxu0 %v1896
        %v1967 = vpop.f32.mrb[0].mxu0
        %v1968 = vadd.f32 0.0, %v1967
        %v1969 = vpop.f32.mrb[0].mxu0
        %1970 = vmatprep.mubr.f32.mxu0 0.0
        %1971 = vmatmul.mubr.f32.gmra.mrb[0].mxu0 %v1899
        %v1972 = vpop.f32.mrb[0].mxu0
        %v1973 = vadd.f32 0.0, %v1972
        %v1974 = vpop.f32.mrb[0].mxu0
        %1975 = vdwg.mxu0
        %v1976 = vadd.f32 %v1689, %v1968
        %v1977 = vadd.f32 %v1690, %v1973
        %s1978 = sadd.s32 %s836, 1
        %s1979 = sld [smem:[#allocation3 + %s1978]]
        %v1980 = vstv %s1979
        %vm1981 = vcmp.lt.s32.totalorder %v516, %v1980
        %v1983 = vsel %vm840, %v658, 0
        %v1986 = vsel %vm840, %v663, 0
        %v1989 = vsel %vm840, %v743, 0
        %v1992 = vsel %vm840, %v748, 0
        %1994 = vmatprep.subr.mxu0 0.0
        %1995 = vmatpush1.xpose.msra.mxu0 %v1989
        %1996 = vmatprep.subr.mxu0 0.0
        %1997 = vmatpush1.xpose.msra.mxu0 %v1992
        %1998 = vmatprep.subr.mxu0 0.0
        %1999 = vmatpush1.xpose.msra.mxu0 0.0
        %2000 = vmatprep.subr.mxu0 0.0
        %2001 = vmatpush1.xpose.msra.mxu0 0.0
        %2002 = vmatprep.subr.mxu0 0.0
        %2003 = vmatpush1.xpose.msra.mxu0 0.0
        %2004 = vmatprep.subr.mxu0 0.0
        %2005 = vmatpush1.xpose.msra.mxu0 0.0
        %2006 = vmatprep.subr.mxu0 0.0
        %2007 = vmatpush1.xpose.msra.mxu0 0.0
        %2008 = vmatprep.subr.mxu0 0.0
        %2009 = vmatpush1.xpose.msra.mxu0 0.0
        %2010 = vmatprep.subr.mxu0 0.0
        %2011 = vmatpush1.xpose.msra.mxu0 0.0
        %2012 = vmatprep.subr.mxu0 0.0
        %2013 = vmatpush1.xpose.msra.mxu0 0.0
        %2014 = vmatprep.subr.mxu0 0.0
        %2015 = vmatpush1.xpose.msra.mxu0 0.0
        %2016 = vmatprep.subr.mxu0 0.0
        %2017 = vmatpush1.xpose.msra.mxu0 0.0
        %2018 = vmatprep.subr.mxu0 0.0
        %2019 = vmatpush1.xpose.msra.mxu0 0.0
        %2020 = vmatprep.subr.mxu0 0.0
        %2021 = vmatpush1.xpose.msra.mxu0 0.0
        %2022 = vmatprep.subr.mxu0 0.0
        %2023 = vmatpush1.xpose.msra.mxu0 0.0
        %2024 = vmatprep.subr.mxu0 0.0
        %2025 = vmatpush1.xpose.msra.mxu0 0.0
        %2026 = vmatprep.subr.mxu0 0.0
        %2027 = vmatpush1.xpose.msra.mxu0 0.0
        %2028 = vmatprep.subr.mxu0 0.0
        %2029 = vmatpush1.xpose.msra.mxu0 0.0
        %2030 = vmatprep.subr.mxu0 0.0
        %2031 = vmatpush1.xpose.msra.mxu0 0.0
        %2032 = vmatprep.subr.mxu0 0.0
        %2033 = vmatpush1.xpose.msra.mxu0 0.0
        %2034 = vmatprep.subr.mxu0 0.0
        %2035 = vmatpush1.xpose.msra.mxu0 0.0
        %2036 = vmatprep.subr.mxu0 0.0
        %2037 = vmatpush1.xpose.msra.mxu0 0.0
        %2038 = vmatprep.subr.mxu0 0.0
        %2039 = vmatpush1.xpose.msra.mxu0 0.0
        %2040 = vmatprep.subr.mxu0 0.0
        %2041 = vmatpush1.xpose.msra.mxu0 0.0
        %2042 = vmatprep.subr.mxu0 0.0
        %2043 = vmatpush1.xpose.msra.mxu0 0.0
        %2044 = vmatprep.subr.mxu0 0.0
        %2045 = vmatpush1.xpose.msra.mxu0 0.0
        %2046 = vmatprep.subr.mxu0 0.0
        %2047 = vmatpush1.xpose.msra.mxu0 0.0
        %2048 = vmatprep.subr.mxu0 0.0
        %2049 = vmatpush1.xpose.msra.mxu0 0.0
        %2050 = vmatprep.subr.mxu0 0.0
        %2051 = vmatpush1.xpose.msra.mxu0 0.0
        %2052 = vmatprep.subr.mxu0 0.0
        %2053 = vmatpush1.xpose.msra.mxu0 0.0
        %2054 = vmatprep.subr.mxu0 0.0
        %2055 = vmatpush1.xpose.msra.mxu0 0.0
        %2056 = vmatprep.subr.mxu0 0.0
        %2057 = vmatpush1.xpose.msra.mxu0 0.0
        %2058 = vmatprep.mubr.f32.mxu0 0.0
        %2059 = vmatmul.mubr.f32.gmra.mrb[0].mxu0 %v1983
        %v2060 = vpop.f32.mrb[0].mxu0
        %v2061 = vadd.f32 0.0, %v2060
        %v2062 = vpop.f32.mrb[0].mxu0
        %2063 = vmatprep.mubr.f32.mxu0 0.0
        %2064 = vmatmul.mubr.f32.gmra.mrb[0].mxu0 %v1986
        %v2065 = vpop.f32.mrb[0].mxu0
        %v2066 = vadd.f32 0.0, %v2065
        %v2067 = vpop.f32.mrb[0].mxu0
        %2068 = vdwg.mxu0
        %v2069 = vmul.f32 %v2061, 0.17677669
        %v2070 = vmul.f32 %v2066, 0.17677669
        %v2071 = vsel %vm1981, %v2069, -1000000.0
        %v2072 = vsel %vm1981, %v2070, -1000000.0
        %v2073 = vsel %vm932, %v2071, -inf
        %2074 = vmax.xlane.f32.xlu0 %v2073
        %v2075 = vpop.xlane.xlu0 %2074
        %v2076 = vsel %vm932, %v2072, -inf
        %2077 = vmax.xlane.f32.xlu0 %v2076
        %v2078 = vpop.xlane.xlu0 %2077
        %v2079 = vsub.f32 %v2071, %v2075
        %v2080 = vsub.f32 %v2072, %v2078
        %v2081 = vmul.f32 %v2079, 1.442695
        %v2082 = vpow.pop %v2081
        %v2083 = vmul.f32 %v2080, 1.442695
        %v2084 = vpow.pop %v2083
        %v2085 = vsel %vm932, %v2082, 0.0
        %2086 = vadd.xlane.f32.xlu0 %v2085
        %v2087 = vpop.xlane.xlu0 %2086
        %v2088 = vsel %vm932, %v2084, 0.0
        %2089 = vadd.xlane.f32.xlu0 %v2088
        %v2090 = vpop.xlane.xlu0 %2089
        %v2091 = vrcp.pop %v2087
        %v2092 = vrcp.pop %v2090
        %v2093 = vmul.f32 %v2082, %v2091
        %v2094 = vmul.f32 %v2084, %v2092
        %v2096 = vsel %vm932, %v2093, 0
        %v2099 = vsel %vm932, %v2094, 0
        %2101 = vmatprep.subr.mxu0 0.0
        %2102 = vmatpush1.msra.mxu0 %v828
        %2103 = vmatprep.subr.mxu0 0.0
        %2104 = vmatpush1.msra.mxu0 %v833
        %2105 = vmatprep.subr.mxu0 0.0
        %2106 = vmatpush1.msra.mxu0 0.0
        %2107 = vmatprep.subr.mxu0 0.0
        %2108 = vmatpush1.msra.mxu0 0.0
        %2109 = vmatprep.subr.mxu0 0.0
        %2110 = vmatpush1.msra.mxu0 0.0
        %2111 = vmatprep.subr.mxu0 0.0
        %2112 = vmatpush1.msra.mxu0 0.0
        %2113 = vmatprep.subr.mxu0 0.0
        %2114 = vmatpush1.msra.mxu0 0.0
        %2115 = vmatprep.subr.mxu0 0.0
        %2116 = vmatpush1.msra.mxu0 0.0
        %2117 = vmatprep.subr.mxu0 0.0
        %2118 = vmatpush1.msra.mxu0 0.0
        %2119 = vmatprep.subr.mxu0 0.0
        %2120 = vmatpush1.msra.mxu0 0.0
        %2121 = vmatprep.subr.mxu0 0.0
        %2122 = vmatpush1.msra.mxu0 0.0
        %2123 = vmatprep.subr.mxu0 0.0
        %2124 = vmatpush1.msra.mxu0 0.0
        %2125 = vmatprep.subr.mxu0 0.0
        %2126 = vmatpush1.msra.mxu0 0.0
        %2127 = vmatprep.subr.mxu0 0.0
        %2128 = vmatpush1.msra.mxu0 0.0
        %2129 = vmatprep.subr.mxu0 0.0
        %2130 = vmatpush1.msra.mxu0 0.0
        %2131 = vmatprep.subr.mxu0 0.0
        %2132 = vmatpush1.msra.mxu0 0.0
        %2133 = vmatprep.subr.mxu0 0.0
        %2134 = vmatpush1.msra.mxu0 0.0
        %2135 = vmatprep.subr.mxu0 0.0
        %2136 = vmatpush1.msra.mxu0 0.0
        %2137 = vmatprep.subr.mxu0 0.0
        %2138 = vmatpush1.msra.mxu0 0.0
        %2139 = vmatprep.subr.mxu0 0.0
        %2140 = vmatpush1.msra.mxu0 0.0
        %2141 = vmatprep.subr.mxu0 0.0
        %2142 = vmatpush1.msra.mxu0 0.0
        %2143 = vmatprep.subr.mxu0 0.0
        %2144 = vmatpush1.msra.mxu0 0.0
        %2145 = vmatprep.subr.mxu0 0.0
        %2146 = vmatpush1.msra.mxu0 0.0
        %2147 = vmatprep.subr.mxu0 0.0
        %2148 = vmatpush1.msra.mxu0 0.0
        %2149 = vmatprep.subr.mxu0 0.0
        %2150 = vmatpush1.msra.mxu0 0.0
        %2151 = vmatprep.subr.mxu0 0.0
        %2152 = vmatpush1.msra.mxu0 0.0
        %2153 = vmatprep.subr.mxu0 0.0
        %2154 = vmatpush1.msra.mxu0 0.0
        %2155 = vmatprep.subr.mxu0 0.0
        %2156 = vmatpush1.msra.mxu0 0.0
        %2157 = vmatprep.subr.mxu0 0.0
        %2158 = vmatpush1.msra.mxu0 0.0
        %2159 = vmatprep.subr.mxu0 0.0
        %2160 = vmatpush1.msra.mxu0 0.0
        %2161 = vmatprep.subr.mxu0 0.0
        %2162 = vmatpush1.msra.mxu0 0.0
        %2163 = vmatprep.subr.mxu0 0.0
        %2164 = vmatpush1.msra.mxu0 0.0
        %2165 = vmatprep.mubr.f32.mxu0 0.0
        %2166 = vmatmul.mubr.f32.gmra.mrb[0].mxu0 %v2096
        %v2167 = vpop.f32.mrb[0].mxu0
        %v2168 = vadd.f32 0.0, %v2167
        %v2169 = vpop.f32.mrb[0].mxu0
        %2170 = vmatprep.mubr.f32.mxu0 0.0
        %2171 = vmatmul.mubr.f32.gmra.mrb[0].mxu0 %v2099
        %v2172 = vpop.f32.mrb[0].mxu0
        %v2173 = vadd.f32 0.0, %v2172
        %v2174 = vpop.f32.mrb[0].mxu0
        %2175 = vdwg.mxu0
        %2176 = vrot.lane.b32.xlu0 %v658, 96
        %v2177 = vpop.permute.xlu0 %2176
        %2178 = vrot.lane.b32.xlu0 %v663, 96
        %v2179 = vpop.permute.xlu0 %2178
        %2180 = vrot.lane.b32.xlu0 %v743, 96
        %v2181 = vpop.permute.xlu0 %2180
        %2182 = vrot.lane.b32.xlu0 %v748, 96
        %v2183 = vpop.permute.xlu0 %2182
        %v2184 = vsel %vm840, %v2177, 0
        %v2186 = vsel %vm840, %v2179, 0
        %v2188 = vsel %vm840, %v2181, 0
        %v2190 = vsel %vm840, %v2183, 0
        %2192 = vmatprep.subr.mxu0 0.0
        %2193 = vmatpush1.xpose.msra.mxu0 %v2188
        %2194 = vmatprep.subr.mxu0 0.0
        %2195 = vmatpush1.xpose.msra.mxu0 %v2190
        %2196 = vmatprep.subr.mxu0 0.0
        %2197 = vmatpush1.xpose.msra.mxu0 0.0
        %2198 = vmatprep.subr.mxu0 0.0
        %2199 = vmatpush1.xpose.msra.mxu0 0.0
        %2200 = vmatprep.subr.mxu0 0.0
        %2201 = vmatpush1.xpose.msra.mxu0 0.0
        %2202 = vmatprep.subr.mxu0 0.0
        %2203 = vmatpush1.xpose.msra.mxu0 0.0
        %2204 = vmatprep.subr.mxu0 0.0
        %2205 = vmatpush1.xpose.msra.mxu0 0.0
        %2206 = vmatprep.subr.mxu0 0.0
        %2207 = vmatpush1.xpose.msra.mxu0 0.0
        %2208 = vmatprep.subr.mxu0 0.0
        %2209 = vmatpush1.xpose.msra.mxu0 0.0
        %2210 = vmatprep.subr.mxu0 0.0
        %2211 = vmatpush1.xpose.msra.mxu0 0.0
        %2212 = vmatprep.subr.mxu0 0.0
        %2213 = vmatpush1.xpose.msra.mxu0 0.0
        %2214 = vmatprep.subr.mxu0 0.0
        %2215 = vmatpush1.xpose.msra.mxu0 0.0
        %2216 = vmatprep.subr.mxu0 0.0
        %2217 = vmatpush1.xpose.msra.mxu0 0.0
        %2218 = vmatprep.subr.mxu0 0.0
        %2219 = vmatpush1.xpose.msra.mxu0 0.0
        %2220 = vmatprep.subr.mxu0 0.0
        %2221 = vmatpush1.xpose.msra.mxu0 0.0
        %2222 = vmatprep.subr.mxu0 0.0
        %2223 = vmatpush1.xpose.msra.mxu0 0.0
        %2224 = vmatprep.subr.mxu0 0.0
        %2225 = vmatpush1.xpose.msra.mxu0 0.0
        %2226 = vmatprep.subr.mxu0 0.0
        %2227 = vmatpush1.xpose.msra.mxu0 0.0
        %2228 = vmatprep.subr.mxu0 0.0
        %2229 = vmatpush1.xpose.msra.mxu0 0.0
        %2230 = vmatprep.subr.mxu0 0.0
        %2231 = vmatpush1.xpose.msra.mxu0 0.0
        %2232 = vmatprep.subr.mxu0 0.0
        %2233 = vmatpush1.xpose.msra.mxu0 0.0
        %2234 = vmatprep.subr.mxu0 0.0
        %2235 = vmatpush1.xpose.msra.mxu0 0.0
        %2236 = vmatprep.subr.mxu0 0.0
        %2237 = vmatpush1.xpose.msra.mxu0 0.0
        %2238 = vmatprep.subr.mxu0 0.0
        %2239 = vmatpush1.xpose.msra.mxu0 0.0
        %2240 = vmatprep.subr.mxu0 0.0
        %2241 = vmatpush1.xpose.msra.mxu0 0.0
        %2242 = vmatprep.subr.mxu0 0.0
        %2243 = vmatpush1.xpose.msra.mxu0 0.0
        %2244 = vmatprep.subr.mxu0 0.0
        %2245 = vmatpush1.xpose.msra.mxu0 0.0
        %2246 = vmatprep.subr.mxu0 0.0
        %2247 = vmatpush1.xpose.msra.mxu0 0.0
        %2248 = vmatprep.subr.mxu0 0.0
        %2249 = vmatpush1.xpose.msra.mxu0 0.0
        %2250 = vmatprep.subr.mxu0 0.0
        %2251 = vmatpush1.xpose.msra.mxu0 0.0
        %2252 = vmatprep.subr.mxu0 0.0
        %2253 = vmatpush1.xpose.msra.mxu0 0.0
        %2254 = vmatprep.subr.mxu0 0.0
        %2255 = vmatpush1.xpose.msra.mxu0 0.0
        %2256 = vmatprep.mubr.f32.mxu0 0.0
        %2257 = vmatmul.mubr.f32.gmra.mrb[0].mxu0 %v2184
        %v2258 = vpop.f32.mrb[0].mxu0
        %v2259 = vadd.f32 0.0, %v2258
        %v2260 = vpop.f32.mrb[0].mxu0
        %2261 = vmatprep.mubr.f32.mxu0 0.0
        %2262 = vmatmul.mubr.f32.gmra.mrb[0].mxu0 %v2186
        %v2263 = vpop.f32.mrb[0].mxu0
        %v2264 = vadd.f32 0.0, %v2263
        %v2265 = vpop.f32.mrb[0].mxu0
        %2266 = vdwg.mxu0
        %v2267 = vmul.f32 %v2259, 0.17677669
        %v2268 = vmul.f32 %v2264, 0.17677669
        %v2269 = vsel %vm1981, %v2267, -1000000.0
        %v2270 = vsel %vm1981, %v2268, -1000000.0
        %v2271 = vsel %vm932, %v2269, -inf
        %2272 = vmax.xlane.f32.xlu0 %v2271
        %v2273 = vpop.xlane.xlu0 %2272
        %v2274 = vsel %vm932, %v2270, -inf
        %2275 = vmax.xlane.f32.xlu0 %v2274
        %v2276 = vpop.xlane.xlu0 %2275
        %v2277 = vsub.f32 %v2269, %v2273
        %v2278 = vsub.f32 %v2270, %v2276
        %v2279 = vmul.f32 %v2277, 1.442695
        %v2280 = vpow.pop %v2279
        %v2281 = vmul.f32 %v2278, 1.442695
        %v2282 = vpow.pop %v2281
        %v2283 = vsel %vm932, %v2280, 0.0
        %2284 = vadd.xlane.f32.xlu0 %v2283
        %v2285 = vpop.xlane.xlu0 %2284
        %v2286 = vsel %vm932, %v2282, 0.0
        %2287 = vadd.xlane.f32.xlu0 %v2286
        %v2288 = vpop.xlane.xlu0 %2287
        %v2289 = vrcp.pop %v2285
        %v2290 = vrcp.pop %v2288
        %v2291 = vmul.f32 %v2280, %v2289
        %v2292 = vmul.f32 %v2282, %v2290
        %2295 = vrot.lane.b32.xlu0 %v828, 96
        %v2296 = vpop.permute.xlu0 %2295
        %2297 = vrot.lane.b32.xlu0 %v833, 96
        %v2298 = vpop.permute.xlu0 %2297
        %v2302 = vsel %vm932, %v2291, 0
        %v2305 = vsel %vm932, %v2292, 0
        %2307 = vmatprep.subr.mxu0 0.0
        %2308 = vmatpush1.msra.mxu0 %v2296
        %2309 = vmatprep.subr.mxu0 0.0
        %2310 = vmatpush1.msra.mxu0 %v2298
        %2311 = vmatprep.subr.mxu0 0.0
        %2312 = vmatpush1.msra.mxu0 0.0
        %2313 = vmatprep.subr.mxu0 0.0
        %2314 = vmatpush1.msra.mxu0 0.0
        %2315 = vmatprep.subr.mxu0 0.0
        %2316 = vmatpush1.msra.mxu0 0.0
        %2317 = vmatprep.subr.mxu0 0.0
        %2318 = vmatpush1.msra.mxu0 0.0
        %2319 = vmatprep.subr.mxu0 0.0
        %2320 = vmatpush1.msra.mxu0 0.0
        %2321 = vmatprep.subr.mxu0 0.0
        %2322 = vmatpush1.msra.mxu0 0.0
        %2323 = vmatprep.subr.mxu0 0.0
        %2324 = vmatpush1.msra.mxu0 0.0
        %2325 = vmatprep.subr.mxu0 0.0
        %2326 = vmatpush1.msra.mxu0 0.0
        %2327 = vmatprep.subr.mxu0 0.0
        %2328 = vmatpush1.msra.mxu0 0.0
        %2329 = vmatprep.subr.mxu0 0.0
        %2330 = vmatpush1.msra.mxu0 0.0
        %2331 = vmatprep.subr.mxu0 0.0
        %2332 = vmatpush1.msra.mxu0 0.0
        %2333 = vmatprep.subr.mxu0 0.0
        %2334 = vmatpush1.msra.mxu0 0.0
        %2335 = vmatprep.subr.mxu0 0.0
        %2336 = vmatpush1.msra.mxu0 0.0
        %2337 = vmatprep.subr.mxu0 0.0
        %2338 = vmatpush1.msra.mxu0 0.0
        %2339 = vmatprep.subr.mxu0 0.0
        %2340 = vmatpush1.msra.mxu0 0.0
        %2341 = vmatprep.subr.mxu0 0.0
        %2342 = vmatpush1.msra.mxu0 0.0
        %2343 = vmatprep.subr.mxu0 0.0
        %2344 = vmatpush1.msra.mxu0 0.0
        %2345 = vmatprep.subr.mxu0 0.0
        %2346 = vmatpush1.msra.mxu0 0.0
        %2347 = vmatprep.subr.mxu0 0.0
        %2348 = vmatpush1.msra.mxu0 0.0
        %2349 = vmatprep.subr.mxu0 0.0
        %2350 = vmatpush1.msra.mxu0 0.0
        %2351 = vmatprep.subr.mxu0 0.0
        %2352 = vmatpush1.msra.mxu0 0.0
        %2353 = vmatprep.subr.mxu0 0.0
        %2354 = vmatpush1.msra.mxu0 0.0
        %2355 = vmatprep.subr.mxu0 0.0
        %2356 = vmatpush1.msra.mxu0 0.0
        %2357 = vmatprep.subr.mxu0 0.0
        %2358 = vmatpush1.msra.mxu0 0.0
        %2359 = vmatprep.subr.mxu0 0.0
        %2360 = vmatpush1.msra.mxu0 0.0
        %2361 = vmatprep.subr.mxu0 0.0
        %2362 = vmatpush1.msra.mxu0 0.0
        %2363 = vmatprep.subr.mxu0 0.0
        %2364 = vmatpush1.msra.mxu0 0.0
        %2365 = vmatprep.subr.mxu0 0.0
        %2366 = vmatpush1.msra.mxu0 0.0
        %2367 = vmatprep.subr.mxu0 0.0
        %2368 = vmatpush1.msra.mxu0 0.0
        %2369 = vmatprep.subr.mxu0 0.0
        %2370 = vmatpush1.msra.mxu0 0.0
        %2371 = vmatprep.mubr.f32.mxu0 0.0
        %2372 = vmatmul.mubr.f32.gmra.mrb[0].mxu0 %v2302
        %v2373 = vpop.f32.mrb[0].mxu0
        %v2374 = vadd.f32 0.0, %v2373
        %v2375 = vpop.f32.mrb[0].mxu0
        %2376 = vmatprep.mubr.f32.mxu0 0.0
        %2377 = vmatmul.mubr.f32.gmra.mrb[0].mxu0 %v2305
        %v2378 = vpop.f32.mrb[0].mxu0
        %v2379 = vadd.f32 0.0, %v2378
        %v2380 = vpop.f32.mrb[0].mxu0
        %2381 = vdwg.mxu0
        %v2383 = vsel %vm840, %v2374, 0
        %v2386 = vsel %vm840, %v2379, 0
        %2388 = vmatprep.subr.mxu0 0.0
        %2389 = vmatpush1.msra.mxu0 %v569
        %2390 = vmatprep.subr.mxu0 0.0
        %2391 = vmatpush1.msra.mxu0 %v570
        %2392 = vmatprep.subr.mxu0 0.0
        %2393 = vmatpush1.msra.mxu0 %v571
        %2394 = vmatprep.subr.mxu0 0.0
        %2395 = vmatpush1.msra.mxu0 %v572
        %2396 = vmatprep.subr.mxu0 0.0
        %2397 = vmatpush1.msra.mxu0 0.0
        %2398 = vmatprep.subr.mxu0 0.0
        %2399 = vmatpush1.msra.mxu0 0.0
        %2400 = vmatprep.subr.mxu0 0.0
        %2401 = vmatpush1.msra.mxu0 0.0
        %2402 = vmatprep.subr.mxu0 0.0
        %2403 = vmatpush1.msra.mxu0 0.0
        %2404 = vmatprep.subr.mxu0 0.0
        %2405 = vmatpush1.msra.mxu0 0.0
        %2406 = vmatprep.subr.mxu0 0.0
        %2407 = vmatpush1.msra.mxu0 0.0
        %2408 = vmatprep.subr.mxu0 0.0
        %2409 = vmatpush1.msra.mxu0 0.0
        %2410 = vmatprep.subr.mxu0 0.0
        %2411 = vmatpush1.msra.mxu0 0.0
        %2412 = vmatprep.subr.mxu0 0.0
        %2413 = vmatpush1.msra.mxu0 0.0
        %2414 = vmatprep.subr.mxu0 0.0
        %2415 = vmatpush1.msra.mxu0 0.0
        %2416 = vmatprep.subr.mxu0 0.0
        %2417 = vmatpush1.msra.mxu0 0.0
        %2418 = vmatprep.subr.mxu0 0.0
        %2419 = vmatpush1.msra.mxu0 0.0
        %2420 = vmatprep.subr.mxu0 0.0
        %2421 = vmatpush1.msra.mxu0 0.0
        %2422 = vmatprep.subr.mxu0 0.0
        %2423 = vmatpush1.msra.mxu0 0.0
        %2424 = vmatprep.subr.mxu0 0.0
        %2425 = vmatpush1.msra.mxu0 0.0
        %2426 = vmatprep.subr.mxu0 0.0
        %2427 = vmatpush1.msra.mxu0 0.0
        %2428 = vmatprep.subr.mxu0 0.0
        %2429 = vmatpush1.msra.mxu0 0.0
        %2430 = vmatprep.subr.mxu0 0.0
        %2431 = vmatpush1.msra.mxu0 0.0
        %2432 = vmatprep.subr.mxu0 0.0
        %2433 = vmatpush1.msra.mxu0 0.0
        %2434 = vmatprep.subr.mxu0 0.0
        %2435 = vmatpush1.msra.mxu0 0.0
        %2436 = vmatprep.subr.mxu0 0.0
        %2437 = vmatpush1.msra.mxu0 0.0
        %2438 = vmatprep.subr.mxu0 0.0
        %2439 = vmatpush1.msra.mxu0 0.0
        %2440 = vmatprep.subr.mxu0 0.0
        %2441 = vmatpush1.msra.mxu0 0.0
        %2442 = vmatprep.subr.mxu0 0.0
        %2443 = vmatpush1.msra.mxu0 0.0
        %2444 = vmatprep.subr.mxu0 0.0
        %2445 = vmatpush1.msra.mxu0 0.0
        %2446 = vmatprep.subr.mxu0 0.0
        %2447 = vmatpush1.msra.mxu0 0.0
        %2448 = vmatprep.subr.mxu0 0.0
        %2449 = vmatpush1.msra.mxu0 0.0
        %2450 = vmatprep.subr.mxu0 0.0
        %2451 = vmatpush1.msra.mxu0 0.0
        %2452 = vmatprep.mubr.f32.mxu0 0.0
        %2453 = vmatmul.mubr.f32.gmra.mrb[0].mxu0 %v2383
        %v2454 = vpop.f32.mrb[0].mxu0
        %v2455 = vadd.f32 0.0, %v2454
        %v2456 = vpop.f32.mrb[0].mxu0
        %2457 = vmatprep.mubr.f32.mxu0 0.0
        %2458 = vmatmul.mubr.f32.gmra.mrb[0].mxu0 %v2386
        %v2459 = vpop.f32.mrb[0].mxu0
        %v2460 = vadd.f32 0.0, %v2459
        %v2461 = vpop.f32.mrb[0].mxu0
        %2462 = vdwg.mxu0
        %v2464 = vsel %vm840, %v2168, 0
        %v2467 = vsel %vm840, %v2173, 0
        %2469 = vmatprep.subr.mxu0 0.0
        %2470 = vmatpush1.msra.mxu0 %v565
        %2471 = vmatprep.subr.mxu0 0.0
        %2472 = vmatpush1.msra.mxu0 %v566
        %2473 = vmatprep.subr.mxu0 0.0
        %2474 = vmatpush1.msra.mxu0 %v567
        %2475 = vmatprep.subr.mxu0 0.0
        %2476 = vmatpush1.msra.mxu0 %v568
        %2477 = vmatprep.subr.mxu0 0.0
        %2478 = vmatpush1.msra.mxu0 0.0
        %2479 = vmatprep.subr.mxu0 0.0
        %2480 = vmatpush1.msra.mxu0 0.0
        %2481 = vmatprep.subr.mxu0 0.0
        %2482 = vmatpush1.msra.mxu0 0.0
        %2483 = vmatprep.subr.mxu0 0.0
        %2484 = vmatpush1.msra.mxu0 0.0
        %2485 = vmatprep.subr.mxu0 0.0
        %2486 = vmatpush1.msra.mxu0 0.0
        %2487 = vmatprep.subr.mxu0 0.0
        %2488 = vmatpush1.msra.mxu0 0.0
        %2489 = vmatprep.subr.mxu0 0.0
        %2490 = vmatpush1.msra.mxu0 0.0
        %2491 = vmatprep.subr.mxu0 0.0
        %2492 = vmatpush1.msra.mxu0 0.0
        %2493 = vmatprep.subr.mxu0 0.0
        %2494 = vmatpush1.msra.mxu0 0.0
        %2495 = vmatprep.subr.mxu0 0.0
        %2496 = vmatpush1.msra.mxu0 0.0
        %2497 = vmatprep.subr.mxu0 0.0
        %2498 = vmatpush1.msra.mxu0 0.0
        %2499 = vmatprep.subr.mxu0 0.0
        %2500 = vmatpush1.msra.mxu0 0.0
        %2501 = vmatprep.subr.mxu0 0.0
        %2502 = vmatpush1.msra.mxu0 0.0
        %2503 = vmatprep.subr.mxu0 0.0
        %2504 = vmatpush1.msra.mxu0 0.0
        %2505 = vmatprep.subr.mxu0 0.0
        %2506 = vmatpush1.msra.mxu0 0.0
        %2507 = vmatprep.subr.mxu0 0.0
        %2508 = vmatpush1.msra.mxu0 0.0
        %2509 = vmatprep.subr.mxu0 0.0
        %2510 = vmatpush1.msra.mxu0 0.0
        %2511 = vmatprep.subr.mxu0 0.0
        %2512 = vmatpush1.msra.mxu0 0.0
        %2513 = vmatprep.subr.mxu0 0.0
        %2514 = vmatpush1.msra.mxu0 0.0
        %2515 = vmatprep.subr.mxu0 0.0
        %2516 = vmatpush1.msra.mxu0 0.0
        %2517 = vmatprep.subr.mxu0 0.0
        %2518 = vmatpush1.msra.mxu0 0.0
        %2519 = vmatprep.subr.mxu0 0.0
        %2520 = vmatpush1.msra.mxu0 0.0
        %2521 = vmatprep.subr.mxu0 0.0
        %2522 = vmatpush1.msra.mxu0 0.0
        %2523 = vmatprep.subr.mxu0 0.0
        %2524 = vmatpush1.msra.mxu0 0.0
        %2525 = vmatprep.subr.mxu0 0.0
        %2526 = vmatpush1.msra.mxu0 0.0
        %2527 = vmatprep.subr.mxu0 0.0
        %2528 = vmatpush1.msra.mxu0 0.0
        %2529 = vmatprep.subr.mxu0 0.0
        %2530 = vmatpush1.msra.mxu0 0.0
        %2531 = vmatprep.subr.mxu0 0.0
        %2532 = vmatpush1.msra.mxu0 0.0
        %2533 = vmatprep.mubr.f32.mxu0 0.0
        %2534 = vmatmul.mubr.f32.gmra.mrb[0].mxu0 %v2464
        %v2535 = vpop.f32.mrb[0].mxu0
        %v2536 = vadd.f32 %v2455, %v2535
        %v2537 = vpop.f32.mrb[0].mxu0
        %2538 = vmatprep.mubr.f32.mxu0 0.0
        %2539 = vmatmul.mubr.f32.gmra.mrb[0].mxu0 %v2467
        %v2540 = vpop.f32.mrb[0].mxu0
        %v2541 = vadd.f32 %v2460, %v2540
        %v2542 = vpop.f32.mrb[0].mxu0
        %2543 = vdwg.mxu0
        %2544 = vrot.lane.b32.xlu0 %v658, 64
        %v2545 = vpop.permute.xlu0 %2544
        %2546 = vrot.lane.b32.xlu0 %v663, 64
        %v2547 = vpop.permute.xlu0 %2546
        %2548 = vrot.lane.b32.xlu0 %v743, 64
        %v2549 = vpop.permute.xlu0 %2548
        %2550 = vrot.lane.b32.xlu0 %v748, 64
        %v2551 = vpop.permute.xlu0 %2550
        %v2552 = vsel %vm840, %v2545, 0
        %v2554 = vsel %vm840, %v2547, 0
        %v2556 = vsel %vm840, %v2549, 0
        %v2558 = vsel %vm840, %v2551, 0
        %2560 = vmatprep.subr.mxu0 0.0
        %2561 = vmatpush1.xpose.msra.mxu0 %v2556
        %2562 = vmatprep.subr.mxu0 0.0
        %2563 = vmatpush1.xpose.msra.mxu0 %v2558
        %2564 = vmatprep.subr.mxu0 0.0
        %2565 = vmatpush1.xpose.msra.mxu0 0.0
        %2566 = vmatprep.subr.mxu0 0.0
        %2567 = vmatpush1.xpose.msra.mxu0 0.0
        %2568 = vmatprep.subr.mxu0 0.0
        %2569 = vmatpush1.xpose.msra.mxu0 0.0
        %2570 = vmatprep.subr.mxu0 0.0
        %2571 = vmatpush1.xpose.msra.mxu0 0.0
        %2572 = vmatprep.subr.mxu0 0.0
        %2573 = vmatpush1.xpose.msra.mxu0 0.0
        %2574 = vmatprep.subr.mxu0 0.0
        %2575 = vmatpush1.xpose.msra.mxu0 0.0
        %2576 = vmatprep.subr.mxu0 0.0
        %2577 = vmatpush1.xpose.msra.mxu0 0.0
        %2578 = vmatprep.subr.mxu0 0.0
        %2579 = vmatpush1.xpose.msra.mxu0 0.0
        %2580 = vmatprep.subr.mxu0 0.0
        %2581 = vmatpush1.xpose.msra.mxu0 0.0
        %2582 = vmatprep.subr.mxu0 0.0
        %2583 = vmatpush1.xpose.msra.mxu0 0.0
        %2584 = vmatprep.subr.mxu0 0.0
        %2585 = vmatpush1.xpose.msra.mxu0 0.0
        %2586 = vmatprep.subr.mxu0 0.0
        %2587 = vmatpush1.xpose.msra.mxu0 0.0
        %2588 = vmatprep.subr.mxu0 0.0
        %2589 = vmatpush1.xpose.msra.mxu0 0.0
        %2590 = vmatprep.subr.mxu0 0.0
        %2591 = vmatpush1.xpose.msra.mxu0 0.0
        %2592 = vmatprep.subr.mxu0 0.0
        %2593 = vmatpush1.xpose.msra.mxu0 0.0
        %2594 = vmatprep.subr.mxu0 0.0
        %2595 = vmatpush1.xpose.msra.mxu0 0.0
        %2596 = vmatprep.subr.mxu0 0.0
        %2597 = vmatpush1.xpose.msra.mxu0 0.0
        %2598 = vmatprep.subr.mxu0 0.0
        %2599 = vmatpush1.xpose.msra.mxu0 0.0
        %2600 = vmatprep.subr.mxu0 0.0
        %2601 = vmatpush1.xpose.msra.mxu0 0.0
        %2602 = vmatprep.subr.mxu0 0.0
        %2603 = vmatpush1.xpose.msra.mxu0 0.0
        %2604 = vmatprep.subr.mxu0 0.0
        %2605 = vmatpush1.xpose.msra.mxu0 0.0
        %2606 = vmatprep.subr.mxu0 0.0
        %2607 = vmatpush1.xpose.msra.mxu0 0.0
        %2608 = vmatprep.subr.mxu0 0.0
        %2609 = vmatpush1.xpose.msra.mxu0 0.0
        %2610 = vmatprep.subr.mxu0 0.0
        %2611 = vmatpush1.xpose.msra.mxu0 0.0
        %2612 = vmatprep.subr.mxu0 0.0
        %2613 = vmatpush1.xpose.msra.mxu0 0.0
        %2614 = vmatprep.subr.mxu0 0.0
        %2615 = vmatpush1.xpose.msra.mxu0 0.0
        %2616 = vmatprep.subr.mxu0 0.0
        %2617 = vmatpush1.xpose.msra.mxu0 0.0
        %2618 = vmatprep.subr.mxu0 0.0
        %2619 = vmatpush1.xpose.msra.mxu0 0.0
        %2620 = vmatprep.subr.mxu0 0.0
        %2621 = vmatpush1.xpose.msra.mxu0 0.0
        %2622 = vmatprep.subr.mxu0 0.0
        %2623 = vmatpush1.xpose.msra.mxu0 0.0
        %2624 = vmatprep.mubr.f32.mxu0 0.0
        %2625 = vmatmul.mubr.f32.gmra.mrb[0].mxu0 %v2552
        %v2626 = vpop.f32.mrb[0].mxu0
        %v2627 = vadd.f32 0.0, %v2626
        %v2628 = vpop.f32.mrb[0].mxu0
        %2629 = vmatprep.mubr.f32.mxu0 0.0
        %2630 = vmatmul.mubr.f32.gmra.mrb[0].mxu0 %v2554
        %v2631 = vpop.f32.mrb[0].mxu0
        %v2632 = vadd.f32 0.0, %v2631
        %v2633 = vpop.f32.mrb[0].mxu0
        %2634 = vdwg.mxu0
        %v2635 = vmul.f32 %v2627, 0.17677669
        %v2636 = vmul.f32 %v2632, 0.17677669
        %v2637 = vsel %vm1981, %v2635, -1000000.0
        %v2638 = vsel %vm1981, %v2636, -1000000.0
        %v2639 = vsel %vm932, %v2637, -inf
        %2640 = vmax.xlane.f32.xlu0 %v2639
        %v2641 = vpop.xlane.xlu0 %2640
        %v2642 = vsel %vm932, %v2638, -inf
        %2643 = vmax.xlane.f32.xlu0 %v2642
        %v2644 = vpop.xlane.xlu0 %2643
        %v2645 = vsub.f32 %v2637, %v2641
        %v2646 = vsub.f32 %v2638, %v2644
        %v2647 = vmul.f32 %v2645, 1.442695
        %v2648 = vpow.pop %v2647
        %v2649 = vmul.f32 %v2646, 1.442695
        %v2650 = vpow.pop %v2649
        %v2651 = vsel %vm932, %v2648, 0.0
        %2652 = vadd.xlane.f32.xlu0 %v2651
        %v2653 = vpop.xlane.xlu0 %2652
        %v2654 = vsel %vm932, %v2650, 0.0
        %2655 = vadd.xlane.f32.xlu0 %v2654
        %v2656 = vpop.xlane.xlu0 %2655
        %v2657 = vrcp.pop %v2653
        %v2658 = vrcp.pop %v2656
        %v2659 = vmul.f32 %v2648, %v2657
        %v2660 = vmul.f32 %v2650, %v2658
        %2661 = vrot.lane.b32.xlu0 %v828, 64
        %v2662 = vpop.permute.xlu0 %2661
        %2663 = vrot.lane.b32.xlu0 %v833, 64
        %v2664 = vpop.permute.xlu0 %2663
        %v2668 = vsel %vm932, %v2659, 0
        %v2671 = vsel %vm932, %v2660, 0
        %2673 = vmatprep.subr.mxu0 0.0
        %2674 = vmatpush1.msra.mxu0 %v2662
        %2675 = vmatprep.subr.mxu0 0.0
        %2676 = vmatpush1.msra.mxu0 %v2664
        %2677 = vmatprep.subr.mxu0 0.0
        %2678 = vmatpush1.msra.mxu0 0.0
        %2679 = vmatprep.subr.mxu0 0.0
        %2680 = vmatpush1.msra.mxu0 0.0
        %2681 = vmatprep.subr.mxu0 0.0
        %2682 = vmatpush1.msra.mxu0 0.0
        %2683 = vmatprep.subr.mxu0 0.0
        %2684 = vmatpush1.msra.mxu0 0.0
        %2685 = vmatprep.subr.mxu0 0.0
        %2686 = vmatpush1.msra.mxu0 0.0
        %2687 = vmatprep.subr.mxu0 0.0
        %2688 = vmatpush1.msra.mxu0 0.0
        %2689 = vmatprep.subr.mxu0 0.0
        %2690 = vmatpush1.msra.mxu0 0.0
        %2691 = vmatprep.subr.mxu0 0.0
        %2692 = vmatpush1.msra.mxu0 0.0
        %2693 = vmatprep.subr.mxu0 0.0
        %2694 = vmatpush1.msra.mxu0 0.0
        %2695 = vmatprep.subr.mxu0 0.0
        %2696 = vmatpush1.msra.mxu0 0.0
        %2697 = vmatprep.subr.mxu0 0.0
        %2698 = vmatpush1.msra.mxu0 0.0
        %2699 = vmatprep.subr.mxu0 0.0
        %2700 = vmatpush1.msra.mxu0 0.0
        %2701 = vmatprep.subr.mxu0 0.0
        %2702 = vmatpush1.msra.mxu0 0.0
        %2703 = vmatprep.subr.mxu0 0.0
        %2704 = vmatpush1.msra.mxu0 0.0
        %2705 = vmatprep.subr.mxu0 0.0
        %2706 = vmatpush1.msra.mxu0 0.0
        %2707 = vmatprep.subr.mxu0 0.0
        %2708 = vmatpush1.msra.mxu0 0.0
        %2709 = vmatprep.subr.mxu0 0.0
        %2710 = vmatpush1.msra.mxu0 0.0
        %2711 = vmatprep.subr.mxu0 0.0
        %2712 = vmatpush1.msra.mxu0 0.0
        %2713 = vmatprep.subr.mxu0 0.0
        %2714 = vmatpush1.msra.mxu0 0.0
        %2715 = vmatprep.subr.mxu0 0.0
        %2716 = vmatpush1.msra.mxu0 0.0
        %2717 = vmatprep.subr.mxu0 0.0
        %2718 = vmatpush1.msra.mxu0 0.0
        %2719 = vmatprep.subr.mxu0 0.0
        %2720 = vmatpush1.msra.mxu0 0.0
        %2721 = vmatprep.subr.mxu0 0.0
        %2722 = vmatpush1.msra.mxu0 0.0
        %2723 = vmatprep.subr.mxu0 0.0
        %2724 = vmatpush1.msra.mxu0 0.0
        %2725 = vmatprep.subr.mxu0 0.0
        %2726 = vmatpush1.msra.mxu0 0.0
        %2727 = vmatprep.subr.mxu0 0.0
        %2728 = vmatpush1.msra.mxu0 0.0
        %2729 = vmatprep.subr.mxu0 0.0
        %2730 = vmatpush1.msra.mxu0 0.0
        %2731 = vmatprep.subr.mxu0 0.0
        %2732 = vmatpush1.msra.mxu0 0.0
        %2733 = vmatprep.subr.mxu0 0.0
        %2734 = vmatpush1.msra.mxu0 0.0
        %2735 = vmatprep.subr.mxu0 0.0
        %2736 = vmatpush1.msra.mxu0 0.0
        %2737 = vmatprep.mubr.f32.mxu0 0.0
        %2738 = vmatmul.mubr.f32.gmra.mrb[0].mxu0 %v2668
        %v2739 = vpop.f32.mrb[0].mxu0
        %v2740 = vadd.f32 0.0, %v2739
        %v2741 = vpop.f32.mrb[0].mxu0
        %2742 = vmatprep.mubr.f32.mxu0 0.0
        %2743 = vmatmul.mubr.f32.gmra.mrb[0].mxu0 %v2671
        %v2744 = vpop.f32.mrb[0].mxu0
        %v2745 = vadd.f32 0.0, %v2744
        %v2746 = vpop.f32.mrb[0].mxu0
        %2747 = vdwg.mxu0
        %v2749 = vsel %vm840, %v2740, 0
        %v2752 = vsel %vm840, %v2745, 0
        %2754 = vmatprep.subr.mxu0 0.0
        %2755 = vmatpush1.msra.mxu0 %v573
        %2756 = vmatprep.subr.mxu0 0.0
        %2757 = vmatpush1.msra.mxu0 %v574
        %2758 = vmatprep.subr.mxu0 0.0
        %2759 = vmatpush1.msra.mxu0 %v575
        %2760 = vmatprep.subr.mxu0 0.0
        %2761 = vmatpush1.msra.mxu0 %v576
        %2762 = vmatprep.subr.mxu0 0.0
        %2763 = vmatpush1.msra.mxu0 0.0
        %2764 = vmatprep.subr.mxu0 0.0
        %2765 = vmatpush1.msra.mxu0 0.0
        %2766 = vmatprep.subr.mxu0 0.0
        %2767 = vmatpush1.msra.mxu0 0.0
        %2768 = vmatprep.subr.mxu0 0.0
        %2769 = vmatpush1.msra.mxu0 0.0
        %2770 = vmatprep.subr.mxu0 0.0
        %2771 = vmatpush1.msra.mxu0 0.0
        %2772 = vmatprep.subr.mxu0 0.0
        %2773 = vmatpush1.msra.mxu0 0.0
        %2774 = vmatprep.subr.mxu0 0.0
        %2775 = vmatpush1.msra.mxu0 0.0
        %2776 = vmatprep.subr.mxu0 0.0
        %2777 = vmatpush1.msra.mxu0 0.0
        %2778 = vmatprep.subr.mxu0 0.0
        %2779 = vmatpush1.msra.mxu0 0.0
        %2780 = vmatprep.subr.mxu0 0.0
        %2781 = vmatpush1.msra.mxu0 0.0
        %2782 = vmatprep.subr.mxu0 0.0
        %2783 = vmatpush1.msra.mxu0 0.0
        %2784 = vmatprep.subr.mxu0 0.0
        %2785 = vmatpush1.msra.mxu0 0.0
        %2786 = vmatprep.subr.mxu0 0.0
        %2787 = vmatpush1.msra.mxu0 0.0
        %2788 = vmatprep.subr.mxu0 0.0
        %2789 = vmatpush1.msra.mxu0 0.0
        %2790 = vmatprep.subr.mxu0 0.0
        %2791 = vmatpush1.msra.mxu0 0.0
        %2792 = vmatprep.subr.mxu0 0.0
        %2793 = vmatpush1.msra.mxu0 0.0
        %2794 = vmatprep.subr.mxu0 0.0
        %2795 = vmatpush1.msra.mxu0 0.0
        %2796 = vmatprep.subr.mxu0 0.0
        %2797 = vmatpush1.msra.mxu0 0.0
        %2798 = vmatprep.subr.mxu0 0.0
        %2799 = vmatpush1.msra.mxu0 0.0
        %2800 = vmatprep.subr.mxu0 0.0
        %2801 = vmatpush1.msra.mxu0 0.0
        %2802 = vmatprep.subr.mxu0 0.0
        %2803 = vmatpush1.msra.mxu0 0.0
        %2804 = vmatprep.subr.mxu0 0.0
        %2805 = vmatpush1.msra.mxu0 0.0
        %2806 = vmatprep.subr.mxu0 0.0
        %2807 = vmatpush1.msra.mxu0 0.0
        %2808 = vmatprep.subr.mxu0 0.0
        %2809 = vmatpush1.msra.mxu0 0.0
        %2810 = vmatprep.subr.mxu0 0.0
        %2811 = vmatpush1.msra.mxu0 0.0
        %2812 = vmatprep.subr.mxu0 0.0
        %2813 = vmatpush1.msra.mxu0 0.0
        %2814 = vmatprep.subr.mxu0 0.0
        %2815 = vmatpush1.msra.mxu0 0.0
        %2816 = vmatprep.subr.mxu0 0.0
        %2817 = vmatpush1.msra.mxu0 0.0
        %2818 = vmatprep.mubr.f32.mxu0 0.0
        %2819 = vmatmul.mubr.f32.gmra.mrb[0].mxu0 %v2749
        %v2820 = vpop.f32.mrb[0].mxu0
        %v2821 = vadd.f32 0.0, %v2820
        %v2822 = vpop.f32.mrb[0].mxu0
        %2823 = vmatprep.mubr.f32.mxu0 0.0
        %2824 = vmatmul.mubr.f32.gmra.mrb[0].mxu0 %v2752
        %v2825 = vpop.f32.mrb[0].mxu0
        %v2826 = vadd.f32 0.0, %v2825
        %v2827 = vpop.f32.mrb[0].mxu0
        %2828 = vdwg.mxu0
        %v2829 = vadd.f32 %v2536, %v2821
        %v2830 = vadd.f32 %v2541, %v2826
        %2831 = vrot.lane.b32.xlu0 %v658, 32
        %v2832 = vpop.permute.xlu0 %2831
        %2833 = vrot.lane.b32.xlu0 %v663, 32
        %v2834 = vpop.permute.xlu0 %2833
        %2835 = vrot.lane.b32.xlu0 %v743, 32
        %v2836 = vpop.permute.xlu0 %2835
        %2837 = vrot.lane.b32.xlu0 %v748, 32
        %v2838 = vpop.permute.xlu0 %2837
        %v2839 = vsel %vm840, %v2832, 0
        %v2841 = vsel %vm840, %v2834, 0
        %v2843 = vsel %vm840, %v2836, 0
        %v2845 = vsel %vm840, %v2838, 0
        %2847 = vmatprep.subr.mxu0 0.0
        %2848 = vmatpush1.xpose.msra.mxu0 %v2843
        %2849 = vmatprep.subr.mxu0 0.0
        %2850 = vmatpush1.xpose.msra.mxu0 %v2845
        %2851 = vmatprep.subr.mxu0 0.0
        %2852 = vmatpush1.xpose.msra.mxu0 0.0
        %2853 = vmatprep.subr.mxu0 0.0
        %2854 = vmatpush1.xpose.msra.mxu0 0.0
        %2855 = vmatprep.subr.mxu0 0.0
        %2856 = vmatpush1.xpose.msra.mxu0 0.0
        %2857 = vmatprep.subr.mxu0 0.0
        %2858 = vmatpush1.xpose.msra.mxu0 0.0
        %2859 = vmatprep.subr.mxu0 0.0
        %2860 = vmatpush1.xpose.msra.mxu0 0.0
        %2861 = vmatprep.subr.mxu0 0.0
        %2862 = vmatpush1.xpose.msra.mxu0 0.0
        %2863 = vmatprep.subr.mxu0 0.0
        %2864 = vmatpush1.xpose.msra.mxu0 0.0
        %2865 = vmatprep.subr.mxu0 0.0
        %2866 = vmatpush1.xpose.msra.mxu0 0.0
        %2867 = vmatprep.subr.mxu0 0.0
        %2868 = vmatpush1.xpose.msra.mxu0 0.0
        %2869 = vmatprep.subr.mxu0 0.0
        %2870 = vmatpush1.xpose.msra.mxu0 0.0
        %2871 = vmatprep.subr.mxu0 0.0
        %2872 = vmatpush1.xpose.msra.mxu0 0.0
        %2873 = vmatprep.subr.mxu0 0.0
        %2874 = vmatpush1.xpose.msra.mxu0 0.0
        %2875 = vmatprep.subr.mxu0 0.0
        %2876 = vmatpush1.xpose.msra.mxu0 0.0
        %2877 = vmatprep.subr.mxu0 0.0
        %2878 = vmatpush1.xpose.msra.mxu0 0.0
        %2879 = vmatprep.subr.mxu0 0.0
        %2880 = vmatpush1.xpose.msra.mxu0 0.0
        %2881 = vmatprep.subr.mxu0 0.0
        %2882 = vmatpush1.xpose.msra.mxu0 0.0
        %2883 = vmatprep.subr.mxu0 0.0
        %2884 = vmatpush1.xpose.msra.mxu0 0.0
        %2885 = vmatprep.subr.mxu0 0.0
        %2886 = vmatpush1.xpose.msra.mxu0 0.0
        %2887 = vmatprep.subr.mxu0 0.0
        %2888 = vmatpush1.xpose.msra.mxu0 0.0
        %2889 = vmatprep.subr.mxu0 0.0
        %2890 = vmatpush1.xpose.msra.mxu0 0.0
        %2891 = vmatprep.subr.mxu0 0.0
        %2892 = vmatpush1.xpose.msra.mxu0 0.0
        %2893 = vmatprep.subr.mxu0 0.0
        %2894 = vmatpush1.xpose.msra.mxu0 0.0
        %2895 = vmatprep.subr.mxu0 0.0
        %2896 = vmatpush1.xpose.msra.mxu0 0.0
        %2897 = vmatprep.subr.mxu0 0.0
        %2898 = vmatpush1.xpose.msra.mxu0 0.0
        %2899 = vmatprep.subr.mxu0 0.0
        %2900 = vmatpush1.xpose.msra.mxu0 0.0
        %2901 = vmatprep.subr.mxu0 0.0
        %2902 = vmatpush1.xpose.msra.mxu0 0.0
        %2903 = vmatprep.subr.mxu0 0.0
        %2904 = vmatpush1.xpose.msra.mxu0 0.0
        %2905 = vmatprep.subr.mxu0 0.0
        %2906 = vmatpush1.xpose.msra.mxu0 0.0
        %2907 = vmatprep.subr.mxu0 0.0
        %2908 = vmatpush1.xpose.msra.mxu0 0.0
        %2909 = vmatprep.subr.mxu0 0.0
        %2910 = vmatpush1.xpose.msra.mxu0 0.0
        %2911 = vmatprep.mubr.f32.mxu0 0.0
        %2912 = vmatmul.mubr.f32.gmra.mrb[0].mxu0 %v2839
        %v2913 = vpop.f32.mrb[0].mxu0
        %v2914 = vadd.f32 0.0, %v2913
        %v2915 = vpop.f32.mrb[0].mxu0
        %2916 = vmatprep.mubr.f32.mxu0 0.0
        %2917 = vmatmul.mubr.f32.gmra.mrb[0].mxu0 %v2841
        %v2918 = vpop.f32.mrb[0].mxu0
        %v2919 = vadd.f32 0.0, %v2918
        %v2920 = vpop.f32.mrb[0].mxu0
        %2921 = vdwg.mxu0
        %v2922 = vmul.f32 %v2914, 0.17677669
        %v2923 = vmul.f32 %v2919, 0.17677669
        %v2924 = vsel %vm1981, %v2922, -1000000.0
        %v2925 = vsel %vm1981, %v2923, -1000000.0
        %v2926 = vsel %vm932, %v2924, -inf
        %2927 = vmax.xlane.f32.xlu0 %v2926
        %v2928 = vpop.xlane.xlu0 %2927
        %v2929 = vsel %vm932, %v2925, -inf
        %2930 = vmax.xlane.f32.xlu0 %v2929
        %v2931 = vpop.xlane.xlu0 %2930
        %v2932 = vsub.f32 %v2924, %v2928
        %v2933 = vsub.f32 %v2925, %v2931
        %v2934 = vmul.f32 %v2932, 1.442695
        %v2935 = vpow.pop %v2934
        %v2936 = vmul.f32 %v2933, 1.442695
        %v2937 = vpow.pop %v2936
        %v2938 = vsel %vm932, %v2935, 0.0
        %2939 = vadd.xlane.f32.xlu0 %v2938
        %v2940 = vpop.xlane.xlu0 %2939
        %v2941 = vsel %vm932, %v2937, 0.0
        %2942 = vadd.xlane.f32.xlu0 %v2941
        %v2943 = vpop.xlane.xlu0 %2942
        %v2944 = vrcp.pop %v2940
        %v2945 = vrcp.pop %v2943
        %v2946 = vmul.f32 %v2935, %v2944
        %v2947 = vmul.f32 %v2937, %v2945
        %2948 = vrot.lane.b32.xlu0 %v828, 32
        %v2949 = vpop.permute.xlu0 %2948
        %2950 = vrot.lane.b32.xlu0 %v833, 32
        %v2951 = vpop.permute.xlu0 %2950
        %v2955 = vsel %vm932, %v2946, 0
        %v2958 = vsel %vm932, %v2947, 0
        %2960 = vmatprep.subr.mxu0 0.0
        %2961 = vmatpush1.msra.mxu0 %v2949
        %2962 = vmatprep.subr.mxu0 0.0
        %2963 = vmatpush1.msra.mxu0 %v2951
        %2964 = vmatprep.subr.mxu0 0.0
        %2965 = vmatpush1.msra.mxu0 0.0
        %2966 = vmatprep.subr.mxu0 0.0
        %2967 = vmatpush1.msra.mxu0 0.0
        %2968 = vmatprep.subr.mxu0 0.0
        %2969 = vmatpush1.msra.mxu0 0.0
        %2970 = vmatprep.subr.mxu0 0.0
        %2971 = vmatpush1.msra.mxu0 0.0
        %2972 = vmatprep.subr.mxu0 0.0
        %2973 = vmatpush1.msra.mxu0 0.0
        %2974 = vmatprep.subr.mxu0 0.0
        %2975 = vmatpush1.msra.mxu0 0.0
        %2976 = vmatprep.subr.mxu0 0.0
        %2977 = vmatpush1.msra.mxu0 0.0
        %2978 = vmatprep.subr.mxu0 0.0
        %2979 = vmatpush1.msra.mxu0 0.0
        %2980 = vmatprep.subr.mxu0 0.0
        %2981 = vmatpush1.msra.mxu0 0.0
        %2982 = vmatprep.subr.mxu0 0.0
        %2983 = vmatpush1.msra.mxu0 0.0
        %2984 = vmatprep.subr.mxu0 0.0
        %2985 = vmatpush1.msra.mxu0 0.0
        %2986 = vmatprep.subr.mxu0 0.0
        %2987 = vmatpush1.msra.mxu0 0.0
        %2988 = vmatprep.subr.mxu0 0.0
        %2989 = vmatpush1.msra.mxu0 0.0
        %2990 = vmatprep.subr.mxu0 0.0
        %2991 = vmatpush1.msra.mxu0 0.0
        %2992 = vmatprep.subr.mxu0 0.0
        %2993 = vmatpush1.msra.mxu0 0.0
        %2994 = vmatprep.subr.mxu0 0.0
        %2995 = vmatpush1.msra.mxu0 0.0
        %2996 = vmatprep.subr.mxu0 0.0
        %2997 = vmatpush1.msra.mxu0 0.0
        %2998 = vmatprep.subr.mxu0 0.0
        %2999 = vmatpush1.msra.mxu0 0.0
        %3000 = vmatprep.subr.mxu0 0.0
        %3001 = vmatpush1.msra.mxu0 0.0
        %3002 = vmatprep.subr.mxu0 0.0
        %3003 = vmatpush1.msra.mxu0 0.0
        %3004 = vmatprep.subr.mxu0 0.0
        %3005 = vmatpush1.msra.mxu0 0.0
        %3006 = vmatprep.subr.mxu0 0.0
        %3007 = vmatpush1.msra.mxu0 0.0
        %3008 = vmatprep.subr.mxu0 0.0
        %3009 = vmatpush1.msra.mxu0 0.0
        %3010 = vmatprep.subr.mxu0 0.0
        %3011 = vmatpush1.msra.mxu0 0.0
        %3012 = vmatprep.subr.mxu0 0.0
        %3013 = vmatpush1.msra.mxu0 0.0
        %3014 = vmatprep.subr.mxu0 0.0
        %3015 = vmatpush1.msra.mxu0 0.0
        %3016 = vmatprep.subr.mxu0 0.0
        %3017 = vmatpush1.msra.mxu0 0.0
        %3018 = vmatprep.subr.mxu0 0.0
        %3019 = vmatpush1.msra.mxu0 0.0
        %3020 = vmatprep.subr.mxu0 0.0
        %3021 = vmatpush1.msra.mxu0 0.0
        %3022 = vmatprep.subr.mxu0 0.0
        %3023 = vmatpush1.msra.mxu0 0.0
        %3024 = vmatprep.mubr.f32.mxu0 0.0
        %3025 = vmatmul.mubr.f32.gmra.mrb[0].mxu0 %v2955
        %v3026 = vpop.f32.mrb[0].mxu0
        %v3027 = vadd.f32 0.0, %v3026
        %v3028 = vpop.f32.mrb[0].mxu0
        %3029 = vmatprep.mubr.f32.mxu0 0.0
        %3030 = vmatmul.mubr.f32.gmra.mrb[0].mxu0 %v2958
        %v3031 = vpop.f32.mrb[0].mxu0
        %v3032 = vadd.f32 0.0, %v3031
        %v3033 = vpop.f32.mrb[0].mxu0
        %3034 = vdwg.mxu0
        %v3036 = vsel %vm840, %v3027, 0
        %v3039 = vsel %vm840, %v3032, 0
        %3041 = vmatprep.subr.mxu0 0.0
        %3042 = vmatpush1.msra.mxu0 %v577
        %3043 = vmatprep.subr.mxu0 0.0
        %3044 = vmatpush1.msra.mxu0 %v578
        %3045 = vmatprep.subr.mxu0 0.0
        %3046 = vmatpush1.msra.mxu0 %v579
        %3047 = vmatprep.subr.mxu0 0.0
        %3048 = vmatpush1.msra.mxu0 %v580
        %3049 = vmatprep.subr.mxu0 0.0
        %3050 = vmatpush1.msra.mxu0 0.0
        %3051 = vmatprep.subr.mxu0 0.0
        %3052 = vmatpush1.msra.mxu0 0.0
        %3053 = vmatprep.subr.mxu0 0.0
        %3054 = vmatpush1.msra.mxu0 0.0
        %3055 = vmatprep.subr.mxu0 0.0
        %3056 = vmatpush1.msra.mxu0 0.0
        %3057 = vmatprep.subr.mxu0 0.0
        %3058 = vmatpush1.msra.mxu0 0.0
        %3059 = vmatprep.subr.mxu0 0.0
        %3060 = vmatpush1.msra.mxu0 0.0
        %3061 = vmatprep.subr.mxu0 0.0
        %3062 = vmatpush1.msra.mxu0 0.0
        %3063 = vmatprep.subr.mxu0 0.0
        %3064 = vmatpush1.msra.mxu0 0.0
        %3065 = vmatprep.subr.mxu0 0.0
        %3066 = vmatpush1.msra.mxu0 0.0
        %3067 = vmatprep.subr.mxu0 0.0
        %3068 = vmatpush1.msra.mxu0 0.0
        %3069 = vmatprep.subr.mxu0 0.0
        %3070 = vmatpush1.msra.mxu0 0.0
        %3071 = vmatprep.subr.mxu0 0.0
        %3072 = vmatpush1.msra.mxu0 0.0
        %3073 = vmatprep.subr.mxu0 0.0
        %3074 = vmatpush1.msra.mxu0 0.0
        %3075 = vmatprep.subr.mxu0 0.0
        %3076 = vmatpush1.msra.mxu0 0.0
        %3077 = vmatprep.subr.mxu0 0.0
        %3078 = vmatpush1.msra.mxu0 0.0
        %3079 = vmatprep.subr.mxu0 0.0
        %3080 = vmatpush1.msra.mxu0 0.0
        %3081 = vmatprep.subr.mxu0 0.0
        %3082 = vmatpush1.msra.mxu0 0.0
        %3083 = vmatprep.subr.mxu0 0.0
        %3084 = vmatpush1.msra.mxu0 0.0
        %3085 = vmatprep.subr.mxu0 0.0
        %3086 = vmatpush1.msra.mxu0 0.0
        %3087 = vmatprep.subr.mxu0 0.0
        %3088 = vmatpush1.msra.mxu0 0.0
        %3089 = vmatprep.subr.mxu0 0.0
        %3090 = vmatpush1.msra.mxu0 0.0
        %3091 = vmatprep.subr.mxu0 0.0
        %3092 = vmatpush1.msra.mxu0 0.0
        %3093 = vmatprep.subr.mxu0 0.0
        %3094 = vmatpush1.msra.mxu0 0.0
        %3095 = vmatprep.subr.mxu0 0.0
        %3096 = vmatpush1.msra.mxu0 0.0
        %3097 = vmatprep.subr.mxu0 0.0
        %3098 = vmatpush1.msra.mxu0 0.0
        %3099 = vmatprep.subr.mxu0 0.0
        %3100 = vmatpush1.msra.mxu0 0.0
        %3101 = vmatprep.subr.mxu0 0.0
        %3102 = vmatpush1.msra.mxu0 0.0
        %3103 = vmatprep.subr.mxu0 0.0
        %3104 = vmatpush1.msra.mxu0 0.0
        %3105 = vmatprep.mubr.f32.mxu0 0.0
        %3106 = vmatmul.mubr.f32.gmra.mrb[0].mxu0 %v3036
        %v3107 = vpop.f32.mrb[0].mxu0
        %v3108 = vadd.f32 0.0, %v3107
        %v3109 = vpop.f32.mrb[0].mxu0
        %3110 = vmatprep.mubr.f32.mxu0 0.0
        %3111 = vmatmul.mubr.f32.gmra.mrb[0].mxu0 %v3039
        %v3112 = vpop.f32.mrb[0].mxu0
        %v3113 = vadd.f32 0.0, %v3112
        %v3114 = vpop.f32.mrb[0].mxu0
        %3115 = vdwg.mxu0
        %v3116 = vadd.f32 %v2829, %v3108
        %v3117 = vadd.f32 %v2830, %v3113
        %v3118 = vadd.f32 %v511, %v1976
        %v3119 = vadd.f32 %v512, %v1977
        %v3120 = vadd.f32 %v513, %v3116
        %v3121 = vadd.f32 %v514, %v3117
        %v3122 = vld [vmem:[%s6] sm:$0x1]
        %v3123 = vld [vmem:[%s7] sm:$0x1]
        %3124 = vadd.xlane.f32.xlu0 %v3118
        %v3125 = vpop.xlane.xlu0 %3124
        %3126 = vadd.xlane.f32.xlu0 %v3119
        %v3127 = vpop.xlane.xlu0 %3126
        %3128 = vadd.xlane.f32.xlu0 %v3120
        %v3129 = vpop.xlane.xlu0 %3128
        %3130 = vadd.xlane.f32.xlu0 %v3121
        %v3131 = vpop.xlane.xlu0 %3130
        %v3132 = vrcp.pop 128.0
        %v3133 = vmul.f32 %v3125, %v3132
        %v3134 = vmul.f32 %v3127, %v3132
        %v3135 = vmul.f32 %v3129, %v3132
        %v3136 = vmul.f32 %v3131, %v3132
        %v3137 = vsub.f32 %v3118, %v3133
        %v3138 = vsub.f32 %v3119, %v3134
        %v3139 = vsub.f32 %v3120, %v3135
        %v3140 = vsub.f32 %v3121, %v3136
        %v3141 = vmul.f32 %v3137, %v3137
        %v3142 = vmul.f32 %v3138, %v3138
        %v3143 = vmul.f32 %v3139, %v3139
        %v3144 = vmul.f32 %v3140, %v3140
        %3145 = vadd.xlane.f32.xlu0 %v3141
        %v3146 = vpop.xlane.xlu0 %3145
        %3147 = vadd.xlane.f32.xlu0 %v3142
        %v3148 = vpop.xlane.xlu0 %3147
        %3149 = vadd.xlane.f32.xlu0 %v3143
        %v3150 = vpop.xlane.xlu0 %3149
        %3151 = vadd.xlane.f32.xlu0 %v3144
        %v3152 = vpop.xlane.xlu0 %3151
        %v3153 = vmul.f32 %v3146, %v3132
        %v3154 = vmul.f32 %v3148, %v3132
        %v3155 = vmul.f32 %v3150, %v3132
        %v3156 = vmul.f32 %v3152, %v3132
        %v3157 = vadd.f32 %v3153, 1e-05
        %v3158 = vadd.f32 %v3154, 1e-05
        %v3159 = vadd.f32 %v3155, 1e-05
        %v3160 = vadd.f32 %v3156, 1e-05
        %v3161 = vrsqrt.pop %v3157
        %v3162 = vrsqrt.pop %v3158
        %v3163 = vrsqrt.pop %v3159
        %v3164 = vrsqrt.pop %v3160
        %v3165 = vmul.f32 %v3137, %v3161
        %v3166 = vmul.f32 %v3138, %v3162
        %v3167 = vmul.f32 %v3139, %v3163
        %v3168 = vmul.f32 %v3140, %v3164
        %v3170 = vlaneseq
        %v3171 = vshrl.u32 %v3170, 7
        %v3172 = vsub.s32 0, %v3171
        %v3173 = vrot.slane %v3122, %v3172
        %v3175 = vmul.f32 %v3165, %v3173
        %v3176 = vmul.f32 %v3166, %v3173
        %v3177 = vmul.f32 %v3167, %v3173
        %v3178 = vmul.f32 %v3168, %v3173
        %v3180 = vlaneseq
        %v3181 = vshrl.u32 %v3180, 7
        %v3182 = vsub.s32 0, %v3181
        %v3183 = vrot.slane %v3123, %v3182
        %v3185 = vadd.f32 %v3175, %v3183
        %v3186 = vadd.f32 %v3176, %v3183
        %v3187 = vadd.f32 %v3177, %v3183
        %v3188 = vadd.f32 %v3178, %v3183
        %v3189 = vld [vmem:[%s8] sm:$0xff]
        %v3190 = vld [vmem:[%s8 + $0x8] sm:$0xff]
        %v3191 = vld [vmem:[%s8 + $0x10] sm:$0xff]
        %v3192 = vld [vmem:[%s8 + $0x18] sm:$0xff]
        %v3193 = vld [vmem:[%s8 + $0x20] sm:$0xff]
        %v3194 = vld [vmem:[%s8 + $0x28] sm:$0xff]
        %v3195 = vld [vmem:[%s8 + $0x30] sm:$0xff]
        %v3196 = vld [vmem:[%s8 + $0x38] sm:$0xff]
        %v3197 = vld [vmem:[%s8 + $0x40] sm:$0xff]
        %v3198 = vld [vmem:[%s8 + $0x48] sm:$0xff]
        %v3199 = vld [vmem:[%s8 + $0x50] sm:$0xff]
        %v3200 = vld [vmem:[%s8 + $0x58] sm:$0xff]
        %v3201 = vld [vmem:[%s8 + $0x60] sm:$0xff]
        %v3202 = vld [vmem:[%s8 + $0x68] sm:$0xff]
        %v3203 = vld [vmem:[%s8 + $0x70] sm:$0xff]
        %v3204 = vld [vmem:[%s8 + $0x78] sm:$0xff]
        %v3205 = vld [vmem:[%s8 + $0x80] sm:$0xff]
        %v3206 = vld [vmem:[%s8 + $0x88] sm:$0xff]
        %v3207 = vld [vmem:[%s8 + $0x90] sm:$0xff]
        %v3208 = vld [vmem:[%s8 + $0x98] sm:$0xff]
        %v3209 = vld [vmem:[%s8 + $0xa0] sm:$0xff]
        %v3210 = vld [vmem:[%s8 + $0xa8] sm:$0xff]
        %v3211 = vld [vmem:[%s8 + $0xb0] sm:$0xff]
        %v3212 = vld [vmem:[%s8 + $0xb8] sm:$0xff]
        %v3213 = vld [vmem:[%s8 + $0xc0] sm:$0xff]
        %v3214 = vld [vmem:[%s8 + $0xc8] sm:$0xff]
        %v3215 = vld [vmem:[%s8 + $0xd0] sm:$0xff]
        %v3216 = vld [vmem:[%s8 + $0xd8] sm:$0xff]
        %v3217 = vld [vmem:[%s8 + $0xe0] sm:$0xff]
        %v3218 = vld [vmem:[%s8 + $0xe8] sm:$0xff]
        %v3219 = vld [vmem:[%s8 + $0xf0] sm:$0xff]
        %v3220 = vld [vmem:[%s8 + $0xf8] sm:$0xff]
        %v3221 = vld [vmem:[%s9] sm:$0x3]
        %v3223 = vlaneseq
        %v3224 = vshrl.u32 %v3223, 7
        %v3225 = vsub.s32 0, %v3224
        %v3226 = vrot.slane %v3221, %v3225
        %v3227 = vlaneseq
        %v3228 = vshrl.u32 %v3227, 7
        %v3229 = vsub.s32 1, %v3228
        %v3230 = vrot.slane %v3221, %v3229
        %3233 = vmatprep.subr.mxu0 %v3190
        %3234 = vmatpush1.msra.mxu0 %v3189
        %3235 = vmatprep.subr.mxu0 %v3192
        %3236 = vmatpush1.msra.mxu0 %v3191
        %3237 = vmatprep.subr.mxu0 %v3194
        %3238 = vmatpush1.msra.mxu0 %v3193
        %3239 = vmatprep.subr.mxu0 %v3196
        %3240 = vmatpush1.msra.mxu0 %v3195
        %3241 = vmatprep.subr.mxu0 %v3198
        %3242 = vmatpush1.msra.mxu0 %v3197
        %3243 = vmatprep.subr.mxu0 %v3200
        %3244 = vmatpush1.msra.mxu0 %v3199
        %3245 = vmatprep.subr.mxu0 %v3202
        %3246 = vmatpush1.msra.mxu0 %v3201
        %3247 = vmatprep.subr.mxu0 %v3204
        %3248 = vmatpush1.msra.mxu0 %v3203
        %3249 = vmatprep.subr.mxu0 %v3206
        %3250 = vmatpush1.msra.mxu0 %v3205
        %3251 = vmatprep.subr.mxu0 %v3208
        %3252 = vmatpush1.msra.mxu0 %v3207
        %3253 = vmatprep.subr.mxu0 %v3210
        %3254 = vmatpush1.msra.mxu0 %v3209
        %3255 = vmatprep.subr.mxu0 %v3212
        %3256 = vmatpush1.msra.mxu0 %v3211
        %3257 = vmatprep.subr.mxu0 %v3214
        %3258 = vmatpush1.msra.mxu0 %v3213
        %3259 = vmatprep.subr.mxu0 %v3216
        %3260 = vmatpush1.msra.mxu0 %v3215
        %3261 = vmatprep.subr.mxu0 %v3218
        %3262 = vmatpush1.msra.mxu0 %v3217
        %3263 = vmatprep.subr.mxu0 %v3220
        %3264 = vmatpush1.msra.mxu0 %v3219
        %3265 = vmatprep.subr.mxu0 0.0
        %3266 = vmatpush1.msra.mxu0 0.0
        %3267 = vmatprep.subr.mxu0 0.0
        %3268 = vmatpush1.msra.mxu0 0.0
        %3269 = vmatprep.subr.mxu0 0.0
        %3270 = vmatpush1.msra.mxu0 0.0
        %3271 = vmatprep.subr.mxu0 0.0
        %3272 = vmatpush1.msra.mxu0 0.0
        %3273 = vmatprep.subr.mxu0 0.0
        %3274 = vmatpush1.msra.mxu0 0.0
        %3275 = vmatprep.subr.mxu0 0.0
        %3276 = vmatpush1.msra.mxu0 0.0
        %3277 = vmatprep.subr.mxu0 0.0
        %3278 = vmatpush1.msra.mxu0 0.0
        %3279 = vmatprep.subr.mxu0 0.0
        %3280 = vmatpush1.msra.mxu0 0.0
        %3281 = vmatprep.subr.mxu0 0.0
        %3282 = vmatpush1.msra.mxu0 0.0
        %3283 = vmatprep.subr.mxu0 0.0
        %3284 = vmatpush1.msra.mxu0 0.0
        %3285 = vmatprep.subr.mxu0 0.0
        %3286 = vmatpush1.msra.mxu0 0.0
        %3287 = vmatprep.subr.mxu0 0.0
        %3288 = vmatpush1.msra.mxu0 0.0
        %3289 = vmatprep.subr.mxu0 0.0
        %3290 = vmatpush1.msra.mxu0 0.0
        %3291 = vmatprep.subr.mxu0 0.0
        %3292 = vmatpush1.msra.mxu0 0.0
        %3293 = vmatprep.subr.mxu0 0.0
        %3294 = vmatpush1.msra.mxu0 0.0
        %3295 = vmatprep.subr.mxu0 0.0
        %3296 = vmatpush1.msra.mxu0 0.0
        %3297 = vmatprep.mubr.f32.mxu0 0.0
        %3298 = vmatmul.mubr.f32.gmra.mrb[0].mxu0 %v3185
        %v3299 = vpop.f32.mrb[0].mxu0
        %v3300 = vadd.f32 %v3226, %v3299
        %v3301 = vpop.f32.mrb[0].mxu0
        %v3302 = vadd.f32 %v3230, %v3301
        %3303 = vmatprep.mubr.f32.mxu0 0.0
        %3304 = vmatmul.mubr.f32.gmra.mrb[0].mxu0 %v3186
        %v3305 = vpop.f32.mrb[0].mxu0
        %v3306 = vadd.f32 %v3226, %v3305
        %v3307 = vpop.f32.mrb[0].mxu0
        %v3308 = vadd.f32 %v3230, %v3307
        %3309 = vmatprep.mubr.f32.mxu0 0.0
        %3310 = vmatmul.mubr.f32.gmra.mrb[0].mxu0 %v3187
        %v3311 = vpop.f32.mrb[0].mxu0
        %v3312 = vadd.f32 %v3226, %v3311
        %v3313 = vpop.f32.mrb[0].mxu0
        %v3314 = vadd.f32 %v3230, %v3313
        %3315 = vmatprep.mubr.f32.mxu0 0.0
        %3316 = vmatmul.mubr.f32.gmra.mrb[0].mxu0 %v3188
        %v3317 = vpop.f32.mrb[0].mxu0
        %v3318 = vadd.f32 %v3226, %v3317
        %v3319 = vpop.f32.mrb[0].mxu0
        %v3320 = vadd.f32 %v3230, %v3319
        %3321 = vdwg.mxu0
        %v3322 = vmax.f32 %v3300, 0.0
        %v3323 = vmax.f32 %v3302, 0.0
        %v3324 = vmax.f32 %v3306, 0.0
        %v3325 = vmax.f32 %v3308, 0.0
        %v3326 = vmax.f32 %v3312, 0.0
        %v3327 = vmax.f32 %v3314, 0.0
        %v3328 = vmax.f32 %v3318, 0.0
        %v3329 = vmax.f32 %v3320, 0.0
        %v3330 = vld [vmem:[#allocation10] sm:$0xff]
        %v3331 = vld [vmem:[#allocation10 + $0x8] sm:$0xff]
        %v3332 = vld [vmem:[#allocation10 + $0x10] sm:$0xff]
        %v3333 = vld [vmem:[#allocation10 + $0x18] sm:$0xff]
        %v3334 = vld [vmem:[#allocation10 + $0x20] sm:$0xff]
        %v3335 = vld [vmem:[#allocation10 + $0x28] sm:$0xff]
        %v3336 = vld [vmem:[#allocation10 + $0x30] sm:$0xff]
        %v3337 = vld [vmem:[#allocation10 + $0x38] sm:$0xff]
        %v3338 = vld [vmem:[#allocation10 + $0x40] sm:$0xff]
        %v3339 = vld [vmem:[#allocation10 + $0x48] sm:$0xff]
        %v3340 = vld [vmem:[#allocation10 + $0x50] sm:$0xff]
        %v3341 = vld [vmem:[#allocation10 + $0x58] sm:$0xff]
        %v3342 = vld [vmem:[#allocation10 + $0x60] sm:$0xff]
        %v3343 = vld [vmem:[#allocation10 + $0x68] sm:$0xff]
        %v3344 = vld [vmem:[#allocation10 + $0x70] sm:$0xff]
        %v3345 = vld [vmem:[#allocation10 + $0x78] sm:$0xff]
        %v3346 = vld [vmem:[#allocation10 + $0x80] sm:$0xff]
        %v3347 = vld [vmem:[#allocation10 + $0x88] sm:$0xff]
        %v3348 = vld [vmem:[#allocation10 + $0x90] sm:$0xff]
        %v3349 = vld [vmem:[#allocation10 + $0x98] sm:$0xff]
        %v3350 = vld [vmem:[#allocation10 + $0xa0] sm:$0xff]
        %v3351 = vld [vmem:[#allocation10 + $0xa8] sm:$0xff]
        %v3352 = vld [vmem:[#allocation10 + $0xb0] sm:$0xff]
        %v3353 = vld [vmem:[#allocation10 + $0xb8] sm:$0xff]
        %v3354 = vld [vmem:[#allocation10 + $0xc0] sm:$0xff]
        %v3355 = vld [vmem:[#allocation10 + $0xc8] sm:$0xff]
        %v3356 = vld [vmem:[#allocation10 + $0xd0] sm:$0xff]
        %v3357 = vld [vmem:[#allocation10 + $0xd8] sm:$0xff]
        %v3358 = vld [vmem:[#allocation10 + $0xe0] sm:$0xff]
        %v3359 = vld [vmem:[#allocation10 + $0xe8] sm:$0xff]
        %v3360 = vld [vmem:[#allocation10 + $0xf0] sm:$0xff]
        %v3361 = vld [vmem:[#allocation10 + $0xf8] sm:$0xff]
        %v3362 = vld [vmem:[%s11] sm:$0x1]
        %v3364 = vlaneseq
        %v3365 = vshrl.u32 %v3364, 7
        %v3366 = vsub.s32 0, %v3365
        %v3367 = vrot.slane %v3362, %v3366
        %3369 = vmatprep.subr.mxu0 0.0
        %3370 = vmatpush1.msra.mxu0 %v3330
        %3371 = vmatprep.subr.mxu0 0.0
        %3372 = vmatpush1.msra.mxu0 %v3331
        %3373 = vmatprep.subr.mxu0 0.0
        %3374 = vmatpush1.msra.mxu0 %v3332
        %3375 = vmatprep.subr.mxu0 0.0
        %3376 = vmatpush1.msra.mxu0 %v3333
        %3377 = vmatprep.subr.mxu0 0.0
        %3378 = vmatpush1.msra.mxu0 %v3334
        %3379 = vmatprep.subr.mxu0 0.0
        %3380 = vmatpush1.msra.mxu0 %v3335
        %3381 = vmatprep.subr.mxu0 0.0
        %3382 = vmatpush1.msra.mxu0 %v3336
        %3383 = vmatprep.subr.mxu0 0.0
        %3384 = vmatpush1.msra.mxu0 %v3337
        %3385 = vmatprep.subr.mxu0 0.0
        %3386 = vmatpush1.msra.mxu0 %v3338
        %3387 = vmatprep.subr.mxu0 0.0
        %3388 = vmatpush1.msra.mxu0 %v3339
        %3389 = vmatprep.subr.mxu0 0.0
        %3390 = vmatpush1.msra.mxu0 %v3340
        %3391 = vmatprep.subr.mxu0 0.0
        %3392 = vmatpush1.msra.mxu0 %v3341
        %3393 = vmatprep.subr.mxu0 0.0
        %3394 = vmatpush1.msra.mxu0 %v3342
        %3395 = vmatprep.subr.mxu0 0.0
        %3396 = vmatpush1.msra.mxu0 %v3343
        %3397 = vmatprep.subr.mxu0 0.0
        %3398 = vmatpush1.msra.mxu0 %v3344
        %3399 = vmatprep.subr.mxu0 0.0
        %3400 = vmatpush1.msra.mxu0 %v3345
        %3401 = vmatprep.subr.mxu0 0.0
        %3402 = vmatpush1.msra.mxu0 %v3346
        %3403 = vmatprep.subr.mxu0 0.0
        %3404 = vmatpush1.msra.mxu0 %v3347
        %3405 = vmatprep.subr.mxu0 0.0
        %3406 = vmatpush1.msra.mxu0 %v3348
        %3407 = vmatprep.subr.mxu0 0.0
        %3408 = vmatpush1.msra.mxu0 %v3349
        %3409 = vmatprep.subr.mxu0 0.0
        %3410 = vmatpush1.msra.mxu0 %v3350
        %3411 = vmatprep.subr.mxu0 0.0
        %3412 = vmatpush1.msra.mxu0 %v3351
        %3413 = vmatprep.subr.mxu0 0.0
        %3414 = vmatpush1.msra.mxu0 %v3352
        %3415 = vmatprep.subr.mxu0 0.0
        %3416 = vmatpush1.msra.mxu0 %v3353
        %3417 = vmatprep.subr.mxu0 0.0
        %3418 = vmatpush1.msra.mxu0 %v3354
        %3419 = vmatprep.subr.mxu0 0.0
        %3420 = vmatpush1.msra.mxu0 %v3355
        %3421 = vmatprep.subr.mxu0 0.0
        %3422 = vmatpush1.msra.mxu0 %v3356
        %3423 = vmatprep.subr.mxu0 0.0
        %3424 = vmatpush1.msra.mxu0 %v3357
        %3425 = vmatprep.subr.mxu0 0.0
        %3426 = vmatpush1.msra.mxu0 %v3358
        %3427 = vmatprep.subr.mxu0 0.0
        %3428 = vmatpush1.msra.mxu0 %v3359
        %3429 = vmatprep.subr.mxu0 0.0
        %3430 = vmatpush1.msra.mxu0 %v3360
        %3431 = vmatprep.subr.mxu0 0.0
        %3432 = vmatpush1.msra.mxu0 %v3361
        %3433 = vmatprep.mubr.f32.mxu0 %v3323
        %3434 = vmatmul.mubr.f32.gmra.mrb[0].mxu0 %v3322
        %v3435 = vpop.f32.mrb[0].mxu0
        %v3436 = vadd.f32 %v3367, %v3435
        %v3437 = vpop.f32.mrb[0].mxu0
        %3438 = vmatprep.mubr.f32.mxu0 %v3325
        %3439 = vmatmul.mubr.f32.gmra.mrb[0].mxu0 %v3324
        %v3440 = vpop.f32.mrb[0].mxu0
        %v3441 = vadd.f32 %v3367, %v3440
        %v3442 = vpop.f32.mrb[0].mxu0
        %3443 = vmatprep.mubr.f32.mxu0 %v3327
        %3444 = vmatmul.mubr.f32.gmra.mrb[0].mxu0 %v3326
        %v3445 = vpop.f32.mrb[0].mxu0
        %v3446 = vadd.f32 %v3367, %v3445
        %v3447 = vpop.f32.mrb[0].mxu0
        %3448 = vmatprep.mubr.f32.mxu0 %v3329
        %3449 = vmatmul.mubr.f32.gmra.mrb[0].mxu0 %v3328
        %v3450 = vpop.f32.mrb[0].mxu0
        %v3451 = vadd.f32 %v3367, %v3450
        %v3452 = vpop.f32.mrb[0].mxu0
        %3453 = vdwg.mxu0
        %v3454 = vadd.f32 %v3185, %v3436
        %v3455 = vadd.f32 %v3186, %v3441
        %v3456 = vadd.f32 %v3187, %v3446
        %v3457 = vadd.f32 %v3188, %v3451
        %v3458 = vld [vmem:[%s12] sm:$0x1]
        %v3459 = vld [vmem:[%s13] sm:$0x1]
        %3460 = vadd.xlane.f32.xlu0 %v3454
        %v3461 = vpop.xlane.xlu0 %3460
        %3462 = vadd.xlane.f32.xlu0 %v3455
        %v3463 = vpop.xlane.xlu0 %3462
        %3464 = vadd.xlane.f32.xlu0 %v3456
        %v3465 = vpop.xlane.xlu0 %3464
        %3466 = vadd.xlane.f32.xlu0 %v3457
        %v3467 = vpop.xlane.xlu0 %3466
        %v3468 = vmul.f32 %v3461, %v3132
        %v3469 = vmul.f32 %v3463, %v3132
        %v3470 = vmul.f32 %v3465, %v3132
        %v3471 = vmul.f32 %v3467, %v3132
        %v3472 = vsub.f32 %v3454, %v3468
        %v3473 = vsub.f32 %v3455, %v3469
        %v3474 = vsub.f32 %v3456, %v3470
        %v3475 = vsub.f32 %v3457, %v3471
        %v3476 = vmul.f32 %v3472, %v3472
        %v3477 = vmul.f32 %v3473, %v3473
        %v3478 = vmul.f32 %v3474, %v3474
        %v3479 = vmul.f32 %v3475, %v3475
        %3480 = vadd.xlane.f32.xlu0 %v3476
        %v3481 = vpop.xlane.xlu0 %3480
        %3482 = vadd.xlane.f32.xlu0 %v3477
        %v3483 = vpop.xlane.xlu0 %3482
        %3484 = vadd.xlane.f32.xlu0 %v3478
        %v3485 = vpop.xlane.xlu0 %3484
        %3486 = vadd.xlane.f32.xlu0 %v3479
        %v3487 = vpop.xlane.xlu0 %3486
        %v3488 = vmul.f32 %v3481, %v3132
        %v3489 = vmul.f32 %v3483, %v3132
        %v3490 = vmul.f32 %v3485, %v3132
        %v3491 = vmul.f32 %v3487, %v3132
        %v3492 = vadd.f32 %v3488, 1e-05
        %v3493 = vadd.f32 %v3489, 1e-05
        %v3494 = vadd.f32 %v3490, 1e-05
        %v3495 = vadd.f32 %v3491, 1e-05
        %v3496 = vrsqrt.pop %v3492
        %v3497 = vrsqrt.pop %v3493
        %v3498 = vrsqrt.pop %v3494
        %v3499 = vrsqrt.pop %v3495
        %v3500 = vmul.f32 %v3472, %v3496
        %v3501 = vmul.f32 %v3473, %v3497
        %v3502 = vmul.f32 %v3474, %v3498
        %v3503 = vmul.f32 %v3475, %v3499
        %v3505 = vlaneseq
        %v3506 = vshrl.u32 %v3505, 7
        %v3507 = vsub.s32 0, %v3506
        %v3508 = vrot.slane %v3458, %v3507
        %v3510 = vmul.f32 %v3500, %v3508
        %v3511 = vmul.f32 %v3501, %v3508
        %v3512 = vmul.f32 %v3502, %v3508
        %v3513 = vmul.f32 %v3503, %v3508
        %v3515 = vlaneseq
        %v3516 = vshrl.u32 %v3515, 7
        %v3517 = vsub.s32 0, %v3516
        %v3518 = vrot.slane %v3459, %v3517
        %v3520 = vadd.f32 %v3510, %v3518
        %v3521 = vadd.f32 %v3511, %v3518
        %v3522 = vadd.f32 %v3512, %v3518
        %v3523 = vadd.f32 %v3513, %v3518
        %s3524 = scalar_lea.vmem %s2, 128
        %v3525 = vld [vmem:[%s3524] sm:$0xff]
        %v3526 = vld [vmem:[%s3524 + $0x8] sm:$0xff]
        %v3527 = vld [vmem:[%s3524 + $0x10] sm:$0xff]
        %v3528 = vld [vmem:[%s3524 + $0x18] sm:$0xff]
        %v3529 = vld [vmem:[%s3524 + $0x20] sm:$0xff]
        %v3530 = vld [vmem:[%s3524 + $0x28] sm:$0xff]
        %v3531 = vld [vmem:[%s3524 + $0x30] sm:$0xff]
        %v3532 = vld [vmem:[%s3524 + $0x38] sm:$0xff]
        %v3533 = vld [vmem:[%s3524 + $0x40] sm:$0xff]
        %v3534 = vld [vmem:[%s3524 + $0x48] sm:$0xff]
        %v3535 = vld [vmem:[%s3524 + $0x50] sm:$0xff]
        %v3536 = vld [vmem:[%s3524 + $0x58] sm:$0xff]
        %v3537 = vld [vmem:[%s3524 + $0x60] sm:$0xff]
        %v3538 = vld [vmem:[%s3524 + $0x68] sm:$0xff]
        %v3539 = vld [vmem:[%s3524 + $0x70] sm:$0xff]
        %v3540 = vld [vmem:[%s3524 + $0x78] sm:$0xff]
        %s3541 = scalar_lea.vmem [#allocation4], 128
        %v3542 = vld [vmem:[%s3541] sm:$0xff]
        %v3543 = vld [vmem:[%s3541 + $0x8] sm:$0xff]
        %v3544 = vld [vmem:[%s3541 + $0x10] sm:$0xff]
        %v3545 = vld [vmem:[%s3541 + $0x18] sm:$0xff]
        %v3546 = vld [vmem:[%s3541 + $0x20] sm:$0xff]
        %v3547 = vld [vmem:[%s3541 + $0x28] sm:$0xff]
        %v3548 = vld [vmem:[%s3541 + $0x30] sm:$0xff]
        %v3549 = vld [vmem:[%s3541 + $0x38] sm:$0xff]
        %v3550 = vld [vmem:[%s3541 + $0x40] sm:$0xff]
        %v3551 = vld [vmem:[%s3541 + $0x48] sm:$0xff]
        %v3552 = vld [vmem:[%s3541 + $0x50] sm:$0xff]
        %v3553 = vld [vmem:[%s3541 + $0x58] sm:$0xff]
        %v3554 = vld [vmem:[%s3541 + $0x60] sm:$0xff]
        %v3555 = vld [vmem:[%s3541 + $0x68] sm:$0xff]
        %v3556 = vld [vmem:[%s3541 + $0x70] sm:$0xff]
        %v3557 = vld [vmem:[%s3541 + $0x78] sm:$0xff]
        %s3558 = scalar_lea.vmem [#allocation7], 128
        %v3559 = vld [vmem:[%s3558] sm:$0xff]
        %v3560 = vld [vmem:[%s3558 + $0x8] sm:$0xff]
        %v3561 = vld [vmem:[%s3558 + $0x10] sm:$0xff]
        %v3562 = vld [vmem:[%s3558 + $0x18] sm:$0xff]
        %v3563 = vld [vmem:[%s3558 + $0x20] sm:$0xff]
        %v3564 = vld [vmem:[%s3558 + $0x28] sm:$0xff]
        %v3565 = vld [vmem:[%s3558 + $0x30] sm:$0xff]
        %v3566 = vld [vmem:[%s3558 + $0x38] sm:$0xff]
        %v3567 = vld [vmem:[%s3558 + $0x40] sm:$0xff]
        %v3568 = vld [vmem:[%s3558 + $0x48] sm:$0xff]
        %v3569 = vld [vmem:[%s3558 + $0x50] sm:$0xff]
        %v3570 = vld [vmem:[%s3558 + $0x58] sm:$0xff]
        %v3571 = vld [vmem:[%s3558 + $0x60] sm:$0xff]
        %v3572 = vld [vmem:[%s3558 + $0x68] sm:$0xff]
        %v3573 = vld [vmem:[%s3558 + $0x70] sm:$0xff]
        %v3574 = vld [vmem:[%s3558 + $0x78] sm:$0xff]
        %s3575 = scalar_lea.vmem [#allocation9], 128
        %v3576 = vld [vmem:[%s3575] sm:$0xff]
        %v3577 = vld [vmem:[%s3575 + $0x8] sm:$0xff]
        %v3578 = vld [vmem:[%s3575 + $0x10] sm:$0xff]
        %v3579 = vld [vmem:[%s3575 + $0x18] sm:$0xff]
        %v3580 = vld [vmem:[%s3575 + $0x20] sm:$0xff]
        %v3581 = vld [vmem:[%s3575 + $0x28] sm:$0xff]
        %v3582 = vld [vmem:[%s3575 + $0x30] sm:$0xff]
        %v3583 = vld [vmem:[%s3575 + $0x38] sm:$0xff]
        %v3584 = vld [vmem:[%s3575 + $0x40] sm:$0xff]
        %v3585 = vld [vmem:[%s3575 + $0x48] sm:$0xff]
        %v3586 = vld [vmem:[%s3575 + $0x50] sm:$0xff]
        %v3587 = vld [vmem:[%s3575 + $0x58] sm:$0xff]
        %v3588 = vld [vmem:[%s3575 + $0x60] sm:$0xff]
        %v3589 = vld [vmem:[%s3575 + $0x68] sm:$0xff]
        %v3590 = vld [vmem:[%s3575 + $0x70] sm:$0xff]
        %v3591 = vld [vmem:[%s3575 + $0x78] sm:$0xff]
        %3592 = vmatprep.subr.mxu0 0.0
        %3593 = vmatpush1.msra.mxu0 %v3525
        %3594 = vmatprep.subr.mxu0 0.0
        %3595 = vmatpush1.msra.mxu0 %v3526
        %3596 = vmatprep.subr.mxu0 0.0
        %3597 = vmatpush1.msra.mxu0 %v3527
        %3598 = vmatprep.subr.mxu0 0.0
        %3599 = vmatpush1.msra.mxu0 %v3528
        %3600 = vmatprep.subr.mxu0 0.0
        %3601 = vmatpush1.msra.mxu0 %v3529
        %3602 = vmatprep.subr.mxu0 0.0
        %3603 = vmatpush1.msra.mxu0 %v3530
        %3604 = vmatprep.subr.mxu0 0.0
        %3605 = vmatpush1.msra.mxu0 %v3531
        %3606 = vmatprep.subr.mxu0 0.0
        %3607 = vmatpush1.msra.mxu0 %v3532
        %3608 = vmatprep.subr.mxu0 0.0
        %3609 = vmatpush1.msra.mxu0 %v3533
        %3610 = vmatprep.subr.mxu0 0.0
        %3611 = vmatpush1.msra.mxu0 %v3534
        %3612 = vmatprep.subr.mxu0 0.0
        %3613 = vmatpush1.msra.mxu0 %v3535
        %3614 = vmatprep.subr.mxu0 0.0
        %3615 = vmatpush1.msra.mxu0 %v3536
        %3616 = vmatprep.subr.mxu0 0.0
        %3617 = vmatpush1.msra.mxu0 %v3537
        %3618 = vmatprep.subr.mxu0 0.0
        %3619 = vmatpush1.msra.mxu0 %v3538
        %3620 = vmatprep.subr.mxu0 0.0
        %3621 = vmatpush1.msra.mxu0 %v3539
        %3622 = vmatprep.subr.mxu0 0.0
        %3623 = vmatpush1.msra.mxu0 %v3540
        %3624 = vmatprep.subr.mxu0 0.0
        %3625 = vmatpush1.msra.mxu0 0.0
        %3626 = vmatprep.subr.mxu0 0.0
        %3627 = vmatpush1.msra.mxu0 0.0
        %3628 = vmatprep.subr.mxu0 0.0
        %3629 = vmatpush1.msra.mxu0 0.0
        %3630 = vmatprep.subr.mxu0 0.0
        %3631 = vmatpush1.msra.mxu0 0.0
        %3632 = vmatprep.subr.mxu0 0.0
        %3633 = vmatpush1.msra.mxu0 0.0
        %3634 = vmatprep.subr.mxu0 0.0
        %3635 = vmatpush1.msra.mxu0 0.0
        %3636 = vmatprep.subr.mxu0 0.0
        %3637 = vmatpush1.msra.mxu0 0.0
        %3638 = vmatprep.subr.mxu0 0.0
        %3639 = vmatpush1.msra.mxu0 0.0
        %3640 = vmatprep.subr.mxu0 0.0
        %3641 = vmatpush1.msra.mxu0 0.0
        %3642 = vmatprep.subr.mxu0 0.0
        %3643 = vmatpush1.msra.mxu0 0.0
        %3644 = vmatprep.subr.mxu0 0.0
        %3645 = vmatpush1.msra.mxu0 0.0
        %3646 = vmatprep.subr.mxu0 0.0
        %3647 = vmatpush1.msra.mxu0 0.0
        %3648 = vmatprep.subr.mxu0 0.0
        %3649 = vmatpush1.msra.mxu0 0.0
        %3650 = vmatprep.subr.mxu0 0.0
        %3651 = vmatpush1.msra.mxu0 0.0
        %3652 = vmatprep.subr.mxu0 0.0
        %3653 = vmatpush1.msra.mxu0 0.0
        %3654 = vmatprep.subr.mxu0 0.0
        %3655 = vmatpush1.msra.mxu0 0.0
        %3656 = vmatprep.mubr.f32.mxu0 0.0
        %3657 = vmatmul.mubr.f32.gmra.mrb[0].mxu0 %v3520
        %v3658 = vpop.f32.mrb[0].mxu0
        %v3659 = vadd.f32 0.0, %v3658
        %v3660 = vpop.f32.mrb[0].mxu0
        %3661 = vmatprep.mubr.f32.mxu0 0.0
        %3662 = vmatmul.mubr.f32.gmra.mrb[0].mxu0 %v3521
        %v3663 = vpop.f32.mrb[0].mxu0
        %v3664 = vadd.f32 0.0, %v3663
        %v3665 = vpop.f32.mrb[0].mxu0
        %3666 = vmatprep.mubr.f32.mxu0 0.0
        %3667 = vmatmul.mubr.f32.gmra.mrb[0].mxu0 %v3522
        %v3668 = vpop.f32.mrb[0].mxu0
        %v3669 = vadd.f32 0.0, %v3668
        %v3670 = vpop.f32.mrb[0].mxu0
        %3671 = vmatprep.mubr.f32.mxu0 0.0
        %3672 = vmatmul.mubr.f32.gmra.mrb[0].mxu0 %v3523
        %v3673 = vpop.f32.mrb[0].mxu0
        %v3674 = vadd.f32 0.0, %v3673
        %v3675 = vpop.f32.mrb[0].mxu0
        %3676 = vdwg.mxu0
        %3677 = vmatprep.subr.mxu0 0.0
        %3678 = vmatpush1.msra.mxu0 %v3542
        %3679 = vmatprep.subr.mxu0 0.0
        %3680 = vmatpush1.msra.mxu0 %v3543
        %3681 = vmatprep.subr.mxu0 0.0
        %3682 = vmatpush1.msra.mxu0 %v3544
        %3683 = vmatprep.subr.mxu0 0.0
        %3684 = vmatpush1.msra.mxu0 %v3545
        %3685 = vmatprep.subr.mxu0 0.0
        %3686 = vmatpush1.msra.mxu0 %v3546
        %3687 = vmatprep.subr.mxu0 0.0
        %3688 = vmatpush1.msra.mxu0 %v3547
        %3689 = vmatprep.subr.mxu0 0.0
        %3690 = vmatpush1.msra.mxu0 %v3548
        %3691 = vmatprep.subr.mxu0 0.0
        %3692 = vmatpush1.msra.mxu0 %v3549
        %3693 = vmatprep.subr.mxu0 0.0
        %3694 = vmatpush1.msra.mxu0 %v3550
        %3695 = vmatprep.subr.mxu0 0.0
        %3696 = vmatpush1.msra.mxu0 %v3551
        %3697 = vmatprep.subr.mxu0 0.0
        %3698 = vmatpush1.msra.mxu0 %v3552
        %3699 = vmatprep.subr.mxu0 0.0
        %3700 = vmatpush1.msra.mxu0 %v3553
        %3701 = vmatprep.subr.mxu0 0.0
        %3702 = vmatpush1.msra.mxu0 %v3554
        %3703 = vmatprep.subr.mxu0 0.0
        %3704 = vmatpush1.msra.mxu0 %v3555
        %3705 = vmatprep.subr.mxu0 0.0
        %3706 = vmatpush1.msra.mxu0 %v3556
        %3707 = vmatprep.subr.mxu0 0.0
        %3708 = vmatpush1.msra.mxu0 %v3557
        %3709 = vmatprep.subr.mxu0 0.0
        %3710 = vmatpush1.msra.mxu0 0.0
        %3711 = vmatprep.subr.mxu0 0.0
        %3712 = vmatpush1.msra.mxu0 0.0
        %3713 = vmatprep.subr.mxu0 0.0
        %3714 = vmatpush1.msra.mxu0 0.0
        %3715 = vmatprep.subr.mxu0 0.0
        %3716 = vmatpush1.msra.mxu0 0.0
        %3717 = vmatprep.subr.mxu0 0.0
        %3718 = vmatpush1.msra.mxu0 0.0
        %3719 = vmatprep.subr.mxu0 0.0
        %3720 = vmatpush1.msra.mxu0 0.0
        %3721 = vmatprep.subr.mxu0 0.0
        %3722 = vmatpush1.msra.mxu0 0.0
        %3723 = vmatprep.subr.mxu0 0.0
        %3724 = vmatpush1.msra.mxu0 0.0
        %3725 = vmatprep.subr.mxu0 0.0
        %3726 = vmatpush1.msra.mxu0 0.0
        %3727 = vmatprep.subr.mxu0 0.0
        %3728 = vmatpush1.msra.mxu0 0.0
        %3729 = vmatprep.subr.mxu0 0.0
        %3730 = vmatpush1.msra.mxu0 0.0
        %3731 = vmatprep.subr.mxu0 0.0
        %3732 = vmatpush1.msra.mxu0 0.0
        %3733 = vmatprep.subr.mxu0 0.0
        %3734 = vmatpush1.msra.mxu0 0.0
        %3735 = vmatprep.subr.mxu0 0.0
        %3736 = vmatpush1.msra.mxu0 0.0
        %3737 = vmatprep.subr.mxu0 0.0
        %3738 = vmatpush1.msra.mxu0 0.0
        %3739 = vmatprep.subr.mxu0 0.0
        %3740 = vmatpush1.msra.mxu0 0.0
        %3741 = vmatprep.mubr.f32.mxu0 0.0
        %3742 = vmatmul.mubr.f32.gmra.mrb[0].mxu0 %v3520
        %v3743 = vpop.f32.mrb[0].mxu0
        %v3744 = vadd.f32 0.0, %v3743
        %v3745 = vpop.f32.mrb[0].mxu0
        %3746 = vmatprep.mubr.f32.mxu0 0.0
        %3747 = vmatmul.mubr.f32.gmra.mrb[0].mxu0 %v3521
        %v3748 = vpop.f32.mrb[0].mxu0
        %v3749 = vadd.f32 0.0, %v3748
        %v3750 = vpop.f32.mrb[0].mxu0
        %3751 = vmatprep.mubr.f32.mxu0 0.0
        %3752 = vmatmul.mubr.f32.gmra.mrb[0].mxu0 %v3522
        %v3753 = vpop.f32.mrb[0].mxu0
        %v3754 = vadd.f32 0.0, %v3753
        %v3755 = vpop.f32.mrb[0].mxu0
        %3756 = vmatprep.mubr.f32.mxu0 0.0
        %3757 = vmatmul.mubr.f32.gmra.mrb[0].mxu0 %v3523
        %v3758 = vpop.f32.mrb[0].mxu0
        %v3759 = vadd.f32 0.0, %v3758
        %v3760 = vpop.f32.mrb[0].mxu0
        %3761 = vdwg.mxu0
        %3762 = vmatprep.subr.mxu0 0.0
        %3763 = vmatpush1.msra.mxu0 %v3559
        %3764 = vmatprep.subr.mxu0 0.0
        %3765 = vmatpush1.msra.mxu0 %v3560
        %3766 = vmatprep.subr.mxu0 0.0
        %3767 = vmatpush1.msra.mxu0 %v3561
        %3768 = vmatprep.subr.mxu0 0.0
        %3769 = vmatpush1.msra.mxu0 %v3562
        %3770 = vmatprep.subr.mxu0 0.0
        %3771 = vmatpush1.msra.mxu0 %v3563
        %3772 = vmatprep.subr.mxu0 0.0
        %3773 = vmatpush1.msra.mxu0 %v3564
        %3774 = vmatprep.subr.mxu0 0.0
        %3775 = vmatpush1.msra.mxu0 %v3565
        %3776 = vmatprep.subr.mxu0 0.0
        %3777 = vmatpush1.msra.mxu0 %v3566
        %3778 = vmatprep.subr.mxu0 0.0
        %3779 = vmatpush1.msra.mxu0 %v3567
        %3780 = vmatprep.subr.mxu0 0.0
        %3781 = vmatpush1.msra.mxu0 %v3568
        %3782 = vmatprep.subr.mxu0 0.0
        %3783 = vmatpush1.msra.mxu0 %v3569
        %3784 = vmatprep.subr.mxu0 0.0
        %3785 = vmatpush1.msra.mxu0 %v3570
        %3786 = vmatprep.subr.mxu0 0.0
        %3787 = vmatpush1.msra.mxu0 %v3571
        %3788 = vmatprep.subr.mxu0 0.0
        %3789 = vmatpush1.msra.mxu0 %v3572
        %3790 = vmatprep.subr.mxu0 0.0
        %3791 = vmatpush1.msra.mxu0 %v3573
        %3792 = vmatprep.subr.mxu0 0.0
        %3793 = vmatpush1.msra.mxu0 %v3574
        %3794 = vmatprep.subr.mxu0 0.0
        %3795 = vmatpush1.msra.mxu0 0.0
        %3796 = vmatprep.subr.mxu0 0.0
        %3797 = vmatpush1.msra.mxu0 0.0
        %3798 = vmatprep.subr.mxu0 0.0
        %3799 = vmatpush1.msra.mxu0 0.0
        %3800 = vmatprep.subr.mxu0 0.0
        %3801 = vmatpush1.msra.mxu0 0.0
        %3802 = vmatprep.subr.mxu0 0.0
        %3803 = vmatpush1.msra.mxu0 0.0
        %3804 = vmatprep.subr.mxu0 0.0
        %3805 = vmatpush1.msra.mxu0 0.0
        %3806 = vmatprep.subr.mxu0 0.0
        %3807 = vmatpush1.msra.mxu0 0.0
        %3808 = vmatprep.subr.mxu0 0.0
        %3809 = vmatpush1.msra.mxu0 0.0
        %3810 = vmatprep.subr.mxu0 0.0
        %3811 = vmatpush1.msra.mxu0 0.0
        %3812 = vmatprep.subr.mxu0 0.0
        %3813 = vmatpush1.msra.mxu0 0.0
        %3814 = vmatprep.subr.mxu0 0.0
        %3815 = vmatpush1.msra.mxu0 0.0
        %3816 = vmatprep.subr.mxu0 0.0
        %3817 = vmatpush1.msra.mxu0 0.0
        %3818 = vmatprep.subr.mxu0 0.0
        %3819 = vmatpush1.msra.mxu0 0.0
        %3820 = vmatprep.subr.mxu0 0.0
        %3821 = vmatpush1.msra.mxu0 0.0
        %3822 = vmatprep.subr.mxu0 0.0
        %3823 = vmatpush1.msra.mxu0 0.0
        %3824 = vmatprep.subr.mxu0 0.0
        %3825 = vmatpush1.msra.mxu0 0.0
        %3826 = vmatprep.mubr.f32.mxu0 0.0
        %3827 = vmatmul.mubr.f32.gmra.mrb[0].mxu0 %v3520
        %v3828 = vpop.f32.mrb[0].mxu0
        %v3829 = vadd.f32 0.0, %v3828
        %v3830 = vpop.f32.mrb[0].mxu0
        %3831 = vmatprep.mubr.f32.mxu0 0.0
        %3832 = vmatmul.mubr.f32.gmra.mrb[0].mxu0 %v3521
        %v3833 = vpop.f32.mrb[0].mxu0
        %v3834 = vadd.f32 0.0, %v3833
        %v3835 = vpop.f32.mrb[0].mxu0
        %3836 = vmatprep.mubr.f32.mxu0 0.0
        %3837 = vmatmul.mubr.f32.gmra.mrb[0].mxu0 %v3522
        %v3838 = vpop.f32.mrb[0].mxu0
        %v3839 = vadd.f32 0.0, %v3838
        %v3840 = vpop.f32.mrb[0].mxu0
        %3841 = vmatprep.mubr.f32.mxu0 0.0
        %3842 = vmatmul.mubr.f32.gmra.mrb[0].mxu0 %v3523
        %v3843 = vpop.f32.mrb[0].mxu0
        %v3844 = vadd.f32 0.0, %v3843
        %v3845 = vpop.f32.mrb[0].mxu0
        %3846 = vdwg.mxu0
        %v3848 = vsel %vm840, %v3659, 0
        %v3851 = vsel %vm840, %v3664, 0
        %v3854 = vsel %vm840, %v3744, 0
        %v3857 = vsel %vm840, %v3749, 0
        %3859 = vmatprep.subr.mxu0 0.0
        %3860 = vmatpush1.xpose.msra.mxu0 %v3854
        %3861 = vmatprep.subr.mxu0 0.0
        %3862 = vmatpush1.xpose.msra.mxu0 %v3857
        %3863 = vmatprep.subr.mxu0 0.0
        %3864 = vmatpush1.xpose.msra.mxu0 0.0
        %3865 = vmatprep.subr.mxu0 0.0
        %3866 = vmatpush1.xpose.msra.mxu0 0.0
        %3867 = vmatprep.subr.mxu0 0.0
        %3868 = vmatpush1.xpose.msra.mxu0 0.0
        %3869 = vmatprep.subr.mxu0 0.0
        %3870 = vmatpush1.xpose.msra.mxu0 0.0
        %3871 = vmatprep.subr.mxu0 0.0
        %3872 = vmatpush1.xpose.msra.mxu0 0.0
        %3873 = vmatprep.subr.mxu0 0.0
        %3874 = vmatpush1.xpose.msra.mxu0 0.0
        %3875 = vmatprep.subr.mxu0 0.0
        %3876 = vmatpush1.xpose.msra.mxu0 0.0
        %3877 = vmatprep.subr.mxu0 0.0
        %3878 = vmatpush1.xpose.msra.mxu0 0.0
        %3879 = vmatprep.subr.mxu0 0.0
        %3880 = vmatpush1.xpose.msra.mxu0 0.0
        %3881 = vmatprep.subr.mxu0 0.0
        %3882 = vmatpush1.xpose.msra.mxu0 0.0
        %3883 = vmatprep.subr.mxu0 0.0
        %3884 = vmatpush1.xpose.msra.mxu0 0.0
        %3885 = vmatprep.subr.mxu0 0.0
        %3886 = vmatpush1.xpose.msra.mxu0 0.0
        %3887 = vmatprep.subr.mxu0 0.0
        %3888 = vmatpush1.xpose.msra.mxu0 0.0
        %3889 = vmatprep.subr.mxu0 0.0
        %3890 = vmatpush1.xpose.msra.mxu0 0.0
        %3891 = vmatprep.subr.mxu0 0.0
        %3892 = vmatpush1.xpose.msra.mxu0 0.0
        %3893 = vmatprep.subr.mxu0 0.0
        %3894 = vmatpush1.xpose.msra.mxu0 0.0
        %3895 = vmatprep.subr.mxu0 0.0
        %3896 = vmatpush1.xpose.msra.mxu0 0.0
        %3897 = vmatprep.subr.mxu0 0.0
        %3898 = vmatpush1.xpose.msra.mxu0 0.0
        %3899 = vmatprep.subr.mxu0 0.0
        %3900 = vmatpush1.xpose.msra.mxu0 0.0
        %3901 = vmatprep.subr.mxu0 0.0
        %3902 = vmatpush1.xpose.msra.mxu0 0.0
        %3903 = vmatprep.subr.mxu0 0.0
        %3904 = vmatpush1.xpose.msra.mxu0 0.0
        %3905 = vmatprep.subr.mxu0 0.0
        %3906 = vmatpush1.xpose.msra.mxu0 0.0
        %3907 = vmatprep.subr.mxu0 0.0
        %3908 = vmatpush1.xpose.msra.mxu0 0.0
        %3909 = vmatprep.subr.mxu0 0.0
        %3910 = vmatpush1.xpose.msra.mxu0 0.0
        %3911 = vmatprep.subr.mxu0 0.0
        %3912 = vmatpush1.xpose.msra.mxu0 0.0
        %3913 = vmatprep.subr.mxu0 0.0
        %3914 = vmatpush1.xpose.msra.mxu0 0.0
        %3915 = vmatprep.subr.mxu0 0.0
        %3916 = vmatpush1.xpose.msra.mxu0 0.0
        %3917 = vmatprep.subr.mxu0 0.0
        %3918 = vmatpush1.xpose.msra.mxu0 0.0
        %3919 = vmatprep.subr.mxu0 0.0
        %3920 = vmatpush1.xpose.msra.mxu0 0.0
        %3921 = vmatprep.subr.mxu0 0.0
        %3922 = vmatpush1.xpose.msra.mxu0 0.0
        %3923 = vmatprep.mubr.f32.mxu0 0.0
        %3924 = vmatmul.mubr.f32.gmra.mrb[0].mxu0 %v3848
        %v3925 = vpop.f32.mrb[0].mxu0
        %v3926 = vadd.f32 0.0, %v3925
        %v3927 = vpop.f32.mrb[0].mxu0
        %3928 = vmatprep.mubr.f32.mxu0 0.0
        %3929 = vmatmul.mubr.f32.gmra.mrb[0].mxu0 %v3851
        %v3930 = vpop.f32.mrb[0].mxu0
        %v3931 = vadd.f32 0.0, %v3930
        %v3932 = vpop.f32.mrb[0].mxu0
        %3933 = vdwg.mxu0
        %v3934 = vmul.f32 %v3926, 0.17677669
        %v3935 = vmul.f32 %v3931, 0.17677669
        %v3936 = vsel %vm839, %v3934, -1000000.0
        %v3937 = vsel %vm839, %v3935, -1000000.0
        %v3938 = vsel %vm932, %v3936, -inf
        %3939 = vmax.xlane.f32.xlu0 %v3938
        %v3940 = vpop.xlane.xlu0 %3939
        %v3941 = vsel %vm932, %v3937, -inf
        %3942 = vmax.xlane.f32.xlu0 %v3941
        %v3943 = vpop.xlane.xlu0 %3942
        %v3944 = vsub.f32 %v3936, %v3940
        %v3945 = vsub.f32 %v3937, %v3943
        %v3946 = vmul.f32 %v3944, 1.442695
        %v3947 = vpow.pop %v3946
        %v3948 = vmul.f32 %v3945, 1.442695
        %v3949 = vpow.pop %v3948
        %v3950 = vsel %vm932, %v3947, 0.0
        %3951 = vadd.xlane.f32.xlu0 %v3950
        %v3952 = vpop.xlane.xlu0 %3951
        %v3953 = vsel %vm932, %v3949, 0.0
        %3954 = vadd.xlane.f32.xlu0 %v3953
        %v3955 = vpop.xlane.xlu0 %3954
        %v3956 = vrcp.pop %v3952
        %v3957 = vrcp.pop %v3955
        %v3958 = vmul.f32 %v3947, %v3956
        %v3959 = vmul.f32 %v3949, %v3957
        %v3961 = vsel %vm932, %v3958, 0
        %v3964 = vsel %vm932, %v3959, 0
        %3966 = vmatprep.subr.mxu0 0.0
        %3967 = vmatpush1.msra.mxu0 %v3829
        %3968 = vmatprep.subr.mxu0 0.0
        %3969 = vmatpush1.msra.mxu0 %v3834
        %3970 = vmatprep.subr.mxu0 0.0
        %3971 = vmatpush1.msra.mxu0 0.0
        %3972 = vmatprep.subr.mxu0 0.0
        %3973 = vmatpush1.msra.mxu0 0.0
        %3974 = vmatprep.subr.mxu0 0.0
        %3975 = vmatpush1.msra.mxu0 0.0
        %3976 = vmatprep.subr.mxu0 0.0
        %3977 = vmatpush1.msra.mxu0 0.0
        %3978 = vmatprep.subr.mxu0 0.0
        %3979 = vmatpush1.msra.mxu0 0.0
        %3980 = vmatprep.subr.mxu0 0.0
        %3981 = vmatpush1.msra.mxu0 0.0
        %3982 = vmatprep.subr.mxu0 0.0
        %3983 = vmatpush1.msra.mxu0 0.0
        %3984 = vmatprep.subr.mxu0 0.0
        %3985 = vmatpush1.msra.mxu0 0.0
        %3986 = vmatprep.subr.mxu0 0.0
        %3987 = vmatpush1.msra.mxu0 0.0
        %3988 = vmatprep.subr.mxu0 0.0
        %3989 = vmatpush1.msra.mxu0 0.0
        %3990 = vmatprep.subr.mxu0 0.0
        %3991 = vmatpush1.msra.mxu0 0.0
        %3992 = vmatprep.subr.mxu0 0.0
        %3993 = vmatpush1.msra.mxu0 0.0
        %3994 = vmatprep.subr.mxu0 0.0
        %3995 = vmatpush1.msra.mxu0 0.0
        %3996 = vmatprep.subr.mxu0 0.0
        %3997 = vmatpush1.msra.mxu0 0.0
        %3998 = vmatprep.subr.mxu0 0.0
        %3999 = vmatpush1.msra.mxu0 0.0
        %4000 = vmatprep.subr.mxu0 0.0
        %4001 = vmatpush1.msra.mxu0 0.0
        %4002 = vmatprep.subr.mxu0 0.0
        %4003 = vmatpush1.msra.mxu0 0.0
        %4004 = vmatprep.subr.mxu0 0.0
        %4005 = vmatpush1.msra.mxu0 0.0
        %4006 = vmatprep.subr.mxu0 0.0
        %4007 = vmatpush1.msra.mxu0 0.0
        %4008 = vmatprep.subr.mxu0 0.0
        %4009 = vmatpush1.msra.mxu0 0.0
        %4010 = vmatprep.subr.mxu0 0.0
        %4011 = vmatpush1.msra.mxu0 0.0
        %4012 = vmatprep.subr.mxu0 0.0
        %4013 = vmatpush1.msra.mxu0 0.0
        %4014 = vmatprep.subr.mxu0 0.0
        %4015 = vmatpush1.msra.mxu0 0.0
        %4016 = vmatprep.subr.mxu0 0.0
        %4017 = vmatpush1.msra.mxu0 0.0
        %4018 = vmatprep.subr.mxu0 0.0
        %4019 = vmatpush1.msra.mxu0 0.0
        %4020 = vmatprep.subr.mxu0 0.0
        %4021 = vmatpush1.msra.mxu0 0.0
        %4022 = vmatprep.subr.mxu0 0.0
        %4023 = vmatpush1.msra.mxu0 0.0
        %4024 = vmatprep.subr.mxu0 0.0
        %4025 = vmatpush1.msra.mxu0 0.0
        %4026 = vmatprep.subr.mxu0 0.0
        %4027 = vmatpush1.msra.mxu0 0.0
        %4028 = vmatprep.subr.mxu0 0.0
        %4029 = vmatpush1.msra.mxu0 0.0
        %4030 = vmatprep.mubr.f32.mxu0 0.0
        %4031 = vmatmul.mubr.f32.gmra.mrb[0].mxu0 %v3961
        %v4032 = vpop.f32.mrb[0].mxu0
        %v4033 = vadd.f32 0.0, %v4032
        %v4034 = vpop.f32.mrb[0].mxu0
        %4035 = vmatprep.mubr.f32.mxu0 0.0
        %4036 = vmatmul.mubr.f32.gmra.mrb[0].mxu0 %v3964
        %v4037 = vpop.f32.mrb[0].mxu0
        %v4038 = vadd.f32 0.0, %v4037
        %v4039 = vpop.f32.mrb[0].mxu0
        %4040 = vdwg.mxu0
        %4041 = vrot.lane.b32.xlu0 %v3659, 96
        %v4042 = vpop.permute.xlu0 %4041
        %4043 = vrot.lane.b32.xlu0 %v3664, 96
        %v4044 = vpop.permute.xlu0 %4043
        %4045 = vrot.lane.b32.xlu0 %v3744, 96
        %v4046 = vpop.permute.xlu0 %4045
        %4047 = vrot.lane.b32.xlu0 %v3749, 96
        %v4048 = vpop.permute.xlu0 %4047
        %v4049 = vsel %vm840, %v4042, 0
        %v4051 = vsel %vm840, %v4044, 0
        %v4053 = vsel %vm840, %v4046, 0
        %v4055 = vsel %vm840, %v4048, 0
        %4057 = vmatprep.subr.mxu0 0.0
        %4058 = vmatpush1.xpose.msra.mxu0 %v4053
        %4059 = vmatprep.subr.mxu0 0.0
        %4060 = vmatpush1.xpose.msra.mxu0 %v4055
        %4061 = vmatprep.subr.mxu0 0.0
        %4062 = vmatpush1.xpose.msra.mxu0 0.0
        %4063 = vmatprep.subr.mxu0 0.0
        %4064 = vmatpush1.xpose.msra.mxu0 0.0
        %4065 = vmatprep.subr.mxu0 0.0
        %4066 = vmatpush1.xpose.msra.mxu0 0.0
        %4067 = vmatprep.subr.mxu0 0.0
        %4068 = vmatpush1.xpose.msra.mxu0 0.0
        %4069 = vmatprep.subr.mxu0 0.0
        %4070 = vmatpush1.xpose.msra.mxu0 0.0
        %4071 = vmatprep.subr.mxu0 0.0
        %4072 = vmatpush1.xpose.msra.mxu0 0.0
        %4073 = vmatprep.subr.mxu0 0.0
        %4074 = vmatpush1.xpose.msra.mxu0 0.0
        %4075 = vmatprep.subr.mxu0 0.0
        %4076 = vmatpush1.xpose.msra.mxu0 0.0
        %4077 = vmatprep.subr.mxu0 0.0
        %4078 = vmatpush1.xpose.msra.mxu0 0.0
        %4079 = vmatprep.subr.mxu0 0.0
        %4080 = vmatpush1.xpose.msra.mxu0 0.0
        %4081 = vmatprep.subr.mxu0 0.0
        %4082 = vmatpush1.xpose.msra.mxu0 0.0
        %4083 = vmatprep.subr.mxu0 0.0
        %4084 = vmatpush1.xpose.msra.mxu0 0.0
        %4085 = vmatprep.subr.mxu0 0.0
        %4086 = vmatpush1.xpose.msra.mxu0 0.0
        %4087 = vmatprep.subr.mxu0 0.0
        %4088 = vmatpush1.xpose.msra.mxu0 0.0
        %4089 = vmatprep.subr.mxu0 0.0
        %4090 = vmatpush1.xpose.msra.mxu0 0.0
        %4091 = vmatprep.subr.mxu0 0.0
        %4092 = vmatpush1.xpose.msra.mxu0 0.0
        %4093 = vmatprep.subr.mxu0 0.0
        %4094 = vmatpush1.xpose.msra.mxu0 0.0
        %4095 = vmatprep.subr.mxu0 0.0
        %4096 = vmatpush1.xpose.msra.mxu0 0.0
        %4097 = vmatprep.subr.mxu0 0.0
        %4098 = vmatpush1.xpose.msra.mxu0 0.0
        %4099 = vmatprep.subr.mxu0 0.0
        %4100 = vmatpush1.xpose.msra.mxu0 0.0
        %4101 = vmatprep.subr.mxu0 0.0
        %4102 = vmatpush1.xpose.msra.mxu0 0.0
        %4103 = vmatprep.subr.mxu0 0.0
        %4104 = vmatpush1.xpose.msra.mxu0 0.0
        %4105 = vmatprep.subr.mxu0 0.0
        %4106 = vmatpush1.xpose.msra.mxu0 0.0
        %4107 = vmatprep.subr.mxu0 0.0
        %4108 = vmatpush1.xpose.msra.mxu0 0.0
        %4109 = vmatprep.subr.mxu0 0.0
        %4110 = vmatpush1.xpose.msra.mxu0 0.0
        %4111 = vmatprep.subr.mxu0 0.0
        %4112 = vmatpush1.xpose.msra.mxu0 0.0
        %4113 = vmatprep.subr.mxu0 0.0
        %4114 = vmatpush1.xpose.msra.mxu0 0.0
        %4115 = vmatprep.subr.mxu0 0.0
        %4116 = vmatpush1.xpose.msra.mxu0 0.0
        %4117 = vmatprep.subr.mxu0 0.0
        %4118 = vmatpush1.xpose.msra.mxu0 0.0
        %4119 = vmatprep.subr.mxu0 0.0
        %4120 = vmatpush1.xpose.msra.mxu0 0.0
        %4121 = vmatprep.mubr.f32.mxu0 0.0
        %4122 = vmatmul.mubr.f32.gmra.mrb[0].mxu0 %v4049
        %v4123 = vpop.f32.mrb[0].mxu0
        %v4124 = vadd.f32 0.0, %v4123
        %v4125 = vpop.f32.mrb[0].mxu0
        %4126 = vmatprep.mubr.f32.mxu0 0.0
        %4127 = vmatmul.mubr.f32.gmra.mrb[0].mxu0 %v4051
        %v4128 = vpop.f32.mrb[0].mxu0
        %v4129 = vadd.f32 0.0, %v4128
        %v4130 = vpop.f32.mrb[0].mxu0
        %4131 = vdwg.mxu0
        %v4132 = vmul.f32 %v4124, 0.17677669
        %v4133 = vmul.f32 %v4129, 0.17677669
        %v4134 = vsel %vm839, %v4132, -1000000.0
        %v4135 = vsel %vm839, %v4133, -1000000.0
        %v4136 = vsel %vm932, %v4134, -inf
        %4137 = vmax.xlane.f32.xlu0 %v4136
        %v4138 = vpop.xlane.xlu0 %4137
        %v4139 = vsel %vm932, %v4135, -inf
        %4140 = vmax.xlane.f32.xlu0 %v4139
        %v4141 = vpop.xlane.xlu0 %4140
        %v4142 = vsub.f32 %v4134, %v4138
        %v4143 = vsub.f32 %v4135, %v4141
        %v4144 = vmul.f32 %v4142, 1.442695
        %v4145 = vpow.pop %v4144
        %v4146 = vmul.f32 %v4143, 1.442695
        %v4147 = vpow.pop %v4146
        %v4148 = vsel %vm932, %v4145, 0.0
        %4149 = vadd.xlane.f32.xlu0 %v4148
        %v4150 = vpop.xlane.xlu0 %4149
        %v4151 = vsel %vm932, %v4147, 0.0
        %4152 = vadd.xlane.f32.xlu0 %v4151
        %v4153 = vpop.xlane.xlu0 %4152
        %v4154 = vrcp.pop %v4150
        %v4155 = vrcp.pop %v4153
        %v4156 = vmul.f32 %v4145, %v4154
        %v4157 = vmul.f32 %v4147, %v4155
        %4160 = vrot.lane.b32.xlu0 %v3829, 96
        %v4161 = vpop.permute.xlu0 %4160
        %4162 = vrot.lane.b32.xlu0 %v3834, 96
        %v4163 = vpop.permute.xlu0 %4162
        %v4167 = vsel %vm932, %v4156, 0
        %v4170 = vsel %vm932, %v4157, 0
        %4172 = vmatprep.subr.mxu0 0.0
        %4173 = vmatpush1.msra.mxu0 %v4161
        %4174 = vmatprep.subr.mxu0 0.0
        %4175 = vmatpush1.msra.mxu0 %v4163
        %4176 = vmatprep.subr.mxu0 0.0
        %4177 = vmatpush1.msra.mxu0 0.0
        %4178 = vmatprep.subr.mxu0 0.0
        %4179 = vmatpush1.msra.mxu0 0.0
        %4180 = vmatprep.subr.mxu0 0.0
        %4181 = vmatpush1.msra.mxu0 0.0
        %4182 = vmatprep.subr.mxu0 0.0
        %4183 = vmatpush1.msra.mxu0 0.0
        %4184 = vmatprep.subr.mxu0 0.0
        %4185 = vmatpush1.msra.mxu0 0.0
        %4186 = vmatprep.subr.mxu0 0.0
        %4187 = vmatpush1.msra.mxu0 0.0
        %4188 = vmatprep.subr.mxu0 0.0
        %4189 = vmatpush1.msra.mxu0 0.0
        %4190 = vmatprep.subr.mxu0 0.0
        %4191 = vmatpush1.msra.mxu0 0.0
        %4192 = vmatprep.subr.mxu0 0.0
        %4193 = vmatpush1.msra.mxu0 0.0
        %4194 = vmatprep.subr.mxu0 0.0
        %4195 = vmatpush1.msra.mxu0 0.0
        %4196 = vmatprep.subr.mxu0 0.0
        %4197 = vmatpush1.msra.mxu0 0.0
        %4198 = vmatprep.subr.mxu0 0.0
        %4199 = vmatpush1.msra.mxu0 0.0
        %4200 = vmatprep.subr.mxu0 0.0
        %4201 = vmatpush1.msra.mxu0 0.0
        %4202 = vmatprep.subr.mxu0 0.0
        %4203 = vmatpush1.msra.mxu0 0.0
        %4204 = vmatprep.subr.mxu0 0.0
        %4205 = vmatpush1.msra.mxu0 0.0
        %4206 = vmatprep.subr.mxu0 0.0
        %4207 = vmatpush1.msra.mxu0 0.0
        %4208 = vmatprep.subr.mxu0 0.0
        %4209 = vmatpush1.msra.mxu0 0.0
        %4210 = vmatprep.subr.mxu0 0.0
        %4211 = vmatpush1.msra.mxu0 0.0
        %4212 = vmatprep.subr.mxu0 0.0
        %4213 = vmatpush1.msra.mxu0 0.0
        %4214 = vmatprep.subr.mxu0 0.0
        %4215 = vmatpush1.msra.mxu0 0.0
        %4216 = vmatprep.subr.mxu0 0.0
        %4217 = vmatpush1.msra.mxu0 0.0
        %4218 = vmatprep.subr.mxu0 0.0
        %4219 = vmatpush1.msra.mxu0 0.0
        %4220 = vmatprep.subr.mxu0 0.0
        %4221 = vmatpush1.msra.mxu0 0.0
        %4222 = vmatprep.subr.mxu0 0.0
        %4223 = vmatpush1.msra.mxu0 0.0
        %4224 = vmatprep.subr.mxu0 0.0
        %4225 = vmatpush1.msra.mxu0 0.0
        %4226 = vmatprep.subr.mxu0 0.0
        %4227 = vmatpush1.msra.mxu0 0.0
        %4228 = vmatprep.subr.mxu0 0.0
        %4229 = vmatpush1.msra.mxu0 0.0
        %4230 = vmatprep.subr.mxu0 0.0
        %4231 = vmatpush1.msra.mxu0 0.0
        %4232 = vmatprep.subr.mxu0 0.0
        %4233 = vmatpush1.msra.mxu0 0.0
        %4234 = vmatprep.subr.mxu0 0.0
        %4235 = vmatpush1.msra.mxu0 0.0
        %4236 = vmatprep.mubr.f32.mxu0 0.0
        %4237 = vmatmul.mubr.f32.gmra.mrb[0].mxu0 %v4167
        %v4238 = vpop.f32.mrb[0].mxu0
        %v4239 = vadd.f32 0.0, %v4238
        %v4240 = vpop.f32.mrb[0].mxu0
        %4241 = vmatprep.mubr.f32.mxu0 0.0
        %4242 = vmatmul.mubr.f32.gmra.mrb[0].mxu0 %v4170
        %v4243 = vpop.f32.mrb[0].mxu0
        %v4244 = vadd.f32 0.0, %v4243
        %v4245 = vpop.f32.mrb[0].mxu0
        %4246 = vdwg.mxu0
        %v4248 = vsel %vm840, %v4239, 0
        %v4251 = vsel %vm840, %v4244, 0
        %4253 = vmatprep.subr.mxu0 0.0
        %4254 = vmatpush1.msra.mxu0 %v3580
        %4255 = vmatprep.subr.mxu0 0.0
        %4256 = vmatpush1.msra.mxu0 %v3581
        %4257 = vmatprep.subr.mxu0 0.0
        %4258 = vmatpush1.msra.mxu0 %v3582
        %4259 = vmatprep.subr.mxu0 0.0
        %4260 = vmatpush1.msra.mxu0 %v3583
        %4261 = vmatprep.subr.mxu0 0.0
        %4262 = vmatpush1.msra.mxu0 0.0
        %4263 = vmatprep.subr.mxu0 0.0
        %4264 = vmatpush1.msra.mxu0 0.0
        %4265 = vmatprep.subr.mxu0 0.0
        %4266 = vmatpush1.msra.mxu0 0.0
        %4267 = vmatprep.subr.mxu0 0.0
        %4268 = vmatpush1.msra.mxu0 0.0
        %4269 = vmatprep.subr.mxu0 0.0
        %4270 = vmatpush1.msra.mxu0 0.0
        %4271 = vmatprep.subr.mxu0 0.0
        %4272 = vmatpush1.msra.mxu0 0.0
        %4273 = vmatprep.subr.mxu0 0.0
        %4274 = vmatpush1.msra.mxu0 0.0
        %4275 = vmatprep.subr.mxu0 0.0
        %4276 = vmatpush1.msra.mxu0 0.0
        %4277 = vmatprep.subr.mxu0 0.0
        %4278 = vmatpush1.msra.mxu0 0.0
        %4279 = vmatprep.subr.mxu0 0.0
        %4280 = vmatpush1.msra.mxu0 0.0
        %4281 = vmatprep.subr.mxu0 0.0
        %4282 = vmatpush1.msra.mxu0 0.0
        %4283 = vmatprep.subr.mxu0 0.0
        %4284 = vmatpush1.msra.mxu0 0.0
        %4285 = vmatprep.subr.mxu0 0.0
        %4286 = vmatpush1.msra.mxu0 0.0
        %4287 = vmatprep.subr.mxu0 0.0
        %4288 = vmatpush1.msra.mxu0 0.0
        %4289 = vmatprep.subr.mxu0 0.0
        %4290 = vmatpush1.msra.mxu0 0.0
        %4291 = vmatprep.subr.mxu0 0.0
        %4292 = vmatpush1.msra.mxu0 0.0
        %4293 = vmatprep.subr.mxu0 0.0
        %4294 = vmatpush1.msra.mxu0 0.0
        %4295 = vmatprep.subr.mxu0 0.0
        %4296 = vmatpush1.msra.mxu0 0.0
        %4297 = vmatprep.subr.mxu0 0.0
        %4298 = vmatpush1.msra.mxu0 0.0
        %4299 = vmatprep.subr.mxu0 0.0
        %4300 = vmatpush1.msra.mxu0 0.0
        %4301 = vmatprep.subr.mxu0 0.0
        %4302 = vmatpush1.msra.mxu0 0.0
        %4303 = vmatprep.subr.mxu0 0.0
        %4304 = vmatpush1.msra.mxu0 0.0
        %4305 = vmatprep.subr.mxu0 0.0
        %4306 = vmatpush1.msra.mxu0 0.0
        %4307 = vmatprep.subr.mxu0 0.0
        %4308 = vmatpush1.msra.mxu0 0.0
        %4309 = vmatprep.subr.mxu0 0.0
        %4310 = vmatpush1.msra.mxu0 0.0
        %4311 = vmatprep.subr.mxu0 0.0
        %4312 = vmatpush1.msra.mxu0 0.0
        %4313 = vmatprep.subr.mxu0 0.0
        %4314 = vmatpush1.msra.mxu0 0.0
        %4315 = vmatprep.subr.mxu0 0.0
        %4316 = vmatpush1.msra.mxu0 0.0
        %4317 = vmatprep.mubr.f32.mxu0 0.0
        %4318 = vmatmul.mubr.f32.gmra.mrb[0].mxu0 %v4248
        %v4319 = vpop.f32.mrb[0].mxu0
        %v4320 = vadd.f32 0.0, %v4319
        %v4321 = vpop.f32.mrb[0].mxu0
        %4322 = vmatprep.mubr.f32.mxu0 0.0
        %4323 = vmatmul.mubr.f32.gmra.mrb[0].mxu0 %v4251
        %v4324 = vpop.f32.mrb[0].mxu0
        %v4325 = vadd.f32 0.0, %v4324
        %v4326 = vpop.f32.mrb[0].mxu0
        %4327 = vdwg.mxu0
        %v4329 = vsel %vm840, %v4033, 0
        %v4332 = vsel %vm840, %v4038, 0
        %4334 = vmatprep.subr.mxu0 0.0
        %4335 = vmatpush1.msra.mxu0 %v3576
        %4336 = vmatprep.subr.mxu0 0.0
        %4337 = vmatpush1.msra.mxu0 %v3577
        %4338 = vmatprep.subr.mxu0 0.0
        %4339 = vmatpush1.msra.mxu0 %v3578
        %4340 = vmatprep.subr.mxu0 0.0
        %4341 = vmatpush1.msra.mxu0 %v3579
        %4342 = vmatprep.subr.mxu0 0.0
        %4343 = vmatpush1.msra.mxu0 0.0
        %4344 = vmatprep.subr.mxu0 0.0
        %4345 = vmatpush1.msra.mxu0 0.0
        %4346 = vmatprep.subr.mxu0 0.0
        %4347 = vmatpush1.msra.mxu0 0.0
        %4348 = vmatprep.subr.mxu0 0.0
        %4349 = vmatpush1.msra.mxu0 0.0
        %4350 = vmatprep.subr.mxu0 0.0
        %4351 = vmatpush1.msra.mxu0 0.0
        %4352 = vmatprep.subr.mxu0 0.0
        %4353 = vmatpush1.msra.mxu0 0.0
        %4354 = vmatprep.subr.mxu0 0.0
        %4355 = vmatpush1.msra.mxu0 0.0
        %4356 = vmatprep.subr.mxu0 0.0
        %4357 = vmatpush1.msra.mxu0 0.0
        %4358 = vmatprep.subr.mxu0 0.0
        %4359 = vmatpush1.msra.mxu0 0.0
        %4360 = vmatprep.subr.mxu0 0.0
        %4361 = vmatpush1.msra.mxu0 0.0
        %4362 = vmatprep.subr.mxu0 0.0
        %4363 = vmatpush1.msra.mxu0 0.0
        %4364 = vmatprep.subr.mxu0 0.0
        %4365 = vmatpush1.msra.mxu0 0.0
        %4366 = vmatprep.subr.mxu0 0.0
        %4367 = vmatpush1.msra.mxu0 0.0
        %4368 = vmatprep.subr.mxu0 0.0
        %4369 = vmatpush1.msra.mxu0 0.0
        %4370 = vmatprep.subr.mxu0 0.0
        %4371 = vmatpush1.msra.mxu0 0.0
        %4372 = vmatprep.subr.mxu0 0.0
        %4373 = vmatpush1.msra.mxu0 0.0
        %4374 = vmatprep.subr.mxu0 0.0
        %4375 = vmatpush1.msra.mxu0 0.0
        %4376 = vmatprep.subr.mxu0 0.0
        %4377 = vmatpush1.msra.mxu0 0.0
        %4378 = vmatprep.subr.mxu0 0.0
        %4379 = vmatpush1.msra.mxu0 0.0
        %4380 = vmatprep.subr.mxu0 0.0
        %4381 = vmatpush1.msra.mxu0 0.0
        %4382 = vmatprep.subr.mxu0 0.0
        %4383 = vmatpush1.msra.mxu0 0.0
        %4384 = vmatprep.subr.mxu0 0.0
        %4385 = vmatpush1.msra.mxu0 0.0
        %4386 = vmatprep.subr.mxu0 0.0
        %4387 = vmatpush1.msra.mxu0 0.0
        %4388 = vmatprep.subr.mxu0 0.0
        %4389 = vmatpush1.msra.mxu0 0.0
        %4390 = vmatprep.subr.mxu0 0.0
        %4391 = vmatpush1.msra.mxu0 0.0
        %4392 = vmatprep.subr.mxu0 0.0
        %4393 = vmatpush1.msra.mxu0 0.0
        %4394 = vmatprep.subr.mxu0 0.0
        %4395 = vmatpush1.msra.mxu0 0.0
        %4396 = vmatprep.subr.mxu0 0.0
        %4397 = vmatpush1.msra.mxu0 0.0
        %4398 = vmatprep.mubr.f32.mxu0 0.0
        %4399 = vmatmul.mubr.f32.gmra.mrb[0].mxu0 %v4329
        %v4400 = vpop.f32.mrb[0].mxu0
        %v4401 = vadd.f32 %v4320, %v4400
        %v4402 = vpop.f32.mrb[0].mxu0
        %4403 = vmatprep.mubr.f32.mxu0 0.0
        %4404 = vmatmul.mubr.f32.gmra.mrb[0].mxu0 %v4332
        %v4405 = vpop.f32.mrb[0].mxu0
        %v4406 = vadd.f32 %v4325, %v4405
        %v4407 = vpop.f32.mrb[0].mxu0
        %4408 = vdwg.mxu0
        %4409 = vrot.lane.b32.xlu0 %v3659, 64
        %v4410 = vpop.permute.xlu0 %4409
        %4411 = vrot.lane.b32.xlu0 %v3664, 64
        %v4412 = vpop.permute.xlu0 %4411
        %4413 = vrot.lane.b32.xlu0 %v3744, 64
        %v4414 = vpop.permute.xlu0 %4413
        %4415 = vrot.lane.b32.xlu0 %v3749, 64
        %v4416 = vpop.permute.xlu0 %4415
        %v4417 = vsel %vm840, %v4410, 0
        %v4419 = vsel %vm840, %v4412, 0
        %v4421 = vsel %vm840, %v4414, 0
        %v4423 = vsel %vm840, %v4416, 0
        %4425 = vmatprep.subr.mxu0 0.0
        %4426 = vmatpush1.xpose.msra.mxu0 %v4421
        %4427 = vmatprep.subr.mxu0 0.0
        %4428 = vmatpush1.xpose.msra.mxu0 %v4423
        %4429 = vmatprep.subr.mxu0 0.0
        %4430 = vmatpush1.xpose.msra.mxu0 0.0
        %4431 = vmatprep.subr.mxu0 0.0
        %4432 = vmatpush1.xpose.msra.mxu0 0.0
        %4433 = vmatprep.subr.mxu0 0.0
        %4434 = vmatpush1.xpose.msra.mxu0 0.0
        %4435 = vmatprep.subr.mxu0 0.0
        %4436 = vmatpush1.xpose.msra.mxu0 0.0
        %4437 = vmatprep.subr.mxu0 0.0
        %4438 = vmatpush1.xpose.msra.mxu0 0.0
        %4439 = vmatprep.subr.mxu0 0.0
        %4440 = vmatpush1.xpose.msra.mxu0 0.0
        %4441 = vmatprep.subr.mxu0 0.0
        %4442 = vmatpush1.xpose.msra.mxu0 0.0
        %4443 = vmatprep.subr.mxu0 0.0
        %4444 = vmatpush1.xpose.msra.mxu0 0.0
        %4445 = vmatprep.subr.mxu0 0.0
        %4446 = vmatpush1.xpose.msra.mxu0 0.0
        %4447 = vmatprep.subr.mxu0 0.0
        %4448 = vmatpush1.xpose.msra.mxu0 0.0
        %4449 = vmatprep.subr.mxu0 0.0
        %4450 = vmatpush1.xpose.msra.mxu0 0.0
        %4451 = vmatprep.subr.mxu0 0.0
        %4452 = vmatpush1.xpose.msra.mxu0 0.0
        %4453 = vmatprep.subr.mxu0 0.0
        %4454 = vmatpush1.xpose.msra.mxu0 0.0
        %4455 = vmatprep.subr.mxu0 0.0
        %4456 = vmatpush1.xpose.msra.mxu0 0.0
        %4457 = vmatprep.subr.mxu0 0.0
        %4458 = vmatpush1.xpose.msra.mxu0 0.0
        %4459 = vmatprep.subr.mxu0 0.0
        %4460 = vmatpush1.xpose.msra.mxu0 0.0
        %4461 = vmatprep.subr.mxu0 0.0
        %4462 = vmatpush1.xpose.msra.mxu0 0.0
        %4463 = vmatprep.subr.mxu0 0.0
        %4464 = vmatpush1.xpose.msra.mxu0 0.0
        %4465 = vmatprep.subr.mxu0 0.0
        %4466 = vmatpush1.xpose.msra.mxu0 0.0
        %4467 = vmatprep.subr.mxu0 0.0
        %4468 = vmatpush1.xpose.msra.mxu0 0.0
        %4469 = vmatprep.subr.mxu0 0.0
        %4470 = vmatpush1.xpose.msra.mxu0 0.0
        %4471 = vmatprep.subr.mxu0 0.0
        %4472 = vmatpush1.xpose.msra.mxu0 0.0
        %4473 = vmatprep.subr.mxu0 0.0
        %4474 = vmatpush1.xpose.msra.mxu0 0.0
        %4475 = vmatprep.subr.mxu0 0.0
        %4476 = vmatpush1.xpose.msra.mxu0 0.0
        %4477 = vmatprep.subr.mxu0 0.0
        %4478 = vmatpush1.xpose.msra.mxu0 0.0
        %4479 = vmatprep.subr.mxu0 0.0
        %4480 = vmatpush1.xpose.msra.mxu0 0.0
        %4481 = vmatprep.subr.mxu0 0.0
        %4482 = vmatpush1.xpose.msra.mxu0 0.0
        %4483 = vmatprep.subr.mxu0 0.0
        %4484 = vmatpush1.xpose.msra.mxu0 0.0
        %4485 = vmatprep.subr.mxu0 0.0
        %4486 = vmatpush1.xpose.msra.mxu0 0.0
        %4487 = vmatprep.subr.mxu0 0.0
        %4488 = vmatpush1.xpose.msra.mxu0 0.0
        %4489 = vmatprep.mubr.f32.mxu0 0.0
        %4490 = vmatmul.mubr.f32.gmra.mrb[0].mxu0 %v4417
        %v4491 = vpop.f32.mrb[0].mxu0
        %v4492 = vadd.f32 0.0, %v4491
        %v4493 = vpop.f32.mrb[0].mxu0
        %4494 = vmatprep.mubr.f32.mxu0 0.0
        %4495 = vmatmul.mubr.f32.gmra.mrb[0].mxu0 %v4419
        %v4496 = vpop.f32.mrb[0].mxu0
        %v4497 = vadd.f32 0.0, %v4496
        %v4498 = vpop.f32.mrb[0].mxu0
        %4499 = vdwg.mxu0
        %v4500 = vmul.f32 %v4492, 0.17677669
        %v4501 = vmul.f32 %v4497, 0.17677669
        %v4502 = vsel %vm839, %v4500, -1000000.0
        %v4503 = vsel %vm839, %v4501, -1000000.0
        %v4504 = vsel %vm932, %v4502, -inf
        %4505 = vmax.xlane.f32.xlu0 %v4504
        %v4506 = vpop.xlane.xlu0 %4505
        %v4507 = vsel %vm932, %v4503, -inf
        %4508 = vmax.xlane.f32.xlu0 %v4507
        %v4509 = vpop.xlane.xlu0 %4508
        %v4510 = vsub.f32 %v4502, %v4506
        %v4511 = vsub.f32 %v4503, %v4509
        %v4512 = vmul.f32 %v4510, 1.442695
        %v4513 = vpow.pop %v4512
        %v4514 = vmul.f32 %v4511, 1.442695
        %v4515 = vpow.pop %v4514
        %v4516 = vsel %vm932, %v4513, 0.0
        %4517 = vadd.xlane.f32.xlu0 %v4516
        %v4518 = vpop.xlane.xlu0 %4517
        %v4519 = vsel %vm932, %v4515, 0.0
        %4520 = vadd.xlane.f32.xlu0 %v4519
        %v4521 = vpop.xlane.xlu0 %4520
        %v4522 = vrcp.pop %v4518
        %v4523 = vrcp.pop %v4521
        %v4524 = vmul.f32 %v4513, %v4522
        %v4525 = vmul.f32 %v4515, %v4523
        %4526 = vrot.lane.b32.xlu0 %v3829, 64
        %v4527 = vpop.permute.xlu0 %4526
        %4528 = vrot.lane.b32.xlu0 %v3834, 64
        %v4529 = vpop.permute.xlu0 %4528
        %v4533 = vsel %vm932, %v4524, 0
        %v4536 = vsel %vm932, %v4525, 0
        %4538 = vmatprep.subr.mxu0 0.0
        %4539 = vmatpush1.msra.mxu0 %v4527
        %4540 = vmatprep.subr.mxu0 0.0
        %4541 = vmatpush1.msra.mxu0 %v4529
        %4542 = vmatprep.subr.mxu0 0.0
        %4543 = vmatpush1.msra.mxu0 0.0
        %4544 = vmatprep.subr.mxu0 0.0
        %4545 = vmatpush1.msra.mxu0 0.0
        %4546 = vmatprep.subr.mxu0 0.0
        %4547 = vmatpush1.msra.mxu0 0.0
        %4548 = vmatprep.subr.mxu0 0.0
        %4549 = vmatpush1.msra.mxu0 0.0
        %4550 = vmatprep.subr.mxu0 0.0
        %4551 = vmatpush1.msra.mxu0 0.0
        %4552 = vmatprep.subr.mxu0 0.0
        %4553 = vmatpush1.msra.mxu0 0.0
        %4554 = vmatprep.subr.mxu0 0.0
        %4555 = vmatpush1.msra.mxu0 0.0
        %4556 = vmatprep.subr.mxu0 0.0
        %4557 = vmatpush1.msra.mxu0 0.0
        %4558 = vmatprep.subr.mxu0 0.0
        %4559 = vmatpush1.msra.mxu0 0.0
        %4560 = vmatprep.subr.mxu0 0.0
        %4561 = vmatpush1.msra.mxu0 0.0
        %4562 = vmatprep.subr.mxu0 0.0
        %4563 = vmatpush1.msra.mxu0 0.0
        %4564 = vmatprep.subr.mxu0 0.0
        %4565 = vmatpush1.msra.mxu0 0.0
        %4566 = vmatprep.subr.mxu0 0.0
        %4567 = vmatpush1.msra.mxu0 0.0
        %4568 = vmatprep.subr.mxu0 0.0
        %4569 = vmatpush1.msra.mxu0 0.0
        %4570 = vmatprep.subr.mxu0 0.0
        %4571 = vmatpush1.msra.mxu0 0.0
        %4572 = vmatprep.subr.mxu0 0.0
        %4573 = vmatpush1.msra.mxu0 0.0
        %4574 = vmatprep.subr.mxu0 0.0
        %4575 = vmatpush1.msra.mxu0 0.0
        %4576 = vmatprep.subr.mxu0 0.0
        %4577 = vmatpush1.msra.mxu0 0.0
        %4578 = vmatprep.subr.mxu0 0.0
        %4579 = vmatpush1.msra.mxu0 0.0
        %4580 = vmatprep.subr.mxu0 0.0
        %4581 = vmatpush1.msra.mxu0 0.0
        %4582 = vmatprep.subr.mxu0 0.0
        %4583 = vmatpush1.msra.mxu0 0.0
        %4584 = vmatprep.subr.mxu0 0.0
        %4585 = vmatpush1.msra.mxu0 0.0
        %4586 = vmatprep.subr.mxu0 0.0
        %4587 = vmatpush1.msra.mxu0 0.0
        %4588 = vmatprep.subr.mxu0 0.0
        %4589 = vmatpush1.msra.mxu0 0.0
        %4590 = vmatprep.subr.mxu0 0.0
        %4591 = vmatpush1.msra.mxu0 0.0
        %4592 = vmatprep.subr.mxu0 0.0
        %4593 = vmatpush1.msra.mxu0 0.0
        %4594 = vmatprep.subr.mxu0 0.0
        %4595 = vmatpush1.msra.mxu0 0.0
        %4596 = vmatprep.subr.mxu0 0.0
        %4597 = vmatpush1.msra.mxu0 0.0
        %4598 = vmatprep.subr.mxu0 0.0
        %4599 = vmatpush1.msra.mxu0 0.0
        %4600 = vmatprep.subr.mxu0 0.0
        %4601 = vmatpush1.msra.mxu0 0.0
        %4602 = vmatprep.mubr.f32.mxu0 0.0
        %4603 = vmatmul.mubr.f32.gmra.mrb[0].mxu0 %v4533
        %v4604 = vpop.f32.mrb[0].mxu0
        %v4605 = vadd.f32 0.0, %v4604
        %v4606 = vpop.f32.mrb[0].mxu0
        %4607 = vmatprep.mubr.f32.mxu0 0.0
        %4608 = vmatmul.mubr.f32.gmra.mrb[0].mxu0 %v4536
        %v4609 = vpop.f32.mrb[0].mxu0
        %v4610 = vadd.f32 0.0, %v4609
        %v4611 = vpop.f32.mrb[0].mxu0
        %4612 = vdwg.mxu0
        %v4614 = vsel %vm840, %v4605, 0
        %v4617 = vsel %vm840, %v4610, 0
        %4619 = vmatprep.subr.mxu0 0.0
        %4620 = vmatpush1.msra.mxu0 %v3584
        %4621 = vmatprep.subr.mxu0 0.0
        %4622 = vmatpush1.msra.mxu0 %v3585
        %4623 = vmatprep.subr.mxu0 0.0
        %4624 = vmatpush1.msra.mxu0 %v3586
        %4625 = vmatprep.subr.mxu0 0.0
        %4626 = vmatpush1.msra.mxu0 %v3587
        %4627 = vmatprep.subr.mxu0 0.0
        %4628 = vmatpush1.msra.mxu0 0.0
        %4629 = vmatprep.subr.mxu0 0.0
        %4630 = vmatpush1.msra.mxu0 0.0
        %4631 = vmatprep.subr.mxu0 0.0
        %4632 = vmatpush1.msra.mxu0 0.0
        %4633 = vmatprep.subr.mxu0 0.0
        %4634 = vmatpush1.msra.mxu0 0.0
        %4635 = vmatprep.subr.mxu0 0.0
        %4636 = vmatpush1.msra.mxu0 0.0
        %4637 = vmatprep.subr.mxu0 0.0
        %4638 = vmatpush1.msra.mxu0 0.0
        %4639 = vmatprep.subr.mxu0 0.0
        %4640 = vmatpush1.msra.mxu0 0.0
        %4641 = vmatprep.subr.mxu0 0.0
        %4642 = vmatpush1.msra.mxu0 0.0
        %4643 = vmatprep.subr.mxu0 0.0
        %4644 = vmatpush1.msra.mxu0 0.0
        %4645 = vmatprep.subr.mxu0 0.0
        %4646 = vmatpush1.msra.mxu0 0.0
        %4647 = vmatprep.subr.mxu0 0.0
        %4648 = vmatpush1.msra.mxu0 0.0
        %4649 = vmatprep.subr.mxu0 0.0
        %4650 = vmatpush1.msra.mxu0 0.0
        %4651 = vmatprep.subr.mxu0 0.0
        %4652 = vmatpush1.msra.mxu0 0.0
        %4653 = vmatprep.subr.mxu0 0.0
        %4654 = vmatpush1.msra.mxu0 0.0
        %4655 = vmatprep.subr.mxu0 0.0
        %4656 = vmatpush1.msra.mxu0 0.0
        %4657 = vmatprep.subr.mxu0 0.0
        %4658 = vmatpush1.msra.mxu0 0.0
        %4659 = vmatprep.subr.mxu0 0.0
        %4660 = vmatpush1.msra.mxu0 0.0
        %4661 = vmatprep.subr.mxu0 0.0
        %4662 = vmatpush1.msra.mxu0 0.0
        %4663 = vmatprep.subr.mxu0 0.0
        %4664 = vmatpush1.msra.mxu0 0.0
        %4665 = vmatprep.subr.mxu0 0.0
        %4666 = vmatpush1.msra.mxu0 0.0
        %4667 = vmatprep.subr.mxu0 0.0
        %4668 = vmatpush1.msra.mxu0 0.0
        %4669 = vmatprep.subr.mxu0 0.0
        %4670 = vmatpush1.msra.mxu0 0.0
        %4671 = vmatprep.subr.mxu0 0.0
        %4672 = vmatpush1.msra.mxu0 0.0
        %4673 = vmatprep.subr.mxu0 0.0
        %4674 = vmatpush1.msra.mxu0 0.0
        %4675 = vmatprep.subr.mxu0 0.0
        %4676 = vmatpush1.msra.mxu0 0.0
        %4677 = vmatprep.subr.mxu0 0.0
        %4678 = vmatpush1.msra.mxu0 0.0
        %4679 = vmatprep.subr.mxu0 0.0
        %4680 = vmatpush1.msra.mxu0 0.0
        %4681 = vmatprep.subr.mxu0 0.0
        %4682 = vmatpush1.msra.mxu0 0.0
        %4683 = vmatprep.mubr.f32.mxu0 0.0
        %4684 = vmatmul.mubr.f32.gmra.mrb[0].mxu0 %v4614
        %v4685 = vpop.f32.mrb[0].mxu0
        %v4686 = vadd.f32 0.0, %v4685
        %v4687 = vpop.f32.mrb[0].mxu0
        %4688 = vmatprep.mubr.f32.mxu0 0.0
        %4689 = vmatmul.mubr.f32.gmra.mrb[0].mxu0 %v4617
        %v4690 = vpop.f32.mrb[0].mxu0
        %v4691 = vadd.f32 0.0, %v4690
        %v4692 = vpop.f32.mrb[0].mxu0
        %4693 = vdwg.mxu0
        %v4694 = vadd.f32 %v4401, %v4686
        %v4695 = vadd.f32 %v4406, %v4691
        %4696 = vrot.lane.b32.xlu0 %v3659, 32
        %v4697 = vpop.permute.xlu0 %4696
        %4698 = vrot.lane.b32.xlu0 %v3664, 32
        %v4699 = vpop.permute.xlu0 %4698
        %4700 = vrot.lane.b32.xlu0 %v3744, 32
        %v4701 = vpop.permute.xlu0 %4700
        %4702 = vrot.lane.b32.xlu0 %v3749, 32
        %v4703 = vpop.permute.xlu0 %4702
        %v4704 = vsel %vm840, %v4697, 0
        %v4706 = vsel %vm840, %v4699, 0
        %v4708 = vsel %vm840, %v4701, 0
        %v4710 = vsel %vm840, %v4703, 0
        %4712 = vmatprep.subr.mxu0 0.0
        %4713 = vmatpush1.xpose.msra.mxu0 %v4708
        %4714 = vmatprep.subr.mxu0 0.0
        %4715 = vmatpush1.xpose.msra.mxu0 %v4710
        %4716 = vmatprep.subr.mxu0 0.0
        %4717 = vmatpush1.xpose.msra.mxu0 0.0
        %4718 = vmatprep.subr.mxu0 0.0
        %4719 = vmatpush1.xpose.msra.mxu0 0.0
        %4720 = vmatprep.subr.mxu0 0.0
        %4721 = vmatpush1.xpose.msra.mxu0 0.0
        %4722 = vmatprep.subr.mxu0 0.0
        %4723 = vmatpush1.xpose.msra.mxu0 0.0
        %4724 = vmatprep.subr.mxu0 0.0
        %4725 = vmatpush1.xpose.msra.mxu0 0.0
        %4726 = vmatprep.subr.mxu0 0.0
        %4727 = vmatpush1.xpose.msra.mxu0 0.0
        %4728 = vmatprep.subr.mxu0 0.0
        %4729 = vmatpush1.xpose.msra.mxu0 0.0
        %4730 = vmatprep.subr.mxu0 0.0
        %4731 = vmatpush1.xpose.msra.mxu0 0.0
        %4732 = vmatprep.subr.mxu0 0.0
        %4733 = vmatpush1.xpose.msra.mxu0 0.0
        %4734 = vmatprep.subr.mxu0 0.0
        %4735 = vmatpush1.xpose.msra.mxu0 0.0
        %4736 = vmatprep.subr.mxu0 0.0
        %4737 = vmatpush1.xpose.msra.mxu0 0.0
        %4738 = vmatprep.subr.mxu0 0.0
        %4739 = vmatpush1.xpose.msra.mxu0 0.0
        %4740 = vmatprep.subr.mxu0 0.0
        %4741 = vmatpush1.xpose.msra.mxu0 0.0
        %4742 = vmatprep.subr.mxu0 0.0
        %4743 = vmatpush1.xpose.msra.mxu0 0.0
        %4744 = vmatprep.subr.mxu0 0.0
        %4745 = vmatpush1.xpose.msra.mxu0 0.0
        %4746 = vmatprep.subr.mxu0 0.0
        %4747 = vmatpush1.xpose.msra.mxu0 0.0
        %4748 = vmatprep.subr.mxu0 0.0
        %4749 = vmatpush1.xpose.msra.mxu0 0.0
        %4750 = vmatprep.subr.mxu0 0.0
        %4751 = vmatpush1.xpose.msra.mxu0 0.0
        %4752 = vmatprep.subr.mxu0 0.0
        %4753 = vmatpush1.xpose.msra.mxu0 0.0
        %4754 = vmatprep.subr.mxu0 0.0
        %4755 = vmatpush1.xpose.msra.mxu0 0.0
        %4756 = vmatprep.subr.mxu0 0.0
        %4757 = vmatpush1.xpose.msra.mxu0 0.0
        %4758 = vmatprep.subr.mxu0 0.0
        %4759 = vmatpush1.xpose.msra.mxu0 0.0
        %4760 = vmatprep.subr.mxu0 0.0
        %4761 = vmatpush1.xpose.msra.mxu0 0.0
        %4762 = vmatprep.subr.mxu0 0.0
        %4763 = vmatpush1.xpose.msra.mxu0 0.0
        %4764 = vmatprep.subr.mxu0 0.0
        %4765 = vmatpush1.xpose.msra.mxu0 0.0
        %4766 = vmatprep.subr.mxu0 0.0
        %4767 = vmatpush1.xpose.msra.mxu0 0.0
        %4768 = vmatprep.subr.mxu0 0.0
        %4769 = vmatpush1.xpose.msra.mxu0 0.0
        %4770 = vmatprep.subr.mxu0 0.0
        %4771 = vmatpush1.xpose.msra.mxu0 0.0
        %4772 = vmatprep.subr.mxu0 0.0
        %4773 = vmatpush1.xpose.msra.mxu0 0.0
        %4774 = vmatprep.subr.mxu0 0.0
        %4775 = vmatpush1.xpose.msra.mxu0 0.0
        %4776 = vmatprep.mubr.f32.mxu0 0.0
        %4777 = vmatmul.mubr.f32.gmra.mrb[0].mxu0 %v4704
        %v4778 = vpop.f32.mrb[0].mxu0
        %v4779 = vadd.f32 0.0, %v4778
        %v4780 = vpop.f32.mrb[0].mxu0
        %4781 = vmatprep.mubr.f32.mxu0 0.0
        %4782 = vmatmul.mubr.f32.gmra.mrb[0].mxu0 %v4706
        %v4783 = vpop.f32.mrb[0].mxu0
        %v4784 = vadd.f32 0.0, %v4783
        %v4785 = vpop.f32.mrb[0].mxu0
        %4786 = vdwg.mxu0
        %v4787 = vmul.f32 %v4779, 0.17677669
        %v4788 = vmul.f32 %v4784, 0.17677669
        %v4789 = vsel %vm839, %v4787, -1000000.0
        %v4790 = vsel %vm839, %v4788, -1000000.0
        %v4791 = vsel %vm932, %v4789, -inf
        %4792 = vmax.xlane.f32.xlu0 %v4791
        %v4793 = vpop.xlane.xlu0 %4792
        %v4794 = vsel %vm932, %v4790, -inf
        %4795 = vmax.xlane.f32.xlu0 %v4794
        %v4796 = vpop.xlane.xlu0 %4795
        %v4797 = vsub.f32 %v4789, %v4793
        %v4798 = vsub.f32 %v4790, %v4796
        %v4799 = vmul.f32 %v4797, 1.442695
        %v4800 = vpow.pop %v4799
        %v4801 = vmul.f32 %v4798, 1.442695
        %v4802 = vpow.pop %v4801
        %v4803 = vsel %vm932, %v4800, 0.0
        %4804 = vadd.xlane.f32.xlu0 %v4803
        %v4805 = vpop.xlane.xlu0 %4804
        %v4806 = vsel %vm932, %v4802, 0.0
        %4807 = vadd.xlane.f32.xlu0 %v4806
        %v4808 = vpop.xlane.xlu0 %4807
        %v4809 = vrcp.pop %v4805
        %v4810 = vrcp.pop %v4808
        %v4811 = vmul.f32 %v4800, %v4809
        %v4812 = vmul.f32 %v4802, %v4810
        %4813 = vrot.lane.b32.xlu0 %v3829, 32
        %v4814 = vpop.permute.xlu0 %4813
        %4815 = vrot.lane.b32.xlu0 %v3834, 32
        %v4816 = vpop.permute.xlu0 %4815
        %v4820 = vsel %vm932, %v4811, 0
        %v4823 = vsel %vm932, %v4812, 0
        %4825 = vmatprep.subr.mxu0 0.0
        %4826 = vmatpush1.msra.mxu0 %v4814
        %4827 = vmatprep.subr.mxu0 0.0
        %4828 = vmatpush1.msra.mxu0 %v4816
        %4829 = vmatprep.subr.mxu0 0.0
        %4830 = vmatpush1.msra.mxu0 0.0
        %4831 = vmatprep.subr.mxu0 0.0
        %4832 = vmatpush1.msra.mxu0 0.0
        %4833 = vmatprep.subr.mxu0 0.0
        %4834 = vmatpush1.msra.mxu0 0.0
        %4835 = vmatprep.subr.mxu0 0.0
        %4836 = vmatpush1.msra.mxu0 0.0
        %4837 = vmatprep.subr.mxu0 0.0
        %4838 = vmatpush1.msra.mxu0 0.0
        %4839 = vmatprep.subr.mxu0 0.0
        %4840 = vmatpush1.msra.mxu0 0.0
        %4841 = vmatprep.subr.mxu0 0.0
        %4842 = vmatpush1.msra.mxu0 0.0
        %4843 = vmatprep.subr.mxu0 0.0
        %4844 = vmatpush1.msra.mxu0 0.0
        %4845 = vmatprep.subr.mxu0 0.0
        %4846 = vmatpush1.msra.mxu0 0.0
        %4847 = vmatprep.subr.mxu0 0.0
        %4848 = vmatpush1.msra.mxu0 0.0
        %4849 = vmatprep.subr.mxu0 0.0
        %4850 = vmatpush1.msra.mxu0 0.0
        %4851 = vmatprep.subr.mxu0 0.0
        %4852 = vmatpush1.msra.mxu0 0.0
        %4853 = vmatprep.subr.mxu0 0.0
        %4854 = vmatpush1.msra.mxu0 0.0
        %4855 = vmatprep.subr.mxu0 0.0
        %4856 = vmatpush1.msra.mxu0 0.0
        %4857 = vmatprep.subr.mxu0 0.0
        %4858 = vmatpush1.msra.mxu0 0.0
        %4859 = vmatprep.subr.mxu0 0.0
        %4860 = vmatpush1.msra.mxu0 0.0
        %4861 = vmatprep.subr.mxu0 0.0
        %4862 = vmatpush1.msra.mxu0 0.0
        %4863 = vmatprep.subr.mxu0 0.0
        %4864 = vmatpush1.msra.mxu0 0.0
        %4865 = vmatprep.subr.mxu0 0.0
        %4866 = vmatpush1.msra.mxu0 0.0
        %4867 = vmatprep.subr.mxu0 0.0
        %4868 = vmatpush1.msra.mxu0 0.0
        %4869 = vmatprep.subr.mxu0 0.0
        %4870 = vmatpush1.msra.mxu0 0.0
        %4871 = vmatprep.subr.mxu0 0.0
        %4872 = vmatpush1.msra.mxu0 0.0
        %4873 = vmatprep.subr.mxu0 0.0
        %4874 = vmatpush1.msra.mxu0 0.0
        %4875 = vmatprep.subr.mxu0 0.0
        %4876 = vmatpush1.msra.mxu0 0.0
        %4877 = vmatprep.subr.mxu0 0.0
        %4878 = vmatpush1.msra.mxu0 0.0
        %4879 = vmatprep.subr.mxu0 0.0
        %4880 = vmatpush1.msra.mxu0 0.0
        %4881 = vmatprep.subr.mxu0 0.0
        %4882 = vmatpush1.msra.mxu0 0.0
        %4883 = vmatprep.subr.mxu0 0.0
        %4884 = vmatpush1.msra.mxu0 0.0
        %4885 = vmatprep.subr.mxu0 0.0
        %4886 = vmatpush1.msra.mxu0 0.0
        %4887 = vmatprep.subr.mxu0 0.0
        %4888 = vmatpush1.msra.mxu0 0.0
        %4889 = vmatprep.mubr.f32.mxu0 0.0
        %4890 = vmatmul.mubr.f32.gmra.mrb[0].mxu0 %v4820
        %v4891 = vpop.f32.mrb[0].mxu0
        %v4892 = vadd.f32 0.0, %v4891
        %v4893 = vpop.f32.mrb[0].mxu0
        %4894 = vmatprep.mubr.f32.mxu0 0.0
        %4895 = vmatmul.mubr.f32.gmra.mrb[0].mxu0 %v4823
        %v4896 = vpop.f32.mrb[0].mxu0
        %v4897 = vadd.f32 0.0, %v4896
        %v4898 = vpop.f32.mrb[0].mxu0
        %4899 = vdwg.mxu0
        %v4901 = vsel %vm840, %v4892, 0
        %v4904 = vsel %vm840, %v4897, 0
        %4906 = vmatprep.subr.mxu0 0.0
        %4907 = vmatpush1.msra.mxu0 %v3588
        %4908 = vmatprep.subr.mxu0 0.0
        %4909 = vmatpush1.msra.mxu0 %v3589
        %4910 = vmatprep.subr.mxu0 0.0
        %4911 = vmatpush1.msra.mxu0 %v3590
        %4912 = vmatprep.subr.mxu0 0.0
        %4913 = vmatpush1.msra.mxu0 %v3591
        %4914 = vmatprep.subr.mxu0 0.0
        %4915 = vmatpush1.msra.mxu0 0.0
        %4916 = vmatprep.subr.mxu0 0.0
        %4917 = vmatpush1.msra.mxu0 0.0
        %4918 = vmatprep.subr.mxu0 0.0
        %4919 = vmatpush1.msra.mxu0 0.0
        %4920 = vmatprep.subr.mxu0 0.0
        %4921 = vmatpush1.msra.mxu0 0.0
        %4922 = vmatprep.subr.mxu0 0.0
        %4923 = vmatpush1.msra.mxu0 0.0
        %4924 = vmatprep.subr.mxu0 0.0
        %4925 = vmatpush1.msra.mxu0 0.0
        %4926 = vmatprep.subr.mxu0 0.0
        %4927 = vmatpush1.msra.mxu0 0.0
        %4928 = vmatprep.subr.mxu0 0.0
        %4929 = vmatpush1.msra.mxu0 0.0
        %4930 = vmatprep.subr.mxu0 0.0
        %4931 = vmatpush1.msra.mxu0 0.0
        %4932 = vmatprep.subr.mxu0 0.0
        %4933 = vmatpush1.msra.mxu0 0.0
        %4934 = vmatprep.subr.mxu0 0.0
        %4935 = vmatpush1.msra.mxu0 0.0
        %4936 = vmatprep.subr.mxu0 0.0
        %4937 = vmatpush1.msra.mxu0 0.0
        %4938 = vmatprep.subr.mxu0 0.0
        %4939 = vmatpush1.msra.mxu0 0.0
        %4940 = vmatprep.subr.mxu0 0.0
        %4941 = vmatpush1.msra.mxu0 0.0
        %4942 = vmatprep.subr.mxu0 0.0
        %4943 = vmatpush1.msra.mxu0 0.0
        %4944 = vmatprep.subr.mxu0 0.0
        %4945 = vmatpush1.msra.mxu0 0.0
        %4946 = vmatprep.subr.mxu0 0.0
        %4947 = vmatpush1.msra.mxu0 0.0
        %4948 = vmatprep.subr.mxu0 0.0
        %4949 = vmatpush1.msra.mxu0 0.0
        %4950 = vmatprep.subr.mxu0 0.0
        %4951 = vmatpush1.msra.mxu0 0.0
        %4952 = vmatprep.subr.mxu0 0.0
        %4953 = vmatpush1.msra.mxu0 0.0
        %4954 = vmatprep.subr.mxu0 0.0
        %4955 = vmatpush1.msra.mxu0 0.0
        %4956 = vmatprep.subr.mxu0 0.0
        %4957 = vmatpush1.msra.mxu0 0.0
        %4958 = vmatprep.subr.mxu0 0.0
        %4959 = vmatpush1.msra.mxu0 0.0
        %4960 = vmatprep.subr.mxu0 0.0
        %4961 = vmatpush1.msra.mxu0 0.0
        %4962 = vmatprep.subr.mxu0 0.0
        %4963 = vmatpush1.msra.mxu0 0.0
        %4964 = vmatprep.subr.mxu0 0.0
        %4965 = vmatpush1.msra.mxu0 0.0
        %4966 = vmatprep.subr.mxu0 0.0
        %4967 = vmatpush1.msra.mxu0 0.0
        %4968 = vmatprep.subr.mxu0 0.0
        %4969 = vmatpush1.msra.mxu0 0.0
        %4970 = vmatprep.mubr.f32.mxu0 0.0
        %4971 = vmatmul.mubr.f32.gmra.mrb[0].mxu0 %v4901
        %v4972 = vpop.f32.mrb[0].mxu0
        %v4973 = vadd.f32 0.0, %v4972
        %v4974 = vpop.f32.mrb[0].mxu0
        %4975 = vmatprep.mubr.f32.mxu0 0.0
        %4976 = vmatmul.mubr.f32.gmra.mrb[0].mxu0 %v4904
        %v4977 = vpop.f32.mrb[0].mxu0
        %v4978 = vadd.f32 0.0, %v4977
        %v4979 = vpop.f32.mrb[0].mxu0
        %4980 = vdwg.mxu0
        %v4981 = vadd.f32 %v4694, %v4973
        %v4982 = vadd.f32 %v4695, %v4978
        %v4984 = vsel %vm840, %v3669, 0
        %v4987 = vsel %vm840, %v3674, 0
        %v4990 = vsel %vm840, %v3754, 0
        %v4993 = vsel %vm840, %v3759, 0
        %4995 = vmatprep.subr.mxu0 0.0
        %4996 = vmatpush1.xpose.msra.mxu0 %v4990
        %4997 = vmatprep.subr.mxu0 0.0
        %4998 = vmatpush1.xpose.msra.mxu0 %v4993
        %4999 = vmatprep.subr.mxu0 0.0
        %5000 = vmatpush1.xpose.msra.mxu0 0.0
        %5001 = vmatprep.subr.mxu0 0.0
        %5002 = vmatpush1.xpose.msra.mxu0 0.0
        %5003 = vmatprep.subr.mxu0 0.0
        %5004 = vmatpush1.xpose.msra.mxu0 0.0
        %5005 = vmatprep.subr.mxu0 0.0
        %5006 = vmatpush1.xpose.msra.mxu0 0.0
        %5007 = vmatprep.subr.mxu0 0.0
        %5008 = vmatpush1.xpose.msra.mxu0 0.0
        %5009 = vmatprep.subr.mxu0 0.0
        %5010 = vmatpush1.xpose.msra.mxu0 0.0
        %5011 = vmatprep.subr.mxu0 0.0
        %5012 = vmatpush1.xpose.msra.mxu0 0.0
        %5013 = vmatprep.subr.mxu0 0.0
        %5014 = vmatpush1.xpose.msra.mxu0 0.0
        %5015 = vmatprep.subr.mxu0 0.0
        %5016 = vmatpush1.xpose.msra.mxu0 0.0
        %5017 = vmatprep.subr.mxu0 0.0
        %5018 = vmatpush1.xpose.msra.mxu0 0.0
        %5019 = vmatprep.subr.mxu0 0.0
        %5020 = vmatpush1.xpose.msra.mxu0 0.0
        %5021 = vmatprep.subr.mxu0 0.0
        %5022 = vmatpush1.xpose.msra.mxu0 0.0
        %5023 = vmatprep.subr.mxu0 0.0
        %5024 = vmatpush1.xpose.msra.mxu0 0.0
        %5025 = vmatprep.subr.mxu0 0.0
        %5026 = vmatpush1.xpose.msra.mxu0 0.0
        %5027 = vmatprep.subr.mxu0 0.0
        %5028 = vmatpush1.xpose.msra.mxu0 0.0
        %5029 = vmatprep.subr.mxu0 0.0
        %5030 = vmatpush1.xpose.msra.mxu0 0.0
        %5031 = vmatprep.subr.mxu0 0.0
        %5032 = vmatpush1.xpose.msra.mxu0 0.0
        %5033 = vmatprep.subr.mxu0 0.0
        %5034 = vmatpush1.xpose.msra.mxu0 0.0
        %5035 = vmatprep.subr.mxu0 0.0
        %5036 = vmatpush1.xpose.msra.mxu0 0.0
        %5037 = vmatprep.subr.mxu0 0.0
        %5038 = vmatpush1.xpose.msra.mxu0 0.0
        %5039 = vmatprep.subr.mxu0 0.0
        %5040 = vmatpush1.xpose.msra.mxu0 0.0
        %5041 = vmatprep.subr.mxu0 0.0
        %5042 = vmatpush1.xpose.msra.mxu0 0.0
        %5043 = vmatprep.subr.mxu0 0.0
        %5044 = vmatpush1.xpose.msra.mxu0 0.0
        %5045 = vmatprep.subr.mxu0 0.0
        %5046 = vmatpush1.xpose.msra.mxu0 0.0
        %5047 = vmatprep.subr.mxu0 0.0
        %5048 = vmatpush1.xpose.msra.mxu0 0.0
        %5049 = vmatprep.subr.mxu0 0.0
        %5050 = vmatpush1.xpose.msra.mxu0 0.0
        %5051 = vmatprep.subr.mxu0 0.0
        %5052 = vmatpush1.xpose.msra.mxu0 0.0
        %5053 = vmatprep.subr.mxu0 0.0
        %5054 = vmatpush1.xpose.msra.mxu0 0.0
        %5055 = vmatprep.subr.mxu0 0.0
        %5056 = vmatpush1.xpose.msra.mxu0 0.0
        %5057 = vmatprep.subr.mxu0 0.0
        %5058 = vmatpush1.xpose.msra.mxu0 0.0
        %5059 = vmatprep.mubr.f32.mxu0 0.0
        %5060 = vmatmul.mubr.f32.gmra.mrb[0].mxu0 %v4984
        %v5061 = vpop.f32.mrb[0].mxu0
        %v5062 = vadd.f32 0.0, %v5061
        %v5063 = vpop.f32.mrb[0].mxu0
        %5064 = vmatprep.mubr.f32.mxu0 0.0
        %5065 = vmatmul.mubr.f32.gmra.mrb[0].mxu0 %v4987
        %v5066 = vpop.f32.mrb[0].mxu0
        %v5067 = vadd.f32 0.0, %v5066
        %v5068 = vpop.f32.mrb[0].mxu0
        %5069 = vdwg.mxu0
        %v5070 = vmul.f32 %v5062, 0.17677669
        %v5071 = vmul.f32 %v5067, 0.17677669
        %v5072 = vsel %vm1981, %v5070, -1000000.0
        %v5073 = vsel %vm1981, %v5071, -1000000.0
        %v5074 = vsel %vm932, %v5072, -inf
        %5075 = vmax.xlane.f32.xlu0 %v5074
        %v5076 = vpop.xlane.xlu0 %5075
        %v5077 = vsel %vm932, %v5073, -inf
        %5078 = vmax.xlane.f32.xlu0 %v5077
        %v5079 = vpop.xlane.xlu0 %5078
        %v5080 = vsub.f32 %v5072, %v5076
        %v5081 = vsub.f32 %v5073, %v5079
        %v5082 = vmul.f32 %v5080, 1.442695
        %v5083 = vpow.pop %v5082
        %v5084 = vmul.f32 %v5081, 1.442695
        %v5085 = vpow.pop %v5084
        %v5086 = vsel %vm932, %v5083, 0.0
        %5087 = vadd.xlane.f32.xlu0 %v5086
        %v5088 = vpop.xlane.xlu0 %5087
        %v5089 = vsel %vm932, %v5085, 0.0
        %5090 = vadd.xlane.f32.xlu0 %v5089
        %v5091 = vpop.xlane.xlu0 %5090
        %v5092 = vrcp.pop %v5088
        %v5093 = vrcp.pop %v5091
        %v5094 = vmul.f32 %v5083, %v5092
        %v5095 = vmul.f32 %v5085, %v5093
        %v5097 = vsel %vm932, %v5094, 0
        %v5100 = vsel %vm932, %v5095, 0
        %5102 = vmatprep.subr.mxu0 0.0
        %5103 = vmatpush1.msra.mxu0 %v3839
        %5104 = vmatprep.subr.mxu0 0.0
        %5105 = vmatpush1.msra.mxu0 %v3844
        %5106 = vmatprep.subr.mxu0 0.0
        %5107 = vmatpush1.msra.mxu0 0.0
        %5108 = vmatprep.subr.mxu0 0.0
        %5109 = vmatpush1.msra.mxu0 0.0
        %5110 = vmatprep.subr.mxu0 0.0
        %5111 = vmatpush1.msra.mxu0 0.0
        %5112 = vmatprep.subr.mxu0 0.0
        %5113 = vmatpush1.msra.mxu0 0.0
        %5114 = vmatprep.subr.mxu0 0.0
        %5115 = vmatpush1.msra.mxu0 0.0
        %5116 = vmatprep.subr.mxu0 0.0
        %5117 = vmatpush1.msra.mxu0 0.0
        %5118 = vmatprep.subr.mxu0 0.0
        %5119 = vmatpush1.msra.mxu0 0.0
        %5120 = vmatprep.subr.mxu0 0.0
        %5121 = vmatpush1.msra.mxu0 0.0
        %5122 = vmatprep.subr.mxu0 0.0
        %5123 = vmatpush1.msra.mxu0 0.0
        %5124 = vmatprep.subr.mxu0 0.0
        %5125 = vmatpush1.msra.mxu0 0.0
        %5126 = vmatprep.subr.mxu0 0.0
        %5127 = vmatpush1.msra.mxu0 0.0
        %5128 = vmatprep.subr.mxu0 0.0
        %5129 = vmatpush1.msra.mxu0 0.0
        %5130 = vmatprep.subr.mxu0 0.0
        %5131 = vmatpush1.msra.mxu0 0.0
        %5132 = vmatprep.subr.mxu0 0.0
        %5133 = vmatpush1.msra.mxu0 0.0
        %5134 = vmatprep.subr.mxu0 0.0
        %5135 = vmatpush1.msra.mxu0 0.0
        %5136 = vmatprep.subr.mxu0 0.0
        %5137 = vmatpush1.msra.mxu0 0.0
        %5138 = vmatprep.subr.mxu0 0.0
        %5139 = vmatpush1.msra.mxu0 0.0
        %5140 = vmatprep.subr.mxu0 0.0
        %5141 = vmatpush1.msra.mxu0 0.0
        %5142 = vmatprep.subr.mxu0 0.0
        %5143 = vmatpush1.msra.mxu0 0.0
        %5144 = vmatprep.subr.mxu0 0.0
        %5145 = vmatpush1.msra.mxu0 0.0
        %5146 = vmatprep.subr.mxu0 0.0
        %5147 = vmatpush1.msra.mxu0 0.0
        %5148 = vmatprep.subr.mxu0 0.0
        %5149 = vmatpush1.msra.mxu0 0.0
        %5150 = vmatprep.subr.mxu0 0.0
        %5151 = vmatpush1.msra.mxu0 0.0
        %5152 = vmatprep.subr.mxu0 0.0
        %5153 = vmatpush1.msra.mxu0 0.0
        %5154 = vmatprep.subr.mxu0 0.0
        %5155 = vmatpush1.msra.mxu0 0.0
        %5156 = vmatprep.subr.mxu0 0.0
        %5157 = vmatpush1.msra.mxu0 0.0
        %5158 = vmatprep.subr.mxu0 0.0
        %5159 = vmatpush1.msra.mxu0 0.0
        %5160 = vmatprep.subr.mxu0 0.0
        %5161 = vmatpush1.msra.mxu0 0.0
        %5162 = vmatprep.subr.mxu0 0.0
        %5163 = vmatpush1.msra.mxu0 0.0
        %5164 = vmatprep.subr.mxu0 0.0
        %5165 = vmatpush1.msra.mxu0 0.0
        %5166 = vmatprep.mubr.f32.mxu0 0.0
        %5167 = vmatmul.mubr.f32.gmra.mrb[0].mxu0 %v5097
        %v5168 = vpop.f32.mrb[0].mxu0
        %v5169 = vadd.f32 0.0, %v5168
        %v5170 = vpop.f32.mrb[0].mxu0
        %5171 = vmatprep.mubr.f32.mxu0 0.0
        %5172 = vmatmul.mubr.f32.gmra.mrb[0].mxu0 %v5100
        %v5173 = vpop.f32.mrb[0].mxu0
        %v5174 = vadd.f32 0.0, %v5173
        %v5175 = vpop.f32.mrb[0].mxu0
        %5176 = vdwg.mxu0
        %5177 = vrot.lane.b32.xlu0 %v3669, 96
        %v5178 = vpop.permute.xlu0 %5177
        %5179 = vrot.lane.b32.xlu0 %v3674, 96
        %v5180 = vpop.permute.xlu0 %5179
        %5181 = vrot.lane.b32.xlu0 %v3754, 96
        %v5182 = vpop.permute.xlu0 %5181
        %5183 = vrot.lane.b32.xlu0 %v3759, 96
        %v5184 = vpop.permute.xlu0 %5183
        %v5185 = vsel %vm840, %v5178, 0
        %v5187 = vsel %vm840, %v5180, 0
        %v5189 = vsel %vm840, %v5182, 0
        %v5191 = vsel %vm840, %v5184, 0
        %5193 = vmatprep.subr.mxu0 0.0
        %5194 = vmatpush1.xpose.msra.mxu0 %v5189
        %5195 = vmatprep.subr.mxu0 0.0
        %5196 = vmatpush1.xpose.msra.mxu0 %v5191
        %5197 = vmatprep.subr.mxu0 0.0
        %5198 = vmatpush1.xpose.msra.mxu0 0.0
        %5199 = vmatprep.subr.mxu0 0.0
        %5200 = vmatpush1.xpose.msra.mxu0 0.0
        %5201 = vmatprep.subr.mxu0 0.0
        %5202 = vmatpush1.xpose.msra.mxu0 0.0
        %5203 = vmatprep.subr.mxu0 0.0
        %5204 = vmatpush1.xpose.msra.mxu0 0.0
        %5205 = vmatprep.subr.mxu0 0.0
        %5206 = vmatpush1.xpose.msra.mxu0 0.0
        %5207 = vmatprep.subr.mxu0 0.0
        %5208 = vmatpush1.xpose.msra.mxu0 0.0
        %5209 = vmatprep.subr.mxu0 0.0
        %5210 = vmatpush1.xpose.msra.mxu0 0.0
        %5211 = vmatprep.subr.mxu0 0.0
        %5212 = vmatpush1.xpose.msra.mxu0 0.0
        %5213 = vmatprep.subr.mxu0 0.0
        %5214 = vmatpush1.xpose.msra.mxu0 0.0
        %5215 = vmatprep.subr.mxu0 0.0
        %5216 = vmatpush1.xpose.msra.mxu0 0.0
        %5217 = vmatprep.subr.mxu0 0.0
        %5218 = vmatpush1.xpose.msra.mxu0 0.0
        %5219 = vmatprep.subr.mxu0 0.0
        %5220 = vmatpush1.xpose.msra.mxu0 0.0
        %5221 = vmatprep.subr.mxu0 0.0
        %5222 = vmatpush1.xpose.msra.mxu0 0.0
        %5223 = vmatprep.subr.mxu0 0.0
        %5224 = vmatpush1.xpose.msra.mxu0 0.0
        %5225 = vmatprep.subr.mxu0 0.0
        %5226 = vmatpush1.xpose.msra.mxu0 0.0
        %5227 = vmatprep.subr.mxu0 0.0
        %5228 = vmatpush1.xpose.msra.mxu0 0.0
        %5229 = vmatprep.subr.mxu0 0.0
        %5230 = vmatpush1.xpose.msra.mxu0 0.0
        %5231 = vmatprep.subr.mxu0 0.0
        %5232 = vmatpush1.xpose.msra.mxu0 0.0
        %5233 = vmatprep.subr.mxu0 0.0
        %5234 = vmatpush1.xpose.msra.mxu0 0.0
        %5235 = vmatprep.subr.mxu0 0.0
        %5236 = vmatpush1.xpose.msra.mxu0 0.0
        %5237 = vmatprep.subr.mxu0 0.0
        %5238 = vmatpush1.xpose.msra.mxu0 0.0
        %5239 = vmatprep.subr.mxu0 0.0
        %5240 = vmatpush1.xpose.msra.mxu0 0.0
        %5241 = vmatprep.subr.mxu0 0.0
        %5242 = vmatpush1.xpose.msra.mxu0 0.0
        %5243 = vmatprep.subr.mxu0 0.0
        %5244 = vmatpush1.xpose.msra.mxu0 0.0
        %5245 = vmatprep.subr.mxu0 0.0
        %5246 = vmatpush1.xpose.msra.mxu0 0.0
        %5247 = vmatprep.subr.mxu0 0.0
        %5248 = vmatpush1.xpose.msra.mxu0 0.0
        %5249 = vmatprep.subr.mxu0 0.0
        %5250 = vmatpush1.xpose.msra.mxu0 0.0
        %5251 = vmatprep.subr.mxu0 0.0
        %5252 = vmatpush1.xpose.msra.mxu0 0.0
        %5253 = vmatprep.subr.mxu0 0.0
        %5254 = vmatpush1.xpose.msra.mxu0 0.0
        %5255 = vmatprep.subr.mxu0 0.0
        %5256 = vmatpush1.xpose.msra.mxu0 0.0
        %5257 = vmatprep.mubr.f32.mxu0 0.0
        %5258 = vmatmul.mubr.f32.gmra.mrb[0].mxu0 %v5185
        %v5259 = vpop.f32.mrb[0].mxu0
        %v5260 = vadd.f32 0.0, %v5259
        %v5261 = vpop.f32.mrb[0].mxu0
        %5262 = vmatprep.mubr.f32.mxu0 0.0
        %5263 = vmatmul.mubr.f32.gmra.mrb[0].mxu0 %v5187
        %v5264 = vpop.f32.mrb[0].mxu0
        %v5265 = vadd.f32 0.0, %v5264
        %v5266 = vpop.f32.mrb[0].mxu0
        %5267 = vdwg.mxu0
        %v5268 = vmul.f32 %v5260, 0.17677669
        %v5269 = vmul.f32 %v5265, 0.17677669
        %v5270 = vsel %vm1981, %v5268, -1000000.0
        %v5271 = vsel %vm1981, %v5269, -1000000.0
        %v5272 = vsel %vm932, %v5270, -inf
        %5273 = vmax.xlane.f32.xlu0 %v5272
        %v5274 = vpop.xlane.xlu0 %5273
        %v5275 = vsel %vm932, %v5271, -inf
        %5276 = vmax.xlane.f32.xlu0 %v5275
        %v5277 = vpop.xlane.xlu0 %5276
        %v5278 = vsub.f32 %v5270, %v5274
        %v5279 = vsub.f32 %v5271, %v5277
        %v5280 = vmul.f32 %v5278, 1.442695
        %v5281 = vpow.pop %v5280
        %v5282 = vmul.f32 %v5279, 1.442695
        %v5283 = vpow.pop %v5282
        %v5284 = vsel %vm932, %v5281, 0.0
        %5285 = vadd.xlane.f32.xlu0 %v5284
        %v5286 = vpop.xlane.xlu0 %5285
        %v5287 = vsel %vm932, %v5283, 0.0
        %5288 = vadd.xlane.f32.xlu0 %v5287
        %v5289 = vpop.xlane.xlu0 %5288
        %v5290 = vrcp.pop %v5286
        %v5291 = vrcp.pop %v5289
        %v5292 = vmul.f32 %v5281, %v5290
        %v5293 = vmul.f32 %v5283, %v5291
        %5296 = vrot.lane.b32.xlu0 %v3839, 96
        %v5297 = vpop.permute.xlu0 %5296
        %5298 = vrot.lane.b32.xlu0 %v3844, 96
        %v5299 = vpop.permute.xlu0 %5298
        %v5303 = vsel %vm932, %v5292, 0
        %v5306 = vsel %vm932, %v5293, 0
        %5308 = vmatprep.subr.mxu0 0.0
        %5309 = vmatpush1.msra.mxu0 %v5297
        %5310 = vmatprep.subr.mxu0 0.0
        %5311 = vmatpush1.msra.mxu0 %v5299
        %5312 = vmatprep.subr.mxu0 0.0
        %5313 = vmatpush1.msra.mxu0 0.0
        %5314 = vmatprep.subr.mxu0 0.0
        %5315 = vmatpush1.msra.mxu0 0.0
        %5316 = vmatprep.subr.mxu0 0.0
        %5317 = vmatpush1.msra.mxu0 0.0
        %5318 = vmatprep.subr.mxu0 0.0
        %5319 = vmatpush1.msra.mxu0 0.0
        %5320 = vmatprep.subr.mxu0 0.0
        %5321 = vmatpush1.msra.mxu0 0.0
        %5322 = vmatprep.subr.mxu0 0.0
        %5323 = vmatpush1.msra.mxu0 0.0
        %5324 = vmatprep.subr.mxu0 0.0
        %5325 = vmatpush1.msra.mxu0 0.0
        %5326 = vmatprep.subr.mxu0 0.0
        %5327 = vmatpush1.msra.mxu0 0.0
        %5328 = vmatprep.subr.mxu0 0.0
        %5329 = vmatpush1.msra.mxu0 0.0
        %5330 = vmatprep.subr.mxu0 0.0
        %5331 = vmatpush1.msra.mxu0 0.0
        %5332 = vmatprep.subr.mxu0 0.0
        %5333 = vmatpush1.msra.mxu0 0.0
        %5334 = vmatprep.subr.mxu0 0.0
        %5335 = vmatpush1.msra.mxu0 0.0
        %5336 = vmatprep.subr.mxu0 0.0
        %5337 = vmatpush1.msra.mxu0 0.0
        %5338 = vmatprep.subr.mxu0 0.0
        %5339 = vmatpush1.msra.mxu0 0.0
        %5340 = vmatprep.subr.mxu0 0.0
        %5341 = vmatpush1.msra.mxu0 0.0
        %5342 = vmatprep.subr.mxu0 0.0
        %5343 = vmatpush1.msra.mxu0 0.0
        %5344 = vmatprep.subr.mxu0 0.0
        %5345 = vmatpush1.msra.mxu0 0.0
        %5346 = vmatprep.subr.mxu0 0.0
        %5347 = vmatpush1.msra.mxu0 0.0
        %5348 = vmatprep.subr.mxu0 0.0
        %5349 = vmatpush1.msra.mxu0 0.0
        %5350 = vmatprep.subr.mxu0 0.0
        %5351 = vmatpush1.msra.mxu0 0.0
        %5352 = vmatprep.subr.mxu0 0.0
        %5353 = vmatpush1.msra.mxu0 0.0
        %5354 = vmatprep.subr.mxu0 0.0
        %5355 = vmatpush1.msra.mxu0 0.0
        %5356 = vmatprep.subr.mxu0 0.0
        %5357 = vmatpush1.msra.mxu0 0.0
        %5358 = vmatprep.subr.mxu0 0.0
        %5359 = vmatpush1.msra.mxu0 0.0
        %5360 = vmatprep.subr.mxu0 0.0
        %5361 = vmatpush1.msra.mxu0 0.0
        %5362 = vmatprep.subr.mxu0 0.0
        %5363 = vmatpush1.msra.mxu0 0.0
        %5364 = vmatprep.subr.mxu0 0.0
        %5365 = vmatpush1.msra.mxu0 0.0
        %5366 = vmatprep.subr.mxu0 0.0
        %5367 = vmatpush1.msra.mxu0 0.0
        %5368 = vmatprep.subr.mxu0 0.0
        %5369 = vmatpush1.msra.mxu0 0.0
        %5370 = vmatprep.subr.mxu0 0.0
        %5371 = vmatpush1.msra.mxu0 0.0
        %5372 = vmatprep.mubr.f32.mxu0 0.0
        %5373 = vmatmul.mubr.f32.gmra.mrb[0].mxu0 %v5303
        %v5374 = vpop.f32.mrb[0].mxu0
        %v5375 = vadd.f32 0.0, %v5374
        %v5376 = vpop.f32.mrb[0].mxu0
        %5377 = vmatprep.mubr.f32.mxu0 0.0
        %5378 = vmatmul.mubr.f32.gmra.mrb[0].mxu0 %v5306
        %v5379 = vpop.f32.mrb[0].mxu0
        %v5380 = vadd.f32 0.0, %v5379
        %v5381 = vpop.f32.mrb[0].mxu0
        %5382 = vdwg.mxu0
        %v5384 = vsel %vm840, %v5375, 0
        %v5387 = vsel %vm840, %v5380, 0
        %5389 = vmatprep.subr.mxu0 0.0
        %5390 = vmatpush1.msra.mxu0 %v3580
        %5391 = vmatprep.subr.mxu0 0.0
        %5392 = vmatpush1.msra.mxu0 %v3581
        %5393 = vmatprep.subr.mxu0 0.0
        %5394 = vmatpush1.msra.mxu0 %v3582
        %5395 = vmatprep.subr.mxu0 0.0
        %5396 = vmatpush1.msra.mxu0 %v3583
        %5397 = vmatprep.subr.mxu0 0.0
        %5398 = vmatpush1.msra.mxu0 0.0
        %5399 = vmatprep.subr.mxu0 0.0
        %5400 = vmatpush1.msra.mxu0 0.0
        %5401 = vmatprep.subr.mxu0 0.0
        %5402 = vmatpush1.msra.mxu0 0.0
        %5403 = vmatprep.subr.mxu0 0.0
        %5404 = vmatpush1.msra.mxu0 0.0
        %5405 = vmatprep.subr.mxu0 0.0
        %5406 = vmatpush1.msra.mxu0 0.0
        %5407 = vmatprep.subr.mxu0 0.0
        %5408 = vmatpush1.msra.mxu0 0.0
        %5409 = vmatprep.subr.mxu0 0.0
        %5410 = vmatpush1.msra.mxu0 0.0
        %5411 = vmatprep.subr.mxu0 0.0
        %5412 = vmatpush1.msra.mxu0 0.0
        %5413 = vmatprep.subr.mxu0 0.0
        %5414 = vmatpush1.msra.mxu0 0.0
        %5415 = vmatprep.subr.mxu0 0.0
        %5416 = vmatpush1.msra.mxu0 0.0
        %5417 = vmatprep.subr.mxu0 0.0
        %5418 = vmatpush1.msra.mxu0 0.0
        %5419 = vmatprep.subr.mxu0 0.0
        %5420 = vmatpush1.msra.mxu0 0.0
        %5421 = vmatprep.subr.mxu0 0.0
        %5422 = vmatpush1.msra.mxu0 0.0
        %5423 = vmatprep.subr.mxu0 0.0
        %5424 = vmatpush1.msra.mxu0 0.0
        %5425 = vmatprep.subr.mxu0 0.0
        %5426 = vmatpush1.msra.mxu0 0.0
        %5427 = vmatprep.subr.mxu0 0.0
        %5428 = vmatpush1.msra.mxu0 0.0
        %5429 = vmatprep.subr.mxu0 0.0
        %5430 = vmatpush1.msra.mxu0 0.0
        %5431 = vmatprep.subr.mxu0 0.0
        %5432 = vmatpush1.msra.mxu0 0.0
        %5433 = vmatprep.subr.mxu0 0.0
        %5434 = vmatpush1.msra.mxu0 0.0
        %5435 = vmatprep.subr.mxu0 0.0
        %5436 = vmatpush1.msra.mxu0 0.0
        %5437 = vmatprep.subr.mxu0 0.0
        %5438 = vmatpush1.msra.mxu0 0.0
        %5439 = vmatprep.subr.mxu0 0.0
        %5440 = vmatpush1.msra.mxu0 0.0
        %5441 = vmatprep.subr.mxu0 0.0
        %5442 = vmatpush1.msra.mxu0 0.0
        %5443 = vmatprep.subr.mxu0 0.0
        %5444 = vmatpush1.msra.mxu0 0.0
        %5445 = vmatprep.subr.mxu0 0.0
        %5446 = vmatpush1.msra.mxu0 0.0
        %5447 = vmatprep.subr.mxu0 0.0
        %5448 = vmatpush1.msra.mxu0 0.0
        %5449 = vmatprep.subr.mxu0 0.0
        %5450 = vmatpush1.msra.mxu0 0.0
        %5451 = vmatprep.subr.mxu0 0.0
        %5452 = vmatpush1.msra.mxu0 0.0
        %5453 = vmatprep.mubr.f32.mxu0 0.0
        %5454 = vmatmul.mubr.f32.gmra.mrb[0].mxu0 %v5384
        %v5455 = vpop.f32.mrb[0].mxu0
        %v5456 = vadd.f32 0.0, %v5455
        %v5457 = vpop.f32.mrb[0].mxu0
        %5458 = vmatprep.mubr.f32.mxu0 0.0
        %5459 = vmatmul.mubr.f32.gmra.mrb[0].mxu0 %v5387
        %v5460 = vpop.f32.mrb[0].mxu0
        %v5461 = vadd.f32 0.0, %v5460
        %v5462 = vpop.f32.mrb[0].mxu0
        %5463 = vdwg.mxu0
        %v5465 = vsel %vm840, %v5169, 0
        %v5468 = vsel %vm840, %v5174, 0
        %5470 = vmatprep.subr.mxu0 0.0
        %5471 = vmatpush1.msra.mxu0 %v3576
        %5472 = vmatprep.subr.mxu0 0.0
        %5473 = vmatpush1.msra.mxu0 %v3577
        %5474 = vmatprep.subr.mxu0 0.0
        %5475 = vmatpush1.msra.mxu0 %v3578
        %5476 = vmatprep.subr.mxu0 0.0
        %5477 = vmatpush1.msra.mxu0 %v3579
        %5478 = vmatprep.subr.mxu0 0.0
        %5479 = vmatpush1.msra.mxu0 0.0
        %5480 = vmatprep.subr.mxu0 0.0
        %5481 = vmatpush1.msra.mxu0 0.0
        %5482 = vmatprep.subr.mxu0 0.0
        %5483 = vmatpush1.msra.mxu0 0.0
        %5484 = vmatprep.subr.mxu0 0.0
        %5485 = vmatpush1.msra.mxu0 0.0
        %5486 = vmatprep.subr.mxu0 0.0
        %5487 = vmatpush1.msra.mxu0 0.0
        %5488 = vmatprep.subr.mxu0 0.0
        %5489 = vmatpush1.msra.mxu0 0.0
        %5490 = vmatprep.subr.mxu0 0.0
        %5491 = vmatpush1.msra.mxu0 0.0
        %5492 = vmatprep.subr.mxu0 0.0
        %5493 = vmatpush1.msra.mxu0 0.0
        %5494 = vmatprep.subr.mxu0 0.0
        %5495 = vmatpush1.msra.mxu0 0.0
        %5496 = vmatprep.subr.mxu0 0.0
        %5497 = vmatpush1.msra.mxu0 0.0
        %5498 = vmatprep.subr.mxu0 0.0
        %5499 = vmatpush1.msra.mxu0 0.0
        %5500 = vmatprep.subr.mxu0 0.0
        %5501 = vmatpush1.msra.mxu0 0.0
        %5502 = vmatprep.subr.mxu0 0.0
        %5503 = vmatpush1.msra.mxu0 0.0
        %5504 = vmatprep.subr.mxu0 0.0
        %5505 = vmatpush1.msra.mxu0 0.0
        %5506 = vmatprep.subr.mxu0 0.0
        %5507 = vmatpush1.msra.mxu0 0.0
        %5508 = vmatprep.subr.mxu0 0.0
        %5509 = vmatpush1.msra.mxu0 0.0
        %5510 = vmatprep.subr.mxu0 0.0
        %5511 = vmatpush1.msra.mxu0 0.0
        %5512 = vmatprep.subr.mxu0 0.0
        %5513 = vmatpush1.msra.mxu0 0.0
        %5514 = vmatprep.subr.mxu0 0.0
        %5515 = vmatpush1.msra.mxu0 0.0
        %5516 = vmatprep.subr.mxu0 0.0
        %5517 = vmatpush1.msra.mxu0 0.0
        %5518 = vmatprep.subr.mxu0 0.0
        %5519 = vmatpush1.msra.mxu0 0.0
        %5520 = vmatprep.subr.mxu0 0.0
        %5521 = vmatpush1.msra.mxu0 0.0
        %5522 = vmatprep.subr.mxu0 0.0
        %5523 = vmatpush1.msra.mxu0 0.0
        %5524 = vmatprep.subr.mxu0 0.0
        %5525 = vmatpush1.msra.mxu0 0.0
        %5526 = vmatprep.subr.mxu0 0.0
        %5527 = vmatpush1.msra.mxu0 0.0
        %5528 = vmatprep.subr.mxu0 0.0
        %5529 = vmatpush1.msra.mxu0 0.0
        %5530 = vmatprep.subr.mxu0 0.0
        %5531 = vmatpush1.msra.mxu0 0.0
        %5532 = vmatprep.subr.mxu0 0.0
        %5533 = vmatpush1.msra.mxu0 0.0
        %5534 = vmatprep.mubr.f32.mxu0 0.0
        %5535 = vmatmul.mubr.f32.gmra.mrb[0].mxu0 %v5465
        %v5536 = vpop.f32.mrb[0].mxu0
        %v5537 = vadd.f32 %v5456, %v5536
        %v5538 = vpop.f32.mrb[0].mxu0
        %5539 = vmatprep.mubr.f32.mxu0 0.0
        %5540 = vmatmul.mubr.f32.gmra.mrb[0].mxu0 %v5468
        %v5541 = vpop.f32.mrb[0].mxu0
        %v5542 = vadd.f32 %v5461, %v5541
        %v5543 = vpop.f32.mrb[0].mxu0
        %5544 = vdwg.mxu0
        %5545 = vrot.lane.b32.xlu0 %v3669, 64
        %v5546 = vpop.permute.xlu0 %5545
        %5547 = vrot.lane.b32.xlu0 %v3674, 64
        %v5548 = vpop.permute.xlu0 %5547
        %5549 = vrot.lane.b32.xlu0 %v3754, 64
        %v5550 = vpop.permute.xlu0 %5549
        %5551 = vrot.lane.b32.xlu0 %v3759, 64
        %v5552 = vpop.permute.xlu0 %5551
        %v5553 = vsel %vm840, %v5546, 0
        %v5555 = vsel %vm840, %v5548, 0
        %v5557 = vsel %vm840, %v5550, 0
        %v5559 = vsel %vm840, %v5552, 0
        %5561 = vmatprep.subr.mxu0 0.0
        %5562 = vmatpush1.xpose.msra.mxu0 %v5557
        %5563 = vmatprep.subr.mxu0 0.0
        %5564 = vmatpush1.xpose.msra.mxu0 %v5559
        %5565 = vmatprep.subr.mxu0 0.0
        %5566 = vmatpush1.xpose.msra.mxu0 0.0
        %5567 = vmatprep.subr.mxu0 0.0
        %5568 = vmatpush1.xpose.msra.mxu0 0.0
        %5569 = vmatprep.subr.mxu0 0.0
        %5570 = vmatpush1.xpose.msra.mxu0 0.0
        %5571 = vmatprep.subr.mxu0 0.0
        %5572 = vmatpush1.xpose.msra.mxu0 0.0
        %5573 = vmatprep.subr.mxu0 0.0
        %5574 = vmatpush1.xpose.msra.mxu0 0.0
        %5575 = vmatprep.subr.mxu0 0.0
        %5576 = vmatpush1.xpose.msra.mxu0 0.0
        %5577 = vmatprep.subr.mxu0 0.0
        %5578 = vmatpush1.xpose.msra.mxu0 0.0
        %5579 = vmatprep.subr.mxu0 0.0
        %5580 = vmatpush1.xpose.msra.mxu0 0.0
        %5581 = vmatprep.subr.mxu0 0.0
        %5582 = vmatpush1.xpose.msra.mxu0 0.0
        %5583 = vmatprep.subr.mxu0 0.0
        %5584 = vmatpush1.xpose.msra.mxu0 0.0
        %5585 = vmatprep.subr.mxu0 0.0
        %5586 = vmatpush1.xpose.msra.mxu0 0.0
        %5587 = vmatprep.subr.mxu0 0.0
        %5588 = vmatpush1.xpose.msra.mxu0 0.0
        %5589 = vmatprep.subr.mxu0 0.0
        %5590 = vmatpush1.xpose.msra.mxu0 0.0
        %5591 = vmatprep.subr.mxu0 0.0
        %5592 = vmatpush1.xpose.msra.mxu0 0.0
        %5593 = vmatprep.subr.mxu0 0.0
        %5594 = vmatpush1.xpose.msra.mxu0 0.0
        %5595 = vmatprep.subr.mxu0 0.0
        %5596 = vmatpush1.xpose.msra.mxu0 0.0
        %5597 = vmatprep.subr.mxu0 0.0
        %5598 = vmatpush1.xpose.msra.mxu0 0.0
        %5599 = vmatprep.subr.mxu0 0.0
        %5600 = vmatpush1.xpose.msra.mxu0 0.0
        %5601 = vmatprep.subr.mxu0 0.0
        %5602 = vmatpush1.xpose.msra.mxu0 0.0
        %5603 = vmatprep.subr.mxu0 0.0
        %5604 = vmatpush1.xpose.msra.mxu0 0.0
        %5605 = vmatprep.subr.mxu0 0.0
        %5606 = vmatpush1.xpose.msra.mxu0 0.0
        %5607 = vmatprep.subr.mxu0 0.0
        %5608 = vmatpush1.xpose.msra.mxu0 0.0
        %5609 = vmatprep.subr.mxu0 0.0
        %5610 = vmatpush1.xpose.msra.mxu0 0.0
        %5611 = vmatprep.subr.mxu0 0.0
        %5612 = vmatpush1.xpose.msra.mxu0 0.0
        %5613 = vmatprep.subr.mxu0 0.0
        %5614 = vmatpush1.xpose.msra.mxu0 0.0
        %5615 = vmatprep.subr.mxu0 0.0
        %5616 = vmatpush1.xpose.msra.mxu0 0.0
        %5617 = vmatprep.subr.mxu0 0.0
        %5618 = vmatpush1.xpose.msra.mxu0 0.0
        %5619 = vmatprep.subr.mxu0 0.0
        %5620 = vmatpush1.xpose.msra.mxu0 0.0
        %5621 = vmatprep.subr.mxu0 0.0
        %5622 = vmatpush1.xpose.msra.mxu0 0.0
        %5623 = vmatprep.subr.mxu0 0.0
        %5624 = vmatpush1.xpose.msra.mxu0 0.0
        %5625 = vmatprep.mubr.f32.mxu0 0.0
        %5626 = vmatmul.mubr.f32.gmra.mrb[0].mxu0 %v5553
        %v5627 = vpop.f32.mrb[0].mxu0
        %v5628 = vadd.f32 0.0, %v5627
        %v5629 = vpop.f32.mrb[0].mxu0
        %5630 = vmatprep.mubr.f32.mxu0 0.0
        %5631 = vmatmul.mubr.f32.gmra.mrb[0].mxu0 %v5555
        %v5632 = vpop.f32.mrb[0].mxu0
        %v5633 = vadd.f32 0.0, %v5632
        %v5634 = vpop.f32.mrb[0].mxu0
        %5635 = vdwg.mxu0
        %v5636 = vmul.f32 %v5628, 0.17677669
        %v5637 = vmul.f32 %v5633, 0.17677669
        %v5638 = vsel %vm1981, %v5636, -1000000.0
        %v5639 = vsel %vm1981, %v5637, -1000000.0
        %v5640 = vsel %vm932, %v5638, -inf
        %5641 = vmax.xlane.f32.xlu0 %v5640
        %v5642 = vpop.xlane.xlu0 %5641
        %v5643 = vsel %vm932, %v5639, -inf
        %5644 = vmax.xlane.f32.xlu0 %v5643
        %v5645 = vpop.xlane.xlu0 %5644
        %v5646 = vsub.f32 %v5638, %v5642
        %v5647 = vsub.f32 %v5639, %v5645
        %v5648 = vmul.f32 %v5646, 1.442695
        %v5649 = vpow.pop %v5648
        %v5650 = vmul.f32 %v5647, 1.442695
        %v5651 = vpow.pop %v5650
        %v5652 = vsel %vm932, %v5649, 0.0
        %5653 = vadd.xlane.f32.xlu0 %v5652
        %v5654 = vpop.xlane.xlu0 %5653
        %v5655 = vsel %vm932, %v5651, 0.0
        %5656 = vadd.xlane.f32.xlu0 %v5655
        %v5657 = vpop.xlane.xlu0 %5656
        %v5658 = vrcp.pop %v5654
        %v5659 = vrcp.pop %v5657
        %v5660 = vmul.f32 %v5649, %v5658
        %v5661 = vmul.f32 %v5651, %v5659
        %5662 = vrot.lane.b32.xlu0 %v3839, 64
        %v5663 = vpop.permute.xlu0 %5662
        %5664 = vrot.lane.b32.xlu0 %v3844, 64
        %v5665 = vpop.permute.xlu0 %5664
        %v5669 = vsel %vm932, %v5660, 0
        %v5672 = vsel %vm932, %v5661, 0
        %5674 = vmatprep.subr.mxu0 0.0
        %5675 = vmatpush1.msra.mxu0 %v5663
        %5676 = vmatprep.subr.mxu0 0.0
        %5677 = vmatpush1.msra.mxu0 %v5665
        %5678 = vmatprep.subr.mxu0 0.0
        %5679 = vmatpush1.msra.mxu0 0.0
        %5680 = vmatprep.subr.mxu0 0.0
        %5681 = vmatpush1.msra.mxu0 0.0
        %5682 = vmatprep.subr.mxu0 0.0
        %5683 = vmatpush1.msra.mxu0 0.0
        %5684 = vmatprep.subr.mxu0 0.0
        %5685 = vmatpush1.msra.mxu0 0.0
        %5686 = vmatprep.subr.mxu0 0.0
        %5687 = vmatpush1.msra.mxu0 0.0
        %5688 = vmatprep.subr.mxu0 0.0
        %5689 = vmatpush1.msra.mxu0 0.0
        %5690 = vmatprep.subr.mxu0 0.0
        %5691 = vmatpush1.msra.mxu0 0.0
        %5692 = vmatprep.subr.mxu0 0.0
        %5693 = vmatpush1.msra.mxu0 0.0
        %5694 = vmatprep.subr.mxu0 0.0
        %5695 = vmatpush1.msra.mxu0 0.0
        %5696 = vmatprep.subr.mxu0 0.0
        %5697 = vmatpush1.msra.mxu0 0.0
        %5698 = vmatprep.subr.mxu0 0.0
        %5699 = vmatpush1.msra.mxu0 0.0
        %5700 = vmatprep.subr.mxu0 0.0
        %5701 = vmatpush1.msra.mxu0 0.0
        %5702 = vmatprep.subr.mxu0 0.0
        %5703 = vmatpush1.msra.mxu0 0.0
        %5704 = vmatprep.subr.mxu0 0.0
        %5705 = vmatpush1.msra.mxu0 0.0
        %5706 = vmatprep.subr.mxu0 0.0
        %5707 = vmatpush1.msra.mxu0 0.0
        %5708 = vmatprep.subr.mxu0 0.0
        %5709 = vmatpush1.msra.mxu0 0.0
        %5710 = vmatprep.subr.mxu0 0.0
        %5711 = vmatpush1.msra.mxu0 0.0
        %5712 = vmatprep.subr.mxu0 0.0
        %5713 = vmatpush1.msra.mxu0 0.0
        %5714 = vmatprep.subr.mxu0 0.0
        %5715 = vmatpush1.msra.mxu0 0.0
        %5716 = vmatprep.subr.mxu0 0.0
        %5717 = vmatpush1.msra.mxu0 0.0
        %5718 = vmatprep.subr.mxu0 0.0
        %5719 = vmatpush1.msra.mxu0 0.0
        %5720 = vmatprep.subr.mxu0 0.0
        %5721 = vmatpush1.msra.mxu0 0.0
        %5722 = vmatprep.subr.mxu0 0.0
        %5723 = vmatpush1.msra.mxu0 0.0
        %5724 = vmatprep.subr.mxu0 0.0
        %5725 = vmatpush1.msra.mxu0 0.0
        %5726 = vmatprep.subr.mxu0 0.0
        %5727 = vmatpush1.msra.mxu0 0.0
        %5728 = vmatprep.subr.mxu0 0.0
        %5729 = vmatpush1.msra.mxu0 0.0
        %5730 = vmatprep.subr.mxu0 0.0
        %5731 = vmatpush1.msra.mxu0 0.0
        %5732 = vmatprep.subr.mxu0 0.0
        %5733 = vmatpush1.msra.mxu0 0.0
        %5734 = vmatprep.subr.mxu0 0.0
        %5735 = vmatpush1.msra.mxu0 0.0
        %5736 = vmatprep.subr.mxu0 0.0
        %5737 = vmatpush1.msra.mxu0 0.0
        %5738 = vmatprep.mubr.f32.mxu0 0.0
        %5739 = vmatmul.mubr.f32.gmra.mrb[0].mxu0 %v5669
        %v5740 = vpop.f32.mrb[0].mxu0
        %v5741 = vadd.f32 0.0, %v5740
        %v5742 = vpop.f32.mrb[0].mxu0
        %5743 = vmatprep.mubr.f32.mxu0 0.0
        %5744 = vmatmul.mubr.f32.gmra.mrb[0].mxu0 %v5672
        %v5745 = vpop.f32.mrb[0].mxu0
        %v5746 = vadd.f32 0.0, %v5745
        %v5747 = vpop.f32.mrb[0].mxu0
        %5748 = vdwg.mxu0
        %v5750 = vsel %vm840, %v5741, 0
        %v5753 = vsel %vm840, %v5746, 0
        %5755 = vmatprep.subr.mxu0 0.0
        %5756 = vmatpush1.msra.mxu0 %v3584
        %5757 = vmatprep.subr.mxu0 0.0
        %5758 = vmatpush1.msra.mxu0 %v3585
        %5759 = vmatprep.subr.mxu0 0.0
        %5760 = vmatpush1.msra.mxu0 %v3586
        %5761 = vmatprep.subr.mxu0 0.0
        %5762 = vmatpush1.msra.mxu0 %v3587
        %5763 = vmatprep.subr.mxu0 0.0
        %5764 = vmatpush1.msra.mxu0 0.0
        %5765 = vmatprep.subr.mxu0 0.0
        %5766 = vmatpush1.msra.mxu0 0.0
        %5767 = vmatprep.subr.mxu0 0.0
        %5768 = vmatpush1.msra.mxu0 0.0
        %5769 = vmatprep.subr.mxu0 0.0
        %5770 = vmatpush1.msra.mxu0 0.0
        %5771 = vmatprep.subr.mxu0 0.0
        %5772 = vmatpush1.msra.mxu0 0.0
        %5773 = vmatprep.subr.mxu0 0.0
        %5774 = vmatpush1.msra.mxu0 0.0
        %5775 = vmatprep.subr.mxu0 0.0
        %5776 = vmatpush1.msra.mxu0 0.0
        %5777 = vmatprep.subr.mxu0 0.0
        %5778 = vmatpush1.msra.mxu0 0.0
        %5779 = vmatprep.subr.mxu0 0.0
        %5780 = vmatpush1.msra.mxu0 0.0
        %5781 = vmatprep.subr.mxu0 0.0
        %5782 = vmatpush1.msra.mxu0 0.0
        %5783 = vmatprep.subr.mxu0 0.0
        %5784 = vmatpush1.msra.mxu0 0.0
        %5785 = vmatprep.subr.mxu0 0.0
        %5786 = vmatpush1.msra.mxu0 0.0
        %5787 = vmatprep.subr.mxu0 0.0
        %5788 = vmatpush1.msra.mxu0 0.0
        %5789 = vmatprep.subr.mxu0 0.0
        %5790 = vmatpush1.msra.mxu0 0.0
        %5791 = vmatprep.subr.mxu0 0.0
        %5792 = vmatpush1.msra.mxu0 0.0
        %5793 = vmatprep.subr.mxu0 0.0
        %5794 = vmatpush1.msra.mxu0 0.0
        %5795 = vmatprep.subr.mxu0 0.0
        %5796 = vmatpush1.msra.mxu0 0.0
        %5797 = vmatprep.subr.mxu0 0.0
        %5798 = vmatpush1.msra.mxu0 0.0
        %5799 = vmatprep.subr.mxu0 0.0
        %5800 = vmatpush1.msra.mxu0 0.0
        %5801 = vmatprep.subr.mxu0 0.0
        %5802 = vmatpush1.msra.mxu0 0.0
        %5803 = vmatprep.subr.mxu0 0.0
        %5804 = vmatpush1.msra.mxu0 0.0
        %5805 = vmatprep.subr.mxu0 0.0
        %5806 = vmatpush1.msra.mxu0 0.0
        %5807 = vmatprep.subr.mxu0 0.0
        %5808 = vmatpush1.msra.mxu0 0.0
        %5809 = vmatprep.subr.mxu0 0.0
        %5810 = vmatpush1.msra.mxu0 0.0
        %5811 = vmatprep.subr.mxu0 0.0
        %5812 = vmatpush1.msra.mxu0 0.0
        %5813 = vmatprep.subr.mxu0 0.0
        %5814 = vmatpush1.msra.mxu0 0.0
        %5815 = vmatprep.subr.mxu0 0.0
        %5816 = vmatpush1.msra.mxu0 0.0
        %5817 = vmatprep.subr.mxu0 0.0
        %5818 = vmatpush1.msra.mxu0 0.0
        %5819 = vmatprep.mubr.f32.mxu0 0.0
        %5820 = vmatmul.mubr.f32.gmra.mrb[0].mxu0 %v5750
        %v5821 = vpop.f32.mrb[0].mxu0
        %v5822 = vadd.f32 0.0, %v5821
        %v5823 = vpop.f32.mrb[0].mxu0
        %5824 = vmatprep.mubr.f32.mxu0 0.0
        %5825 = vmatmul.mubr.f32.gmra.mrb[0].mxu0 %v5753
        %v5826 = vpop.f32.mrb[0].mxu0
        %v5827 = vadd.f32 0.0, %v5826
        %v5828 = vpop.f32.mrb[0].mxu0
        %5829 = vdwg.mxu0
        %v5830 = vadd.f32 %v5537, %v5822
        %v5831 = vadd.f32 %v5542, %v5827
        %5832 = vrot.lane.b32.xlu0 %v3669, 32
        %v5833 = vpop.permute.xlu0 %5832
        %5834 = vrot.lane.b32.xlu0 %v3674, 32
        %v5835 = vpop.permute.xlu0 %5834
        %5836 = vrot.lane.b32.xlu0 %v3754, 32
        %v5837 = vpop.permute.xlu0 %5836
        %5838 = vrot.lane.b32.xlu0 %v3759, 32
        %v5839 = vpop.permute.xlu0 %5838
        %v5840 = vsel %vm840, %v5833, 0
        %v5842 = vsel %vm840, %v5835, 0
        %v5844 = vsel %vm840, %v5837, 0
        %v5846 = vsel %vm840, %v5839, 0
        %5848 = vmatprep.subr.mxu0 0.0
        %5849 = vmatpush1.xpose.msra.mxu0 %v5844
        %5850 = vmatprep.subr.mxu0 0.0
        %5851 = vmatpush1.xpose.msra.mxu0 %v5846
        %5852 = vmatprep.subr.mxu0 0.0
        %5853 = vmatpush1.xpose.msra.mxu0 0.0
        %5854 = vmatprep.subr.mxu0 0.0
        %5855 = vmatpush1.xpose.msra.mxu0 0.0
        %5856 = vmatprep.subr.mxu0 0.0
        %5857 = vmatpush1.xpose.msra.mxu0 0.0
        %5858 = vmatprep.subr.mxu0 0.0
        %5859 = vmatpush1.xpose.msra.mxu0 0.0
        %5860 = vmatprep.subr.mxu0 0.0
        %5861 = vmatpush1.xpose.msra.mxu0 0.0
        %5862 = vmatprep.subr.mxu0 0.0
        %5863 = vmatpush1.xpose.msra.mxu0 0.0
        %5864 = vmatprep.subr.mxu0 0.0
        %5865 = vmatpush1.xpose.msra.mxu0 0.0
        %5866 = vmatprep.subr.mxu0 0.0
        %5867 = vmatpush1.xpose.msra.mxu0 0.0
        %5868 = vmatprep.subr.mxu0 0.0
        %5869 = vmatpush1.xpose.msra.mxu0 0.0
        %5870 = vmatprep.subr.mxu0 0.0
        %5871 = vmatpush1.xpose.msra.mxu0 0.0
        %5872 = vmatprep.subr.mxu0 0.0
        %5873 = vmatpush1.xpose.msra.mxu0 0.0
        %5874 = vmatprep.subr.mxu0 0.0
        %5875 = vmatpush1.xpose.msra.mxu0 0.0
        %5876 = vmatprep.subr.mxu0 0.0
        %5877 = vmatpush1.xpose.msra.mxu0 0.0
        %5878 = vmatprep.subr.mxu0 0.0
        %5879 = vmatpush1.xpose.msra.mxu0 0.0
        %5880 = vmatprep.subr.mxu0 0.0
        %5881 = vmatpush1.xpose.msra.mxu0 0.0
        %5882 = vmatprep.subr.mxu0 0.0
        %5883 = vmatpush1.xpose.msra.mxu0 0.0
        %5884 = vmatprep.subr.mxu0 0.0
        %5885 = vmatpush1.xpose.msra.mxu0 0.0
        %5886 = vmatprep.subr.mxu0 0.0
        %5887 = vmatpush1.xpose.msra.mxu0 0.0
        %5888 = vmatprep.subr.mxu0 0.0
        %5889 = vmatpush1.xpose.msra.mxu0 0.0
        %5890 = vmatprep.subr.mxu0 0.0
        %5891 = vmatpush1.xpose.msra.mxu0 0.0
        %5892 = vmatprep.subr.mxu0 0.0
        %5893 = vmatpush1.xpose.msra.mxu0 0.0
        %5894 = vmatprep.subr.mxu0 0.0
        %5895 = vmatpush1.xpose.msra.mxu0 0.0
        %5896 = vmatprep.subr.mxu0 0.0
        %5897 = vmatpush1.xpose.msra.mxu0 0.0
        %5898 = vmatprep.subr.mxu0 0.0
        %5899 = vmatpush1.xpose.msra.mxu0 0.0
        %5900 = vmatprep.subr.mxu0 0.0
        %5901 = vmatpush1.xpose.msra.mxu0 0.0
        %5902 = vmatprep.subr.mxu0 0.0
        %5903 = vmatpush1.xpose.msra.mxu0 0.0
        %5904 = vmatprep.subr.mxu0 0.0
        %5905 = vmatpush1.xpose.msra.mxu0 0.0
        %5906 = vmatprep.subr.mxu0 0.0
        %5907 = vmatpush1.xpose.msra.mxu0 0.0
        %5908 = vmatprep.subr.mxu0 0.0
        %5909 = vmatpush1.xpose.msra.mxu0 0.0
        %5910 = vmatprep.subr.mxu0 0.0
        %5911 = vmatpush1.xpose.msra.mxu0 0.0
        %5912 = vmatprep.mubr.f32.mxu0 0.0
        %5913 = vmatmul.mubr.f32.gmra.mrb[0].mxu0 %v5840
        %v5914 = vpop.f32.mrb[0].mxu0
        %v5915 = vadd.f32 0.0, %v5914
        %v5916 = vpop.f32.mrb[0].mxu0
        %5917 = vmatprep.mubr.f32.mxu0 0.0
        %5918 = vmatmul.mubr.f32.gmra.mrb[0].mxu0 %v5842
        %v5919 = vpop.f32.mrb[0].mxu0
        %v5920 = vadd.f32 0.0, %v5919
        %v5921 = vpop.f32.mrb[0].mxu0
        %5922 = vdwg.mxu0
        %v5923 = vmul.f32 %v5915, 0.17677669
        %v5924 = vmul.f32 %v5920, 0.17677669
        %v5925 = vsel %vm1981, %v5923, -1000000.0
        %v5926 = vsel %vm1981, %v5924, -1000000.0
        %v5927 = vsel %vm932, %v5925, -inf
        %5928 = vmax.xlane.f32.xlu0 %v5927
        %v5929 = vpop.xlane.xlu0 %5928
        %v5930 = vsel %vm932, %v5926, -inf
        %5931 = vmax.xlane.f32.xlu0 %v5930
        %v5932 = vpop.xlane.xlu0 %5931
        %v5933 = vsub.f32 %v5925, %v5929
        %v5934 = vsub.f32 %v5926, %v5932
        %v5935 = vmul.f32 %v5933, 1.442695
        %v5936 = vpow.pop %v5935
        %v5937 = vmul.f32 %v5934, 1.442695
        %v5938 = vpow.pop %v5937
        %v5939 = vsel %vm932, %v5936, 0.0
        %5940 = vadd.xlane.f32.xlu0 %v5939
        %v5941 = vpop.xlane.xlu0 %5940
        %v5942 = vsel %vm932, %v5938, 0.0
        %5943 = vadd.xlane.f32.xlu0 %v5942
        %v5944 = vpop.xlane.xlu0 %5943
        %v5945 = vrcp.pop %v5941
        %v5946 = vrcp.pop %v5944
        %v5947 = vmul.f32 %v5936, %v5945
        %v5948 = vmul.f32 %v5938, %v5946
        %5949 = vrot.lane.b32.xlu0 %v3839, 32
        %v5950 = vpop.permute.xlu0 %5949
        %5951 = vrot.lane.b32.xlu0 %v3844, 32
        %v5952 = vpop.permute.xlu0 %5951
        %v5956 = vsel %vm932, %v5947, 0
        %v5959 = vsel %vm932, %v5948, 0
        %5961 = vmatprep.subr.mxu0 0.0
        %5962 = vmatpush1.msra.mxu0 %v5950
        %5963 = vmatprep.subr.mxu0 0.0
        %5964 = vmatpush1.msra.mxu0 %v5952
        %5965 = vmatprep.subr.mxu0 0.0
        %5966 = vmatpush1.msra.mxu0 0.0
        %5967 = vmatprep.subr.mxu0 0.0
        %5968 = vmatpush1.msra.mxu0 0.0
        %5969 = vmatprep.subr.mxu0 0.0
        %5970 = vmatpush1.msra.mxu0 0.0
        %5971 = vmatprep.subr.mxu0 0.0
        %5972 = vmatpush1.msra.mxu0 0.0
        %5973 = vmatprep.subr.mxu0 0.0
        %5974 = vmatpush1.msra.mxu0 0.0
        %5975 = vmatprep.subr.mxu0 0.0
        %5976 = vmatpush1.msra.mxu0 0.0
        %5977 = vmatprep.subr.mxu0 0.0
        %5978 = vmatpush1.msra.mxu0 0.0
        %5979 = vmatprep.subr.mxu0 0.0
        %5980 = vmatpush1.msra.mxu0 0.0
        %5981 = vmatprep.subr.mxu0 0.0
        %5982 = vmatpush1.msra.mxu0 0.0
        %5983 = vmatprep.subr.mxu0 0.0
        %5984 = vmatpush1.msra.mxu0 0.0
        %5985 = vmatprep.subr.mxu0 0.0
        %5986 = vmatpush1.msra.mxu0 0.0
        %5987 = vmatprep.subr.mxu0 0.0
        %5988 = vmatpush1.msra.mxu0 0.0
        %5989 = vmatprep.subr.mxu0 0.0
        %5990 = vmatpush1.msra.mxu0 0.0
        %5991 = vmatprep.subr.mxu0 0.0
        %5992 = vmatpush1.msra.mxu0 0.0
        %5993 = vmatprep.subr.mxu0 0.0
        %5994 = vmatpush1.msra.mxu0 0.0
        %5995 = vmatprep.subr.mxu0 0.0
        %5996 = vmatpush1.msra.mxu0 0.0
        %5997 = vmatprep.subr.mxu0 0.0
        %5998 = vmatpush1.msra.mxu0 0.0
        %5999 = vmatprep.subr.mxu0 0.0
        %6000 = vmatpush1.msra.mxu0 0.0
        %6001 = vmatprep.subr.mxu0 0.0
        %6002 = vmatpush1.msra.mxu0 0.0
        %6003 = vmatprep.subr.mxu0 0.0
        %6004 = vmatpush1.msra.mxu0 0.0
        %6005 = vmatprep.subr.mxu0 0.0
        %6006 = vmatpush1.msra.mxu0 0.0
        %6007 = vmatprep.subr.mxu0 0.0
        %6008 = vmatpush1.msra.mxu0 0.0
        %6009 = vmatprep.subr.mxu0 0.0
        %6010 = vmatpush1.msra.mxu0 0.0
        %6011 = vmatprep.subr.mxu0 0.0
        %6012 = vmatpush1.msra.mxu0 0.0
        %6013 = vmatprep.subr.mxu0 0.0
        %6014 = vmatpush1.msra.mxu0 0.0
        %6015 = vmatprep.subr.mxu0 0.0
        %6016 = vmatpush1.msra.mxu0 0.0
        %6017 = vmatprep.subr.mxu0 0.0
        %6018 = vmatpush1.msra.mxu0 0.0
        %6019 = vmatprep.subr.mxu0 0.0
        %6020 = vmatpush1.msra.mxu0 0.0
        %6021 = vmatprep.subr.mxu0 0.0
        %6022 = vmatpush1.msra.mxu0 0.0
        %6023 = vmatprep.subr.mxu0 0.0
        %6024 = vmatpush1.msra.mxu0 0.0
        %6025 = vmatprep.mubr.f32.mxu0 0.0
        %6026 = vmatmul.mubr.f32.gmra.mrb[0].mxu0 %v5956
        %v6027 = vpop.f32.mrb[0].mxu0
        %v6028 = vadd.f32 0.0, %v6027
        %v6029 = vpop.f32.mrb[0].mxu0
        %6030 = vmatprep.mubr.f32.mxu0 0.0
        %6031 = vmatmul.mubr.f32.gmra.mrb[0].mxu0 %v5959
        %v6032 = vpop.f32.mrb[0].mxu0
        %v6033 = vadd.f32 0.0, %v6032
        %v6034 = vpop.f32.mrb[0].mxu0
        %6035 = vdwg.mxu0
        %v6037 = vsel %vm840, %v6028, 0
        %v6040 = vsel %vm840, %v6033, 0
        %6042 = vmatprep.subr.mxu0 0.0
        %6043 = vmatpush1.msra.mxu0 %v3588
        %6044 = vmatprep.subr.mxu0 0.0
        %6045 = vmatpush1.msra.mxu0 %v3589
        %6046 = vmatprep.subr.mxu0 0.0
        %6047 = vmatpush1.msra.mxu0 %v3590
        %6048 = vmatprep.subr.mxu0 0.0
        %6049 = vmatpush1.msra.mxu0 %v3591
        %6050 = vmatprep.subr.mxu0 0.0
        %6051 = vmatpush1.msra.mxu0 0.0
        %6052 = vmatprep.subr.mxu0 0.0
        %6053 = vmatpush1.msra.mxu0 0.0
        %6054 = vmatprep.subr.mxu0 0.0
        %6055 = vmatpush1.msra.mxu0 0.0
        %6056 = vmatprep.subr.mxu0 0.0
        %6057 = vmatpush1.msra.mxu0 0.0
        %6058 = vmatprep.subr.mxu0 0.0
        %6059 = vmatpush1.msra.mxu0 0.0
        %6060 = vmatprep.subr.mxu0 0.0
        %6061 = vmatpush1.msra.mxu0 0.0
        %6062 = vmatprep.subr.mxu0 0.0
        %6063 = vmatpush1.msra.mxu0 0.0
        %6064 = vmatprep.subr.mxu0 0.0
        %6065 = vmatpush1.msra.mxu0 0.0
        %6066 = vmatprep.subr.mxu0 0.0
        %6067 = vmatpush1.msra.mxu0 0.0
        %6068 = vmatprep.subr.mxu0 0.0
        %6069 = vmatpush1.msra.mxu0 0.0
        %6070 = vmatprep.subr.mxu0 0.0
        %6071 = vmatpush1.msra.mxu0 0.0
        %6072 = vmatprep.subr.mxu0 0.0
        %6073 = vmatpush1.msra.mxu0 0.0
        %6074 = vmatprep.subr.mxu0 0.0
        %6075 = vmatpush1.msra.mxu0 0.0
        %6076 = vmatprep.subr.mxu0 0.0
        %6077 = vmatpush1.msra.mxu0 0.0
        %6078 = vmatprep.subr.mxu0 0.0
        %6079 = vmatpush1.msra.mxu0 0.0
        %6080 = vmatprep.subr.mxu0 0.0
        %6081 = vmatpush1.msra.mxu0 0.0
        %6082 = vmatprep.subr.mxu0 0.0
        %6083 = vmatpush1.msra.mxu0 0.0
        %6084 = vmatprep.subr.mxu0 0.0
        %6085 = vmatpush1.msra.mxu0 0.0
        %6086 = vmatprep.subr.mxu0 0.0
        %6087 = vmatpush1.msra.mxu0 0.0
        %6088 = vmatprep.subr.mxu0 0.0
        %6089 = vmatpush1.msra.mxu0 0.0
        %6090 = vmatprep.subr.mxu0 0.0
        %6091 = vmatpush1.msra.mxu0 0.0
        %6092 = vmatprep.subr.mxu0 0.0
        %6093 = vmatpush1.msra.mxu0 0.0
        %6094 = vmatprep.subr.mxu0 0.0
        %6095 = vmatpush1.msra.mxu0 0.0
        %6096 = vmatprep.subr.mxu0 0.0
        %6097 = vmatpush1.msra.mxu0 0.0
        %6098 = vmatprep.subr.mxu0 0.0
        %6099 = vmatpush1.msra.mxu0 0.0
        %6100 = vmatprep.subr.mxu0 0.0
        %6101 = vmatpush1.msra.mxu0 0.0
        %6102 = vmatprep.subr.mxu0 0.0
        %6103 = vmatpush1.msra.mxu0 0.0
        %6104 = vmatprep.subr.mxu0 0.0
        %6105 = vmatpush1.msra.mxu0 0.0
        %6106 = vmatprep.mubr.f32.mxu0 0.0
        %6107 = vmatmul.mubr.f32.gmra.mrb[0].mxu0 %v6037
        %v6108 = vpop.f32.mrb[0].mxu0
        %v6109 = vadd.f32 0.0, %v6108
        %v6110 = vpop.f32.mrb[0].mxu0
        %6111 = vmatprep.mubr.f32.mxu0 0.0
        %6112 = vmatmul.mubr.f32.gmra.mrb[0].mxu0 %v6040
        %v6113 = vpop.f32.mrb[0].mxu0
        %v6114 = vadd.f32 0.0, %v6113
        %v6115 = vpop.f32.mrb[0].mxu0
        %6116 = vdwg.mxu0
        %v6117 = vadd.f32 %v5830, %v6109
        %v6118 = vadd.f32 %v5831, %v6114
        %v6119 = vadd.f32 %v3520, %v4981
        %v6120 = vadd.f32 %v3521, %v4982
        %v6121 = vadd.f32 %v3522, %v6117
        %v6122 = vadd.f32 %v3523, %v6118
        %s6123 = scalar_lea.vmem %s6, 1
        %v6124 = vld [vmem:[%s6123] sm:$0x1]
        %s6125 = scalar_lea.vmem %s7, 1
        %v6126 = vld [vmem:[%s6125] sm:$0x1]
        %6127 = vadd.xlane.f32.xlu0 %v6119
        %v6128 = vpop.xlane.xlu0 %6127
        %6129 = vadd.xlane.f32.xlu0 %v6120
        %v6130 = vpop.xlane.xlu0 %6129
        %6131 = vadd.xlane.f32.xlu0 %v6121
        %v6132 = vpop.xlane.xlu0 %6131
        %6133 = vadd.xlane.f32.xlu0 %v6122
        %v6134 = vpop.xlane.xlu0 %6133
        %v6135 = vmul.f32 %v6128, %v3132
        %v6136 = vmul.f32 %v6130, %v3132
        %v6137 = vmul.f32 %v6132, %v3132
        %v6138 = vmul.f32 %v6134, %v3132
        %v6139 = vsub.f32 %v6119, %v6135
        %v6140 = vsub.f32 %v6120, %v6136
        %v6141 = vsub.f32 %v6121, %v6137
        %v6142 = vsub.f32 %v6122, %v6138
        %v6143 = vmul.f32 %v6139, %v6139
        %v6144 = vmul.f32 %v6140, %v6140
        %v6145 = vmul.f32 %v6141, %v6141
        %v6146 = vmul.f32 %v6142, %v6142
        %6147 = vadd.xlane.f32.xlu0 %v6143
        %v6148 = vpop.xlane.xlu0 %6147
        %6149 = vadd.xlane.f32.xlu0 %v6144
        %v6150 = vpop.xlane.xlu0 %6149
        %6151 = vadd.xlane.f32.xlu0 %v6145
        %v6152 = vpop.xlane.xlu0 %6151
        %6153 = vadd.xlane.f32.xlu0 %v6146
        %v6154 = vpop.xlane.xlu0 %6153
        %v6155 = vmul.f32 %v6148, %v3132
        %v6156 = vmul.f32 %v6150, %v3132
        %v6157 = vmul.f32 %v6152, %v3132
        %v6158 = vmul.f32 %v6154, %v3132
        %v6159 = vadd.f32 %v6155, 1e-05
        %v6160 = vadd.f32 %v6156, 1e-05
        %v6161 = vadd.f32 %v6157, 1e-05
        %v6162 = vadd.f32 %v6158, 1e-05
        %v6163 = vrsqrt.pop %v6159
        %v6164 = vrsqrt.pop %v6160
        %v6165 = vrsqrt.pop %v6161
        %v6166 = vrsqrt.pop %v6162
        %v6167 = vmul.f32 %v6139, %v6163
        %v6168 = vmul.f32 %v6140, %v6164
        %v6169 = vmul.f32 %v6141, %v6165
        %v6170 = vmul.f32 %v6142, %v6166
        %v6172 = vlaneseq
        %v6173 = vshrl.u32 %v6172, 7
        %v6174 = vsub.s32 0, %v6173
        %v6175 = vrot.slane %v6124, %v6174
        %v6177 = vmul.f32 %v6167, %v6175
        %v6178 = vmul.f32 %v6168, %v6175
        %v6179 = vmul.f32 %v6169, %v6175
        %v6180 = vmul.f32 %v6170, %v6175
        %v6182 = vlaneseq
        %v6183 = vshrl.u32 %v6182, 7
        %v6184 = vsub.s32 0, %v6183
        %v6185 = vrot.slane %v6126, %v6184
        %v6187 = vadd.f32 %v6177, %v6185
        %v6188 = vadd.f32 %v6178, %v6185
        %v6189 = vadd.f32 %v6179, %v6185
        %v6190 = vadd.f32 %v6180, %v6185
        %s6191 = scalar_lea.vmem %s8, 256
        %v6192 = vld [vmem:[%s6191] sm:$0xff]
        %v6193 = vld [vmem:[%s6191 + $0x8] sm:$0xff]
        %v6194 = vld [vmem:[%s6191 + $0x10] sm:$0xff]
        %v6195 = vld [vmem:[%s6191 + $0x18] sm:$0xff]
        %v6196 = vld [vmem:[%s6191 + $0x20] sm:$0xff]
        %v6197 = vld [vmem:[%s6191 + $0x28] sm:$0xff]
        %v6198 = vld [vmem:[%s6191 + $0x30] sm:$0xff]
        %v6199 = vld [vmem:[%s6191 + $0x38] sm:$0xff]
        %v6200 = vld [vmem:[%s6191 + $0x40] sm:$0xff]
        %v6201 = vld [vmem:[%s6191 + $0x48] sm:$0xff]
        %v6202 = vld [vmem:[%s6191 + $0x50] sm:$0xff]
        %v6203 = vld [vmem:[%s6191 + $0x58] sm:$0xff]
        %v6204 = vld [vmem:[%s6191 + $0x60] sm:$0xff]
        %v6205 = vld [vmem:[%s6191 + $0x68] sm:$0xff]
        %v6206 = vld [vmem:[%s6191 + $0x70] sm:$0xff]
        %v6207 = vld [vmem:[%s6191 + $0x78] sm:$0xff]
        %v6208 = vld [vmem:[%s6191 + $0x80] sm:$0xff]
        %v6209 = vld [vmem:[%s6191 + $0x88] sm:$0xff]
        %v6210 = vld [vmem:[%s6191 + $0x90] sm:$0xff]
        %v6211 = vld [vmem:[%s6191 + $0x98] sm:$0xff]
        %v6212 = vld [vmem:[%s6191 + $0xa0] sm:$0xff]
        %v6213 = vld [vmem:[%s6191 + $0xa8] sm:$0xff]
        %v6214 = vld [vmem:[%s6191 + $0xb0] sm:$0xff]
        %v6215 = vld [vmem:[%s6191 + $0xb8] sm:$0xff]
        %v6216 = vld [vmem:[%s6191 + $0xc0] sm:$0xff]
        %v6217 = vld [vmem:[%s6191 + $0xc8] sm:$0xff]
        %v6218 = vld [vmem:[%s6191 + $0xd0] sm:$0xff]
        %v6219 = vld [vmem:[%s6191 + $0xd8] sm:$0xff]
        %v6220 = vld [vmem:[%s6191 + $0xe0] sm:$0xff]
        %v6221 = vld [vmem:[%s6191 + $0xe8] sm:$0xff]
        %v6222 = vld [vmem:[%s6191 + $0xf0] sm:$0xff]
        %v6223 = vld [vmem:[%s6191 + $0xf8] sm:$0xff]
        %s6224 = scalar_lea.vmem %s9, 2
        %v6225 = vld [vmem:[%s6224] sm:$0x3]
        %v6227 = vlaneseq
        %v6228 = vshrl.u32 %v6227, 7
        %v6229 = vsub.s32 0, %v6228
        %v6230 = vrot.slane %v6225, %v6229
        %v6231 = vlaneseq
        %v6232 = vshrl.u32 %v6231, 7
        %v6233 = vsub.s32 1, %v6232
        %v6234 = vrot.slane %v6225, %v6233
        %6237 = vmatprep.subr.mxu0 %v6193
        %6238 = vmatpush1.msra.mxu0 %v6192
        %6239 = vmatprep.subr.mxu0 %v6195
        %6240 = vmatpush1.msra.mxu0 %v6194
        %6241 = vmatprep.subr.mxu0 %v6197
        %6242 = vmatpush1.msra.mxu0 %v6196
        %6243 = vmatprep.subr.mxu0 %v6199
        %6244 = vmatpush1.msra.mxu0 %v6198
        %6245 = vmatprep.subr.mxu0 %v6201
        %6246 = vmatpush1.msra.mxu0 %v6200
        %6247 = vmatprep.subr.mxu0 %v6203
        %6248 = vmatpush1.msra.mxu0 %v6202
        %6249 = vmatprep.subr.mxu0 %v6205
        %6250 = vmatpush1.msra.mxu0 %v6204
        %6251 = vmatprep.subr.mxu0 %v6207
        %6252 = vmatpush1.msra.mxu0 %v6206
        %6253 = vmatprep.subr.mxu0 %v6209
        %6254 = vmatpush1.msra.mxu0 %v6208
        %6255 = vmatprep.subr.mxu0 %v6211
        %6256 = vmatpush1.msra.mxu0 %v6210
        %6257 = vmatprep.subr.mxu0 %v6213
        %6258 = vmatpush1.msra.mxu0 %v6212
        %6259 = vmatprep.subr.mxu0 %v6215
        %6260 = vmatpush1.msra.mxu0 %v6214
        %6261 = vmatprep.subr.mxu0 %v6217
        %6262 = vmatpush1.msra.mxu0 %v6216
        %6263 = vmatprep.subr.mxu0 %v6219
        %6264 = vmatpush1.msra.mxu0 %v6218
        %6265 = vmatprep.subr.mxu0 %v6221
        %6266 = vmatpush1.msra.mxu0 %v6220
        %6267 = vmatprep.subr.mxu0 %v6223
        %6268 = vmatpush1.msra.mxu0 %v6222
        %6269 = vmatprep.subr.mxu0 0.0
        %6270 = vmatpush1.msra.mxu0 0.0
        %6271 = vmatprep.subr.mxu0 0.0
        %6272 = vmatpush1.msra.mxu0 0.0
        %6273 = vmatprep.subr.mxu0 0.0
        %6274 = vmatpush1.msra.mxu0 0.0
        %6275 = vmatprep.subr.mxu0 0.0
        %6276 = vmatpush1.msra.mxu0 0.0
        %6277 = vmatprep.subr.mxu0 0.0
        %6278 = vmatpush1.msra.mxu0 0.0
        %6279 = vmatprep.subr.mxu0 0.0
        %6280 = vmatpush1.msra.mxu0 0.0
        %6281 = vmatprep.subr.mxu0 0.0
        %6282 = vmatpush1.msra.mxu0 0.0
        %6283 = vmatprep.subr.mxu0 0.0
        %6284 = vmatpush1.msra.mxu0 0.0
        %6285 = vmatprep.subr.mxu0 0.0
        %6286 = vmatpush1.msra.mxu0 0.0
        %6287 = vmatprep.subr.mxu0 0.0
        %6288 = vmatpush1.msra.mxu0 0.0
        %6289 = vmatprep.subr.mxu0 0.0
        %6290 = vmatpush1.msra.mxu0 0.0
        %6291 = vmatprep.subr.mxu0 0.0
        %6292 = vmatpush1.msra.mxu0 0.0
        %6293 = vmatprep.subr.mxu0 0.0
        %6294 = vmatpush1.msra.mxu0 0.0
        %6295 = vmatprep.subr.mxu0 0.0
        %6296 = vmatpush1.msra.mxu0 0.0
        %6297 = vmatprep.subr.mxu0 0.0
        %6298 = vmatpush1.msra.mxu0 0.0
        %6299 = vmatprep.subr.mxu0 0.0
        %6300 = vmatpush1.msra.mxu0 0.0
        %6301 = vmatprep.mubr.f32.mxu0 0.0
        %6302 = vmatmul.mubr.f32.gmra.mrb[0].mxu0 %v6187
        %v6303 = vpop.f32.mrb[0].mxu0
        %v6304 = vadd.f32 %v6230, %v6303
        %v6305 = vpop.f32.mrb[0].mxu0
        %v6306 = vadd.f32 %v6234, %v6305
        %6307 = vmatprep.mubr.f32.mxu0 0.0
        %6308 = vmatmul.mubr.f32.gmra.mrb[0].mxu0 %v6188
        %v6309 = vpop.f32.mrb[0].mxu0
        %v6310 = vadd.f32 %v6230, %v6309
        %v6311 = vpop.f32.mrb[0].mxu0
        %v6312 = vadd.f32 %v6234, %v6311
        %6313 = vmatprep.mubr.f32.mxu0 0.0
        %6314 = vmatmul.mubr.f32.gmra.mrb[0].mxu0 %v6189
        %v6315 = vpop.f32.mrb[0].mxu0
        %v6316 = vadd.f32 %v6230, %v6315
        %v6317 = vpop.f32.mrb[0].mxu0
        %v6318 = vadd.f32 %v6234, %v6317
        %6319 = vmatprep.mubr.f32.mxu0 0.0
        %6320 = vmatmul.mubr.f32.gmra.mrb[0].mxu0 %v6190
        %v6321 = vpop.f32.mrb[0].mxu0
        %v6322 = vadd.f32 %v6230, %v6321
        %v6323 = vpop.f32.mrb[0].mxu0
        %v6324 = vadd.f32 %v6234, %v6323
        %6325 = vdwg.mxu0
        %v6326 = vmax.f32 %v6304, 0.0
        %v6327 = vmax.f32 %v6306, 0.0
        %v6328 = vmax.f32 %v6310, 0.0
        %v6329 = vmax.f32 %v6312, 0.0
        %v6330 = vmax.f32 %v6316, 0.0
        %v6331 = vmax.f32 %v6318, 0.0
        %v6332 = vmax.f32 %v6322, 0.0
        %v6333 = vmax.f32 %v6324, 0.0
        %s6334 = scalar_lea.vmem [#allocation10], 256
        %v6335 = vld [vmem:[%s6334] sm:$0xff]
        %v6336 = vld [vmem:[%s6334 + $0x8] sm:$0xff]
        %v6337 = vld [vmem:[%s6334 + $0x10] sm:$0xff]
        %v6338 = vld [vmem:[%s6334 + $0x18] sm:$0xff]
        %v6339 = vld [vmem:[%s6334 + $0x20] sm:$0xff]
        %v6340 = vld [vmem:[%s6334 + $0x28] sm:$0xff]
        %v6341 = vld [vmem:[%s6334 + $0x30] sm:$0xff]
        %v6342 = vld [vmem:[%s6334 + $0x38] sm:$0xff]
        %v6343 = vld [vmem:[%s6334 + $0x40] sm:$0xff]
        %v6344 = vld [vmem:[%s6334 + $0x48] sm:$0xff]
        %v6345 = vld [vmem:[%s6334 + $0x50] sm:$0xff]
        %v6346 = vld [vmem:[%s6334 + $0x58] sm:$0xff]
        %v6347 = vld [vmem:[%s6334 + $0x60] sm:$0xff]
        %v6348 = vld [vmem:[%s6334 + $0x68] sm:$0xff]
        %v6349 = vld [vmem:[%s6334 + $0x70] sm:$0xff]
        %v6350 = vld [vmem:[%s6334 + $0x78] sm:$0xff]
        %v6351 = vld [vmem:[%s6334 + $0x80] sm:$0xff]
        %v6352 = vld [vmem:[%s6334 + $0x88] sm:$0xff]
        %v6353 = vld [vmem:[%s6334 + $0x90] sm:$0xff]
        %v6354 = vld [vmem:[%s6334 + $0x98] sm:$0xff]
        %v6355 = vld [vmem:[%s6334 + $0xa0] sm:$0xff]
        %v6356 = vld [vmem:[%s6334 + $0xa8] sm:$0xff]
        %v6357 = vld [vmem:[%s6334 + $0xb0] sm:$0xff]
        %v6358 = vld [vmem:[%s6334 + $0xb8] sm:$0xff]
        %v6359 = vld [vmem:[%s6334 + $0xc0] sm:$0xff]
        %v6360 = vld [vmem:[%s6334 + $0xc8] sm:$0xff]
        %v6361 = vld [vmem:[%s6334 + $0xd0] sm:$0xff]
        %v6362 = vld [vmem:[%s6334 + $0xd8] sm:$0xff]
        %v6363 = vld [vmem:[%s6334 + $0xe0] sm:$0xff]
        %v6364 = vld [vmem:[%s6334 + $0xe8] sm:$0xff]
        %v6365 = vld [vmem:[%s6334 + $0xf0] sm:$0xff]
        %v6366 = vld [vmem:[%s6334 + $0xf8] sm:$0xff]
        %s6367 = scalar_lea.vmem %s11, 1
        %v6368 = vld [vmem:[%s6367] sm:$0x1]
        %v6370 = vlaneseq
        %v6371 = vshrl.u32 %v6370, 7
        %v6372 = vsub.s32 0, %v6371
        %v6373 = vrot.slane %v6368, %v6372
        %6375 = vmatprep.subr.mxu0 0.0
        %6376 = vmatpush1.msra.mxu0 %v6335
        %6377 = vmatprep.subr.mxu0 0.0
        %6378 = vmatpush1.msra.mxu0 %v6336
        %6379 = vmatprep.subr.mxu0 0.0
        %6380 = vmatpush1.msra.mxu0 %v6337
        %6381 = vmatprep.subr.mxu0 0.0
        %6382 = vmatpush1.msra.mxu0 %v6338
        %6383 = vmatprep.subr.mxu0 0.0
        %6384 = vmatpush1.msra.mxu0 %v6339
        %6385 = vmatprep.subr.mxu0 0.0
        %6386 = vmatpush1.msra.mxu0 %v6340
        %6387 = vmatprep.subr.mxu0 0.0
        %6388 = vmatpush1.msra.mxu0 %v6341
        %6389 = vmatprep.subr.mxu0 0.0
        %6390 = vmatpush1.msra.mxu0 %v6342
        %6391 = vmatprep.subr.mxu0 0.0
        %6392 = vmatpush1.msra.mxu0 %v6343
        %6393 = vmatprep.subr.mxu0 0.0
        %6394 = vmatpush1.msra.mxu0 %v6344
        %6395 = vmatprep.subr.mxu0 0.0
        %6396 = vmatpush1.msra.mxu0 %v6345
        %6397 = vmatprep.subr.mxu0 0.0
        %6398 = vmatpush1.msra.mxu0 %v6346
        %6399 = vmatprep.subr.mxu0 0.0
        %6400 = vmatpush1.msra.mxu0 %v6347
        %6401 = vmatprep.subr.mxu0 0.0
        %6402 = vmatpush1.msra.mxu0 %v6348
        %6403 = vmatprep.subr.mxu0 0.0
        %6404 = vmatpush1.msra.mxu0 %v6349
        %6405 = vmatprep.subr.mxu0 0.0
        %6406 = vmatpush1.msra.mxu0 %v6350
        %6407 = vmatprep.subr.mxu0 0.0
        %6408 = vmatpush1.msra.mxu0 %v6351
        %6409 = vmatprep.subr.mxu0 0.0
        %6410 = vmatpush1.msra.mxu0 %v6352
        %6411 = vmatprep.subr.mxu0 0.0
        %6412 = vmatpush1.msra.mxu0 %v6353
        %6413 = vmatprep.subr.mxu0 0.0
        %6414 = vmatpush1.msra.mxu0 %v6354
        %6415 = vmatprep.subr.mxu0 0.0
        %6416 = vmatpush1.msra.mxu0 %v6355
        %6417 = vmatprep.subr.mxu0 0.0
        %6418 = vmatpush1.msra.mxu0 %v6356
        %6419 = vmatprep.subr.mxu0 0.0
        %6420 = vmatpush1.msra.mxu0 %v6357
        %6421 = vmatprep.subr.mxu0 0.0
        %6422 = vmatpush1.msra.mxu0 %v6358
        %6423 = vmatprep.subr.mxu0 0.0
        %6424 = vmatpush1.msra.mxu0 %v6359
        %6425 = vmatprep.subr.mxu0 0.0
        %6426 = vmatpush1.msra.mxu0 %v6360
        %6427 = vmatprep.subr.mxu0 0.0
        %6428 = vmatpush1.msra.mxu0 %v6361
        %6429 = vmatprep.subr.mxu0 0.0
        %6430 = vmatpush1.msra.mxu0 %v6362
        %6431 = vmatprep.subr.mxu0 0.0
        %6432 = vmatpush1.msra.mxu0 %v6363
        %6433 = vmatprep.subr.mxu0 0.0
        %6434 = vmatpush1.msra.mxu0 %v6364
        %6435 = vmatprep.subr.mxu0 0.0
        %6436 = vmatpush1.msra.mxu0 %v6365
        %6437 = vmatprep.subr.mxu0 0.0
        %6438 = vmatpush1.msra.mxu0 %v6366
        %6439 = vmatprep.mubr.f32.mxu0 %v6327
        %6440 = vmatmul.mubr.f32.gmra.mrb[0].mxu0 %v6326
        %v6441 = vpop.f32.mrb[0].mxu0
        %v6442 = vadd.f32 %v6373, %v6441
        %v6443 = vpop.f32.mrb[0].mxu0
        %6444 = vmatprep.mubr.f32.mxu0 %v6329
        %6445 = vmatmul.mubr.f32.gmra.mrb[0].mxu0 %v6328
        %v6446 = vpop.f32.mrb[0].mxu0
        %v6447 = vadd.f32 %v6373, %v6446
        %v6448 = vpop.f32.mrb[0].mxu0
        %6449 = vmatprep.mubr.f32.mxu0 %v6331
        %6450 = vmatmul.mubr.f32.gmra.mrb[0].mxu0 %v6330
        %v6451 = vpop.f32.mrb[0].mxu0
        %v6452 = vadd.f32 %v6373, %v6451
        %v6453 = vpop.f32.mrb[0].mxu0
        %6454 = vmatprep.mubr.f32.mxu0 %v6333
        %6455 = vmatmul.mubr.f32.gmra.mrb[0].mxu0 %v6332
        %v6456 = vpop.f32.mrb[0].mxu0
        %v6457 = vadd.f32 %v6373, %v6456
        %v6458 = vpop.f32.mrb[0].mxu0
        %6459 = vdwg.mxu0
        %v6460 = vadd.f32 %v6187, %v6442
        %v6461 = vadd.f32 %v6188, %v6447
        %v6462 = vadd.f32 %v6189, %v6452
        %v6463 = vadd.f32 %v6190, %v6457
        %s6464 = scalar_lea.vmem %s12, 1
        %v6465 = vld [vmem:[%s6464] sm:$0x1]
        %s6466 = scalar_lea.vmem %s13, 1
        %v6467 = vld [vmem:[%s6466] sm:$0x1]
        %6468 = vadd.xlane.f32.xlu0 %v6460
        %v6469 = vpop.xlane.xlu0 %6468
        %6470 = vadd.xlane.f32.xlu0 %v6461
        %v6471 = vpop.xlane.xlu0 %6470
        %6472 = vadd.xlane.f32.xlu0 %v6462
        %v6473 = vpop.xlane.xlu0 %6472
        %6474 = vadd.xlane.f32.xlu0 %v6463
        %v6475 = vpop.xlane.xlu0 %6474
        %v6476 = vmul.f32 %v6469, %v3132
        %v6477 = vmul.f32 %v6471, %v3132
        %v6478 = vmul.f32 %v6473, %v3132
        %v6479 = vmul.f32 %v6475, %v3132
        %v6480 = vsub.f32 %v6460, %v6476
        %v6481 = vsub.f32 %v6461, %v6477
        %v6482 = vsub.f32 %v6462, %v6478
        %v6483 = vsub.f32 %v6463, %v6479
        %v6484 = vmul.f32 %v6480, %v6480
        %v6485 = vmul.f32 %v6481, %v6481
        %v6486 = vmul.f32 %v6482, %v6482
        %v6487 = vmul.f32 %v6483, %v6483
        %6488 = vadd.xlane.f32.xlu0 %v6484
        %v6489 = vpop.xlane.xlu0 %6488
        %6490 = vadd.xlane.f32.xlu0 %v6485
        %v6491 = vpop.xlane.xlu0 %6490
        %6492 = vadd.xlane.f32.xlu0 %v6486
        %v6493 = vpop.xlane.xlu0 %6492
        %6494 = vadd.xlane.f32.xlu0 %v6487
        %v6495 = vpop.xlane.xlu0 %6494
        %v6496 = vmul.f32 %v6489, %v3132
        %v6497 = vmul.f32 %v6491, %v3132
        %v6498 = vmul.f32 %v6493, %v3132
        %v6499 = vmul.f32 %v6495, %v3132
        %v6500 = vadd.f32 %v6496, 1e-05
        %v6501 = vadd.f32 %v6497, 1e-05
        %v6502 = vadd.f32 %v6498, 1e-05
        %v6503 = vadd.f32 %v6499, 1e-05
        %v6504 = vrsqrt.pop %v6500
        %v6505 = vrsqrt.pop %v6501
        %v6506 = vrsqrt.pop %v6502
        %v6507 = vrsqrt.pop %v6503
        %v6508 = vmul.f32 %v6480, %v6504
        %v6509 = vmul.f32 %v6481, %v6505
        %v6510 = vmul.f32 %v6482, %v6506
        %v6511 = vmul.f32 %v6483, %v6507
        %v6513 = vlaneseq
        %v6514 = vshrl.u32 %v6513, 7
        %v6515 = vsub.s32 0, %v6514
        %v6516 = vrot.slane %v6465, %v6515
        %v6518 = vmul.f32 %v6508, %v6516
        %v6519 = vmul.f32 %v6509, %v6516
        %v6520 = vmul.f32 %v6510, %v6516
        %v6521 = vmul.f32 %v6511, %v6516
        %v6523 = vlaneseq
        %v6524 = vshrl.u32 %v6523, 7
        %v6525 = vsub.s32 0, %v6524
        %v6526 = vrot.slane %v6467, %v6525
        %v6528 = vadd.f32 %v6518, %v6526
        %v6529 = vadd.f32 %v6519, %v6526
        %v6530 = vadd.f32 %v6520, %v6526
        %v6531 = vadd.f32 %v6521, %v6526
        %6532 = vst [vmem:[%s502] sm:$0xff] %v6528
        %6533 = vst [vmem:[%s502 + $0x8] sm:$0xff] %v6529
        %6534 = vst [vmem:[%s502 + $0x10] sm:$0xff] %v6530
        %6535 = vst [vmem:[%s502 + $0x18] sm:$0xff] %v6531
        %s6536 = sand.u32 %s323, 1
        %s6537 = scalar_lea.sflag [#allocation6], %s6536
        %s6538 = sand.u32 %s323, 1
        %s6539 = smul.addr %s6538, 32
        %s6540 = scalar_lea.vmem [#allocation12], %s6539
        // Predicated region
        $region89: #{transformer_encoder_forward.1} parent=71 // pred_check
          %p6541 = pneg %p333
        $region90: #{transformer_encoder_forward.1} parent=71 // pred_check_branch
          %6543 = sbr.rel (%p6541) target = $region92
        $region91: #{transformer_encoder_forward.1} parent=71 // pred_region
          %s6544 = smul.u32 2, %s37
          %s6546 = ssub.s32 512, 512
          %6547 = vsyncadd %s6537, %s6546
          %s6548 = smul.addr %s6544, 2
          %s6549 = smul.addr %s6548, 128
          %s6550 = scalar_lea.hbm %s14, %s6549
          %s6551 = sshll.u32 %s6540, 4
          %s6552 = int_to_ptr.vmem [resolvable:$true] %s6551
          %6557 = dma.vmem_to_hbm [thread:$0]  %s6552, 512, %s6550, %s6537, 128, 128, 8
        $region92: #{transformer_encoder_forward.1} parent=71 // pred_fallthru
          _
      $region72: #{transformer_encoder_forward.1} parent=5 // pred_fallthru
        _
      %p6558 = scmp.le.s32.totalorder 2, %s32
      // Predicated region
      $region93: #{transformer_encoder_forward.1} parent=5 // pred_check
        %p6559 = pneg %p6558
      $region94: #{transformer_encoder_forward.1} parent=5 // pred_check_branch
        %6561 = sbr.rel (%p6559) target = $region96
      $region95: #{transformer_encoder_forward.1} parent=5 // pred_region
        %s6562 = ssub.s32 %s32, 2
        // Predicated region
        $region97: #{transformer_encoder_forward.1} parent=95 // pred_check
          %p6563 = pneg %p339
        $region98: #{transformer_encoder_forward.1} parent=95 // pred_check_branch
          %6565 = sbr.rel (%p6563) target = $region100
        $region99: #{transformer_encoder_forward.1} parent=95 // pred_region
          %s6566 = sand.u32 %s324, 1
          %s6567 = scalar_lea.sflag [#allocation6], %s6566
          %s6568 = sand.u32 %s324, 1
          %s6569 = smul.addr %s6568, 32
          %s6570 = scalar_lea.vmem [#allocation12], %s6569
          %6571 = dma.done %s6567, 512
        $region100: #{transformer_encoder_forward.1} parent=95 // pred_fallthru
          _
      $region96: #{transformer_encoder_forward.1} parent=5 // pred_fallthru
        _
    $region6: #{transformer_encoder_forward.1} parent=1 // loop_footer
      %s36 = sadd.s32 1, %s32
    $region7: #{transformer_encoder_forward.1} parent=1 // loop_footer_branch
      %31 = sbr.rel target = $region3
    $region8: #{transformer_encoder_forward.1} parent=1 // loop_exit
      _
    %6572 = vsyncpa [#allocation5], 1
    %s6573 = scalar_lea.sflag [#allocation5], 1
    %6574 = vsyncpa %s6573, 1
    %6575 = vsyncpa [#allocation8], 1
    %6576 = vsyncpa [#allocation11], 1
    %6577 = vsyncpa [#allocation6], 1
    %s6578 = scalar_lea.sflag [#allocation6], 1
    %6579 = vsyncpa %s6578, 1

</llo_original>
